<compile_context>
chip_gen: v7x
topology: tpu7x:2x2x1
jax: 0.10.0
libtpu: 0.0.40
codegen_flags: <defaults>
</compile_context>

<pallas_src>
import numpy as np

import jax
import jax.numpy as jnp
from jax import lax
from jax.experimental import pallas as pl
from jax.experimental.pallas import tpu as pltpu


# ----------------------------------------------------------------------------
# Static geometry (28x28 -> conv5x5 pad2 -> 28x28 -> pool2 -> 14x14 -> ... -> 7x7)
# ----------------------------------------------------------------------------
C1, C2 = 16, 32            # conv1 / conv2 output channels
KK = 25                    # 5*5 taps
NFEAT = 49                 # 7*7 pooled spatial positions

H1 = 28                    # conv1 output spatial size
HP1, WP1 = 33, 32          # conv1 padded input: pad top2/bottom3, left2/right2
L1 = HP1 * WP1             # 1056 flattened padded lanes
LA1 = 904                  # conv1 activation lanes computed
LM1 = 864                  # pool1 shifted-max lanes

H2 = 14                    # conv2 output spatial size
HP2, WP2 = 19, 18          # conv2 padded input (built in-kernel by the S1 matmul)
L2 = HP2 * WP2             # 342
LA2 = 256                  # conv2 activation lanes
LM2 = 232                  # pool2 shifted-max lanes

# Static in-bounds checks for the hand-derived slack constants (review concern #2).
assert 4 * WP1 + 4 + LA1 <= L1                                  # conv1 tap slices
assert max(WP1 + 1 + LM1, 27 * WP1 + 27 + 1) <= LA1             # pool1 shifted maxes
assert 26 * WP1 + 26 < LM1                                      # S1 rows in range
assert 4 * WP2 + 4 + LA2 <= L2                                  # conv2 tap slices
assert max(WP2 + 1 + LM2, 13 * WP2 + 13 + 1) <= LA2             # pool2 shifted maxes
assert 12 * WP2 + 12 < LM2                                      # S2 rows in range


def _pool_select_matrix(n_rows, wp_in, hw_out, n_cols, wp_out, r_off, c_off):
    """0/1 matrix S with S[2*i*wp_in + 2*j, (i+r_off)*wp_out + (j+c_off)] = 1.

    Right-multiplying the (rows, n_rows) pooled-window-max by S performs the stride-2
    downsample, repacks into the next layer's flattened padded layout and inserts the
    zero padding, all as one (exact) MXU matmul."""
    s = np.zeros((n_rows, n_cols), dtype=np.float32)
    for i in range(hw_out):
        for j in range(hw_out):
            s[2 * i * wp_in + 2 * j, (i + r_off) * wp_out + (j + c_off)] = 1.0
    return s


# ----------------------------------------------------------------------------
# Fused Pallas kernel: conv1 + bias/ReLU + pool1 + conv2 + bias/ReLU + pool2
# for B = B_inner images per grid step.
# ----------------------------------------------------------------------------
def _fused_cnn_kernel(x_ref, w1_ref, b1_ref, w2_ref, b2_ref, s1_ref, s2_ref,
                      feat_ref,
                      x1t_ref, acc1_ref, h1_ref, x2_ref, x2t_ref, acc2_ref, h2_ref):
    f32 = jnp.float32
    bf16 = jnp.bfloat16
    B = x_ref.shape[0]                      # images per grid step (static)

    # ---- conv1 tap stack: 25 full-batch lane-shifted block copies (bf16) -----------
    for ki in range(5):
        for kj in range(5):
            t = ki * 5 + kj
            s = ki * WP1 + kj
            x1t_ref[t * B:(t + 1) * B, :] = x_ref[:, s:s + LA1].astype(bf16)

    # ---- conv1 as ONE block-diagonal MXU matmul: (B*16, 25*B) @ (25*B, LA1) ---------
    acc1_ref[...] = jnp.dot(w1_ref[...], x1t_ref[...], preferred_element_type=f32)

    # ---- fused 2x2 max-pool + bias + ReLU, per image (bounded live ranges) ----------
    @pl.loop(0, B)
    def _pool1(b):
        r = pl.multiple_of(b * C1, C1)
        a = acc1_ref[pl.ds(r, C1), :]                                   # (16, LA1) f32
        m = jnp.maximum(jnp.maximum(a[:, 0:LM1], a[:, 1:LM1 + 1]),
                        jnp.maximum(a[:, WP1:WP1 + LM1], a[:, WP1 + 1:WP1 + 1 + LM1]))
        h1_ref[pl.ds(r, C1), :] = jnp.maximum(m + b1_ref[...], 0.0).astype(bf16)

    # ---- S1: stride-2 downsample + repack + zero-pad, batch stacked along M ---------
    x2_ref[...] = jnp.dot(h1_ref[...], s1_ref[...],
                          preferred_element_type=f32).astype(bf16)      # (B*16, L2)

    # ---- conv2 tap stack: per image, 25 lane-shifted (16, LA2) copies ----------------
    @pl.loop(0, B)
    def _taps2(b):
        r = pl.multiple_of(b * C1, C1)
        for ki in range(5):
            for kj in range(5):
                t = ki * 5 + kj
                s = ki * WP2 + kj
                x2t_ref[b, t * C1:(t + 1) * C1, :] = x2_ref[pl.ds(r, C1), s:s + LA2]

    # ---- conv2: one folded K=400 batched matmul (B,32,400) @ (B,400,LA2) -------------
    acc2_ref[...] = lax.dot_general(
        w2_ref[...], x2t_ref[...],
        dimension_numbers=(((2,), (1,)), ((0,), (0,))),
        preferred_element_type=f32)                                     # (B, 32, LA2)

    # ---- fused 2x2 max-pool + bias + ReLU, per image ---------------------------------
    @pl.loop(0, B)
    def _pool2(b):
        a = acc2_ref[b]                                                 # (32, LA2) f32
        m = jnp.maximum(jnp.maximum(a[:, 0:LM2], a[:, 1:LM2 + 1]),
                        jnp.maximum(a[:, WP2:WP2 + LM2], a[:, WP2 + 1:WP2 + 1 + LM2]))
        h2_ref[pl.ds(pl.multiple_of(b * C2, C2), C2), :] = (
            jnp.maximum(m + b2_ref[...], 0.0).astype(bf16))

    # ---- S2: pooled 7x7 features in torch NCHW-flatten order, batch on M -------------
    feat_ref[...] = jnp.dot(h2_ref[...], s2_ref[...],
                            preferred_element_type=f32).astype(feat_ref.dtype)


def _fused_conv_stack(x3, prep):
    """x3: (n_steps, B_inner, L1) padded+flattened images -> (n_steps, B_inner*32, 49)."""
    n_steps, B, _ = x3.shape
    bf16 = jnp.bfloat16
    return pl.pallas_call(
        _fused_cnn_kernel,
        out_shape=jax.ShapeDtypeStruct((n_steps, B * C2, NFEAT), jnp.float32),
        grid=(n_steps,),
        in_specs=[
            pl.BlockSpec((None, B, L1), lambda i: (i, 0, 0)),           # images
            pl.BlockSpec((B * C1, KK * B), lambda i: (0, 0)),           # w1 (block-diag)
            pl.BlockSpec((C1, 1), lambda i: (0, 0)),                    # b1
            pl.BlockSpec((B, C2, KK * C1), lambda i: (0, 0, 0)),        # w2 (batched)
            pl.BlockSpec((C2, 1), lambda i: (0, 0)),                    # b2
            pl.BlockSpec((LM1, L2), lambda i: (0, 0)),                  # pool1 select
            pl.BlockSpec((LM2, NFEAT), lambda i: (0, 0)),               # pool2 select
        ],
        out_specs=pl.BlockSpec((None, B * C2, NFEAT), lambda i: (i, 0, 0)),
        scratch_shapes=[
            pltpu.VMEM((KK * B, LA1), bf16),        # conv1 tap stack
            pltpu.VMEM((B * C1, LA1), jnp.float32), # conv1 pre-activations
            pltpu.VMEM((B * C1, LM1), bf16),        # h1 (pooled-max, biased, relu'd)
            pltpu.VMEM((B * C1, L2), bf16),         # padded layer-2 input
            pltpu.VMEM((B, KK * C1, LA2), bf16),    # conv2 tap stack
            pltpu.VMEM((B, C2, LA2), jnp.float32),  # conv2 pre-activations
            pltpu.VMEM((B * C2, LM2), bf16),        # h2
        ],
        compiler_params=pltpu.CompilerParams(
            dimension_semantics=("parallel",),      # shard batch-chunks across TCs
            vmem_limit_bytes=32 * 1024 * 1024,      # ~6 MiB actually used at B_inner=8
        ),
    )(x3, prep["w1big"], prep["b1"], prep["w2b"], prep["b2"], prep["s1"], prep["s2"])


# ----------------------------------------------------------------------------
# One-time parameter re-layout (static; done outside the forward pass)
# ----------------------------------------------------------------------------
def prepare_params(params, b_inner=8):
    """b_inner: images per grid step (multiple of 8 recommended for aligned stores)."""
    B = int(b_inner)
    w1 = params["w1"].reshape(C1, KK).astype(jnp.float32)               # (co, ki*5+kj)
    # Block-diagonal conv1 weight: W[b*16+c, t*B+b'] = w1[c, t] * delta(b, b').
    eye = jnp.eye(B, dtype=jnp.float32)
    w1big = (eye[:, None, None, :] * w1[None, :, :, None]).reshape(B * C1, KK * B)
    w1big = w1big.astype(jnp.bfloat16)
    b1 = params["b1"].reshape(C1, 1).astype(jnp.float32)
    # (Cout, Cin, 5, 5) -> (Cout, 5, 5, Cin) -> (Cout, 25*Cin): tap-major, Cin minor,
    # then tiled over the per-step batch for the batched dot_general.
    w2 = jnp.transpose(params["w2"], (0, 2, 3, 1)).reshape(C2, KK * C1).astype(jnp.bfloat16)
    w2b = jnp.broadcast_to(w2[None], (B, C2, KK * C1))
    b2 = params["b2"].reshape(C2, 1).astype(jnp.float32)
    s1 = jnp.asarray(_pool_select_matrix(LM1, WP1, H1 // 2, L2, WP2, 2, 2),
                     dtype=jnp.bfloat16)
    s2 = jnp.asarray(_pool_select_matrix(LM2, WP2, H2 // 2, NFEAT, 7, 0, 0),
                     dtype=jnp.bfloat16)
    wfc_t = params["wfc"].T.astype(jnp.float32)                          # (1568, 10)
    bfc = params["bfc"].astype(jnp.float32)
    return dict(b_inner=B, w1big=w1big, b1=b1, w2b=w2b, b2=b2, s1=s1, s2=s2,
                wfc_t=wfc_t, bfc=bfc)


def cnn_forward(x_nchw, prep):
    """Matches CNN.forward: conv1 -> conv2 -> flatten (NCHW order) -> linear."""
    B = prep["b_inner"]
    n = x_nchw.shape[0]
    n_pad = -(-n // B) * B
    # Pad batch to a multiple of B_inner, pad spatial (top2/bottom3, left2/right2) and
    # flatten -> (n_steps, B_inner, 33*32).  The extra bottom row is slack so every 5x5
    # tap of the flattened image is one contiguous lane slice.
    xp = jnp.pad(x_nchw[:, 0, :, :], ((0, n_pad - n), (2, 3), (2, 2)))
    x3 = xp.reshape(n_pad // B, B, L1)
    feat = _fused_conv_stack(x3, prep)                       # (steps, B*32, 49)
    feat = feat.reshape(n_pad, C2 * NFEAT)[:n]
    # Final Linear left to XLA as one fused f32 GEMM (per review).
    return feat @ prep["wfc_t"] + prep["bfc"]


# ----------------------------------------------------------------------------
# Pure-JAX reference (correctness check only)
# ----------------------------------------------------------------------------
def cnn_reference(x_nchw, params):
    def conv(x, w, b):
        y = lax.conv_general_dilated(x, w, (1, 1), ((2, 2), (2, 2)),
                                     dimension_numbers=("NCHW", "OIHW", "NCHW"))
        return jnp.maximum(y + b[None, :, None, None], 0.0)

    def pool(x):
        return lax.reduce_window(x, -jnp.inf, lax.max, (1, 1, 2, 2), (1, 1, 2, 2), "VALID")

    x = pool(conv(x_nchw, params["w1"], params["b1"]))
    x = pool(conv(x, params["w2"], params["b2"]))
    return x.reshape(x.shape[0], -1) @ params["wfc"].T + params["bfc"]


# ----------------------------------------------------------------------------
if __name__ == "__main__":
    key = jax.random.PRNGKey(0)
    k_x, k_w1, k_b1, k_w2, k_b2, k_wf, k_bf = jax.random.split(key, 7)

    N = 10  # deliberately not a multiple of B_inner: exercises batch padding + 2 grid steps
    x = jax.random.normal(k_x, (N, 1, 28, 28), dtype=jnp.float32)

    params = {
        "w1": 0.1 * jax.random.normal(k_w1, (16, 1, 5, 5), dtype=jnp.float32),
        "b1": 0.1 * jax.random.normal(k_b1, (16,), dtype=jnp.float32),
        "w2": 0.05 * jax.random.normal(k_w2, (32, 16, 5, 5), dtype=jnp.float32),
        "b2": 0.1 * jax.random.normal(k_b2, (32,), dtype=jnp.float32),
        "wfc": 0.02 * jax.random.normal(k_wf, (10, 32 * 7 * 7), dtype=jnp.float32),
        "bfc": 0.1 * jax.random.normal(k_bf, (10,), dtype=jnp.float32),
    }

    prep = prepare_params(params, b_inner=8)
    out = jax.block_until_ready(cnn_forward(x, prep))
    assert out.shape == (N, 10) and out.dtype == jnp.float32

    ref = jax.block_until_ready(cnn_reference(x, params))
    # The whole conv stack now runs with bf16 MXU operands (f32 accumulation), so allow a
    # small tolerance vs the all-f32 reference.
    assert jnp.allclose(out, ref, atol=2.5e-2, rtol=2.5e-2), "mismatch vs reference"

    print("KERNEL_OK")
</pallas_src>

<mosaic_0001>
module attributes {stable_mosaic.version = 11 : i64} {
  func.func @_fused_cnn_kernel(%arg0: i32, %arg1: memref<1x8x1056xf32, #tpu.memory_space<vmem>>, %arg2: memref<128x200xbf16, #tpu.memory_space<vmem>>, %arg3: memref<16x1xf32, #tpu.memory_space<vmem>>, %arg4: memref<8x32x400xbf16, #tpu.memory_space<vmem>>, %arg5: memref<32x1xf32, #tpu.memory_space<vmem>>, %arg6: memref<864x342xbf16, #tpu.memory_space<vmem>>, %arg7: memref<232x49xbf16, #tpu.memory_space<vmem>>, %arg8: memref<1x256x49xf32, #tpu.memory_space<vmem>>, %arg9: memref<200x904xbf16, #tpu.memory_space<vmem>>, %arg10: memref<128x904xf32, #tpu.memory_space<vmem>>, %arg11: memref<128x864xbf16, #tpu.memory_space<vmem>>, %arg12: memref<128x342xbf16, #tpu.memory_space<vmem>>, %arg13: memref<8x400x256xbf16, #tpu.memory_space<vmem>>, %arg14: memref<8x32x256xf32, #tpu.memory_space<vmem>>, %arg15: memref<256x232xbf16, #tpu.memory_space<vmem>>) attributes {dimension_semantics = [#tpu.dimension_semantics<parallel>], iteration_bounds = array<i64: 2>, scalar_prefetch = 0 : i64, scratch_operands = 7 : i64, tpu.core_type = #tpu.core_type<tc>, window_params = [{transform_indices = @transform_0, window_bounds = array<i64: 1, 8, 1056>}, {pipeline_mode = #tpu.pipeline_mode<synchronous>, transform_indices = @transform_1, window_bounds = array<i64: 128, 200>}, {pipeline_mode = #tpu.pipeline_mode<synchronous>, transform_indices = @transform_2, window_bounds = array<i64: 16, 1>}, {pipeline_mode = #tpu.pipeline_mode<synchronous>, transform_indices = @transform_3, window_bounds = array<i64: 8, 32, 400>}, {pipeline_mode = #tpu.pipeline_mode<synchronous>, transform_indices = @transform_4, window_bounds = array<i64: 32, 1>}, {pipeline_mode = #tpu.pipeline_mode<synchronous>, transform_indices = @transform_5, window_bounds = array<i64: 864, 342>}, {pipeline_mode = #tpu.pipeline_mode<synchronous>, transform_indices = @transform_6, window_bounds = array<i64: 232, 49>}, {transform_indices = @transform_7, window_bounds = array<i64: 1, 256, 49>}]} {
    %c0 = arith.constant 0 : index
    %c0_0 = arith.constant 0 : index
    %c0_1 = arith.constant 0 : index
    %0 = vector.load %arg1[%c0, %c0_0, %c0_1] : memref<1x8x1056xf32, #tpu.memory_space<vmem>>, vector<1x8x904xf32>
    %1 = vector.shape_cast %0 : vector<1x8x904xf32> to vector<8x904xf32>
    %2 = arith.truncf %1 : vector<8x904xf32> to vector<8x904xbf16>
    %c0_2 = arith.constant 0 : index
    %c0_3 = arith.constant 0 : index
    %3 = vector.load %arg9[%c0_2, %c0_3] : memref<200x904xbf16, #tpu.memory_space<vmem>>, vector<8x904xbf16>
    tpu.vector_store %arg9[%c0_2, %c0_3], %2 {strides = array<i32>} : memref<200x904xbf16, #tpu.memory_space<vmem>>, vector<8x904xbf16>,
    %c0_4 = arith.constant 0 : index
    %c0_5 = arith.constant 0 : index
    %c1 = arith.constant 1 : index
    %4 = vector.load %arg1[%c0_4, %c0_5, %c1] : memref<1x8x1056xf32, #tpu.memory_space<vmem>>, vector<1x8x904xf32>
    %5 = vector.shape_cast %4 : vector<1x8x904xf32> to vector<8x904xf32>
    %6 = arith.truncf %5 : vector<8x904xf32> to vector<8x904xbf16>
    %c8 = arith.constant 8 : index
    %c0_6 = arith.constant 0 : index
    %7 = vector.load %arg9[%c8, %c0_6] : memref<200x904xbf16, #tpu.memory_space<vmem>>, vector<8x904xbf16>
    tpu.vector_store %arg9[%c8, %c0_6], %6 {strides = array<i32>} : memref<200x904xbf16, #tpu.memory_space<vmem>>, vector<8x904xbf16>,
    %c0_7 = arith.constant 0 : index
    %c0_8 = arith.constant 0 : index
    %c2 = arith.constant 2 : index
    %8 = vector.load %arg1[%c0_7, %c0_8, %c2] : memref<1x8x1056xf32, #tpu.memory_space<vmem>>, vector<1x8x904xf32>
    %9 = vector.shape_cast %8 : vector<1x8x904xf32> to vector<8x904xf32>
    %10 = arith.truncf %9 : vector<8x904xf32> to vector<8x904xbf16>
    %c16 = arith.constant 16 : index
    %c0_9 = arith.constant 0 : index
    %11 = vector.load %arg9[%c16, %c0_9] : memref<200x904xbf16, #tpu.memory_space<vmem>>, vector<8x904xbf16>
    tpu.vector_store %arg9[%c16, %c0_9], %10 {strides = array<i32>} : memref<200x904xbf16, #tpu.memory_space<vmem>>, vector<8x904xbf16>,
    %c0_10 = arith.constant 0 : index
    %c0_11 = arith.constant 0 : index
    %c3 = arith.constant 3 : index
    %12 = vector.load %arg1[%c0_10, %c0_11, %c3] : memref<1x8x1056xf32, #tpu.memory_space<vmem>>, vector<1x8x904xf32>
    %13 = vector.shape_cast %12 : vector<1x8x904xf32> to vector<8x904xf32>
    %14 = arith.truncf %13 : vector<8x904xf32> to vector<8x904xbf16>
    %c24 = arith.constant 24 : index
    %c0_12 = arith.constant 0 : index
    %15 = vector.load %arg9[%c24, %c0_12] : memref<200x904xbf16, #tpu.memory_space<vmem>>, vector<8x904xbf16>
    tpu.vector_store %arg9[%c24, %c0_12], %14 {strides = array<i32>} : memref<200x904xbf16, #tpu.memory_space<vmem>>, vector<8x904xbf16>,
    %c0_13 = arith.constant 0 : index
    %c0_14 = arith.constant 0 : index
    %c4 = arith.constant 4 : index
    %16 = vector.load %arg1[%c0_13, %c0_14, %c4] : memref<1x8x1056xf32, #tpu.memory_space<vmem>>, vector<1x8x904xf32>
    %17 = vector.shape_cast %16 : vector<1x8x904xf32> to vector<8x904xf32>
    %18 = arith.truncf %17 : vector<8x904xf32> to vector<8x904xbf16>
    %c32 = arith.constant 32 : index
    %c0_15 = arith.constant 0 : index
    %19 = vector.load %arg9[%c32, %c0_15] : memref<200x904xbf16, #tpu.memory_space<vmem>>, vector<8x904xbf16>
    tpu.vector_store %arg9[%c32, %c0_15], %18 {strides = array<i32>} : memref<200x904xbf16, #tpu.memory_space<vmem>>, vector<8x904xbf16>,
    %c0_16 = arith.constant 0 : index
    %c0_17 = arith.constant 0 : index
    %c32_18 = arith.constant 32 : index
    %20 = vector.load %arg1[%c0_16, %c0_17, %c32_18] : memref<1x8x1056xf32, #tpu.memory_space<vmem>>, vector<1x8x904xf32>
    %21 = vector.shape_cast %20 : vector<1x8x904xf32> to vector<8x904xf32>
    %22 = arith.truncf %21 : vector<8x904xf32> to vector<8x904xbf16>
    %c40 = arith.constant 40 : index
    %c0_19 = arith.constant 0 : index
    %23 = vector.load %arg9[%c40, %c0_19] : memref<200x904xbf16, #tpu.memory_space<vmem>>, vector<8x904xbf16>
    tpu.vector_store %arg9[%c40, %c0_19], %22 {strides = array<i32>} : memref<200x904xbf16, #tpu.memory_space<vmem>>, vector<8x904xbf16>,
    %c0_20 = arith.constant 0 : index
    %c0_21 = arith.constant 0 : index
    %c33 = arith.constant 33 : index
    %24 = vector.load %arg1[%c0_20, %c0_21, %c33] : memref<1x8x1056xf32, #tpu.memory_space<vmem>>, vector<1x8x904xf32>
    %25 = vector.shape_cast %24 : vector<1x8x904xf32> to vector<8x904xf32>
    %26 = arith.truncf %25 : vector<8x904xf32> to vector<8x904xbf16>
    %c48 = arith.constant 48 : index
    %c0_22 = arith.constant 0 : index
    %27 = vector.load %arg9[%c48, %c0_22] : memref<200x904xbf16, #tpu.memory_space<vmem>>, vector<8x904xbf16>
    tpu.vector_store %arg9[%c48, %c0_22], %26 {strides = array<i32>} : memref<200x904xbf16, #tpu.memory_space<vmem>>, vector<8x904xbf16>,
    %c0_23 = arith.constant 0 : index
    %c0_24 = arith.constant 0 : index
    %c34 = arith.constant 34 : index
    %28 = vector.load %arg1[%c0_23, %c0_24, %c34] : memref<1x8x1056xf32, #tpu.memory_space<vmem>>, vector<1x8x904xf32>
    %29 = vector.shape_cast %28 : vector<1x8x904xf32> to vector<8x904xf32>
    %30 = arith.truncf %29 : vector<8x904xf32> to vector<8x904xbf16>
    %c56 = arith.constant 56 : index
    %c0_25 = arith.constant 0 : index
    %31 = vector.load %arg9[%c56, %c0_25] : memref<200x904xbf16, #tpu.memory_space<vmem>>, vector<8x904xbf16>
    tpu.vector_store %arg9[%c56, %c0_25], %30 {strides = array<i32>} : memref<200x904xbf16, #tpu.memory_space<vmem>>, vector<8x904xbf16>,
    %c0_26 = arith.constant 0 : index
    %c0_27 = arith.constant 0 : index
    %c35 = arith.constant 35 : index
    %32 = vector.load %arg1[%c0_26, %c0_27, %c35] : memref<1x8x1056xf32, #tpu.memory_space<vmem>>, vector<1x8x904xf32>
    %33 = vector.shape_cast %32 : vector<1x8x904xf32> to vector<8x904xf32>
    %34 = arith.truncf %33 : vector<8x904xf32> to vector<8x904xbf16>
    %c64 = arith.constant 64 : index
    %c0_28 = arith.constant 0 : index
    %35 = vector.load %arg9[%c64, %c0_28] : memref<200x904xbf16, #tpu.memory_space<vmem>>, vector<8x904xbf16>
    tpu.vector_store %arg9[%c64, %c0_28], %34 {strides = array<i32>} : memref<200x904xbf16, #tpu.memory_space<vmem>>, vector<8x904xbf16>,
    %c0_29 = arith.constant 0 : index
    %c0_30 = arith.constant 0 : index
    %c36 = arith.constant 36 : index
    %36 = vector.load %arg1[%c0_29, %c0_30, %c36] : memref<1x8x1056xf32, #tpu.memory_space<vmem>>, vector<1x8x904xf32>
    %37 = vector.shape_cast %36 : vector<1x8x904xf32> to vector<8x904xf32>
    %38 = arith.truncf %37 : vector<8x904xf32> to vector<8x904xbf16>
    %c72 = arith.constant 72 : index
    %c0_31 = arith.constant 0 : index
    %39 = vector.load %arg9[%c72, %c0_31] : memref<200x904xbf16, #tpu.memory_space<vmem>>, vector<8x904xbf16>
    tpu.vector_store %arg9[%c72, %c0_31], %38 {strides = array<i32>} : memref<200x904xbf16, #tpu.memory_space<vmem>>, vector<8x904xbf16>,
    %c0_32 = arith.constant 0 : index
    %c0_33 = arith.constant 0 : index
    %c64_34 = arith.constant 64 : index
    %40 = vector.load %arg1[%c0_32, %c0_33, %c64_34] : memref<1x8x1056xf32, #tpu.memory_space<vmem>>, vector<1x8x904xf32>
    %41 = vector.shape_cast %40 : vector<1x8x904xf32> to vector<8x904xf32>
    %42 = arith.truncf %41 : vector<8x904xf32> to vector<8x904xbf16>
    %c80 = arith.constant 80 : index
    %c0_35 = arith.constant 0 : index
    %43 = vector.load %arg9[%c80, %c0_35] : memref<200x904xbf16, #tpu.memory_space<vmem>>, vector<8x904xbf16>
    tpu.vector_store %arg9[%c80, %c0_35], %42 {strides = array<i32>} : memref<200x904xbf16, #tpu.memory_space<vmem>>, vector<8x904xbf16>,
    %c0_36 = arith.constant 0 : index
    %c0_37 = arith.constant 0 : index
    %c65 = arith.constant 65 : index
    %44 = vector.load %arg1[%c0_36, %c0_37, %c65] : memref<1x8x1056xf32, #tpu.memory_space<vmem>>, vector<1x8x904xf32>
    %45 = vector.shape_cast %44 : vector<1x8x904xf32> to vector<8x904xf32>
    %46 = arith.truncf %45 : vector<8x904xf32> to vector<8x904xbf16>
    %c88 = arith.constant 88 : index
    %c0_38 = arith.constant 0 : index
    %47 = vector.load %arg9[%c88, %c0_38] : memref<200x904xbf16, #tpu.memory_space<vmem>>, vector<8x904xbf16>
    tpu.vector_store %arg9[%c88, %c0_38], %46 {strides = array<i32>} : memref<200x904xbf16, #tpu.memory_space<vmem>>, vector<8x904xbf16>,
    %c0_39 = arith.constant 0 : index
    %c0_40 = arith.constant 0 : index
    %c66 = arith.constant 66 : index
    %48 = vector.load %arg1[%c0_39, %c0_40, %c66] : memref<1x8x1056xf32, #tpu.memory_space<vmem>>, vector<1x8x904xf32>
    %49 = vector.shape_cast %48 : vector<1x8x904xf32> to vector<8x904xf32>
    %50 = arith.truncf %49 : vector<8x904xf32> to vector<8x904xbf16>
    %c96 = arith.constant 96 : index
    %c0_41 = arith.constant 0 : index
    %51 = vector.load %arg9[%c96, %c0_41] : memref<200x904xbf16, #tpu.memory_space<vmem>>, vector<8x904xbf16>
    tpu.vector_store %arg9[%c96, %c0_41], %50 {strides = array<i32>} : memref<200x904xbf16, #tpu.memory_space<vmem>>, vector<8x904xbf16>,
    %c0_42 = arith.constant 0 : index
    %c0_43 = arith.constant 0 : index
    %c67 = arith.constant 67 : index
    %52 = vector.load %arg1[%c0_42, %c0_43, %c67] : memref<1x8x1056xf32, #tpu.memory_space<vmem>>, vector<1x8x904xf32>
    %53 = vector.shape_cast %52 : vector<1x8x904xf32> to vector<8x904xf32>
    %54 = arith.truncf %53 : vector<8x904xf32> to vector<8x904xbf16>
    %c104 = arith.constant 104 : index
    %c0_44 = arith.constant 0 : index
    %55 = vector.load %arg9[%c104, %c0_44] : memref<200x904xbf16, #tpu.memory_space<vmem>>, vector<8x904xbf16>
    tpu.vector_store %arg9[%c104, %c0_44], %54 {strides = array<i32>} : memref<200x904xbf16, #tpu.memory_space<vmem>>, vector<8x904xbf16>,
    %c0_45 = arith.constant 0 : index
    %c0_46 = arith.constant 0 : index
    %c68 = arith.constant 68 : index
    %56 = vector.load %arg1[%c0_45, %c0_46, %c68] : memref<1x8x1056xf32, #tpu.memory_space<vmem>>, vector<1x8x904xf32>
    %57 = vector.shape_cast %56 : vector<1x8x904xf32> to vector<8x904xf32>
    %58 = arith.truncf %57 : vector<8x904xf32> to vector<8x904xbf16>
    %c112 = arith.constant 112 : index
    %c0_47 = arith.constant 0 : index
    %59 = vector.load %arg9[%c112, %c0_47] : memref<200x904xbf16, #tpu.memory_space<vmem>>, vector<8x904xbf16>
    tpu.vector_store %arg9[%c112, %c0_47], %58 {strides = array<i32>} : memref<200x904xbf16, #tpu.memory_space<vmem>>, vector<8x904xbf16>,
    %c0_48 = arith.constant 0 : index
    %c0_49 = arith.constant 0 : index
    %c96_50 = arith.constant 96 : index
    %60 = vector.load %arg1[%c0_48, %c0_49, %c96_50] : memref<1x8x1056xf32, #tpu.memory_space<vmem>>, vector<1x8x904xf32>
    %61 = vector.shape_cast %60 : vector<1x8x904xf32> to vector<8x904xf32>
    %62 = arith.truncf %61 : vector<8x904xf32> to vector<8x904xbf16>
    %c120 = arith.constant 120 : index
    %c0_51 = arith.constant 0 : index
    %63 = vector.load %arg9[%c120, %c0_51] : memref<200x904xbf16, #tpu.memory_space<vmem>>, vector<8x904xbf16>
    tpu.vector_store %arg9[%c120, %c0_51], %62 {strides = array<i32>} : memref<200x904xbf16, #tpu.memory_space<vmem>>, vector<8x904xbf16>,
    %c0_52 = arith.constant 0 : index
    %c0_53 = arith.constant 0 : index
    %c97 = arith.constant 97 : index
    %64 = vector.load %arg1[%c0_52, %c0_53, %c97] : memref<1x8x1056xf32, #tpu.memory_space<vmem>>, vector<1x8x904xf32>
    %65 = vector.shape_cast %64 : vector<1x8x904xf32> to vector<8x904xf32>
    %66 = arith.truncf %65 : vector<8x904xf32> to vector<8x904xbf16>
    %c128 = arith.constant 128 : index
    %c0_54 = arith.constant 0 : index
    %67 = vector.load %arg9[%c128, %c0_54] : memref<200x904xbf16, #tpu.memory_space<vmem>>, vector<8x904xbf16>
    tpu.vector_store %arg9[%c128, %c0_54], %66 {strides = array<i32>} : memref<200x904xbf16, #tpu.memory_space<vmem>>, vector<8x904xbf16>,
    %c0_55 = arith.constant 0 : index
    %c0_56 = arith.constant 0 : index
    %c98 = arith.constant 98 : index
    %68 = vector.load %arg1[%c0_55, %c0_56, %c98] : memref<1x8x1056xf32, #tpu.memory_space<vmem>>, vector<1x8x904xf32>
    %69 = vector.shape_cast %68 : vector<1x8x904xf32> to vector<8x904xf32>
    %70 = arith.truncf %69 : vector<8x904xf32> to vector<8x904xbf16>
    %c136 = arith.constant 136 : index
    %c0_57 = arith.constant 0 : index
    %71 = vector.load %arg9[%c136, %c0_57] : memref<200x904xbf16, #tpu.memory_space<vmem>>, vector<8x904xbf16>
    tpu.vector_store %arg9[%c136, %c0_57], %70 {strides = array<i32>} : memref<200x904xbf16, #tpu.memory_space<vmem>>, vector<8x904xbf16>,
    %c0_58 = arith.constant 0 : index
    %c0_59 = arith.constant 0 : index
    %c99 = arith.constant 99 : index
    %72 = vector.load %arg1[%c0_58, %c0_59, %c99] : memref<1x8x1056xf32, #tpu.memory_space<vmem>>, vector<1x8x904xf32>
    %73 = vector.shape_cast %72 : vector<1x8x904xf32> to vector<8x904xf32>
    %74 = arith.truncf %73 : vector<8x904xf32> to vector<8x904xbf16>
    %c144 = arith.constant 144 : index
    %c0_60 = arith.constant 0 : index
    %75 = vector.load %arg9[%c144, %c0_60] : memref<200x904xbf16, #tpu.memory_space<vmem>>, vector<8x904xbf16>
    tpu.vector_store %arg9[%c144, %c0_60], %74 {strides = array<i32>} : memref<200x904xbf16, #tpu.memory_space<vmem>>, vector<8x904xbf16>,
    %c0_61 = arith.constant 0 : index
    %c0_62 = arith.constant 0 : index
    %c100 = arith.constant 100 : index
    %76 = vector.load %arg1[%c0_61, %c0_62, %c100] : memref<1x8x1056xf32, #tpu.memory_space<vmem>>, vector<1x8x904xf32>
    %77 = vector.shape_cast %76 : vector<1x8x904xf32> to vector<8x904xf32>
    %78 = arith.truncf %77 : vector<8x904xf32> to vector<8x904xbf16>
    %c152 = arith.constant 152 : index
    %c0_63 = arith.constant 0 : index
    %79 = vector.load %arg9[%c152, %c0_63] : memref<200x904xbf16, #tpu.memory_space<vmem>>, vector<8x904xbf16>
    tpu.vector_store %arg9[%c152, %c0_63], %78 {strides = array<i32>} : memref<200x904xbf16, #tpu.memory_space<vmem>>, vector<8x904xbf16>,
    %c0_64 = arith.constant 0 : index
    %c0_65 = arith.constant 0 : index
    %c128_66 = arith.constant 128 : index
    %80 = vector.load %arg1[%c0_64, %c0_65, %c128_66] : memref<1x8x1056xf32, #tpu.memory_space<vmem>>, vector<1x8x904xf32>
    %81 = vector.shape_cast %80 : vector<1x8x904xf32> to vector<8x904xf32>
    %82 = arith.truncf %81 : vector<8x904xf32> to vector<8x904xbf16>
    %c160 = arith.constant 160 : index
    %c0_67 = arith.constant 0 : index
    %83 = vector.load %arg9[%c160, %c0_67] : memref<200x904xbf16, #tpu.memory_space<vmem>>, vector<8x904xbf16>
    tpu.vector_store %arg9[%c160, %c0_67], %82 {strides = array<i32>} : memref<200x904xbf16, #tpu.memory_space<vmem>>, vector<8x904xbf16>,
    %c0_68 = arith.constant 0 : index
    %c0_69 = arith.constant 0 : index
    %c129 = arith.constant 129 : index
    %84 = vector.load %arg1[%c0_68, %c0_69, %c129] : memref<1x8x1056xf32, #tpu.memory_space<vmem>>, vector<1x8x904xf32>
    %85 = vector.shape_cast %84 : vector<1x8x904xf32> to vector<8x904xf32>
    %86 = arith.truncf %85 : vector<8x904xf32> to vector<8x904xbf16>
    %c168 = arith.constant 168 : index
    %c0_70 = arith.constant 0 : index
    %87 = vector.load %arg9[%c168, %c0_70] : memref<200x904xbf16, #tpu.memory_space<vmem>>, vector<8x904xbf16>
    tpu.vector_store %arg9[%c168, %c0_70], %86 {strides = array<i32>} : memref<200x904xbf16, #tpu.memory_space<vmem>>, vector<8x904xbf16>,
    %c0_71 = arith.constant 0 : index
    %c0_72 = arith.constant 0 : index
    %c130 = arith.constant 130 : index
    %88 = vector.load %arg1[%c0_71, %c0_72, %c130] : memref<1x8x1056xf32, #tpu.memory_space<vmem>>, vector<1x8x904xf32>
    %89 = vector.shape_cast %88 : vector<1x8x904xf32> to vector<8x904xf32>
    %90 = arith.truncf %89 : vector<8x904xf32> to vector<8x904xbf16>
    %c176 = arith.constant 176 : index
    %c0_73 = arith.constant 0 : index
    %91 = vector.load %arg9[%c176, %c0_73] : memref<200x904xbf16, #tpu.memory_space<vmem>>, vector<8x904xbf16>
    tpu.vector_store %arg9[%c176, %c0_73], %90 {strides = array<i32>} : memref<200x904xbf16, #tpu.memory_space<vmem>>, vector<8x904xbf16>,
    %c0_74 = arith.constant 0 : index
    %c0_75 = arith.constant 0 : index
    %c131 = arith.constant 131 : index
    %92 = vector.load %arg1[%c0_74, %c0_75, %c131] : memref<1x8x1056xf32, #tpu.memory_space<vmem>>, vector<1x8x904xf32>
    %93 = vector.shape_cast %92 : vector<1x8x904xf32> to vector<8x904xf32>
    %94 = arith.truncf %93 : vector<8x904xf32> to vector<8x904xbf16>
    %c184 = arith.constant 184 : index
    %c0_76 = arith.constant 0 : index
    %95 = vector.load %arg9[%c184, %c0_76] : memref<200x904xbf16, #tpu.memory_space<vmem>>, vector<8x904xbf16>
    tpu.vector_store %arg9[%c184, %c0_76], %94 {strides = array<i32>} : memref<200x904xbf16, #tpu.memory_space<vmem>>, vector<8x904xbf16>,
    %c0_77 = arith.constant 0 : index
    %c0_78 = arith.constant 0 : index
    %c132 = arith.constant 132 : index
    %96 = vector.load %arg1[%c0_77, %c0_78, %c132] : memref<1x8x1056xf32, #tpu.memory_space<vmem>>, vector<1x8x904xf32>
    %97 = vector.shape_cast %96 : vector<1x8x904xf32> to vector<8x904xf32>
    %98 = arith.truncf %97 : vector<8x904xf32> to vector<8x904xbf16>
    %c192 = arith.constant 192 : index
    %c0_79 = arith.constant 0 : index
    %99 = vector.load %arg9[%c192, %c0_79] : memref<200x904xbf16, #tpu.memory_space<vmem>>, vector<8x904xbf16>
    tpu.vector_store %arg9[%c192, %c0_79], %98 {strides = array<i32>} : memref<200x904xbf16, #tpu.memory_space<vmem>>, vector<8x904xbf16>,
    %c0_80 = arith.constant 0 : index
    %c0_81 = arith.constant 0 : index
    %100 = vector.load %arg2[%c0_80, %c0_81] : memref<128x200xbf16, #tpu.memory_space<vmem>>, vector<128x200xbf16>
    %c0_82 = arith.constant 0 : index
    %c0_83 = arith.constant 0 : index
    %101 = vector.load %arg9[%c0_82, %c0_83] : memref<200x904xbf16, #tpu.memory_space<vmem>>, vector<200x904xbf16>
    %cst = arith.constant dense<0.000000e+00> : vector<128x904xf32>
    %102 = tpu.matmul %100, %101, %cst {dimension_numbers = #tpu.dot_dimension_numbers<[1], [0], [0], [1], [0, 0, 1, 1], [], []>} : vector<128x200xbf16>, vector<200x904xbf16>, vector<128x904xf32> -> vector<128x904xf32>
    %c0_84 = arith.constant 0 : index
    %c0_85 = arith.constant 0 : index
    %103 = vector.load %arg10[%c0_84, %c0_85] : memref<128x904xf32, #tpu.memory_space<vmem>>, vector<128x904xf32>
    tpu.vector_store %arg10[%c0_84, %c0_85], %102 {strides = array<i32>} : memref<128x904xf32, #tpu.memory_space<vmem>>, vector<128x904xf32>,
    %c0_i32 = arith.constant 0 : i32
    %c8_i32 = arith.constant 8 : i32
    %104 = arith.addi %c0_i32, %c8_i32 : i32
    %c1_i32 = arith.constant 1 : i32
    scf.for %arg16 = %c0_i32 to %104 step %c1_i32  : i32 {
      %c1_i32_120 = arith.constant 1 : i32
      %122 = arith.muli %arg16, %c1_i32_120 : i32
      %c0_i32_121 = arith.constant 0 : i32
      %123 = arith.addi %c0_i32_121, %122 : i32
      %c16_i32 = arith.constant 16 : i32
      %124 = arith.muli %123, %c16_i32 : i32
      %125 = tpu.assume_multiple %124, 16 : i32
      %126 = arith.index_cast %125 : i32 to index
      %c0_122 = arith.constant 0 : index
      %127 = vector.load %arg10[%126, %c0_122] : memref<128x904xf32, #tpu.memory_space<vmem>>, vector<16x904xf32>
      %128 = vector.extract_strided_slice %127 {offsets = [0, 0], sizes = [16, 864], strides = [1, 1]} : vector<16x904xf32> to vector<16x864xf32>
      %129 = vector.extract_strided_slice %127 {offsets = [0, 1], sizes = [16, 864], strides = [1, 1]} : vector<16x904xf32> to vector<16x864xf32>
      %130 = arith.maximumf %128, %129 : vector<16x864xf32>
      %131 = vector.extract_strided_slice %127 {offsets = [0, 32], sizes = [16, 864], strides = [1, 1]} : vector<16x904xf32> to vector<16x864xf32>
      %132 = vector.extract_strided_slice %127 {offsets = [0, 33], sizes = [16, 864], strides = [1, 1]} : vector<16x904xf32> to vector<16x864xf32>
      %133 = arith.maximumf %131, %132 : vector<16x864xf32>
      %134 = arith.maximumf %130, %133 : vector<16x864xf32>
      %c0_123 = arith.constant 0 : index
      %c0_124 = arith.constant 0 : index
      %135 = vector.load %arg3[%c0_123, %c0_124] : memref<16x1xf32, #tpu.memory_space<vmem>>, vector<16x1xf32>
      %136 = vector.broadcast %135 : vector<16x1xf32> to vector<16x864xf32>
      %137 = arith.addf %134, %136 : vector<16x864xf32>
      %cst_125 = arith.constant 0.000000e+00 : f32
      %138 = vector.broadcast %cst_125 : f32 to vector<16x864xf32>
      %139 = arith.maximumf %137, %138 : vector<16x864xf32>
      %140 = arith.truncf %139 : vector<16x864xf32> to vector<16x864xbf16>
      %141 = arith.index_cast %125 : i32 to index
      %c0_126 = arith.constant 0 : index
      %142 = vector.load %arg11[%141, %c0_126] : memref<128x864xbf16, #tpu.memory_space<vmem>>, vector<16x864xbf16>
      tpu.vector_store %arg11[%141, %c0_126], %140 {strides = array<i32>} : memref<128x864xbf16, #tpu.memory_space<vmem>>, vector<16x864xbf16>,
    }
    %c8_i32_86 = arith.constant 8 : i32
    %c0_87 = arith.constant 0 : index
    %c0_88 = arith.constant 0 : index
    %105 = vector.load %arg11[%c0_87, %c0_88] : memref<128x864xbf16, #tpu.memory_space<vmem>>, vector<128x864xbf16>
    %c0_89 = arith.constant 0 : index
    %c0_90 = arith.constant 0 : index
    %106 = vector.load %arg6[%c0_89, %c0_90] : memref<864x342xbf16, #tpu.memory_space<vmem>>, vector<864x342xbf16>
    %cst_91 = arith.constant dense<0.000000e+00> : vector<128x342xf32>
    %107 = tpu.matmul %105, %106, %cst_91 {dimension_numbers = #tpu.dot_dimension_numbers<[1], [0], [0], [1], [0, 0, 1, 1], [], []>} : vector<128x864xbf16>, vector<864x342xbf16>, vector<128x342xf32> -> vector<128x342xf32>
    %108 = arith.truncf %107 : vector<128x342xf32> to vector<128x342xbf16>
    %c0_92 = arith.constant 0 : index
    %c0_93 = arith.constant 0 : index
    %109 = vector.load %arg12[%c0_92, %c0_93] : memref<128x342xbf16, #tpu.memory_space<vmem>>, vector<128x342xbf16>
    tpu.vector_store %arg12[%c0_92, %c0_93], %108 {strides = array<i32>} : memref<128x342xbf16, #tpu.memory_space<vmem>>, vector<128x342xbf16>,
    %c0_i32_94 = arith.constant 0 : i32
    %c8_i32_95 = arith.constant 8 : i32
    %110 = arith.addi %c0_i32_94, %c8_i32_95 : i32
    %c1_i32_96 = arith.constant 1 : i32
    scf.for %arg16 = %c0_i32_94 to %110 step %c1_i32_96  : i32 {
      %c1_i32_120 = arith.constant 1 : i32
      %122 = arith.muli %arg16, %c1_i32_120 : i32
      %c0_i32_121 = arith.constant 0 : i32
      %123 = arith.addi %c0_i32_121, %122 : i32
      %c16_i32 = arith.constant 16 : i32
      %124 = arith.muli %123, %c16_i32 : i32
      %125 = tpu.assume_multiple %124, 16 : i32
      %126 = arith.index_cast %125 : i32 to index
      %c0_122 = arith.constant 0 : index
      %127 = vector.load %arg12[%126, %c0_122] : memref<128x342xbf16, #tpu.memory_space<vmem>>, vector<16x256xbf16>
      %128 = arith.index_cast %123 : i32 to index
      %c0_123 = arith.constant 0 : index
      %c0_124 = arith.constant 0 : index
      %129 = vector.load %arg13[%128, %c0_123, %c0_124] : memref<8x400x256xbf16, #tpu.memory_space<vmem>>, vector<1x16x256xbf16>
      %130 = vector.shape_cast %129 : vector<1x16x256xbf16> to vector<16x256xbf16>
      %131 = vector.shape_cast %127 : vector<16x256xbf16> to vector<1x16x256xbf16>
      tpu.vector_store %arg13[%128, %c0_123, %c0_124], %131 {strides = array<i32>} : memref<8x400x256xbf16, #tpu.memory_space<vmem>>, vector<1x16x256xbf16>,
      %132 = arith.index_cast %125 : i32 to index
      %c1_125 = arith.constant 1 : index
      %133 = vector.load %arg12[%132, %c1_125] : memref<128x342xbf16, #tpu.memory_space<vmem>>, vector<16x256xbf16>
      %134 = arith.index_cast %123 : i32 to index
      %c16_126 = arith.constant 16 : index
      %c0_127 = arith.constant 0 : index
      %135 = vector.load %arg13[%134, %c16_126, %c0_127] : memref<8x400x256xbf16, #tpu.memory_space<vmem>>, vector<1x16x256xbf16>
      %136 = vector.shape_cast %135 : vector<1x16x256xbf16> to vector<16x256xbf16>
      %137 = vector.shape_cast %133 : vector<16x256xbf16> to vector<1x16x256xbf16>
      tpu.vector_store %arg13[%134, %c16_126, %c0_127], %137 {strides = array<i32>} : memref<8x400x256xbf16, #tpu.memory_space<vmem>>, vector<1x16x256xbf16>,
      %138 = arith.index_cast %125 : i32 to index
      %c2_128 = arith.constant 2 : index
      %139 = vector.load %arg12[%138, %c2_128] : memref<128x342xbf16, #tpu.memory_space<vmem>>, vector<16x256xbf16>
      %140 = arith.index_cast %123 : i32 to index
      %c32_129 = arith.constant 32 : index
      %c0_130 = arith.constant 0 : index
      %141 = vector.load %arg13[%140, %c32_129, %c0_130] : memref<8x400x256xbf16, #tpu.memory_space<vmem>>, vector<1x16x256xbf16>
      %142 = vector.shape_cast %141 : vector<1x16x256xbf16> to vector<16x256xbf16>
      %143 = vector.shape_cast %139 : vector<16x256xbf16> to vector<1x16x256xbf16>
      tpu.vector_store %arg13[%140, %c32_129, %c0_130], %143 {strides = array<i32>} : memref<8x400x256xbf16, #tpu.memory_space<vmem>>, vector<1x16x256xbf16>,
      %144 = arith.index_cast %125 : i32 to index
      %c3_131 = arith.constant 3 : index
      %145 = vector.load %arg12[%144, %c3_131] : memref<128x342xbf16, #tpu.memory_space<vmem>>, vector<16x256xbf16>
      %146 = arith.index_cast %123 : i32 to index
      %c48_132 = arith.constant 48 : index
      %c0_133 = arith.constant 0 : index
      %147 = vector.load %arg13[%146, %c48_132, %c0_133] : memref<8x400x256xbf16, #tpu.memory_space<vmem>>, vector<1x16x256xbf16>
      %148 = vector.shape_cast %147 : vector<1x16x256xbf16> to vector<16x256xbf16>
      %149 = vector.shape_cast %145 : vector<16x256xbf16> to vector<1x16x256xbf16>
      tpu.vector_store %arg13[%146, %c48_132, %c0_133], %149 {strides = array<i32>} : memref<8x400x256xbf16, #tpu.memory_space<vmem>>, vector<1x16x256xbf16>,
      %150 = arith.index_cast %125 : i32 to index
      %c4_134 = arith.constant 4 : index
      %151 = vector.load %arg12[%150, %c4_134] : memref<128x342xbf16, #tpu.memory_space<vmem>>, vector<16x256xbf16>
      %152 = arith.index_cast %123 : i32 to index
      %c64_135 = arith.constant 64 : index
      %c0_136 = arith.constant 0 : index
      %153 = vector.load %arg13[%152, %c64_135, %c0_136] : memref<8x400x256xbf16, #tpu.memory_space<vmem>>, vector<1x16x256xbf16>
      %154 = vector.shape_cast %153 : vector<1x16x256xbf16> to vector<16x256xbf16>
      %155 = vector.shape_cast %151 : vector<16x256xbf16> to vector<1x16x256xbf16>
      tpu.vector_store %arg13[%152, %c64_135, %c0_136], %155 {strides = array<i32>} : memref<8x400x256xbf16, #tpu.memory_space<vmem>>, vector<1x16x256xbf16>,
      %156 = arith.index_cast %125 : i32 to index
      %c18 = arith.constant 18 : index
      %157 = vector.load %arg12[%156, %c18] : memref<128x342xbf16, #tpu.memory_space<vmem>>, vector<16x256xbf16>
      %158 = arith.index_cast %123 : i32 to index
      %c80_137 = arith.constant 80 : index
      %c0_138 = arith.constant 0 : index
      %159 = vector.load %arg13[%158, %c80_137, %c0_138] : memref<8x400x256xbf16, #tpu.memory_space<vmem>>, vector<1x16x256xbf16>
      %160 = vector.shape_cast %159 : vector<1x16x256xbf16> to vector<16x256xbf16>
      %161 = vector.shape_cast %157 : vector<16x256xbf16> to vector<1x16x256xbf16>
      tpu.vector_store %arg13[%158, %c80_137, %c0_138], %161 {strides = array<i32>} : memref<8x400x256xbf16, #tpu.memory_space<vmem>>, vector<1x16x256xbf16>,
      %162 = arith.index_cast %125 : i32 to index
      %c19 = arith.constant 19 : index
      %163 = vector.load %arg12[%162, %c19] : memref<128x342xbf16, #tpu.memory_space<vmem>>, vector<16x256xbf16>
      %164 = arith.index_cast %123 : i32 to index
      %c96_139 = arith.constant 96 : index
      %c0_140 = arith.constant 0 : index
      %165 = vector.load %arg13[%164, %c96_139, %c0_140] : memref<8x400x256xbf16, #tpu.memory_space<vmem>>, vector<1x16x256xbf16>
      %166 = vector.shape_cast %165 : vector<1x16x256xbf16> to vector<16x256xbf16>
      %167 = vector.shape_cast %163 : vector<16x256xbf16> to vector<1x16x256xbf16>
      tpu.vector_store %arg13[%164, %c96_139, %c0_140], %167 {strides = array<i32>} : memref<8x400x256xbf16, #tpu.memory_space<vmem>>, vector<1x16x256xbf16>,
      %168 = arith.index_cast %125 : i32 to index
      %c20 = arith.constant 20 : index
      %169 = vector.load %arg12[%168, %c20] : memref<128x342xbf16, #tpu.memory_space<vmem>>, vector<16x256xbf16>
      %170 = arith.index_cast %123 : i32 to index
      %c112_141 = arith.constant 112 : index
      %c0_142 = arith.constant 0 : index
      %171 = vector.load %arg13[%170, %c112_141, %c0_142] : memref<8x400x256xbf16, #tpu.memory_space<vmem>>, vector<1x16x256xbf16>
      %172 = vector.shape_cast %171 : vector<1x16x256xbf16> to vector<16x256xbf16>
      %173 = vector.shape_cast %169 : vector<16x256xbf16> to vector<1x16x256xbf16>
      tpu.vector_store %arg13[%170, %c112_141, %c0_142], %173 {strides = array<i32>} : memref<8x400x256xbf16, #tpu.memory_space<vmem>>, vector<1x16x256xbf16>,
      %174 = arith.index_cast %125 : i32 to index
      %c21 = arith.constant 21 : index
      %175 = vector.load %arg12[%174, %c21] : memref<128x342xbf16, #tpu.memory_space<vmem>>, vector<16x256xbf16>
      %176 = arith.index_cast %123 : i32 to index
      %c128_143 = arith.constant 128 : index
      %c0_144 = arith.constant 0 : index
      %177 = vector.load %arg13[%176, %c128_143, %c0_144] : memref<8x400x256xbf16, #tpu.memory_space<vmem>>, vector<1x16x256xbf16>
      %178 = vector.shape_cast %177 : vector<1x16x256xbf16> to vector<16x256xbf16>
      %179 = vector.shape_cast %175 : vector<16x256xbf16> to vector<1x16x256xbf16>
      tpu.vector_store %arg13[%176, %c128_143, %c0_144], %179 {strides = array<i32>} : memref<8x400x256xbf16, #tpu.memory_space<vmem>>, vector<1x16x256xbf16>,
      %180 = arith.index_cast %125 : i32 to index
      %c22 = arith.constant 22 : index
      %181 = vector.load %arg12[%180, %c22] : memref<128x342xbf16, #tpu.memory_space<vmem>>, vector<16x256xbf16>
      %182 = arith.index_cast %123 : i32 to index
      %c144_145 = arith.constant 144 : index
      %c0_146 = arith.constant 0 : index
      %183 = vector.load %arg13[%182, %c144_145, %c0_146] : memref<8x400x256xbf16, #tpu.memory_space<vmem>>, vector<1x16x256xbf16>
      %184 = vector.shape_cast %183 : vector<1x16x256xbf16> to vector<16x256xbf16>
      %185 = vector.shape_cast %181 : vector<16x256xbf16> to vector<1x16x256xbf16>
      tpu.vector_store %arg13[%182, %c144_145, %c0_146], %185 {strides = array<i32>} : memref<8x400x256xbf16, #tpu.memory_space<vmem>>, vector<1x16x256xbf16>,
      %186 = arith.index_cast %125 : i32 to index
      %c36_147 = arith.constant 36 : index
      %187 = vector.load %arg12[%186, %c36_147] : memref<128x342xbf16, #tpu.memory_space<vmem>>, vector<16x256xbf16>
      %188 = arith.index_cast %123 : i32 to index
      %c160_148 = arith.constant 160 : index
      %c0_149 = arith.constant 0 : index
      %189 = vector.load %arg13[%188, %c160_148, %c0_149] : memref<8x400x256xbf16, #tpu.memory_space<vmem>>, vector<1x16x256xbf16>
      %190 = vector.shape_cast %189 : vector<1x16x256xbf16> to vector<16x256xbf16>
      %191 = vector.shape_cast %187 : vector<16x256xbf16> to vector<1x16x256xbf16>
      tpu.vector_store %arg13[%188, %c160_148, %c0_149], %191 {strides = array<i32>} : memref<8x400x256xbf16, #tpu.memory_space<vmem>>, vector<1x16x256xbf16>,
      %192 = arith.index_cast %125 : i32 to index
      %c37 = arith.constant 37 : index
      %193 = vector.load %arg12[%192, %c37] : memref<128x342xbf16, #tpu.memory_space<vmem>>, vector<16x256xbf16>
      %194 = arith.index_cast %123 : i32 to index
      %c176_150 = arith.constant 176 : index
      %c0_151 = arith.constant 0 : index
      %195 = vector.load %arg13[%194, %c176_150, %c0_151] : memref<8x400x256xbf16, #tpu.memory_space<vmem>>, vector<1x16x256xbf16>
      %196 = vector.shape_cast %195 : vector<1x16x256xbf16> to vector<16x256xbf16>
      %197 = vector.shape_cast %193 : vector<16x256xbf16> to vector<1x16x256xbf16>
      tpu.vector_store %arg13[%194, %c176_150, %c0_151], %197 {strides = array<i32>} : memref<8x400x256xbf16, #tpu.memory_space<vmem>>, vector<1x16x256xbf16>,
      %198 = arith.index_cast %125 : i32 to index
      %c38 = arith.constant 38 : index
      %199 = vector.load %arg12[%198, %c38] : memref<128x342xbf16, #tpu.memory_space<vmem>>, vector<16x256xbf16>
      %200 = arith.index_cast %123 : i32 to index
      %c192_152 = arith.constant 192 : index
      %c0_153 = arith.constant 0 : index
      %201 = vector.load %arg13[%200, %c192_152, %c0_153] : memref<8x400x256xbf16, #tpu.memory_space<vmem>>, vector<1x16x256xbf16>
      %202 = vector.shape_cast %201 : vector<1x16x256xbf16> to vector<16x256xbf16>
      %203 = vector.shape_cast %199 : vector<16x256xbf16> to vector<1x16x256xbf16>
      tpu.vector_store %arg13[%200, %c192_152, %c0_153], %203 {strides = array<i32>} : memref<8x400x256xbf16, #tpu.memory_space<vmem>>, vector<1x16x256xbf16>,
      %204 = arith.index_cast %125 : i32 to index
      %c39 = arith.constant 39 : index
      %205 = vector.load %arg12[%204, %c39] : memref<128x342xbf16, #tpu.memory_space<vmem>>, vector<16x256xbf16>
      %206 = arith.index_cast %123 : i32 to index
      %c208 = arith.constant 208 : index
      %c0_154 = arith.constant 0 : index
      %207 = vector.load %arg13[%206, %c208, %c0_154] : memref<8x400x256xbf16, #tpu.memory_space<vmem>>, vector<1x16x256xbf16>
      %208 = vector.shape_cast %207 : vector<1x16x256xbf16> to vector<16x256xbf16>
      %209 = vector.shape_cast %205 : vector<16x256xbf16> to vector<1x16x256xbf16>
      tpu.vector_store %arg13[%206, %c208, %c0_154], %209 {strides = array<i32>} : memref<8x400x256xbf16, #tpu.memory_space<vmem>>, vector<1x16x256xbf16>,
      %210 = arith.index_cast %125 : i32 to index
      %c40_155 = arith.constant 40 : index
      %211 = vector.load %arg12[%210, %c40_155] : memref<128x342xbf16, #tpu.memory_space<vmem>>, vector<16x256xbf16>
      %212 = arith.index_cast %123 : i32 to index
      %c224 = arith.constant 224 : index
      %c0_156 = arith.constant 0 : index
      %213 = vector.load %arg13[%212, %c224, %c0_156] : memref<8x400x256xbf16, #tpu.memory_space<vmem>>, vector<1x16x256xbf16>
      %214 = vector.shape_cast %213 : vector<1x16x256xbf16> to vector<16x256xbf16>
      %215 = vector.shape_cast %211 : vector<16x256xbf16> to vector<1x16x256xbf16>
      tpu.vector_store %arg13[%212, %c224, %c0_156], %215 {strides = array<i32>} : memref<8x400x256xbf16, #tpu.memory_space<vmem>>, vector<1x16x256xbf16>,
      %216 = arith.index_cast %125 : i32 to index
      %c54 = arith.constant 54 : index
      %217 = vector.load %arg12[%216, %c54] : memref<128x342xbf16, #tpu.memory_space<vmem>>, vector<16x256xbf16>
      %218 = arith.index_cast %123 : i32 to index
      %c240 = arith.constant 240 : index
      %c0_157 = arith.constant 0 : index
      %219 = vector.load %arg13[%218, %c240, %c0_157] : memref<8x400x256xbf16, #tpu.memory_space<vmem>>, vector<1x16x256xbf16>
      %220 = vector.shape_cast %219 : vector<1x16x256xbf16> to vector<16x256xbf16>
      %221 = vector.shape_cast %217 : vector<16x256xbf16> to vector<1x16x256xbf16>
      tpu.vector_store %arg13[%218, %c240, %c0_157], %221 {strides = array<i32>} : memref<8x400x256xbf16, #tpu.memory_space<vmem>>, vector<1x16x256xbf16>,
      %222 = arith.index_cast %125 : i32 to index
      %c55 = arith.constant 55 : index
      %223 = vector.load %arg12[%222, %c55] : memref<128x342xbf16, #tpu.memory_space<vmem>>, vector<16x256xbf16>
      %224 = arith.index_cast %123 : i32 to index
      %c256 = arith.constant 256 : index
      %c0_158 = arith.constant 0 : index
      %225 = vector.load %arg13[%224, %c256, %c0_158] : memref<8x400x256xbf16, #tpu.memory_space<vmem>>, vector<1x16x256xbf16>
      %226 = vector.shape_cast %225 : vector<1x16x256xbf16> to vector<16x256xbf16>
      %227 = vector.shape_cast %223 : vector<16x256xbf16> to vector<1x16x256xbf16>
      tpu.vector_store %arg13[%224, %c256, %c0_158], %227 {strides = array<i32>} : memref<8x400x256xbf16, #tpu.memory_space<vmem>>, vector<1x16x256xbf16>,
      %228 = arith.index_cast %125 : i32 to index
      %c56_159 = arith.constant 56 : index
      %229 = vector.load %arg12[%228, %c56_159] : memref<128x342xbf16, #tpu.memory_space<vmem>>, vector<16x256xbf16>
      %230 = arith.index_cast %123 : i32 to index
      %c272 = arith.constant 272 : index
      %c0_160 = arith.constant 0 : index
      %231 = vector.load %arg13[%230, %c272, %c0_160] : memref<8x400x256xbf16, #tpu.memory_space<vmem>>, vector<1x16x256xbf16>
      %232 = vector.shape_cast %231 : vector<1x16x256xbf16> to vector<16x256xbf16>
      %233 = vector.shape_cast %229 : vector<16x256xbf16> to vector<1x16x256xbf16>
      tpu.vector_store %arg13[%230, %c272, %c0_160], %233 {strides = array<i32>} : memref<8x400x256xbf16, #tpu.memory_space<vmem>>, vector<1x16x256xbf16>,
      %234 = arith.index_cast %125 : i32 to index
      %c57 = arith.constant 57 : index
      %235 = vector.load %arg12[%234, %c57] : memref<128x342xbf16, #tpu.memory_space<vmem>>, vector<16x256xbf16>
      %236 = arith.index_cast %123 : i32 to index
      %c288 = arith.constant 288 : index
      %c0_161 = arith.constant 0 : index
      %237 = vector.load %arg13[%236, %c288, %c0_161] : memref<8x400x256xbf16, #tpu.memory_space<vmem>>, vector<1x16x256xbf16>
      %238 = vector.shape_cast %237 : vector<1x16x256xbf16> to vector<16x256xbf16>
      %239 = vector.shape_cast %235 : vector<16x256xbf16> to vector<1x16x256xbf16>
      tpu.vector_store %arg13[%236, %c288, %c0_161], %239 {strides = array<i32>} : memref<8x400x256xbf16, #tpu.memory_space<vmem>>, vector<1x16x256xbf16>,
      %240 = arith.index_cast %125 : i32 to index
      %c58 = arith.constant 58 : index
      %241 = vector.load %arg12[%240, %c58] : memref<128x342xbf16, #tpu.memory_space<vmem>>, vector<16x256xbf16>
      %242 = arith.index_cast %123 : i32 to index
      %c304 = arith.constant 304 : index
      %c0_162 = arith.constant 0 : index
      %243 = vector.load %arg13[%242, %c304, %c0_162] : memref<8x400x256xbf16, #tpu.memory_space<vmem>>, vector<1x16x256xbf16>
      %244 = vector.shape_cast %243 : vector<1x16x256xbf16> to vector<16x256xbf16>
      %245 = vector.shape_cast %241 : vector<16x256xbf16> to vector<1x16x256xbf16>
      tpu.vector_store %arg13[%242, %c304, %c0_162], %245 {strides = array<i32>} : memref<8x400x256xbf16, #tpu.memory_space<vmem>>, vector<1x16x256xbf16>,
      %246 = arith.index_cast %125 : i32 to index
      %c72_163 = arith.constant 72 : index
      %247 = vector.load %arg12[%246, %c72_163] : memref<128x342xbf16, #tpu.memory_space<vmem>>, vector<16x256xbf16>
      %248 = arith.index_cast %123 : i32 to index
      %c320 = arith.constant 320 : index
      %c0_164 = arith.constant 0 : index
      %249 = vector.load %arg13[%248, %c320, %c0_164] : memref<8x400x256xbf16, #tpu.memory_space<vmem>>, vector<1x16x256xbf16>
      %250 = vector.shape_cast %249 : vector<1x16x256xbf16> to vector<16x256xbf16>
      %251 = vector.shape_cast %247 : vector<16x256xbf16> to vector<1x16x256xbf16>
      tpu.vector_store %arg13[%248, %c320, %c0_164], %251 {strides = array<i32>} : memref<8x400x256xbf16, #tpu.memory_space<vmem>>, vector<1x16x256xbf16>,
      %252 = arith.index_cast %125 : i32 to index
      %c73 = arith.constant 73 : index
      %253 = vector.load %arg12[%252, %c73] : memref<128x342xbf16, #tpu.memory_space<vmem>>, vector<16x256xbf16>
      %254 = arith.index_cast %123 : i32 to index
      %c336 = arith.constant 336 : index
      %c0_165 = arith.constant 0 : index
      %255 = vector.load %arg13[%254, %c336, %c0_165] : memref<8x400x256xbf16, #tpu.memory_space<vmem>>, vector<1x16x256xbf16>
      %256 = vector.shape_cast %255 : vector<1x16x256xbf16> to vector<16x256xbf16>
      %257 = vector.shape_cast %253 : vector<16x256xbf16> to vector<1x16x256xbf16>
      tpu.vector_store %arg13[%254, %c336, %c0_165], %257 {strides = array<i32>} : memref<8x400x256xbf16, #tpu.memory_space<vmem>>, vector<1x16x256xbf16>,
      %258 = arith.index_cast %125 : i32 to index
      %c74 = arith.constant 74 : index
      %259 = vector.load %arg12[%258, %c74] : memref<128x342xbf16, #tpu.memory_space<vmem>>, vector<16x256xbf16>
      %260 = arith.index_cast %123 : i32 to index
      %c352 = arith.constant 352 : index
      %c0_166 = arith.constant 0 : index
      %261 = vector.load %arg13[%260, %c352, %c0_166] : memref<8x400x256xbf16, #tpu.memory_space<vmem>>, vector<1x16x256xbf16>
      %262 = vector.shape_cast %261 : vector<1x16x256xbf16> to vector<16x256xbf16>
      %263 = vector.shape_cast %259 : vector<16x256xbf16> to vector<1x16x256xbf16>
      tpu.vector_store %arg13[%260, %c352, %c0_166], %263 {strides = array<i32>} : memref<8x400x256xbf16, #tpu.memory_space<vmem>>, vector<1x16x256xbf16>,
      %264 = arith.index_cast %125 : i32 to index
      %c75 = arith.constant 75 : index
      %265 = vector.load %arg12[%264, %c75] : memref<128x342xbf16, #tpu.memory_space<vmem>>, vector<16x256xbf16>
      %266 = arith.index_cast %123 : i32 to index
      %c368 = arith.constant 368 : index
      %c0_167 = arith.constant 0 : index
      %267 = vector.load %arg13[%266, %c368, %c0_167] : memref<8x400x256xbf16, #tpu.memory_space<vmem>>, vector<1x16x256xbf16>
      %268 = vector.shape_cast %267 : vector<1x16x256xbf16> to vector<16x256xbf16>
      %269 = vector.shape_cast %265 : vector<16x256xbf16> to vector<1x16x256xbf16>
      tpu.vector_store %arg13[%266, %c368, %c0_167], %269 {strides = array<i32>} : memref<8x400x256xbf16, #tpu.memory_space<vmem>>, vector<1x16x256xbf16>,
      %270 = arith.index_cast %125 : i32 to index
      %c76 = arith.constant 76 : index
      %271 = vector.load %arg12[%270, %c76] : memref<128x342xbf16, #tpu.memory_space<vmem>>, vector<16x256xbf16>
      %272 = arith.index_cast %123 : i32 to index
      %c384 = arith.constant 384 : index
      %c0_168 = arith.constant 0 : index
      %273 = vector.load %arg13[%272, %c384, %c0_168] : memref<8x400x256xbf16, #tpu.memory_space<vmem>>, vector<1x16x256xbf16>
      %274 = vector.shape_cast %273 : vector<1x16x256xbf16> to vector<16x256xbf16>
      %275 = vector.shape_cast %271 : vector<16x256xbf16> to vector<1x16x256xbf16>
      tpu.vector_store %arg13[%272, %c384, %c0_168], %275 {strides = array<i32>} : memref<8x400x256xbf16, #tpu.memory_space<vmem>>, vector<1x16x256xbf16>,
    }
    %c8_i32_97 = arith.constant 8 : i32
    %c0_98 = arith.constant 0 : index
    %c0_99 = arith.constant 0 : index
    %c0_100 = arith.constant 0 : index
    %111 = vector.load %arg4[%c0_98, %c0_99, %c0_100] : memref<8x32x400xbf16, #tpu.memory_space<vmem>>, vector<8x32x400xbf16>
    %c0_101 = arith.constant 0 : index
    %c0_102 = arith.constant 0 : index
    %c0_103 = arith.constant 0 : index
    %112 = vector.load %arg13[%c0_101, %c0_102, %c0_103] : memref<8x400x256xbf16, #tpu.memory_space<vmem>>, vector<8x400x256xbf16>
    %cst_104 = arith.constant dense<0.000000e+00> : vector<8x32x256xf32>
    %113 = tpu.matmul %111, %112, %cst_104 {dimension_numbers = #tpu.dot_dimension_numbers<[2], [1], [1], [2], [0, 0, 0, 1, 1, 2], [0], [0]>} : vector<8x32x400xbf16>, vector<8x400x256xbf16>, vector<8x32x256xf32> -> vector<8x32x256xf32>
    %c0_105 = arith.constant 0 : index
    %c0_106 = arith.constant 0 : index
    %c0_107 = arith.constant 0 : index
    %114 = vector.load %arg14[%c0_105, %c0_106, %c0_107] : memref<8x32x256xf32, #tpu.memory_space<vmem>>, vector<8x32x256xf32>
    tpu.vector_store %arg14[%c0_105, %c0_106, %c0_107], %113 {strides = array<i32>} : memref<8x32x256xf32, #tpu.memory_space<vmem>>, vector<8x32x256xf32>,
    %c0_i32_108 = arith.constant 0 : i32
    %c8_i32_109 = arith.constant 8 : i32
    %115 = arith.addi %c0_i32_108, %c8_i32_109 : i32
    %c1_i32_110 = arith.constant 1 : i32
    scf.for %arg16 = %c0_i32_108 to %115 step %c1_i32_110  : i32 {
      %c1_i32_120 = arith.constant 1 : i32
      %122 = arith.muli %arg16, %c1_i32_120 : i32
      %c0_i32_121 = arith.constant 0 : i32
      %123 = arith.addi %c0_i32_121, %122 : i32
      %124 = arith.index_cast %123 : i32 to index
      %c0_122 = arith.constant 0 : index
      %c0_123 = arith.constant 0 : index
      %125 = vector.load %arg14[%124, %c0_122, %c0_123] : memref<8x32x256xf32, #tpu.memory_space<vmem>>, vector<1x32x256xf32>
      %126 = vector.shape_cast %125 : vector<1x32x256xf32> to vector<32x256xf32>
      %127 = vector.extract_strided_slice %126 {offsets = [0, 0], sizes = [32, 232], strides = [1, 1]} : vector<32x256xf32> to vector<32x232xf32>
      %128 = vector.extract_strided_slice %126 {offsets = [0, 1], sizes = [32, 232], strides = [1, 1]} : vector<32x256xf32> to vector<32x232xf32>
      %129 = arith.maximumf %127, %128 : vector<32x232xf32>
      %130 = vector.extract_strided_slice %126 {offsets = [0, 18], sizes = [32, 232], strides = [1, 1]} : vector<32x256xf32> to vector<32x232xf32>
      %131 = vector.extract_strided_slice %126 {offsets = [0, 19], sizes = [32, 232], strides = [1, 1]} : vector<32x256xf32> to vector<32x232xf32>
      %132 = arith.maximumf %130, %131 : vector<32x232xf32>
      %133 = arith.maximumf %129, %132 : vector<32x232xf32>
      %c0_124 = arith.constant 0 : index
      %c0_125 = arith.constant 0 : index
      %134 = vector.load %arg5[%c0_124, %c0_125] : memref<32x1xf32, #tpu.memory_space<vmem>>, vector<32x1xf32>
      %135 = vector.broadcast %134 : vector<32x1xf32> to vector<32x232xf32>
      %136 = arith.addf %133, %135 : vector<32x232xf32>
      %cst_126 = arith.constant 0.000000e+00 : f32
      %137 = vector.broadcast %cst_126 : f32 to vector<32x232xf32>
      %138 = arith.maximumf %136, %137 : vector<32x232xf32>
      %139 = arith.truncf %138 : vector<32x232xf32> to vector<32x232xbf16>
      %c32_i32 = arith.constant 32 : i32
      %140 = arith.muli %123, %c32_i32 : i32
      %141 = tpu.assume_multiple %140, 32 : i32
      %142 = arith.index_cast %141 : i32 to index
      %c0_127 = arith.constant 0 : index
      %143 = vector.load %arg15[%142, %c0_127] : memref<256x232xbf16, #tpu.memory_space<vmem>>, vector<32x232xbf16>
      tpu.vector_store %arg15[%142, %c0_127], %139 {strides = array<i32>} : memref<256x232xbf16, #tpu.memory_space<vmem>>, vector<32x232xbf16>,
    }
    %c8_i32_111 = arith.constant 8 : i32
    %c0_112 = arith.constant 0 : index
    %c0_113 = arith.constant 0 : index
    %116 = vector.load %arg15[%c0_112, %c0_113] : memref<256x232xbf16, #tpu.memory_space<vmem>>, vector<256x232xbf16>
    %c0_114 = arith.constant 0 : index
    %c0_115 = arith.constant 0 : index
    %117 = vector.load %arg7[%c0_114, %c0_115] : memref<232x49xbf16, #tpu.memory_space<vmem>>, vector<232x49xbf16>
    %cst_116 = arith.constant dense<0.000000e+00> : vector<256x49xf32>
    %118 = tpu.matmul %116, %117, %cst_116 {dimension_numbers = #tpu.dot_dimension_numbers<[1], [0], [0], [1], [0, 0, 1, 1], [], []>} : vector<256x232xbf16>, vector<232x49xbf16>, vector<256x49xf32> -> vector<256x49xf32>
    %c0_117 = arith.constant 0 : index
    %c0_118 = arith.constant 0 : index
    %c0_119 = arith.constant 0 : index
    %119 = vector.load %arg8[%c0_117, %c0_118, %c0_119] : memref<1x256x49xf32, #tpu.memory_space<vmem>>, vector<1x256x49xf32>
    %120 = vector.shape_cast %119 : vector<1x256x49xf32> to vector<256x49xf32>
    %121 = vector.shape_cast %118 : vector<256x49xf32> to vector<1x256x49xf32>
    tpu.vector_store %arg8[%c0_117, %c0_118, %c0_119], %121 {strides = array<i32>} : memref<1x256x49xf32, #tpu.memory_space<vmem>>, vector<1x256x49xf32>,
    return
  }
  func.func @transform_0(%arg0: i32) -> (i32, i32, i32) {
    %c0_i32 = arith.constant 0 : i32
    %c0_i32_0 = arith.constant 0 : i32
    %c0_i32_1 = arith.constant 0 : i32
    return %arg0, %c0_i32, %c0_i32_0 : i32, i32, i32
  }
  func.func @transform_1(%arg0: i32) -> (i32, i32) {
    %c0_i32 = arith.constant 0 : i32
    %c0_i32_0 = arith.constant 0 : i32
    %c0_i32_1 = arith.constant 0 : i32
    return %c0_i32, %c0_i32_0 : i32, i32
  }
  func.func @transform_2(%arg0: i32) -> (i32, i32) {
    %c0_i32 = arith.constant 0 : i32
    %c0_i32_0 = arith.constant 0 : i32
    %c0_i32_1 = arith.constant 0 : i32
    return %c0_i32, %c0_i32_0 : i32, i32
  }
  func.func @transform_3(%arg0: i32) -> (i32, i32, i32) {
    %c0_i32 = arith.constant 0 : i32
    %c0_i32_0 = arith.constant 0 : i32
    %c0_i32_1 = arith.constant 0 : i32
    %c0_i32_2 = arith.constant 0 : i32
    return %c0_i32, %c0_i32_0, %c0_i32_1 : i32, i32, i32
  }
  func.func @transform_4(%arg0: i32) -> (i32, i32) {
    %c0_i32 = arith.constant 0 : i32
    %c0_i32_0 = arith.constant 0 : i32
    %c0_i32_1 = arith.constant 0 : i32
    return %c0_i32, %c0_i32_0 : i32, i32
  }
  func.func @transform_5(%arg0: i32) -> (i32, i32) {
    %c0_i32 = arith.constant 0 : i32
    %c0_i32_0 = arith.constant 0 : i32
    %c0_i32_1 = arith.constant 0 : i32
    return %c0_i32, %c0_i32_0 : i32, i32
  }
  func.func @transform_6(%arg0: i32) -> (i32, i32) {
    %c0_i32 = arith.constant 0 : i32
    %c0_i32_0 = arith.constant 0 : i32
    %c0_i32_1 = arith.constant 0 : i32
    return %c0_i32, %c0_i32_0 : i32, i32
  }
  func.func @transform_7(%arg0: i32) -> (i32, i32, i32) {
    %c0_i32 = arith.constant 0 : i32
    %c0_i32_0 = arith.constant 0 : i32
    %c0_i32_1 = arith.constant 0 : i32
    return %arg0, %c0_i32, %c0_i32_0 : i32, i32, i32
  }
}

</mosaic_0001>

<llo_original>
// kernel: tpu_custom_call.1
$region0: #{tpu_custom_call.1}
  #allocation0 [shape = 'u32[]', space=smem, size = 0x4, offset = 0x4, fixed_abs, tag = 'smem constant byte address 0x4 - core index']
  #allocation1 [shape = 'u32[144,128]{1,0:T(1,128)}', space=vmem, size = 0x12000, scoped, tag = 'internal scratch']
  #allocation2 [shape = 'bf16[200,904]{1,0:T(8,128)(2,1)}', space=vmem, size = 0x64000, scoped, tag = 'scratch operand']
  #allocation3 [shape = 'f32[128,904]{1,0:T(8,128)}', space=vmem, size = 0x80000, scoped, tag = 'scratch operand']
  #allocation4 [shape = 'bf16[128,864]{1,0:T(16,128)(2,1)}', space=vmem, size = 0x38000, scoped, tag = 'scratch operand']
  #allocation5 [shape = 'bf16[128,342]{1,0:T(16,128)(2,1)}', space=vmem, size = 0x18000, scoped, tag = 'scratch operand']
  #allocation6 [shape = 'bf16[8,400,256]{2,1,0:T(16,128)(2,1)}', space=vmem, size = 0x190000, scoped, tag = 'scratch operand']
  #allocation7 [shape = 'f32[8,32,256]{2,1,0:T(8,128)}', space=vmem, size = 0x40000, scoped, tag = 'scratch operand']
  #allocation8 [shape = 'bf16[256,232]{1,0:T(16,128)(2,1)}', space=vmem, size = 0x20000, scoped, tag = 'scratch operand']
  %s0 = inlined_call_operand.vmem [shape: f32[2,8,1056], index: 0, kind: input, shape index: {}]
  %s1 = inlined_call_operand.vmem [shape: bf16[128,200], index: 1, kind: input, shape index: {}]
  %s2 = inlined_call_operand.vmem [shape: f32[16,1], index: 2, kind: input, shape index: {}]
  %s3 = inlined_call_operand.vmem [shape: bf16[8,32,400], index: 3, kind: input, shape index: {}]
  %s4 = inlined_call_operand.vmem [shape: f32[32,1], index: 4, kind: input, shape index: {}]
  %s5 = inlined_call_operand.vmem [shape: bf16[864,342], index: 5, kind: input, shape index: {}]
  %s6 = inlined_call_operand.vmem [shape: bf16[232,49], index: 6, kind: input, shape index: {}]
  %s7 = inlined_call_operand.vmem [shape: f32[2,256,49], index: 7, kind: output, shape index: {}]
  %s8 = sld [smem:[#allocation0]]
  $region82: #{tpu_custom_call.1} parent=0
    _
  %s10 = ssub.s32 1, %s8
  %s11 = scalar_select 0, %s10, %s8
  loop: start=0, step=1, limit=4
  $region2: #{tpu_custom_call.1} parent=0 // loop_pre_header
    _
  $region3: #{tpu_custom_call.1} parent=0 // loop_header
    %s13 = sphi 0, %s17
    %p14 = scmp.ge.s32.totalorder %s13, 4
    %s23 = sphi 0, %s25
    %s26 = sphi 0, %s23
    %s27 = sphi 0, %s26
    %s43 = sphi 0, %s27
    %s47 = sphi 0, %s47
    %s49 = sphi 0, %s47
    %s50 = sphi 0, %s49
    %s64 = sphi 0, %s50
    %s68 = sphi 0, %s68
    %s70 = sphi 0, %s68
    %s71 = sphi 0, %s70
    %s85 = sphi 0, %s71
    %s89 = sphi 0, %s89
    %s91 = sphi 0, %s89
    %s92 = sphi 0, %s91
    %s106 = sphi 0, %s92
    %s110 = sphi 0, %s110
    %s112 = sphi 0, %s110
    %s113 = sphi 0, %s112
    %s127 = sphi 0, %s113
    %s131 = sphi 0, %s131
    %s133 = sphi 0, %s131
    %s134 = sphi 0, %s133
    %s148 = sphi 0, %s134
    %s152 = sphi 0, %s152
    %s154 = sphi 0, %s152
    %s155 = sphi 0, %s154
    %s169 = sphi 0, %s155
    %s175 = sphi 0, %s177
    %s178 = sphi 0, %s175
    %s179 = sphi 0, %s178
    %s195 = sphi 0, %s179
  $region4: #{tpu_custom_call.1} parent=0 // loop_header_branch
    %16 = sbr.rel (%p14) target = $region8
  $region5: #{tpu_custom_call.1} parent=0 // loop_body
    %s18 = ssub.s32 %s13, 1
    %s19 = ssub.s32 %s13, 2
    %s20 = sadd.s32 %s13, 1
    %s21 = ssub.s32 %s13, %s20
    %p22 = scmp.eq.s32.totalorder %s21, 0
    %s24 = sadd.s32 %s23, 1
    %s25 = scalar_select %p22, %s23, %s24
    %p28 = pneg %p22
    %p29 = scmp.eq.s32.totalorder %s13, 1
    %p30 = por %p28, %p29
    %p31 = scmp.ne.s32.totalorder %s23, %s26
    %p32 = scmp.eq.s32.totalorder %s13, 0
    %p33 = por %p31, %p32
    %p34 = scmp.ne.s32.totalorder %s23, %s26
    %p35 = scmp.eq.s32.totalorder %s18, 1
    %p36 = por %p34, %p35
    %p37 = scmp.ne.s32.totalorder %s26, %s27
    %p38 = scmp.eq.s32.totalorder %s18, 0
    %p39 = por %p37, %p38
    %p40 = scmp.ne.s32.totalorder %s26, %s27
    %p41 = scmp.eq.s32.totalorder %s19, 1
    %p42 = por %p40, %p41
    %p44 = scmp.ne.s32.totalorder %s27, %s43
    %p45 = scmp.eq.s32.totalorder %s19, 0
    %p46 = por %p44, %p45
    %s48 = sadd.s32 %s47, 1
    %p51 = scmp.eq.s32.totalorder %s13, 1
    %p52 = scmp.ne.s32.totalorder %s47, %s49
    %p53 = scmp.eq.s32.totalorder %s13, 0
    %p54 = por %p52, %p53
    %p55 = scmp.ne.s32.totalorder %s47, %s49
    %p56 = scmp.eq.s32.totalorder %s18, 1
    %p57 = por %p55, %p56
    %p58 = scmp.ne.s32.totalorder %s49, %s50
    %p59 = scmp.eq.s32.totalorder %s18, 0
    %p60 = por %p58, %p59
    %p61 = scmp.ne.s32.totalorder %s49, %s50
    %p62 = scmp.eq.s32.totalorder %s19, 1
    %p63 = por %p61, %p62
    %p65 = scmp.ne.s32.totalorder %s50, %s64
    %p66 = scmp.eq.s32.totalorder %s19, 0
    %p67 = por %p65, %p66
    %s69 = sadd.s32 %s68, 1
    %p72 = scmp.eq.s32.totalorder %s13, 1
    %p73 = scmp.ne.s32.totalorder %s68, %s70
    %p74 = scmp.eq.s32.totalorder %s13, 0
    %p75 = por %p73, %p74
    %p76 = scmp.ne.s32.totalorder %s68, %s70
    %p77 = scmp.eq.s32.totalorder %s18, 1
    %p78 = por %p76, %p77
    %p79 = scmp.ne.s32.totalorder %s70, %s71
    %p80 = scmp.eq.s32.totalorder %s18, 0
    %p81 = por %p79, %p80
    %p82 = scmp.ne.s32.totalorder %s70, %s71
    %p83 = scmp.eq.s32.totalorder %s19, 1
    %p84 = por %p82, %p83
    %p86 = scmp.ne.s32.totalorder %s71, %s85
    %p87 = scmp.eq.s32.totalorder %s19, 0
    %p88 = por %p86, %p87
    %s90 = sadd.s32 %s89, 1
    %p93 = scmp.eq.s32.totalorder %s13, 1
    %p94 = scmp.ne.s32.totalorder %s89, %s91
    %p95 = scmp.eq.s32.totalorder %s13, 0
    %p96 = por %p94, %p95
    %p97 = scmp.ne.s32.totalorder %s89, %s91
    %p98 = scmp.eq.s32.totalorder %s18, 1
    %p99 = por %p97, %p98
    %p100 = scmp.ne.s32.totalorder %s91, %s92
    %p101 = scmp.eq.s32.totalorder %s18, 0
    %p102 = por %p100, %p101
    %p103 = scmp.ne.s32.totalorder %s91, %s92
    %p104 = scmp.eq.s32.totalorder %s19, 1
    %p105 = por %p103, %p104
    %p107 = scmp.ne.s32.totalorder %s92, %s106
    %p108 = scmp.eq.s32.totalorder %s19, 0
    %p109 = por %p107, %p108
    %s111 = sadd.s32 %s110, 1
    %p114 = scmp.eq.s32.totalorder %s13, 1
    %p115 = scmp.ne.s32.totalorder %s110, %s112
    %p116 = scmp.eq.s32.totalorder %s13, 0
    %p117 = por %p115, %p116
    %p118 = scmp.ne.s32.totalorder %s110, %s112
    %p119 = scmp.eq.s32.totalorder %s18, 1
    %p120 = por %p118, %p119
    %p121 = scmp.ne.s32.totalorder %s112, %s113
    %p122 = scmp.eq.s32.totalorder %s18, 0
    %p123 = por %p121, %p122
    %p124 = scmp.ne.s32.totalorder %s112, %s113
    %p125 = scmp.eq.s32.totalorder %s19, 1
    %p126 = por %p124, %p125
    %p128 = scmp.ne.s32.totalorder %s113, %s127
    %p129 = scmp.eq.s32.totalorder %s19, 0
    %p130 = por %p128, %p129
    %s132 = sadd.s32 %s131, 1
    %p135 = scmp.eq.s32.totalorder %s13, 1
    %p136 = scmp.ne.s32.totalorder %s131, %s133
    %p137 = scmp.eq.s32.totalorder %s13, 0
    %p138 = por %p136, %p137
    %p139 = scmp.ne.s32.totalorder %s131, %s133
    %p140 = scmp.eq.s32.totalorder %s18, 1
    %p141 = por %p139, %p140
    %p142 = scmp.ne.s32.totalorder %s133, %s134
    %p143 = scmp.eq.s32.totalorder %s18, 0
    %p144 = por %p142, %p143
    %p145 = scmp.ne.s32.totalorder %s133, %s134
    %p146 = scmp.eq.s32.totalorder %s19, 1
    %p147 = por %p145, %p146
    %p149 = scmp.ne.s32.totalorder %s134, %s148
    %p150 = scmp.eq.s32.totalorder %s19, 0
    %p151 = por %p149, %p150
    %s153 = sadd.s32 %s152, 1
    %p156 = scmp.eq.s32.totalorder %s13, 1
    %p157 = scmp.ne.s32.totalorder %s152, %s154
    %p158 = scmp.eq.s32.totalorder %s13, 0
    %p159 = por %p157, %p158
    %p160 = scmp.ne.s32.totalorder %s152, %s154
    %p161 = scmp.eq.s32.totalorder %s18, 1
    %p162 = por %p160, %p161
    %p163 = scmp.ne.s32.totalorder %s154, %s155
    %p164 = scmp.eq.s32.totalorder %s18, 0
    %p165 = por %p163, %p164
    %p166 = scmp.ne.s32.totalorder %s154, %s155
    %p167 = scmp.eq.s32.totalorder %s19, 1
    %p168 = por %p166, %p167
    %p170 = scmp.ne.s32.totalorder %s155, %s169
    %p171 = scmp.eq.s32.totalorder %s19, 0
    %p172 = por %p170, %p171
    %s173 = ssub.s32 %s13, %s20
    %p174 = scmp.eq.s32.totalorder %s173, 0
    %s176 = sadd.s32 %s175, 1
    %s177 = scalar_select %p174, %s175, %s176
    %p180 = pneg %p174
    %p181 = scmp.eq.s32.totalorder %s13, 1
    %p182 = por %p180, %p181
    %p183 = scmp.ne.s32.totalorder %s175, %s178
    %p184 = scmp.eq.s32.totalorder %s13, 0
    %p185 = por %p183, %p184
    %p186 = scmp.ne.s32.totalorder %s175, %s178
    %p187 = scmp.eq.s32.totalorder %s18, 1
    %p188 = por %p186, %p187
    %p189 = scmp.ne.s32.totalorder %s178, %s179
    %p190 = scmp.eq.s32.totalorder %s18, 0
    %p191 = por %p189, %p190
    %p192 = scmp.ne.s32.totalorder %s178, %s179
    %p193 = scmp.eq.s32.totalorder %s19, 1
    %p194 = por %p192, %p193
    %p196 = scmp.ne.s32.totalorder %s179, %s195
    %p197 = scmp.eq.s32.totalorder %s19, 0
    %p198 = por %p196, %p197
    %p199 = scmp.le.s32.totalorder 1, %s13
    %p200 = scmp.lt.s32.totalorder %s13, 3
    %p201 = pnand %p199, %p200
    %p202 = pneg %p201
    // Predicated region
    $region9: #{tpu_custom_call.1} parent=5 // pred_check
      _
    $region10: #{tpu_custom_call.1} parent=5 // pred_check_branch
      %204 = sbr.rel (%p201) target = $region12
    $region11: #{tpu_custom_call.1} parent=5 // pred_region
      %s205 = ssub.s32 %s13, 1
      // Predicated region
      $region13: #{tpu_custom_call.1} parent=11 // pred_check
        %p206 = pneg %p60
      $region14: #{tpu_custom_call.1} parent=11 // pred_check_branch
        %208 = sbr.rel (%p206) target = $region16
      $region15: #{tpu_custom_call.1} parent=11 // pred_region
        _
      $region16: #{tpu_custom_call.1} parent=11 // pred_fallthru
        _
      // Predicated region
      $region17: #{tpu_custom_call.1} parent=11 // pred_check
        %p209 = pneg %p81
      $region18: #{tpu_custom_call.1} parent=11 // pred_check_branch
        %211 = sbr.rel (%p209) target = $region20
      $region19: #{tpu_custom_call.1} parent=11 // pred_region
        _
      $region20: #{tpu_custom_call.1} parent=11 // pred_fallthru
        _
      // Predicated region
      $region21: #{tpu_custom_call.1} parent=11 // pred_check
        %p212 = pneg %p102
      $region22: #{tpu_custom_call.1} parent=11 // pred_check_branch
        %214 = sbr.rel (%p212) target = $region24
      $region23: #{tpu_custom_call.1} parent=11 // pred_region
        _
      $region24: #{tpu_custom_call.1} parent=11 // pred_fallthru
        _
      // Predicated region
      $region25: #{tpu_custom_call.1} parent=11 // pred_check
        %p215 = pneg %p123
      $region26: #{tpu_custom_call.1} parent=11 // pred_check_branch
        %217 = sbr.rel (%p215) target = $region28
      $region27: #{tpu_custom_call.1} parent=11 // pred_region
        _
      $region28: #{tpu_custom_call.1} parent=11 // pred_fallthru
        _
      // Predicated region
      $region29: #{tpu_custom_call.1} parent=11 // pred_check
        %p218 = pneg %p144
      $region30: #{tpu_custom_call.1} parent=11 // pred_check_branch
        %220 = sbr.rel (%p218) target = $region32
      $region31: #{tpu_custom_call.1} parent=11 // pred_region
        _
      $region32: #{tpu_custom_call.1} parent=11 // pred_fallthru
        _
      // Predicated region
      $region33: #{tpu_custom_call.1} parent=11 // pred_check
        %p221 = pneg %p165
      $region34: #{tpu_custom_call.1} parent=11 // pred_check_branch
        %223 = sbr.rel (%p221) target = $region36
      $region35: #{tpu_custom_call.1} parent=11 // pred_region
        _
      $region36: #{tpu_custom_call.1} parent=11 // pred_fallthru
        _
    $region12: #{tpu_custom_call.1} parent=5 // pred_fallthru
      _
    %p224 = scmp.lt.s32.totalorder %s13, 2
    // Predicated region
    $region37: #{tpu_custom_call.1} parent=5 // pred_check
      %p225 = pneg %p224
    $region38: #{tpu_custom_call.1} parent=5 // pred_check_branch
      %227 = sbr.rel (%p225) target = $region40
    $region39: #{tpu_custom_call.1} parent=5 // pred_region
      // Predicated region
      $region41: #{tpu_custom_call.1} parent=39 // pred_check
        %p228 = pneg %p33
      $region42: #{tpu_custom_call.1} parent=39 // pred_check_branch
        %230 = sbr.rel (%p228) target = $region44
      $region43: #{tpu_custom_call.1} parent=39 // pred_region
        %p231 = scmp.lt.s32.totalorder %s13, 1
        %s232 = scalar_select %p231, %s13, 1
        %s233 = smul.addr %s232, 9
        %s234 = smul.addr %s233, 8
        %s235 = scalar_lea.vmem %s0, %s234
      $region44: #{tpu_custom_call.1} parent=39 // pred_fallthru
        _
    $region40: #{tpu_custom_call.1} parent=5 // pred_fallthru
      _
    %p236 = scmp.le.s32.totalorder 1, %s13
    %p237 = scmp.lt.s32.totalorder %s13, 3
    %p238 = pnand %p236, %p237
    %p239 = pneg %p238
    // Predicated region
    $region45: #{tpu_custom_call.1} parent=5 // pred_check
      _
    $region46: #{tpu_custom_call.1} parent=5 // pred_check_branch
      %241 = sbr.rel (%p238) target = $region48
    $region47: #{tpu_custom_call.1} parent=5 // pred_region
      %s242 = ssub.s32 %s13, 1
      %p243 = scmp.lt.s32.totalorder %s18, 1
      %s244 = scalar_select %p243, %s18, 1
      %s245 = smul.addr %s244, 9
      %s246 = smul.addr %s245, 8
      %s247 = scalar_lea.vmem %s0, %s246
      %p248 = pneg %p39
      %p249 = pneg %p36
      %p250 = pneg %p60
      %p251 = pneg %p57
      %p252 = pneg %p81
      %p253 = pneg %p78
      %p254 = pneg %p102
      %p255 = pneg %p99
      %p256 = pneg %p123
      %p257 = pneg %p120
      %p258 = pneg %p144
      %p259 = pneg %p141
      %p260 = pneg %p165
      %p261 = pneg %p162
      %p262 = pneg %p191
      %p263 = pneg %p188
      %p264 = scmp.lt.s32.totalorder %s18, 1
      %s265 = scalar_select %p264, %s18, 1
      %s266 = smul.addr %s265, 32
      %s267 = smul.addr %s266, 8
      %s268 = scalar_lea.vmem %s7, %s267
      %p269 = scmp.lt.s32.totalorder %s18, 1
      %s270 = scalar_select %p269, %s18, 1
      %s271 = smul.addr %s270, 9
      %s272 = smul.addr %s271, 8
      %s273 = scalar_lea.vmem %s0, %s272
      %p274 = scmp.lt.s32.totalorder %s18, 1
      %s275 = scalar_select %p274, %s18, 1
      %s276 = smul.addr %s275, 32
      %s277 = smul.addr %s276, 8
      %s278 = scalar_lea.vmem %s7, %s277
      %v280 = vld [vmem:[%s273] sm:$0xff]
      %v281 = vld [vmem:[%s273 + $0x8] sm:$0xff]
      %v282 = vld [vmem:[%s273 + $0x10] sm:$0xff]
      %v283 = vld [vmem:[%s273 + $0x18] sm:$0xff]
      %v284 = vld [vmem:[%s273 + $0x20] sm:$0xff]
      %v285 = vld [vmem:[%s273 + $0x28] sm:$0xff]
      %v286 = vld [vmem:[%s273 + $0x30] sm:$0xff]
      %v287 = vld [vmem:[%s273 + $0x38] sm:$0xff]
      %v288 = vpack.c.bf16 %v280, %v280
      %v289 = vpack.c.bf16 %v281, %v281
      %v290 = vpack.c.bf16 %v282, %v282
      %v291 = vpack.c.bf16 %v283, %v283
      %v292 = vpack.c.bf16 %v284, %v284
      %v293 = vpack.c.bf16 %v285, %v285
      %v294 = vpack.c.bf16 %v286, %v286
      %v295 = vpack.c.bf16 %v287, %v287
      %v304 = vunpack.c.l.b16 %v288
      %v305 = vunpack.c.l.b16 %v289
      %v306 = vunpack.c.l.b16 %v290
      %v307 = vunpack.c.l.b16 %v291
      %v308 = vunpack.c.l.b16 %v292
      %v309 = vunpack.c.l.b16 %v293
      %v310 = vunpack.c.l.b16 %v294
      %v311 = vunpack.c.l.b16 %v295
      %v312 = vpack.c.b16 %v305, %v304
      %v313 = vpack.c.b16 %v307, %v306
      %v314 = vpack.c.b16 %v309, %v308
      %v315 = vpack.c.b16 %v311, %v310
      %320 = vst [vmem:[#allocation2] sm:$0xff] %v312
      %321 = vst [vmem:[#allocation2 + $0x8] sm:$0xff] %v313
      %322 = vst [vmem:[#allocation2 + $0x10] sm:$0xff] %v314
      %vm323 = vcmask 1043456
      %vm324 = vcmask 64516
      %vm325 = vmor %vm324, %vm323
      %326 = vst.msk [vmem:[#allocation2 + $0x18] sm:$0xff] %vm325, %v315
      %v327 = vld [vmem:[%s273] sm:$0xff]
      %v328 = vld [vmem:[%s273 + $0x8] sm:$0xff]
      %v329 = vld [vmem:[%s273 + $0x10] sm:$0xff]
      %v330 = vld [vmem:[%s273 + $0x18] sm:$0xff]
      %v331 = vld [vmem:[%s273 + $0x20] sm:$0xff]
      %v332 = vld [vmem:[%s273 + $0x28] sm:$0xff]
      %v333 = vld [vmem:[%s273 + $0x30] sm:$0xff]
      %v334 = vld [vmem:[%s273 + $0x38] sm:$0xff]
      %v335 = vpack.c.bf16 %v327, %v327
      %v336 = vpack.c.bf16 %v328, %v328
      %v337 = vpack.c.bf16 %v329, %v329
      %v338 = vpack.c.bf16 %v330, %v330
      %v339 = vpack.c.bf16 %v331, %v331
      %v340 = vpack.c.bf16 %v332, %v332
      %v341 = vpack.c.bf16 %v333, %v333
      %v342 = vpack.c.bf16 %v334, %v334
      %v351 = vunpack.c.l.b16 %v335
      %v352 = vunpack.c.l.b16 %v336
      %v353 = vunpack.c.l.b16 %v337
      %v354 = vunpack.c.l.b16 %v338
      %v355 = vunpack.c.l.b16 %v339
      %v356 = vunpack.c.l.b16 %v340
      %v357 = vunpack.c.l.b16 %v341
      %v358 = vunpack.c.l.b16 %v342
      %v359 = vpack.c.b16 %v352, %v351
      %v360 = vpack.c.b16 %v354, %v353
      %v361 = vpack.c.b16 %v356, %v355
      %v362 = vpack.c.b16 %v358, %v357
      %363 = vrot.lane.b32.xlu0 %v359, 127
      %v364 = vpop.permute.xlu0 %363
      %365 = vrot.lane.b32.xlu0 %v360, 127
      %v366 = vpop.permute.xlu0 %365
      %367 = vrot.lane.b32.xlu0 %v361, 127
      %v368 = vpop.permute.xlu0 %367
      %369 = vrot.lane.b32.xlu0 %v362, 127
      %v370 = vpop.permute.xlu0 %369
      %v371 = vrot.slane %v364, 4
      %v372 = vrot.slane %v366, 4
      %v373 = vrot.slane %v368, 4
      %v374 = vrot.slane %v370, 4
      %vm375 = vcmask 1043456
      %v376 = vsel %vm375, %v371, %v372
      %vm377 = vcmask 1039360
      %v378 = vsel %vm377, %v364, %v376
      %v379 = vsel %vm375, %v372, %v373
      %v380 = vsel %vm377, %v366, %v379
      %v381 = vsel %vm375, %v373, %v374
      %v382 = vsel %vm377, %v368, %v381
      %v383 = vsel %vm377, %v370, %v374
      %388 = vst [vmem:[#allocation2 + $0x20] sm:$0xff] %v378
      %389 = vst [vmem:[#allocation2 + $0x28] sm:$0xff] %v380
      %390 = vst [vmem:[#allocation2 + $0x30] sm:$0xff] %v382
      %391 = vst.msk [vmem:[#allocation2 + $0x38] sm:$0xff] %vm325, %v383
      %v392 = vld [vmem:[%s273] sm:$0xff]
      %v393 = vld [vmem:[%s273 + $0x8] sm:$0xff]
      %v394 = vld [vmem:[%s273 + $0x10] sm:$0xff]
      %v395 = vld [vmem:[%s273 + $0x18] sm:$0xff]
      %v396 = vld [vmem:[%s273 + $0x20] sm:$0xff]
      %v397 = vld [vmem:[%s273 + $0x28] sm:$0xff]
      %v398 = vld [vmem:[%s273 + $0x30] sm:$0xff]
      %v399 = vld [vmem:[%s273 + $0x38] sm:$0xff]
      %v400 = vpack.c.bf16 %v392, %v392
      %v401 = vpack.c.bf16 %v393, %v393
      %v402 = vpack.c.bf16 %v394, %v394
      %v403 = vpack.c.bf16 %v395, %v395
      %v404 = vpack.c.bf16 %v396, %v396
      %v405 = vpack.c.bf16 %v397, %v397
      %v406 = vpack.c.bf16 %v398, %v398
      %v407 = vpack.c.bf16 %v399, %v399
      %v416 = vunpack.c.l.b16 %v400
      %v417 = vunpack.c.l.b16 %v401
      %v418 = vunpack.c.l.b16 %v402
      %v419 = vunpack.c.l.b16 %v403
      %v420 = vunpack.c.l.b16 %v404
      %v421 = vunpack.c.l.b16 %v405
      %v422 = vunpack.c.l.b16 %v406
      %v423 = vunpack.c.l.b16 %v407
      %v424 = vpack.c.b16 %v417, %v416
      %v425 = vpack.c.b16 %v419, %v418
      %v426 = vpack.c.b16 %v421, %v420
      %v427 = vpack.c.b16 %v423, %v422
      %428 = vrot.lane.b32.xlu0 %v424, 126
      %v429 = vpop.permute.xlu0 %428
      %430 = vrot.lane.b32.xlu0 %v425, 126
      %v431 = vpop.permute.xlu0 %430
      %432 = vrot.lane.b32.xlu0 %v426, 126
      %v433 = vpop.permute.xlu0 %432
      %434 = vrot.lane.b32.xlu0 %v427, 126
      %v435 = vpop.permute.xlu0 %434
      %v436 = vrot.slane %v429, 4
      %v437 = vrot.slane %v431, 4
      %v438 = vrot.slane %v433, 4
      %v439 = vrot.slane %v435, 4
      %v440 = vsel %vm375, %v436, %v437
      %vm441 = vcmask 1031168
      %v442 = vsel %vm441, %v429, %v440
      %v443 = vsel %vm375, %v437, %v438
      %v444 = vsel %vm441, %v431, %v443
      %v445 = vsel %vm375, %v438, %v439
      %v446 = vsel %vm441, %v433, %v445
      %v447 = vsel %vm441, %v435, %v439
      %452 = vst [vmem:[#allocation2 + $0x40] sm:$0xff] %v442
      %453 = vst [vmem:[#allocation2 + $0x48] sm:$0xff] %v444
      %454 = vst [vmem:[#allocation2 + $0x50] sm:$0xff] %v446
      %455 = vst.msk [vmem:[#allocation2 + $0x58] sm:$0xff] %vm325, %v447
      %v456 = vld [vmem:[%s273] sm:$0xff]
      %v457 = vld [vmem:[%s273 + $0x8] sm:$0xff]
      %v458 = vld [vmem:[%s273 + $0x10] sm:$0xff]
      %v459 = vld [vmem:[%s273 + $0x18] sm:$0xff]
      %v460 = vld [vmem:[%s273 + $0x20] sm:$0xff]
      %v461 = vld [vmem:[%s273 + $0x28] sm:$0xff]
      %v462 = vld [vmem:[%s273 + $0x30] sm:$0xff]
      %v463 = vld [vmem:[%s273 + $0x38] sm:$0xff]
      %v464 = vpack.c.bf16 %v456, %v456
      %v465 = vpack.c.bf16 %v457, %v457
      %v466 = vpack.c.bf16 %v458, %v458
      %v467 = vpack.c.bf16 %v459, %v459
      %v468 = vpack.c.bf16 %v460, %v460
      %v469 = vpack.c.bf16 %v461, %v461
      %v470 = vpack.c.bf16 %v462, %v462
      %v471 = vpack.c.bf16 %v463, %v463
      %v480 = vunpack.c.l.b16 %v464
      %v481 = vunpack.c.l.b16 %v465
      %v482 = vunpack.c.l.b16 %v466
      %v483 = vunpack.c.l.b16 %v467
      %v484 = vunpack.c.l.b16 %v468
      %v485 = vunpack.c.l.b16 %v469
      %v486 = vunpack.c.l.b16 %v470
      %v487 = vunpack.c.l.b16 %v471
      %v488 = vpack.c.b16 %v481, %v480
      %v489 = vpack.c.b16 %v483, %v482
      %v490 = vpack.c.b16 %v485, %v484
      %v491 = vpack.c.b16 %v487, %v486
      %492 = vrot.lane.b32.xlu0 %v488, 125
      %v493 = vpop.permute.xlu0 %492
      %494 = vrot.lane.b32.xlu0 %v489, 125
      %v495 = vpop.permute.xlu0 %494
      %496 = vrot.lane.b32.xlu0 %v490, 125
      %v497 = vpop.permute.xlu0 %496
      %498 = vrot.lane.b32.xlu0 %v491, 125
      %v499 = vpop.permute.xlu0 %498
      %v500 = vrot.slane %v493, 4
      %v501 = vrot.slane %v495, 4
      %v502 = vrot.slane %v497, 4
      %v503 = vrot.slane %v499, 4
      %v504 = vsel %vm375, %v500, %v501
      %vm505 = vcmask 1022976
      %v506 = vsel %vm505, %v493, %v504
      %v507 = vsel %vm375, %v501, %v502
      %v508 = vsel %vm505, %v495, %v507
      %v509 = vsel %vm375, %v502, %v503
      %v510 = vsel %vm505, %v497, %v509
      %v511 = vsel %vm505, %v499, %v503
      %516 = vst [vmem:[#allocation2 + $0x60] sm:$0xff] %v506
      %517 = vst [vmem:[#allocation2 + $0x68] sm:$0xff] %v508
      %518 = vst [vmem:[#allocation2 + $0x70] sm:$0xff] %v510
      %519 = vst.msk [vmem:[#allocation2 + $0x78] sm:$0xff] %vm325, %v511
      %v520 = vld [vmem:[%s273] sm:$0xff]
      %v521 = vld [vmem:[%s273 + $0x8] sm:$0xff]
      %v522 = vld [vmem:[%s273 + $0x10] sm:$0xff]
      %v523 = vld [vmem:[%s273 + $0x18] sm:$0xff]
      %v524 = vld [vmem:[%s273 + $0x20] sm:$0xff]
      %v525 = vld [vmem:[%s273 + $0x28] sm:$0xff]
      %v526 = vld [vmem:[%s273 + $0x30] sm:$0xff]
      %v527 = vld [vmem:[%s273 + $0x38] sm:$0xff]
      %v528 = vpack.c.bf16 %v520, %v520
      %v529 = vpack.c.bf16 %v521, %v521
      %v530 = vpack.c.bf16 %v522, %v522
      %v531 = vpack.c.bf16 %v523, %v523
      %v532 = vpack.c.bf16 %v524, %v524
      %v533 = vpack.c.bf16 %v525, %v525
      %v534 = vpack.c.bf16 %v526, %v526
      %v535 = vpack.c.bf16 %v527, %v527
      %v544 = vunpack.c.l.b16 %v528
      %v545 = vunpack.c.l.b16 %v529
      %v546 = vunpack.c.l.b16 %v530
      %v547 = vunpack.c.l.b16 %v531
      %v548 = vunpack.c.l.b16 %v532
      %v549 = vunpack.c.l.b16 %v533
      %v550 = vunpack.c.l.b16 %v534
      %v551 = vunpack.c.l.b16 %v535
      %v552 = vpack.c.b16 %v545, %v544
      %v553 = vpack.c.b16 %v547, %v546
      %v554 = vpack.c.b16 %v549, %v548
      %v555 = vpack.c.b16 %v551, %v550
      %556 = vrot.lane.b32.xlu0 %v552, 124
      %v557 = vpop.permute.xlu0 %556
      %558 = vrot.lane.b32.xlu0 %v553, 124
      %v559 = vpop.permute.xlu0 %558
      %560 = vrot.lane.b32.xlu0 %v554, 124
      %v561 = vpop.permute.xlu0 %560
      %562 = vrot.lane.b32.xlu0 %v555, 124
      %v563 = vpop.permute.xlu0 %562
      %v564 = vrot.slane %v557, 4
      %v565 = vrot.slane %v559, 4
      %v566 = vrot.slane %v561, 4
      %v567 = vrot.slane %v563, 4
      %v568 = vsel %vm375, %v564, %v565
      %vm569 = vcmask 1014784
      %v570 = vsel %vm569, %v557, %v568
      %v571 = vsel %vm375, %v565, %v566
      %v572 = vsel %vm569, %v559, %v571
      %v573 = vsel %vm375, %v566, %v567
      %v574 = vsel %vm569, %v561, %v573
      %v575 = vsel %vm569, %v563, %v567
      %580 = vst [vmem:[#allocation2 + $0x80] sm:$0xff] %v570
      %581 = vst [vmem:[#allocation2 + $0x88] sm:$0xff] %v572
      %582 = vst [vmem:[#allocation2 + $0x90] sm:$0xff] %v574
      %583 = vst.msk [vmem:[#allocation2 + $0x98] sm:$0xff] %vm325, %v575
      %v584 = vld [vmem:[%s273] sm:$0xff]
      %v585 = vld [vmem:[%s273 + $0x8] sm:$0xff]
      %v586 = vld [vmem:[%s273 + $0x10] sm:$0xff]
      %v587 = vld [vmem:[%s273 + $0x18] sm:$0xff]
      %v588 = vld [vmem:[%s273 + $0x20] sm:$0xff]
      %v589 = vld [vmem:[%s273 + $0x28] sm:$0xff]
      %v590 = vld [vmem:[%s273 + $0x30] sm:$0xff]
      %v591 = vld [vmem:[%s273 + $0x38] sm:$0xff]
      %v592 = vpack.c.bf16 %v584, %v584
      %v593 = vpack.c.bf16 %v585, %v585
      %v594 = vpack.c.bf16 %v586, %v586
      %v595 = vpack.c.bf16 %v587, %v587
      %v596 = vpack.c.bf16 %v588, %v588
      %v597 = vpack.c.bf16 %v589, %v589
      %v598 = vpack.c.bf16 %v590, %v590
      %v599 = vpack.c.bf16 %v591, %v591
      %v608 = vunpack.c.l.b16 %v592
      %v609 = vunpack.c.l.b16 %v593
      %v610 = vunpack.c.l.b16 %v594
      %v611 = vunpack.c.l.b16 %v595
      %v612 = vunpack.c.l.b16 %v596
      %v613 = vunpack.c.l.b16 %v597
      %v614 = vunpack.c.l.b16 %v598
      %v615 = vunpack.c.l.b16 %v599
      %v616 = vpack.c.b16 %v609, %v608
      %v617 = vpack.c.b16 %v611, %v610
      %v618 = vpack.c.b16 %v613, %v612
      %v619 = vpack.c.b16 %v615, %v614
      %620 = vrot.lane.b32.xlu0 %v616, 96
      %v621 = vpop.permute.xlu0 %620
      %622 = vrot.lane.b32.xlu0 %v617, 96
      %v623 = vpop.permute.xlu0 %622
      %624 = vrot.lane.b32.xlu0 %v618, 96
      %v625 = vpop.permute.xlu0 %624
      %626 = vrot.lane.b32.xlu0 %v619, 96
      %v627 = vpop.permute.xlu0 %626
      %v628 = vrot.slane %v621, 4
      %v629 = vrot.slane %v623, 4
      %v630 = vrot.slane %v625, 4
      %v631 = vrot.slane %v627, 4
      %v632 = vsel %vm375, %v628, %v629
      %vm633 = vcmask 785408
      %v634 = vsel %vm633, %v621, %v632
      %v635 = vsel %vm375, %v629, %v630
      %v636 = vsel %vm633, %v623, %v635
      %v637 = vsel %vm375, %v630, %v631
      %v638 = vsel %vm633, %v625, %v637
      %v639 = vsel %vm633, %v627, %v631
      %644 = vst [vmem:[#allocation2 + $0xa0] sm:$0xff] %v634
      %645 = vst [vmem:[#allocation2 + $0xa8] sm:$0xff] %v636
      %646 = vst [vmem:[#allocation2 + $0xb0] sm:$0xff] %v638
      %647 = vst.msk [vmem:[#allocation2 + $0xb8] sm:$0xff] %vm325, %v639
      %v648 = vld [vmem:[%s273] sm:$0xff]
      %v649 = vld [vmem:[%s273 + $0x8] sm:$0xff]
      %v650 = vld [vmem:[%s273 + $0x10] sm:$0xff]
      %v651 = vld [vmem:[%s273 + $0x18] sm:$0xff]
      %v652 = vld [vmem:[%s273 + $0x20] sm:$0xff]
      %v653 = vld [vmem:[%s273 + $0x28] sm:$0xff]
      %v654 = vld [vmem:[%s273 + $0x30] sm:$0xff]
      %v655 = vld [vmem:[%s273 + $0x38] sm:$0xff]
      %v656 = vpack.c.bf16 %v648, %v648
      %v657 = vpack.c.bf16 %v649, %v649
      %v658 = vpack.c.bf16 %v650, %v650
      %v659 = vpack.c.bf16 %v651, %v651
      %v660 = vpack.c.bf16 %v652, %v652
      %v661 = vpack.c.bf16 %v653, %v653
      %v662 = vpack.c.bf16 %v654, %v654
      %v663 = vpack.c.bf16 %v655, %v655
      %v672 = vunpack.c.l.b16 %v656
      %v673 = vunpack.c.l.b16 %v657
      %v674 = vunpack.c.l.b16 %v658
      %v675 = vunpack.c.l.b16 %v659
      %v676 = vunpack.c.l.b16 %v660
      %v677 = vunpack.c.l.b16 %v661
      %v678 = vunpack.c.l.b16 %v662
      %v679 = vunpack.c.l.b16 %v663
      %v680 = vpack.c.b16 %v673, %v672
      %v681 = vpack.c.b16 %v675, %v674
      %v682 = vpack.c.b16 %v677, %v676
      %v683 = vpack.c.b16 %v679, %v678
      %684 = vrot.lane.b32.xlu0 %v680, 95
      %v685 = vpop.permute.xlu0 %684
      %686 = vrot.lane.b32.xlu0 %v681, 95
      %v687 = vpop.permute.xlu0 %686
      %688 = vrot.lane.b32.xlu0 %v682, 95
      %v689 = vpop.permute.xlu0 %688
      %690 = vrot.lane.b32.xlu0 %v683, 95
      %v691 = vpop.permute.xlu0 %690
      %v692 = vrot.slane %v685, 4
      %v693 = vrot.slane %v687, 4
      %v694 = vrot.slane %v689, 4
      %v695 = vrot.slane %v691, 4
      %v696 = vsel %vm375, %v692, %v693
      %vm697 = vcmask 777216
      %v698 = vsel %vm697, %v685, %v696
      %v699 = vsel %vm375, %v693, %v694
      %v700 = vsel %vm697, %v687, %v699
      %v701 = vsel %vm375, %v694, %v695
      %v702 = vsel %vm697, %v689, %v701
      %v703 = vsel %vm697, %v691, %v695
      %708 = vst [vmem:[#allocation2 + $0xc0] sm:$0xff] %v698
      %709 = vst [vmem:[#allocation2 + $0xc8] sm:$0xff] %v700
      %710 = vst [vmem:[#allocation2 + $0xd0] sm:$0xff] %v702
      %711 = vst.msk [vmem:[#allocation2 + $0xd8] sm:$0xff] %vm325, %v703
      %v712 = vld [vmem:[%s273] sm:$0xff]
      %v713 = vld [vmem:[%s273 + $0x8] sm:$0xff]
      %v714 = vld [vmem:[%s273 + $0x10] sm:$0xff]
      %v715 = vld [vmem:[%s273 + $0x18] sm:$0xff]
      %v716 = vld [vmem:[%s273 + $0x20] sm:$0xff]
      %v717 = vld [vmem:[%s273 + $0x28] sm:$0xff]
      %v718 = vld [vmem:[%s273 + $0x30] sm:$0xff]
      %v719 = vld [vmem:[%s273 + $0x38] sm:$0xff]
      %v720 = vpack.c.bf16 %v712, %v712
      %v721 = vpack.c.bf16 %v713, %v713
      %v722 = vpack.c.bf16 %v714, %v714
      %v723 = vpack.c.bf16 %v715, %v715
      %v724 = vpack.c.bf16 %v716, %v716
      %v725 = vpack.c.bf16 %v717, %v717
      %v726 = vpack.c.bf16 %v718, %v718
      %v727 = vpack.c.bf16 %v719, %v719
      %v736 = vunpack.c.l.b16 %v720
      %v737 = vunpack.c.l.b16 %v721
      %v738 = vunpack.c.l.b16 %v722
      %v739 = vunpack.c.l.b16 %v723
      %v740 = vunpack.c.l.b16 %v724
      %v741 = vunpack.c.l.b16 %v725
      %v742 = vunpack.c.l.b16 %v726
      %v743 = vunpack.c.l.b16 %v727
      %v744 = vpack.c.b16 %v737, %v736
      %v745 = vpack.c.b16 %v739, %v738
      %v746 = vpack.c.b16 %v741, %v740
      %v747 = vpack.c.b16 %v743, %v742
      %748 = vrot.lane.b32.xlu0 %v744, 94
      %v749 = vpop.permute.xlu0 %748
      %750 = vrot.lane.b32.xlu0 %v745, 94
      %v751 = vpop.permute.xlu0 %750
      %752 = vrot.lane.b32.xlu0 %v746, 94
      %v753 = vpop.permute.xlu0 %752
      %754 = vrot.lane.b32.xlu0 %v747, 94
      %v755 = vpop.permute.xlu0 %754
      %v756 = vrot.slane %v749, 4
      %v757 = vrot.slane %v751, 4
      %v758 = vrot.slane %v753, 4
      %v759 = vrot.slane %v755, 4
      %v760 = vsel %vm375, %v756, %v757
      %vm761 = vcmask 769024
      %v762 = vsel %vm761, %v749, %v760
      %v763 = vsel %vm375, %v757, %v758
      %v764 = vsel %vm761, %v751, %v763
      %v765 = vsel %vm375, %v758, %v759
      %v766 = vsel %vm761, %v753, %v765
      %v767 = vsel %vm761, %v755, %v759
      %772 = vst [vmem:[#allocation2 + $0xe0] sm:$0xff] %v762
      %773 = vst [vmem:[#allocation2 + $0xe8] sm:$0xff] %v764
      %774 = vst [vmem:[#allocation2 + $0xf0] sm:$0xff] %v766
      %775 = vst.msk [vmem:[#allocation2 + $0xf8] sm:$0xff] %vm325, %v767
      %v776 = vld [vmem:[%s273] sm:$0xff]
      %v777 = vld [vmem:[%s273 + $0x8] sm:$0xff]
      %v778 = vld [vmem:[%s273 + $0x10] sm:$0xff]
      %v779 = vld [vmem:[%s273 + $0x18] sm:$0xff]
      %v780 = vld [vmem:[%s273 + $0x20] sm:$0xff]
      %v781 = vld [vmem:[%s273 + $0x28] sm:$0xff]
      %v782 = vld [vmem:[%s273 + $0x30] sm:$0xff]
      %v783 = vld [vmem:[%s273 + $0x38] sm:$0xff]
      %v784 = vpack.c.bf16 %v776, %v776
      %v785 = vpack.c.bf16 %v777, %v777
      %v786 = vpack.c.bf16 %v778, %v778
      %v787 = vpack.c.bf16 %v779, %v779
      %v788 = vpack.c.bf16 %v780, %v780
      %v789 = vpack.c.bf16 %v781, %v781
      %v790 = vpack.c.bf16 %v782, %v782
      %v791 = vpack.c.bf16 %v783, %v783
      %v800 = vunpack.c.l.b16 %v784
      %v801 = vunpack.c.l.b16 %v785
      %v802 = vunpack.c.l.b16 %v786
      %v803 = vunpack.c.l.b16 %v787
      %v804 = vunpack.c.l.b16 %v788
      %v805 = vunpack.c.l.b16 %v789
      %v806 = vunpack.c.l.b16 %v790
      %v807 = vunpack.c.l.b16 %v791
      %v808 = vpack.c.b16 %v801, %v800
      %v809 = vpack.c.b16 %v803, %v802
      %v810 = vpack.c.b16 %v805, %v804
      %v811 = vpack.c.b16 %v807, %v806
      %812 = vrot.lane.b32.xlu0 %v808, 93
      %v813 = vpop.permute.xlu0 %812
      %814 = vrot.lane.b32.xlu0 %v809, 93
      %v815 = vpop.permute.xlu0 %814
      %816 = vrot.lane.b32.xlu0 %v810, 93
      %v817 = vpop.permute.xlu0 %816
      %818 = vrot.lane.b32.xlu0 %v811, 93
      %v819 = vpop.permute.xlu0 %818
      %v820 = vrot.slane %v813, 4
      %v821 = vrot.slane %v815, 4
      %v822 = vrot.slane %v817, 4
      %v823 = vrot.slane %v819, 4
      %v824 = vsel %vm375, %v820, %v821
      %vm825 = vcmask 760832
      %v826 = vsel %vm825, %v813, %v824
      %v827 = vsel %vm375, %v821, %v822
      %v828 = vsel %vm825, %v815, %v827
      %v829 = vsel %vm375, %v822, %v823
      %v830 = vsel %vm825, %v817, %v829
      %v831 = vsel %vm825, %v819, %v823
      %836 = vst [vmem:[#allocation2 + $0x100] sm:$0xff] %v826
      %837 = vst [vmem:[#allocation2 + $0x108] sm:$0xff] %v828
      %838 = vst [vmem:[#allocation2 + $0x110] sm:$0xff] %v830
      %839 = vst.msk [vmem:[#allocation2 + $0x118] sm:$0xff] %vm325, %v831
      %v840 = vld [vmem:[%s273] sm:$0xff]
      %v841 = vld [vmem:[%s273 + $0x8] sm:$0xff]
      %v842 = vld [vmem:[%s273 + $0x10] sm:$0xff]
      %v843 = vld [vmem:[%s273 + $0x18] sm:$0xff]
      %v844 = vld [vmem:[%s273 + $0x20] sm:$0xff]
      %v845 = vld [vmem:[%s273 + $0x28] sm:$0xff]
      %v846 = vld [vmem:[%s273 + $0x30] sm:$0xff]
      %v847 = vld [vmem:[%s273 + $0x38] sm:$0xff]
      %v848 = vpack.c.bf16 %v840, %v840
      %v849 = vpack.c.bf16 %v841, %v841
      %v850 = vpack.c.bf16 %v842, %v842
      %v851 = vpack.c.bf16 %v843, %v843
      %v852 = vpack.c.bf16 %v844, %v844
      %v853 = vpack.c.bf16 %v845, %v845
      %v854 = vpack.c.bf16 %v846, %v846
      %v855 = vpack.c.bf16 %v847, %v847
      %v864 = vunpack.c.l.b16 %v848
      %v865 = vunpack.c.l.b16 %v849
      %v866 = vunpack.c.l.b16 %v850
      %v867 = vunpack.c.l.b16 %v851
      %v868 = vunpack.c.l.b16 %v852
      %v869 = vunpack.c.l.b16 %v853
      %v870 = vunpack.c.l.b16 %v854
      %v871 = vunpack.c.l.b16 %v855
      %v872 = vpack.c.b16 %v865, %v864
      %v873 = vpack.c.b16 %v867, %v866
      %v874 = vpack.c.b16 %v869, %v868
      %v875 = vpack.c.b16 %v871, %v870
      %876 = vrot.lane.b32.xlu0 %v872, 92
      %v877 = vpop.permute.xlu0 %876
      %878 = vrot.lane.b32.xlu0 %v873, 92
      %v879 = vpop.permute.xlu0 %878
      %880 = vrot.lane.b32.xlu0 %v874, 92
      %v881 = vpop.permute.xlu0 %880
      %882 = vrot.lane.b32.xlu0 %v875, 92
      %v883 = vpop.permute.xlu0 %882
      %v884 = vrot.slane %v877, 4
      %v885 = vrot.slane %v879, 4
      %v886 = vrot.slane %v881, 4
      %v887 = vrot.slane %v883, 4
      %v888 = vsel %vm375, %v884, %v885
      %vm889 = vcmask 752640
      %v890 = vsel %vm889, %v877, %v888
      %v891 = vsel %vm375, %v885, %v886
      %v892 = vsel %vm889, %v879, %v891
      %v893 = vsel %vm375, %v886, %v887
      %v894 = vsel %vm889, %v881, %v893
      %v895 = vsel %vm889, %v883, %v887
      %900 = vst [vmem:[#allocation2 + $0x120] sm:$0xff] %v890
      %901 = vst [vmem:[#allocation2 + $0x128] sm:$0xff] %v892
      %902 = vst [vmem:[#allocation2 + $0x130] sm:$0xff] %v894
      %903 = vst.msk [vmem:[#allocation2 + $0x138] sm:$0xff] %vm325, %v895
      %v904 = vld [vmem:[%s273] sm:$0xff]
      %v905 = vld [vmem:[%s273 + $0x8] sm:$0xff]
      %v906 = vld [vmem:[%s273 + $0x10] sm:$0xff]
      %v907 = vld [vmem:[%s273 + $0x18] sm:$0xff]
      %v908 = vld [vmem:[%s273 + $0x20] sm:$0xff]
      %v909 = vld [vmem:[%s273 + $0x28] sm:$0xff]
      %v910 = vld [vmem:[%s273 + $0x30] sm:$0xff]
      %v911 = vld [vmem:[%s273 + $0x38] sm:$0xff]
      %v912 = vpack.c.bf16 %v904, %v904
      %v913 = vpack.c.bf16 %v905, %v905
      %v914 = vpack.c.bf16 %v906, %v906
      %v915 = vpack.c.bf16 %v907, %v907
      %v916 = vpack.c.bf16 %v908, %v908
      %v917 = vpack.c.bf16 %v909, %v909
      %v918 = vpack.c.bf16 %v910, %v910
      %v919 = vpack.c.bf16 %v911, %v911
      %v928 = vunpack.c.l.b16 %v912
      %v929 = vunpack.c.l.b16 %v913
      %v930 = vunpack.c.l.b16 %v914
      %v931 = vunpack.c.l.b16 %v915
      %v932 = vunpack.c.l.b16 %v916
      %v933 = vunpack.c.l.b16 %v917
      %v934 = vunpack.c.l.b16 %v918
      %v935 = vunpack.c.l.b16 %v919
      %v936 = vpack.c.b16 %v929, %v928
      %v937 = vpack.c.b16 %v931, %v930
      %v938 = vpack.c.b16 %v933, %v932
      %v939 = vpack.c.b16 %v935, %v934
      %940 = vrot.lane.b32.xlu0 %v936, 64
      %v941 = vpop.permute.xlu0 %940
      %942 = vrot.lane.b32.xlu0 %v937, 64
      %v943 = vpop.permute.xlu0 %942
      %944 = vrot.lane.b32.xlu0 %v938, 64
      %v945 = vpop.permute.xlu0 %944
      %946 = vrot.lane.b32.xlu0 %v939, 64
      %v947 = vpop.permute.xlu0 %946
      %v948 = vrot.slane %v941, 4
      %v949 = vrot.slane %v943, 4
      %v950 = vrot.slane %v945, 4
      %v951 = vrot.slane %v947, 4
      %v952 = vsel %vm375, %v948, %v949
      %vm953 = vcmask 523264
      %v954 = vsel %vm953, %v941, %v952
      %v955 = vsel %vm375, %v949, %v950
      %v956 = vsel %vm953, %v943, %v955
      %v957 = vsel %vm375, %v950, %v951
      %v958 = vsel %vm953, %v945, %v957
      %v959 = vsel %vm953, %v947, %v951
      %964 = vst [vmem:[#allocation2 + $0x140] sm:$0xff] %v954
      %965 = vst [vmem:[#allocation2 + $0x148] sm:$0xff] %v956
      %966 = vst [vmem:[#allocation2 + $0x150] sm:$0xff] %v958
      %967 = vst.msk [vmem:[#allocation2 + $0x158] sm:$0xff] %vm325, %v959
      %v968 = vld [vmem:[%s273] sm:$0xff]
      %v969 = vld [vmem:[%s273 + $0x8] sm:$0xff]
      %v970 = vld [vmem:[%s273 + $0x10] sm:$0xff]
      %v971 = vld [vmem:[%s273 + $0x18] sm:$0xff]
      %v972 = vld [vmem:[%s273 + $0x20] sm:$0xff]
      %v973 = vld [vmem:[%s273 + $0x28] sm:$0xff]
      %v974 = vld [vmem:[%s273 + $0x30] sm:$0xff]
      %v975 = vld [vmem:[%s273 + $0x38] sm:$0xff]
      %v976 = vpack.c.bf16 %v968, %v968
      %v977 = vpack.c.bf16 %v969, %v969
      %v978 = vpack.c.bf16 %v970, %v970
      %v979 = vpack.c.bf16 %v971, %v971
      %v980 = vpack.c.bf16 %v972, %v972
      %v981 = vpack.c.bf16 %v973, %v973
      %v982 = vpack.c.bf16 %v974, %v974
      %v983 = vpack.c.bf16 %v975, %v975
      %v992 = vunpack.c.l.b16 %v976
      %v993 = vunpack.c.l.b16 %v977
      %v994 = vunpack.c.l.b16 %v978
      %v995 = vunpack.c.l.b16 %v979
      %v996 = vunpack.c.l.b16 %v980
      %v997 = vunpack.c.l.b16 %v981
      %v998 = vunpack.c.l.b16 %v982
      %v999 = vunpack.c.l.b16 %v983
      %v1000 = vpack.c.b16 %v993, %v992
      %v1001 = vpack.c.b16 %v995, %v994
      %v1002 = vpack.c.b16 %v997, %v996
      %v1003 = vpack.c.b16 %v999, %v998
      %1004 = vrot.lane.b32.xlu0 %v1000, 63
      %v1005 = vpop.permute.xlu0 %1004
      %1006 = vrot.lane.b32.xlu0 %v1001, 63
      %v1007 = vpop.permute.xlu0 %1006
      %1008 = vrot.lane.b32.xlu0 %v1002, 63
      %v1009 = vpop.permute.xlu0 %1008
      %1010 = vrot.lane.b32.xlu0 %v1003, 63
      %v1011 = vpop.permute.xlu0 %1010
      %v1012 = vrot.slane %v1005, 4
      %v1013 = vrot.slane %v1007, 4
      %v1014 = vrot.slane %v1009, 4
      %v1015 = vrot.slane %v1011, 4
      %v1016 = vsel %vm375, %v1012, %v1013
      %vm1017 = vcmask 515072
      %v1018 = vsel %vm1017, %v1005, %v1016
      %v1019 = vsel %vm375, %v1013, %v1014
      %v1020 = vsel %vm1017, %v1007, %v1019
      %v1021 = vsel %vm375, %v1014, %v1015
      %v1022 = vsel %vm1017, %v1009, %v1021
      %v1023 = vsel %vm1017, %v1011, %v1015
      %1028 = vst [vmem:[#allocation2 + $0x160] sm:$0xff] %v1018
      %1029 = vst [vmem:[#allocation2 + $0x168] sm:$0xff] %v1020
      %1030 = vst [vmem:[#allocation2 + $0x170] sm:$0xff] %v1022
      %1031 = vst.msk [vmem:[#allocation2 + $0x178] sm:$0xff] %vm325, %v1023
      %v1032 = vld [vmem:[%s273] sm:$0xff]
      %v1033 = vld [vmem:[%s273 + $0x8] sm:$0xff]
      %v1034 = vld [vmem:[%s273 + $0x10] sm:$0xff]
      %v1035 = vld [vmem:[%s273 + $0x18] sm:$0xff]
      %v1036 = vld [vmem:[%s273 + $0x20] sm:$0xff]
      %v1037 = vld [vmem:[%s273 + $0x28] sm:$0xff]
      %v1038 = vld [vmem:[%s273 + $0x30] sm:$0xff]
      %v1039 = vld [vmem:[%s273 + $0x38] sm:$0xff]
      %v1040 = vpack.c.bf16 %v1032, %v1032
      %v1041 = vpack.c.bf16 %v1033, %v1033
      %v1042 = vpack.c.bf16 %v1034, %v1034
      %v1043 = vpack.c.bf16 %v1035, %v1035
      %v1044 = vpack.c.bf16 %v1036, %v1036
      %v1045 = vpack.c.bf16 %v1037, %v1037
      %v1046 = vpack.c.bf16 %v1038, %v1038
      %v1047 = vpack.c.bf16 %v1039, %v1039
      %v1056 = vunpack.c.l.b16 %v1040
      %v1057 = vunpack.c.l.b16 %v1041
      %v1058 = vunpack.c.l.b16 %v1042
      %v1059 = vunpack.c.l.b16 %v1043
      %v1060 = vunpack.c.l.b16 %v1044
      %v1061 = vunpack.c.l.b16 %v1045
      %v1062 = vunpack.c.l.b16 %v1046
      %v1063 = vunpack.c.l.b16 %v1047
      %v1064 = vpack.c.b16 %v1057, %v1056
      %v1065 = vpack.c.b16 %v1059, %v1058
      %v1066 = vpack.c.b16 %v1061, %v1060
      %v1067 = vpack.c.b16 %v1063, %v1062
      %1068 = vrot.lane.b32.xlu0 %v1064, 62
      %v1069 = vpop.permute.xlu0 %1068
      %1070 = vrot.lane.b32.xlu0 %v1065, 62
      %v1071 = vpop.permute.xlu0 %1070
      %1072 = vrot.lane.b32.xlu0 %v1066, 62
      %v1073 = vpop.permute.xlu0 %1072
      %1074 = vrot.lane.b32.xlu0 %v1067, 62
      %v1075 = vpop.permute.xlu0 %1074
      %v1076 = vrot.slane %v1069, 4
      %v1077 = vrot.slane %v1071, 4
      %v1078 = vrot.slane %v1073, 4
      %v1079 = vrot.slane %v1075, 4
      %v1080 = vsel %vm375, %v1076, %v1077
      %vm1081 = vcmask 506880
      %v1082 = vsel %vm1081, %v1069, %v1080
      %v1083 = vsel %vm375, %v1077, %v1078
      %v1084 = vsel %vm1081, %v1071, %v1083
      %v1085 = vsel %vm375, %v1078, %v1079
      %v1086 = vsel %vm1081, %v1073, %v1085
      %v1087 = vsel %vm1081, %v1075, %v1079
      %1092 = vst [vmem:[#allocation2 + $0x180] sm:$0xff] %v1082
      %1093 = vst [vmem:[#allocation2 + $0x188] sm:$0xff] %v1084
      %1094 = vst [vmem:[#allocation2 + $0x190] sm:$0xff] %v1086
      %1095 = vst.msk [vmem:[#allocation2 + $0x198] sm:$0xff] %vm325, %v1087
      %v1096 = vld [vmem:[%s273] sm:$0xff]
      %v1097 = vld [vmem:[%s273 + $0x8] sm:$0xff]
      %v1098 = vld [vmem:[%s273 + $0x10] sm:$0xff]
      %v1099 = vld [vmem:[%s273 + $0x18] sm:$0xff]
      %v1100 = vld [vmem:[%s273 + $0x20] sm:$0xff]
      %v1101 = vld [vmem:[%s273 + $0x28] sm:$0xff]
      %v1102 = vld [vmem:[%s273 + $0x30] sm:$0xff]
      %v1103 = vld [vmem:[%s273 + $0x38] sm:$0xff]
      %v1104 = vpack.c.bf16 %v1096, %v1096
      %v1105 = vpack.c.bf16 %v1097, %v1097
      %v1106 = vpack.c.bf16 %v1098, %v1098
      %v1107 = vpack.c.bf16 %v1099, %v1099
      %v1108 = vpack.c.bf16 %v1100, %v1100
      %v1109 = vpack.c.bf16 %v1101, %v1101
      %v1110 = vpack.c.bf16 %v1102, %v1102
      %v1111 = vpack.c.bf16 %v1103, %v1103
      %v1120 = vunpack.c.l.b16 %v1104
      %v1121 = vunpack.c.l.b16 %v1105
      %v1122 = vunpack.c.l.b16 %v1106
      %v1123 = vunpack.c.l.b16 %v1107
      %v1124 = vunpack.c.l.b16 %v1108
      %v1125 = vunpack.c.l.b16 %v1109
      %v1126 = vunpack.c.l.b16 %v1110
      %v1127 = vunpack.c.l.b16 %v1111
      %v1128 = vpack.c.b16 %v1121, %v1120
      %v1129 = vpack.c.b16 %v1123, %v1122
      %v1130 = vpack.c.b16 %v1125, %v1124
      %v1131 = vpack.c.b16 %v1127, %v1126
      %1132 = vrot.lane.b32.xlu0 %v1128, 61
      %v1133 = vpop.permute.xlu0 %1132
      %1134 = vrot.lane.b32.xlu0 %v1129, 61
      %v1135 = vpop.permute.xlu0 %1134
      %1136 = vrot.lane.b32.xlu0 %v1130, 61
      %v1137 = vpop.permute.xlu0 %1136
      %1138 = vrot.lane.b32.xlu0 %v1131, 61
      %v1139 = vpop.permute.xlu0 %1138
      %v1140 = vrot.slane %v1133, 4
      %v1141 = vrot.slane %v1135, 4
      %v1142 = vrot.slane %v1137, 4
      %v1143 = vrot.slane %v1139, 4
      %v1144 = vsel %vm375, %v1140, %v1141
      %vm1145 = vcmask 498688
      %v1146 = vsel %vm1145, %v1133, %v1144
      %v1147 = vsel %vm375, %v1141, %v1142
      %v1148 = vsel %vm1145, %v1135, %v1147
      %v1149 = vsel %vm375, %v1142, %v1143
      %v1150 = vsel %vm1145, %v1137, %v1149
      %v1151 = vsel %vm1145, %v1139, %v1143
      %1156 = vst [vmem:[#allocation2 + $0x1a0] sm:$0xff] %v1146
      %1157 = vst [vmem:[#allocation2 + $0x1a8] sm:$0xff] %v1148
      %1158 = vst [vmem:[#allocation2 + $0x1b0] sm:$0xff] %v1150
      %1159 = vst.msk [vmem:[#allocation2 + $0x1b8] sm:$0xff] %vm325, %v1151
      %v1160 = vld [vmem:[%s273] sm:$0xff]
      %v1161 = vld [vmem:[%s273 + $0x8] sm:$0xff]
      %v1162 = vld [vmem:[%s273 + $0x10] sm:$0xff]
      %v1163 = vld [vmem:[%s273 + $0x18] sm:$0xff]
      %v1164 = vld [vmem:[%s273 + $0x20] sm:$0xff]
      %v1165 = vld [vmem:[%s273 + $0x28] sm:$0xff]
      %v1166 = vld [vmem:[%s273 + $0x30] sm:$0xff]
      %v1167 = vld [vmem:[%s273 + $0x38] sm:$0xff]
      %v1168 = vpack.c.bf16 %v1160, %v1160
      %v1169 = vpack.c.bf16 %v1161, %v1161
      %v1170 = vpack.c.bf16 %v1162, %v1162
      %v1171 = vpack.c.bf16 %v1163, %v1163
      %v1172 = vpack.c.bf16 %v1164, %v1164
      %v1173 = vpack.c.bf16 %v1165, %v1165
      %v1174 = vpack.c.bf16 %v1166, %v1166
      %v1175 = vpack.c.bf16 %v1167, %v1167
      %v1184 = vunpack.c.l.b16 %v1168
      %v1185 = vunpack.c.l.b16 %v1169
      %v1186 = vunpack.c.l.b16 %v1170
      %v1187 = vunpack.c.l.b16 %v1171
      %v1188 = vunpack.c.l.b16 %v1172
      %v1189 = vunpack.c.l.b16 %v1173
      %v1190 = vunpack.c.l.b16 %v1174
      %v1191 = vunpack.c.l.b16 %v1175
      %v1192 = vpack.c.b16 %v1185, %v1184
      %v1193 = vpack.c.b16 %v1187, %v1186
      %v1194 = vpack.c.b16 %v1189, %v1188
      %v1195 = vpack.c.b16 %v1191, %v1190
      %1196 = vrot.lane.b32.xlu0 %v1192, 60
      %v1197 = vpop.permute.xlu0 %1196
      %1198 = vrot.lane.b32.xlu0 %v1193, 60
      %v1199 = vpop.permute.xlu0 %1198
      %1200 = vrot.lane.b32.xlu0 %v1194, 60
      %v1201 = vpop.permute.xlu0 %1200
      %1202 = vrot.lane.b32.xlu0 %v1195, 60
      %v1203 = vpop.permute.xlu0 %1202
      %v1204 = vrot.slane %v1197, 4
      %v1205 = vrot.slane %v1199, 4
      %v1206 = vrot.slane %v1201, 4
      %v1207 = vrot.slane %v1203, 4
      %v1208 = vsel %vm375, %v1204, %v1205
      %vm1209 = vcmask 490496
      %v1210 = vsel %vm1209, %v1197, %v1208
      %v1211 = vsel %vm375, %v1205, %v1206
      %v1212 = vsel %vm1209, %v1199, %v1211
      %v1213 = vsel %vm375, %v1206, %v1207
      %v1214 = vsel %vm1209, %v1201, %v1213
      %v1215 = vsel %vm1209, %v1203, %v1207
      %1220 = vst [vmem:[#allocation2 + $0x1c0] sm:$0xff] %v1210
      %1221 = vst [vmem:[#allocation2 + $0x1c8] sm:$0xff] %v1212
      %1222 = vst [vmem:[#allocation2 + $0x1d0] sm:$0xff] %v1214
      %1223 = vst.msk [vmem:[#allocation2 + $0x1d8] sm:$0xff] %vm325, %v1215
      %v1224 = vld [vmem:[%s273] sm:$0xff]
      %v1225 = vld [vmem:[%s273 + $0x8] sm:$0xff]
      %v1226 = vld [vmem:[%s273 + $0x10] sm:$0xff]
      %v1227 = vld [vmem:[%s273 + $0x18] sm:$0xff]
      %v1228 = vld [vmem:[%s273 + $0x20] sm:$0xff]
      %v1229 = vld [vmem:[%s273 + $0x28] sm:$0xff]
      %v1230 = vld [vmem:[%s273 + $0x30] sm:$0xff]
      %v1231 = vld [vmem:[%s273 + $0x38] sm:$0xff]
      %v1232 = vpack.c.bf16 %v1224, %v1224
      %v1233 = vpack.c.bf16 %v1225, %v1225
      %v1234 = vpack.c.bf16 %v1226, %v1226
      %v1235 = vpack.c.bf16 %v1227, %v1227
      %v1236 = vpack.c.bf16 %v1228, %v1228
      %v1237 = vpack.c.bf16 %v1229, %v1229
      %v1238 = vpack.c.bf16 %v1230, %v1230
      %v1239 = vpack.c.bf16 %v1231, %v1231
      %v1248 = vunpack.c.l.b16 %v1232
      %v1249 = vunpack.c.l.b16 %v1233
      %v1250 = vunpack.c.l.b16 %v1234
      %v1251 = vunpack.c.l.b16 %v1235
      %v1252 = vunpack.c.l.b16 %v1236
      %v1253 = vunpack.c.l.b16 %v1237
      %v1254 = vunpack.c.l.b16 %v1238
      %v1255 = vunpack.c.l.b16 %v1239
      %v1256 = vpack.c.b16 %v1249, %v1248
      %v1257 = vpack.c.b16 %v1251, %v1250
      %v1258 = vpack.c.b16 %v1253, %v1252
      %v1259 = vpack.c.b16 %v1255, %v1254
      %1260 = vrot.lane.b32.xlu0 %v1256, 32
      %v1261 = vpop.permute.xlu0 %1260
      %1262 = vrot.lane.b32.xlu0 %v1257, 32
      %v1263 = vpop.permute.xlu0 %1262
      %1264 = vrot.lane.b32.xlu0 %v1258, 32
      %v1265 = vpop.permute.xlu0 %1264
      %1266 = vrot.lane.b32.xlu0 %v1259, 32
      %v1267 = vpop.permute.xlu0 %1266
      %v1268 = vrot.slane %v1261, 4
      %v1269 = vrot.slane %v1263, 4
      %v1270 = vrot.slane %v1265, 4
      %v1271 = vrot.slane %v1267, 4
      %v1272 = vsel %vm375, %v1268, %v1269
      %vm1273 = vcmask 261120
      %v1274 = vsel %vm1273, %v1261, %v1272
      %v1275 = vsel %vm375, %v1269, %v1270
      %v1276 = vsel %vm1273, %v1263, %v1275
      %v1277 = vsel %vm375, %v1270, %v1271
      %v1278 = vsel %vm1273, %v1265, %v1277
      %v1279 = vsel %vm1273, %v1267, %v1271
      %1284 = vst [vmem:[#allocation2 + $0x1e0] sm:$0xff] %v1274
      %1285 = vst [vmem:[#allocation2 + $0x1e8] sm:$0xff] %v1276
      %1286 = vst [vmem:[#allocation2 + $0x1f0] sm:$0xff] %v1278
      %1287 = vst.msk [vmem:[#allocation2 + $0x1f8] sm:$0xff] %vm325, %v1279
      %v1288 = vld [vmem:[%s273] sm:$0xff]
      %v1289 = vld [vmem:[%s273 + $0x8] sm:$0xff]
      %v1290 = vld [vmem:[%s273 + $0x10] sm:$0xff]
      %v1291 = vld [vmem:[%s273 + $0x18] sm:$0xff]
      %v1292 = vld [vmem:[%s273 + $0x20] sm:$0xff]
      %v1293 = vld [vmem:[%s273 + $0x28] sm:$0xff]
      %v1294 = vld [vmem:[%s273 + $0x30] sm:$0xff]
      %v1295 = vld [vmem:[%s273 + $0x38] sm:$0xff]
      %v1296 = vpack.c.bf16 %v1288, %v1288
      %v1297 = vpack.c.bf16 %v1289, %v1289
      %v1298 = vpack.c.bf16 %v1290, %v1290
      %v1299 = vpack.c.bf16 %v1291, %v1291
      %v1300 = vpack.c.bf16 %v1292, %v1292
      %v1301 = vpack.c.bf16 %v1293, %v1293
      %v1302 = vpack.c.bf16 %v1294, %v1294
      %v1303 = vpack.c.bf16 %v1295, %v1295
      %v1312 = vunpack.c.l.b16 %v1296
      %v1313 = vunpack.c.l.b16 %v1297
      %v1314 = vunpack.c.l.b16 %v1298
      %v1315 = vunpack.c.l.b16 %v1299
      %v1316 = vunpack.c.l.b16 %v1300
      %v1317 = vunpack.c.l.b16 %v1301
      %v1318 = vunpack.c.l.b16 %v1302
      %v1319 = vunpack.c.l.b16 %v1303
      %v1320 = vpack.c.b16 %v1313, %v1312
      %v1321 = vpack.c.b16 %v1315, %v1314
      %v1322 = vpack.c.b16 %v1317, %v1316
      %v1323 = vpack.c.b16 %v1319, %v1318
      %1324 = vrot.lane.b32.xlu0 %v1320, 31
      %v1325 = vpop.permute.xlu0 %1324
      %1326 = vrot.lane.b32.xlu0 %v1321, 31
      %v1327 = vpop.permute.xlu0 %1326
      %1328 = vrot.lane.b32.xlu0 %v1322, 31
      %v1329 = vpop.permute.xlu0 %1328
      %1330 = vrot.lane.b32.xlu0 %v1323, 31
      %v1331 = vpop.permute.xlu0 %1330
      %v1332 = vrot.slane %v1325, 4
      %v1333 = vrot.slane %v1327, 4
      %v1334 = vrot.slane %v1329, 4
      %v1335 = vrot.slane %v1331, 4
      %v1336 = vsel %vm375, %v1332, %v1333
      %vm1337 = vcmask 252928
      %v1338 = vsel %vm1337, %v1325, %v1336
      %v1339 = vsel %vm375, %v1333, %v1334
      %v1340 = vsel %vm1337, %v1327, %v1339
      %v1341 = vsel %vm375, %v1334, %v1335
      %v1342 = vsel %vm1337, %v1329, %v1341
      %v1343 = vsel %vm1337, %v1331, %v1335
      %1348 = vst [vmem:[#allocation2 + $0x200] sm:$0xff] %v1338
      %1349 = vst [vmem:[#allocation2 + $0x208] sm:$0xff] %v1340
      %1350 = vst [vmem:[#allocation2 + $0x210] sm:$0xff] %v1342
      %1351 = vst.msk [vmem:[#allocation2 + $0x218] sm:$0xff] %vm325, %v1343
      %v1352 = vld [vmem:[%s273] sm:$0xff]
      %v1353 = vld [vmem:[%s273 + $0x8] sm:$0xff]
      %v1354 = vld [vmem:[%s273 + $0x10] sm:$0xff]
      %v1355 = vld [vmem:[%s273 + $0x18] sm:$0xff]
      %v1356 = vld [vmem:[%s273 + $0x20] sm:$0xff]
      %v1357 = vld [vmem:[%s273 + $0x28] sm:$0xff]
      %v1358 = vld [vmem:[%s273 + $0x30] sm:$0xff]
      %v1359 = vld [vmem:[%s273 + $0x38] sm:$0xff]
      %v1360 = vpack.c.bf16 %v1352, %v1352
      %v1361 = vpack.c.bf16 %v1353, %v1353
      %v1362 = vpack.c.bf16 %v1354, %v1354
      %v1363 = vpack.c.bf16 %v1355, %v1355
      %v1364 = vpack.c.bf16 %v1356, %v1356
      %v1365 = vpack.c.bf16 %v1357, %v1357
      %v1366 = vpack.c.bf16 %v1358, %v1358
      %v1367 = vpack.c.bf16 %v1359, %v1359
      %v1376 = vunpack.c.l.b16 %v1360
      %v1377 = vunpack.c.l.b16 %v1361
      %v1378 = vunpack.c.l.b16 %v1362
      %v1379 = vunpack.c.l.b16 %v1363
      %v1380 = vunpack.c.l.b16 %v1364
      %v1381 = vunpack.c.l.b16 %v1365
      %v1382 = vunpack.c.l.b16 %v1366
      %v1383 = vunpack.c.l.b16 %v1367
      %v1384 = vpack.c.b16 %v1377, %v1376
      %v1385 = vpack.c.b16 %v1379, %v1378
      %v1386 = vpack.c.b16 %v1381, %v1380
      %v1387 = vpack.c.b16 %v1383, %v1382
      %1388 = vrot.lane.b32.xlu0 %v1384, 30
      %v1389 = vpop.permute.xlu0 %1388
      %1390 = vrot.lane.b32.xlu0 %v1385, 30
      %v1391 = vpop.permute.xlu0 %1390
      %1392 = vrot.lane.b32.xlu0 %v1386, 30
      %v1393 = vpop.permute.xlu0 %1392
      %1394 = vrot.lane.b32.xlu0 %v1387, 30
      %v1395 = vpop.permute.xlu0 %1394
      %v1396 = vrot.slane %v1389, 4
      %v1397 = vrot.slane %v1391, 4
      %v1398 = vrot.slane %v1393, 4
      %v1399 = vrot.slane %v1395, 4
      %v1400 = vsel %vm375, %v1396, %v1397
      %vm1401 = vcmask 244736
      %v1402 = vsel %vm1401, %v1389, %v1400
      %v1403 = vsel %vm375, %v1397, %v1398
      %v1404 = vsel %vm1401, %v1391, %v1403
      %v1405 = vsel %vm375, %v1398, %v1399
      %v1406 = vsel %vm1401, %v1393, %v1405
      %v1407 = vsel %vm1401, %v1395, %v1399
      %1412 = vst [vmem:[#allocation2 + $0x220] sm:$0xff] %v1402
      %1413 = vst [vmem:[#allocation2 + $0x228] sm:$0xff] %v1404
      %1414 = vst [vmem:[#allocation2 + $0x230] sm:$0xff] %v1406
      %1415 = vst.msk [vmem:[#allocation2 + $0x238] sm:$0xff] %vm325, %v1407
      %v1416 = vld [vmem:[%s273] sm:$0xff]
      %v1417 = vld [vmem:[%s273 + $0x8] sm:$0xff]
      %v1418 = vld [vmem:[%s273 + $0x10] sm:$0xff]
      %v1419 = vld [vmem:[%s273 + $0x18] sm:$0xff]
      %v1420 = vld [vmem:[%s273 + $0x20] sm:$0xff]
      %v1421 = vld [vmem:[%s273 + $0x28] sm:$0xff]
      %v1422 = vld [vmem:[%s273 + $0x30] sm:$0xff]
      %v1423 = vld [vmem:[%s273 + $0x38] sm:$0xff]
      %v1424 = vpack.c.bf16 %v1416, %v1416
      %v1425 = vpack.c.bf16 %v1417, %v1417
      %v1426 = vpack.c.bf16 %v1418, %v1418
      %v1427 = vpack.c.bf16 %v1419, %v1419
      %v1428 = vpack.c.bf16 %v1420, %v1420
      %v1429 = vpack.c.bf16 %v1421, %v1421
      %v1430 = vpack.c.bf16 %v1422, %v1422
      %v1431 = vpack.c.bf16 %v1423, %v1423
      %v1440 = vunpack.c.l.b16 %v1424
      %v1441 = vunpack.c.l.b16 %v1425
      %v1442 = vunpack.c.l.b16 %v1426
      %v1443 = vunpack.c.l.b16 %v1427
      %v1444 = vunpack.c.l.b16 %v1428
      %v1445 = vunpack.c.l.b16 %v1429
      %v1446 = vunpack.c.l.b16 %v1430
      %v1447 = vunpack.c.l.b16 %v1431
      %v1448 = vpack.c.b16 %v1441, %v1440
      %v1449 = vpack.c.b16 %v1443, %v1442
      %v1450 = vpack.c.b16 %v1445, %v1444
      %v1451 = vpack.c.b16 %v1447, %v1446
      %1452 = vrot.lane.b32.xlu0 %v1448, 29
      %v1453 = vpop.permute.xlu0 %1452
      %1454 = vrot.lane.b32.xlu0 %v1449, 29
      %v1455 = vpop.permute.xlu0 %1454
      %1456 = vrot.lane.b32.xlu0 %v1450, 29
      %v1457 = vpop.permute.xlu0 %1456
      %1458 = vrot.lane.b32.xlu0 %v1451, 29
      %v1459 = vpop.permute.xlu0 %1458
      %v1460 = vrot.slane %v1453, 4
      %v1461 = vrot.slane %v1455, 4
      %v1462 = vrot.slane %v1457, 4
      %v1463 = vrot.slane %v1459, 4
      %v1464 = vsel %vm375, %v1460, %v1461
      %vm1465 = vcmask 236544
      %v1466 = vsel %vm1465, %v1453, %v1464
      %v1467 = vsel %vm375, %v1461, %v1462
      %v1468 = vsel %vm1465, %v1455, %v1467
      %v1469 = vsel %vm375, %v1462, %v1463
      %v1470 = vsel %vm1465, %v1457, %v1469
      %v1471 = vsel %vm1465, %v1459, %v1463
      %1476 = vst [vmem:[#allocation2 + $0x240] sm:$0xff] %v1466
      %1477 = vst [vmem:[#allocation2 + $0x248] sm:$0xff] %v1468
      %1478 = vst [vmem:[#allocation2 + $0x250] sm:$0xff] %v1470
      %1479 = vst.msk [vmem:[#allocation2 + $0x258] sm:$0xff] %vm325, %v1471
      %v1480 = vld [vmem:[%s273] sm:$0xff]
      %v1481 = vld [vmem:[%s273 + $0x8] sm:$0xff]
      %v1482 = vld [vmem:[%s273 + $0x10] sm:$0xff]
      %v1483 = vld [vmem:[%s273 + $0x18] sm:$0xff]
      %v1484 = vld [vmem:[%s273 + $0x20] sm:$0xff]
      %v1485 = vld [vmem:[%s273 + $0x28] sm:$0xff]
      %v1486 = vld [vmem:[%s273 + $0x30] sm:$0xff]
      %v1487 = vld [vmem:[%s273 + $0x38] sm:$0xff]
      %v1488 = vpack.c.bf16 %v1480, %v1480
      %v1489 = vpack.c.bf16 %v1481, %v1481
      %v1490 = vpack.c.bf16 %v1482, %v1482
      %v1491 = vpack.c.bf16 %v1483, %v1483
      %v1492 = vpack.c.bf16 %v1484, %v1484
      %v1493 = vpack.c.bf16 %v1485, %v1485
      %v1494 = vpack.c.bf16 %v1486, %v1486
      %v1495 = vpack.c.bf16 %v1487, %v1487
      %v1504 = vunpack.c.l.b16 %v1488
      %v1505 = vunpack.c.l.b16 %v1489
      %v1506 = vunpack.c.l.b16 %v1490
      %v1507 = vunpack.c.l.b16 %v1491
      %v1508 = vunpack.c.l.b16 %v1492
      %v1509 = vunpack.c.l.b16 %v1493
      %v1510 = vunpack.c.l.b16 %v1494
      %v1511 = vunpack.c.l.b16 %v1495
      %v1512 = vpack.c.b16 %v1505, %v1504
      %v1513 = vpack.c.b16 %v1507, %v1506
      %v1514 = vpack.c.b16 %v1509, %v1508
      %v1515 = vpack.c.b16 %v1511, %v1510
      %1516 = vrot.lane.b32.xlu0 %v1512, 28
      %v1517 = vpop.permute.xlu0 %1516
      %1518 = vrot.lane.b32.xlu0 %v1513, 28
      %v1519 = vpop.permute.xlu0 %1518
      %1520 = vrot.lane.b32.xlu0 %v1514, 28
      %v1521 = vpop.permute.xlu0 %1520
      %1522 = vrot.lane.b32.xlu0 %v1515, 28
      %v1523 = vpop.permute.xlu0 %1522
      %v1524 = vrot.slane %v1517, 4
      %v1525 = vrot.slane %v1519, 4
      %v1526 = vrot.slane %v1521, 4
      %v1527 = vrot.slane %v1523, 4
      %v1528 = vsel %vm375, %v1524, %v1525
      %vm1529 = vcmask 228352
      %v1530 = vsel %vm1529, %v1517, %v1528
      %v1531 = vsel %vm375, %v1525, %v1526
      %v1532 = vsel %vm1529, %v1519, %v1531
      %v1533 = vsel %vm375, %v1526, %v1527
      %v1534 = vsel %vm1529, %v1521, %v1533
      %v1535 = vsel %vm1529, %v1523, %v1527
      %1540 = vst [vmem:[#allocation2 + $0x260] sm:$0xff] %v1530
      %1541 = vst [vmem:[#allocation2 + $0x268] sm:$0xff] %v1532
      %1542 = vst [vmem:[#allocation2 + $0x270] sm:$0xff] %v1534
      %1543 = vst.msk [vmem:[#allocation2 + $0x278] sm:$0xff] %vm325, %v1535
      %v1544 = vld [vmem:[%s273 + $0x8] sm:$0xff]
      %v1545 = vld [vmem:[%s273 + $0x10] sm:$0xff]
      %v1546 = vld [vmem:[%s273 + $0x18] sm:$0xff]
      %v1547 = vld [vmem:[%s273 + $0x20] sm:$0xff]
      %v1548 = vld [vmem:[%s273 + $0x28] sm:$0xff]
      %v1549 = vld [vmem:[%s273 + $0x30] sm:$0xff]
      %v1550 = vld [vmem:[%s273 + $0x38] sm:$0xff]
      %v1551 = vld [vmem:[%s273 + $0x40] sm:$0xff]
      %v1552 = vpack.c.bf16 %v1544, %v1544
      %v1553 = vpack.c.bf16 %v1545, %v1545
      %v1554 = vpack.c.bf16 %v1546, %v1546
      %v1555 = vpack.c.bf16 %v1547, %v1547
      %v1556 = vpack.c.bf16 %v1548, %v1548
      %v1557 = vpack.c.bf16 %v1549, %v1549
      %v1558 = vpack.c.bf16 %v1550, %v1550
      %v1559 = vpack.c.bf16 %v1551, %v1551
      %v1568 = vunpack.c.l.b16 %v1552
      %v1569 = vunpack.c.l.b16 %v1553
      %v1570 = vunpack.c.l.b16 %v1554
      %v1571 = vunpack.c.l.b16 %v1555
      %v1572 = vunpack.c.l.b16 %v1556
      %v1573 = vunpack.c.l.b16 %v1557
      %v1574 = vunpack.c.l.b16 %v1558
      %v1575 = vunpack.c.l.b16 %v1559
      %v1576 = vpack.c.b16 %v1569, %v1568
      %v1577 = vpack.c.b16 %v1571, %v1570
      %v1578 = vpack.c.b16 %v1573, %v1572
      %v1579 = vpack.c.b16 %v1575, %v1574
      %1584 = vst [vmem:[#allocation2 + $0x280] sm:$0xff] %v1576
      %1585 = vst [vmem:[#allocation2 + $0x288] sm:$0xff] %v1577
      %1586 = vst [vmem:[#allocation2 + $0x290] sm:$0xff] %v1578
      %1587 = vst.msk [vmem:[#allocation2 + $0x298] sm:$0xff] %vm325, %v1579
      %v1588 = vld [vmem:[%s273 + $0x8] sm:$0xff]
      %v1589 = vld [vmem:[%s273 + $0x10] sm:$0xff]
      %v1590 = vld [vmem:[%s273 + $0x18] sm:$0xff]
      %v1591 = vld [vmem:[%s273 + $0x20] sm:$0xff]
      %v1592 = vld [vmem:[%s273 + $0x28] sm:$0xff]
      %v1593 = vld [vmem:[%s273 + $0x30] sm:$0xff]
      %v1594 = vld [vmem:[%s273 + $0x38] sm:$0xff]
      %v1595 = vld [vmem:[%s273 + $0x40] sm:$0xff]
      %v1596 = vpack.c.bf16 %v1588, %v1588
      %v1597 = vpack.c.bf16 %v1589, %v1589
      %v1598 = vpack.c.bf16 %v1590, %v1590
      %v1599 = vpack.c.bf16 %v1591, %v1591
      %v1600 = vpack.c.bf16 %v1592, %v1592
      %v1601 = vpack.c.bf16 %v1593, %v1593
      %v1602 = vpack.c.bf16 %v1594, %v1594
      %v1603 = vpack.c.bf16 %v1595, %v1595
      %v1612 = vunpack.c.l.b16 %v1596
      %v1613 = vunpack.c.l.b16 %v1597
      %v1614 = vunpack.c.l.b16 %v1598
      %v1615 = vunpack.c.l.b16 %v1599
      %v1616 = vunpack.c.l.b16 %v1600
      %v1617 = vunpack.c.l.b16 %v1601
      %v1618 = vunpack.c.l.b16 %v1602
      %v1619 = vunpack.c.l.b16 %v1603
      %v1620 = vpack.c.b16 %v1613, %v1612
      %v1621 = vpack.c.b16 %v1615, %v1614
      %v1622 = vpack.c.b16 %v1617, %v1616
      %v1623 = vpack.c.b16 %v1619, %v1618
      %1624 = vrot.lane.b32.xlu0 %v1620, 127
      %v1625 = vpop.permute.xlu0 %1624
      %1626 = vrot.lane.b32.xlu0 %v1621, 127
      %v1627 = vpop.permute.xlu0 %1626
      %1628 = vrot.lane.b32.xlu0 %v1622, 127
      %v1629 = vpop.permute.xlu0 %1628
      %1630 = vrot.lane.b32.xlu0 %v1623, 127
      %v1631 = vpop.permute.xlu0 %1630
      %v1632 = vrot.slane %v1625, 4
      %v1633 = vrot.slane %v1627, 4
      %v1634 = vrot.slane %v1629, 4
      %v1635 = vrot.slane %v1631, 4
      %v1636 = vsel %vm375, %v1632, %v1633
      %v1637 = vsel %vm377, %v1625, %v1636
      %v1638 = vsel %vm375, %v1633, %v1634
      %v1639 = vsel %vm377, %v1627, %v1638
      %v1640 = vsel %vm375, %v1634, %v1635
      %v1641 = vsel %vm377, %v1629, %v1640
      %v1642 = vsel %vm377, %v1631, %v1635
      %1647 = vst [vmem:[#allocation2 + $0x2a0] sm:$0xff] %v1637
      %1648 = vst [vmem:[#allocation2 + $0x2a8] sm:$0xff] %v1639
      %1649 = vst [vmem:[#allocation2 + $0x2b0] sm:$0xff] %v1641
      %1650 = vst.msk [vmem:[#allocation2 + $0x2b8] sm:$0xff] %vm325, %v1642
      %v1651 = vld [vmem:[%s273 + $0x8] sm:$0xff]
      %v1652 = vld [vmem:[%s273 + $0x10] sm:$0xff]
      %v1653 = vld [vmem:[%s273 + $0x18] sm:$0xff]
      %v1654 = vld [vmem:[%s273 + $0x20] sm:$0xff]
      %v1655 = vld [vmem:[%s273 + $0x28] sm:$0xff]
      %v1656 = vld [vmem:[%s273 + $0x30] sm:$0xff]
      %v1657 = vld [vmem:[%s273 + $0x38] sm:$0xff]
      %v1658 = vld [vmem:[%s273 + $0x40] sm:$0xff]
      %v1659 = vpack.c.bf16 %v1651, %v1651
      %v1660 = vpack.c.bf16 %v1652, %v1652
      %v1661 = vpack.c.bf16 %v1653, %v1653
      %v1662 = vpack.c.bf16 %v1654, %v1654
      %v1663 = vpack.c.bf16 %v1655, %v1655
      %v1664 = vpack.c.bf16 %v1656, %v1656
      %v1665 = vpack.c.bf16 %v1657, %v1657
      %v1666 = vpack.c.bf16 %v1658, %v1658
      %v1675 = vunpack.c.l.b16 %v1659
      %v1676 = vunpack.c.l.b16 %v1660
      %v1677 = vunpack.c.l.b16 %v1661
      %v1678 = vunpack.c.l.b16 %v1662
      %v1679 = vunpack.c.l.b16 %v1663
      %v1680 = vunpack.c.l.b16 %v1664
      %v1681 = vunpack.c.l.b16 %v1665
      %v1682 = vunpack.c.l.b16 %v1666
      %v1683 = vpack.c.b16 %v1676, %v1675
      %v1684 = vpack.c.b16 %v1678, %v1677
      %v1685 = vpack.c.b16 %v1680, %v1679
      %v1686 = vpack.c.b16 %v1682, %v1681
      %1687 = vrot.lane.b32.xlu0 %v1683, 126
      %v1688 = vpop.permute.xlu0 %1687
      %1689 = vrot.lane.b32.xlu0 %v1684, 126
      %v1690 = vpop.permute.xlu0 %1689
      %1691 = vrot.lane.b32.xlu0 %v1685, 126
      %v1692 = vpop.permute.xlu0 %1691
      %1693 = vrot.lane.b32.xlu0 %v1686, 126
      %v1694 = vpop.permute.xlu0 %1693
      %v1695 = vrot.slane %v1688, 4
      %v1696 = vrot.slane %v1690, 4
      %v1697 = vrot.slane %v1692, 4
      %v1698 = vrot.slane %v1694, 4
      %v1699 = vsel %vm375, %v1695, %v1696
      %v1700 = vsel %vm441, %v1688, %v1699
      %v1701 = vsel %vm375, %v1696, %v1697
      %v1702 = vsel %vm441, %v1690, %v1701
      %v1703 = vsel %vm375, %v1697, %v1698
      %v1704 = vsel %vm441, %v1692, %v1703
      %v1705 = vsel %vm441, %v1694, %v1698
      %1710 = vst [vmem:[#allocation2 + $0x2c0] sm:$0xff] %v1700
      %1711 = vst [vmem:[#allocation2 + $0x2c8] sm:$0xff] %v1702
      %1712 = vst [vmem:[#allocation2 + $0x2d0] sm:$0xff] %v1704
      %1713 = vst.msk [vmem:[#allocation2 + $0x2d8] sm:$0xff] %vm325, %v1705
      %v1714 = vld [vmem:[%s273 + $0x8] sm:$0xff]
      %v1715 = vld [vmem:[%s273 + $0x10] sm:$0xff]
      %v1716 = vld [vmem:[%s273 + $0x18] sm:$0xff]
      %v1717 = vld [vmem:[%s273 + $0x20] sm:$0xff]
      %v1718 = vld [vmem:[%s273 + $0x28] sm:$0xff]
      %v1719 = vld [vmem:[%s273 + $0x30] sm:$0xff]
      %v1720 = vld [vmem:[%s273 + $0x38] sm:$0xff]
      %v1721 = vld [vmem:[%s273 + $0x40] sm:$0xff]
      %v1722 = vpack.c.bf16 %v1714, %v1714
      %v1723 = vpack.c.bf16 %v1715, %v1715
      %v1724 = vpack.c.bf16 %v1716, %v1716
      %v1725 = vpack.c.bf16 %v1717, %v1717
      %v1726 = vpack.c.bf16 %v1718, %v1718
      %v1727 = vpack.c.bf16 %v1719, %v1719
      %v1728 = vpack.c.bf16 %v1720, %v1720
      %v1729 = vpack.c.bf16 %v1721, %v1721
      %v1738 = vunpack.c.l.b16 %v1722
      %v1739 = vunpack.c.l.b16 %v1723
      %v1740 = vunpack.c.l.b16 %v1724
      %v1741 = vunpack.c.l.b16 %v1725
      %v1742 = vunpack.c.l.b16 %v1726
      %v1743 = vunpack.c.l.b16 %v1727
      %v1744 = vunpack.c.l.b16 %v1728
      %v1745 = vunpack.c.l.b16 %v1729
      %v1746 = vpack.c.b16 %v1739, %v1738
      %v1747 = vpack.c.b16 %v1741, %v1740
      %v1748 = vpack.c.b16 %v1743, %v1742
      %v1749 = vpack.c.b16 %v1745, %v1744
      %1750 = vrot.lane.b32.xlu0 %v1746, 125
      %v1751 = vpop.permute.xlu0 %1750
      %1752 = vrot.lane.b32.xlu0 %v1747, 125
      %v1753 = vpop.permute.xlu0 %1752
      %1754 = vrot.lane.b32.xlu0 %v1748, 125
      %v1755 = vpop.permute.xlu0 %1754
      %1756 = vrot.lane.b32.xlu0 %v1749, 125
      %v1757 = vpop.permute.xlu0 %1756
      %v1758 = vrot.slane %v1751, 4
      %v1759 = vrot.slane %v1753, 4
      %v1760 = vrot.slane %v1755, 4
      %v1761 = vrot.slane %v1757, 4
      %v1762 = vsel %vm375, %v1758, %v1759
      %v1763 = vsel %vm505, %v1751, %v1762
      %v1764 = vsel %vm375, %v1759, %v1760
      %v1765 = vsel %vm505, %v1753, %v1764
      %v1766 = vsel %vm375, %v1760, %v1761
      %v1767 = vsel %vm505, %v1755, %v1766
      %v1768 = vsel %vm505, %v1757, %v1761
      %1773 = vst [vmem:[#allocation2 + $0x2e0] sm:$0xff] %v1763
      %1774 = vst [vmem:[#allocation2 + $0x2e8] sm:$0xff] %v1765
      %1775 = vst [vmem:[#allocation2 + $0x2f0] sm:$0xff] %v1767
      %1776 = vst.msk [vmem:[#allocation2 + $0x2f8] sm:$0xff] %vm325, %v1768
      %v1777 = vld [vmem:[%s273 + $0x8] sm:$0xff]
      %v1778 = vld [vmem:[%s273 + $0x10] sm:$0xff]
      %v1779 = vld [vmem:[%s273 + $0x18] sm:$0xff]
      %v1780 = vld [vmem:[%s273 + $0x20] sm:$0xff]
      %v1781 = vld [vmem:[%s273 + $0x28] sm:$0xff]
      %v1782 = vld [vmem:[%s273 + $0x30] sm:$0xff]
      %v1783 = vld [vmem:[%s273 + $0x38] sm:$0xff]
      %v1784 = vld [vmem:[%s273 + $0x40] sm:$0xff]
      %v1785 = vpack.c.bf16 %v1777, %v1777
      %v1786 = vpack.c.bf16 %v1778, %v1778
      %v1787 = vpack.c.bf16 %v1779, %v1779
      %v1788 = vpack.c.bf16 %v1780, %v1780
      %v1789 = vpack.c.bf16 %v1781, %v1781
      %v1790 = vpack.c.bf16 %v1782, %v1782
      %v1791 = vpack.c.bf16 %v1783, %v1783
      %v1792 = vpack.c.bf16 %v1784, %v1784
      %v1801 = vunpack.c.l.b16 %v1785
      %v1802 = vunpack.c.l.b16 %v1786
      %v1803 = vunpack.c.l.b16 %v1787
      %v1804 = vunpack.c.l.b16 %v1788
      %v1805 = vunpack.c.l.b16 %v1789
      %v1806 = vunpack.c.l.b16 %v1790
      %v1807 = vunpack.c.l.b16 %v1791
      %v1808 = vunpack.c.l.b16 %v1792
      %v1809 = vpack.c.b16 %v1802, %v1801
      %v1810 = vpack.c.b16 %v1804, %v1803
      %v1811 = vpack.c.b16 %v1806, %v1805
      %v1812 = vpack.c.b16 %v1808, %v1807
      %1813 = vrot.lane.b32.xlu0 %v1809, 124
      %v1814 = vpop.permute.xlu0 %1813
      %1815 = vrot.lane.b32.xlu0 %v1810, 124
      %v1816 = vpop.permute.xlu0 %1815
      %1817 = vrot.lane.b32.xlu0 %v1811, 124
      %v1818 = vpop.permute.xlu0 %1817
      %1819 = vrot.lane.b32.xlu0 %v1812, 124
      %v1820 = vpop.permute.xlu0 %1819
      %v1821 = vrot.slane %v1814, 4
      %v1822 = vrot.slane %v1816, 4
      %v1823 = vrot.slane %v1818, 4
      %v1824 = vrot.slane %v1820, 4
      %v1825 = vsel %vm375, %v1821, %v1822
      %v1826 = vsel %vm569, %v1814, %v1825
      %v1827 = vsel %vm375, %v1822, %v1823
      %v1828 = vsel %vm569, %v1816, %v1827
      %v1829 = vsel %vm375, %v1823, %v1824
      %v1830 = vsel %vm569, %v1818, %v1829
      %v1831 = vsel %vm569, %v1820, %v1824
      %1836 = vst [vmem:[#allocation2 + $0x300] sm:$0xff] %v1826
      %1837 = vst [vmem:[#allocation2 + $0x308] sm:$0xff] %v1828
      %1838 = vst [vmem:[#allocation2 + $0x310] sm:$0xff] %v1830
      %1839 = vst.msk [vmem:[#allocation2 + $0x318] sm:$0xff] %vm325, %v1831
      %v1840 = vld [vmem:[%s1] sm:$0xff]
      %v1841 = vld [vmem:[%s1 + $0x8] sm:$0xff]
      %v1842 = vld [vmem:[%s1 + $0x10] sm:$0xff]
      %v1843 = vld [vmem:[%s1 + $0x18] sm:$0xff]
      %v1844 = vld [vmem:[%s1 + $0x20] sm:$0xff]
      %v1845 = vld [vmem:[%s1 + $0x28] sm:$0xff]
      %v1846 = vld [vmem:[%s1 + $0x30] sm:$0xff]
      %v1847 = vld [vmem:[%s1 + $0x38] sm:$0xff]
      %v1848 = vld [vmem:[%s1 + $0x40] sm:$0xff]
      %v1849 = vld [vmem:[%s1 + $0x48] sm:$0xff]
      %v1850 = vld [vmem:[%s1 + $0x50] sm:$0xff]
      %v1851 = vld [vmem:[%s1 + $0x58] sm:$0xff]
      %v1852 = vld [vmem:[%s1 + $0x60] sm:$0xff]
      %v1853 = vld [vmem:[%s1 + $0x68] sm:$0xff]
      %v1854 = vld [vmem:[%s1 + $0x70] sm:$0xff]
      %v1855 = vld [vmem:[%s1 + $0x78] sm:$0xff]
      %v1856 = vld [vmem:[#allocation2] sm:$0xff]
      %v1857 = vld [vmem:[#allocation2 + $0x8] sm:$0xff]
      %v1858 = vld [vmem:[#allocation2 + $0x10] sm:$0xff]
      %v1859 = vld [vmem:[#allocation2 + $0x18] sm:$0xff]
      %v1860 = vld [vmem:[#allocation2 + $0x20] sm:$0xff]
      %v1861 = vld [vmem:[#allocation2 + $0x28] sm:$0xff]
      %v1862 = vld [vmem:[#allocation2 + $0x30] sm:$0xff]
      %v1863 = vld [vmem:[#allocation2 + $0x38] sm:$0xff]
      %v1864 = vld [vmem:[#allocation2 + $0x40] sm:$0xff]
      %v1865 = vld [vmem:[#allocation2 + $0x48] sm:$0xff]
      %v1866 = vld [vmem:[#allocation2 + $0x50] sm:$0xff]
      %v1867 = vld [vmem:[#allocation2 + $0x58] sm:$0xff]
      %v1868 = vld [vmem:[#allocation2 + $0x60] sm:$0xff]
      %v1869 = vld [vmem:[#allocation2 + $0x68] sm:$0xff]
      %v1870 = vld [vmem:[#allocation2 + $0x70] sm:$0xff]
      %v1871 = vld [vmem:[#allocation2 + $0x78] sm:$0xff]
      %v1872 = vld [vmem:[#allocation2 + $0x80] sm:$0xff]
      %v1873 = vld [vmem:[#allocation2 + $0x88] sm:$0xff]
      %v1874 = vld [vmem:[#allocation2 + $0x90] sm:$0xff]
      %v1875 = vld [vmem:[#allocation2 + $0x98] sm:$0xff]
      %v1876 = vld [vmem:[#allocation2 + $0xa0] sm:$0xff]
      %v1877 = vld [vmem:[#allocation2 + $0xa8] sm:$0xff]
      %v1878 = vld [vmem:[#allocation2 + $0xb0] sm:$0xff]
      %v1879 = vld [vmem:[#allocation2 + $0xb8] sm:$0xff]
      %v1880 = vld [vmem:[#allocation2 + $0xc0] sm:$0xff]
      %v1881 = vld [vmem:[#allocation2 + $0xc8] sm:$0xff]
      %v1882 = vld [vmem:[#allocation2 + $0xd0] sm:$0xff]
      %v1883 = vld [vmem:[#allocation2 + $0xd8] sm:$0xff]
      %v1884 = vld [vmem:[#allocation2 + $0xe0] sm:$0xff]
      %v1885 = vld [vmem:[#allocation2 + $0xe8] sm:$0xff]
      %v1886 = vld [vmem:[#allocation2 + $0xf0] sm:$0xff]
      %v1887 = vld [vmem:[#allocation2 + $0xf8] sm:$0xff]
      %v1888 = vld [vmem:[#allocation2 + $0x100] sm:$0xff]
      %v1889 = vld [vmem:[#allocation2 + $0x108] sm:$0xff]
      %v1890 = vld [vmem:[#allocation2 + $0x110] sm:$0xff]
      %v1891 = vld [vmem:[#allocation2 + $0x118] sm:$0xff]
      %v1892 = vld [vmem:[#allocation2 + $0x120] sm:$0xff]
      %v1893 = vld [vmem:[#allocation2 + $0x128] sm:$0xff]
      %v1894 = vld [vmem:[#allocation2 + $0x130] sm:$0xff]
      %v1895 = vld [vmem:[#allocation2 + $0x138] sm:$0xff]
      %v1896 = vld [vmem:[#allocation2 + $0x140] sm:$0xff]
      %v1897 = vld [vmem:[#allocation2 + $0x148] sm:$0xff]
      %v1898 = vld [vmem:[#allocation2 + $0x150] sm:$0xff]
      %v1899 = vld [vmem:[#allocation2 + $0x158] sm:$0xff]
      %v1900 = vld [vmem:[#allocation2 + $0x160] sm:$0xff]
      %v1901 = vld [vmem:[#allocation2 + $0x168] sm:$0xff]
      %v1902 = vld [vmem:[#allocation2 + $0x170] sm:$0xff]
      %v1903 = vld [vmem:[#allocation2 + $0x178] sm:$0xff]
      %v1904 = vld [vmem:[#allocation2 + $0x180] sm:$0xff]
      %v1905 = vld [vmem:[#allocation2 + $0x188] sm:$0xff]
      %v1906 = vld [vmem:[#allocation2 + $0x190] sm:$0xff]
      %v1907 = vld [vmem:[#allocation2 + $0x198] sm:$0xff]
      %v1908 = vld [vmem:[#allocation2 + $0x1a0] sm:$0xff]
      %v1909 = vld [vmem:[#allocation2 + $0x1a8] sm:$0xff]
      %v1910 = vld [vmem:[#allocation2 + $0x1b0] sm:$0xff]
      %v1911 = vld [vmem:[#allocation2 + $0x1b8] sm:$0xff]
      %v1912 = vld [vmem:[#allocation2 + $0x1c0] sm:$0xff]
      %v1913 = vld [vmem:[#allocation2 + $0x1c8] sm:$0xff]
      %v1914 = vld [vmem:[#allocation2 + $0x1d0] sm:$0xff]
      %v1915 = vld [vmem:[#allocation2 + $0x1d8] sm:$0xff]
      %v1916 = vld [vmem:[#allocation2 + $0x1e0] sm:$0xff]
      %v1917 = vld [vmem:[#allocation2 + $0x1e8] sm:$0xff]
      %v1918 = vld [vmem:[#allocation2 + $0x1f0] sm:$0xff]
      %v1919 = vld [vmem:[#allocation2 + $0x1f8] sm:$0xff]
      %v1920 = vld [vmem:[#allocation2 + $0x200] sm:$0xff]
      %v1921 = vld [vmem:[#allocation2 + $0x208] sm:$0xff]
      %v1922 = vld [vmem:[#allocation2 + $0x210] sm:$0xff]
      %v1923 = vld [vmem:[#allocation2 + $0x218] sm:$0xff]
      %v1924 = vld [vmem:[#allocation2 + $0x220] sm:$0xff]
      %v1925 = vld [vmem:[#allocation2 + $0x228] sm:$0xff]
      %v1926 = vld [vmem:[#allocation2 + $0x230] sm:$0xff]
      %v1927 = vld [vmem:[#allocation2 + $0x238] sm:$0xff]
      %v1928 = vld [vmem:[#allocation2 + $0x240] sm:$0xff]
      %v1929 = vld [vmem:[#allocation2 + $0x248] sm:$0xff]
      %v1930 = vld [vmem:[#allocation2 + $0x250] sm:$0xff]
      %v1931 = vld [vmem:[#allocation2 + $0x258] sm:$0xff]
      %v1932 = vld [vmem:[#allocation2 + $0x260] sm:$0xff]
      %v1933 = vld [vmem:[#allocation2 + $0x268] sm:$0xff]
      %v1934 = vld [vmem:[#allocation2 + $0x270] sm:$0xff]
      %v1935 = vld [vmem:[#allocation2 + $0x278] sm:$0xff]
      %v1936 = vld [vmem:[#allocation2 + $0x280] sm:$0xff]
      %v1937 = vld [vmem:[#allocation2 + $0x288] sm:$0xff]
      %v1938 = vld [vmem:[#allocation2 + $0x290] sm:$0xff]
      %v1939 = vld [vmem:[#allocation2 + $0x298] sm:$0xff]
      %v1940 = vld [vmem:[#allocation2 + $0x2a0] sm:$0xff]
      %v1941 = vld [vmem:[#allocation2 + $0x2a8] sm:$0xff]
      %v1942 = vld [vmem:[#allocation2 + $0x2b0] sm:$0xff]
      %v1943 = vld [vmem:[#allocation2 + $0x2b8] sm:$0xff]
      %v1944 = vld [vmem:[#allocation2 + $0x2c0] sm:$0xff]
      %v1945 = vld [vmem:[#allocation2 + $0x2c8] sm:$0xff]
      %v1946 = vld [vmem:[#allocation2 + $0x2d0] sm:$0xff]
      %v1947 = vld [vmem:[#allocation2 + $0x2d8] sm:$0xff]
      %v1948 = vld [vmem:[#allocation2 + $0x2e0] sm:$0xff]
      %v1949 = vld [vmem:[#allocation2 + $0x2e8] sm:$0xff]
      %v1950 = vld [vmem:[#allocation2 + $0x2f0] sm:$0xff]
      %v1951 = vld [vmem:[#allocation2 + $0x2f8] sm:$0xff]
      %v1952 = vld [vmem:[#allocation2 + $0x300] sm:$0xff]
      %v1953 = vld [vmem:[#allocation2 + $0x308] sm:$0xff]
      %v1954 = vld [vmem:[#allocation2 + $0x310] sm:$0xff]
      %v1955 = vld [vmem:[#allocation2 + $0x318] sm:$0xff]
      %v1972 = vunpack.c.l.b16 %v1840
      %v1973 = vunpack.c.h.b16 %v1840
      %v1974 = vunpack.c.l.b16 %v1841
      %v1975 = vunpack.c.h.b16 %v1841
      %v1976 = vunpack.c.l.b16 %v1842
      %v1977 = vunpack.c.h.b16 %v1842
      %v1978 = vunpack.c.l.b16 %v1843
      %v1979 = vunpack.c.h.b16 %v1843
      %v1980 = vunpack.c.l.b16 %v1844
      %v1981 = vunpack.c.h.b16 %v1844
      %v1982 = vunpack.c.l.b16 %v1845
      %v1983 = vunpack.c.h.b16 %v1845
      %v1984 = vunpack.c.l.b16 %v1846
      %v1985 = vunpack.c.h.b16 %v1846
      %v1986 = vunpack.c.l.b16 %v1847
      %v1987 = vunpack.c.h.b16 %v1847
      %v1988 = vunpack.c.l.b16 %v1848
      %v1989 = vunpack.c.h.b16 %v1848
      %v1990 = vunpack.c.l.b16 %v1849
      %v1991 = vunpack.c.h.b16 %v1849
      %v1992 = vunpack.c.l.b16 %v1850
      %v1993 = vunpack.c.h.b16 %v1850
      %v1994 = vunpack.c.l.b16 %v1851
      %v1995 = vunpack.c.h.b16 %v1851
      %v1996 = vunpack.c.l.b16 %v1852
      %v1997 = vunpack.c.h.b16 %v1852
      %v1998 = vunpack.c.l.b16 %v1853
      %v1999 = vunpack.c.h.b16 %v1853
      %v2000 = vunpack.c.l.b16 %v1854
      %v2001 = vunpack.c.h.b16 %v1854
      %v2002 = vunpack.c.l.b16 %v1855
      %v2003 = vunpack.c.h.b16 %v1855
      %v2004 = vpack.c.b16 %v1974, %v1972
      %v2005 = vpack.c.b16 %v1975, %v1973
      %v2006 = vpack.c.b16 %v1978, %v1976
      %v2007 = vpack.c.b16 %v1979, %v1977
      %v2008 = vpack.c.b16 %v1982, %v1980
      %v2009 = vpack.c.b16 %v1983, %v1981
      %v2010 = vpack.c.b16 %v1986, %v1984
      %v2011 = vpack.c.b16 %v1987, %v1985
      %v2012 = vpack.c.b16 %v1990, %v1988
      %v2013 = vpack.c.b16 %v1991, %v1989
      %v2014 = vpack.c.b16 %v1994, %v1992
      %v2015 = vpack.c.b16 %v1995, %v1993
      %v2016 = vpack.c.b16 %v1998, %v1996
      %v2017 = vpack.c.b16 %v1999, %v1997
      %v2018 = vpack.c.b16 %v2002, %v2000
      %v2019 = vpack.c.b16 %v2003, %v2001
      %v2128 = vunpack.c.l.b16 %v1856
      %v2129 = vunpack.c.h.b16 %v1856
      %v2130 = vunpack.c.l.b16 %v1857
      %v2131 = vunpack.c.h.b16 %v1857
      %v2132 = vunpack.c.l.b16 %v1858
      %v2133 = vunpack.c.h.b16 %v1858
      %v2134 = vunpack.c.l.b16 %v1859
      %v2135 = vunpack.c.h.b16 %v1859
      %v2136 = vunpack.c.l.b16 %v1860
      %v2137 = vunpack.c.h.b16 %v1860
      %v2138 = vunpack.c.l.b16 %v1861
      %v2139 = vunpack.c.h.b16 %v1861
      %v2140 = vunpack.c.l.b16 %v1862
      %v2141 = vunpack.c.h.b16 %v1862
      %v2142 = vunpack.c.l.b16 %v1863
      %v2143 = vunpack.c.h.b16 %v1863
      %v2144 = vunpack.c.l.b16 %v1864
      %v2145 = vunpack.c.h.b16 %v1864
      %v2146 = vunpack.c.l.b16 %v1865
      %v2147 = vunpack.c.h.b16 %v1865
      %v2148 = vunpack.c.l.b16 %v1866
      %v2149 = vunpack.c.h.b16 %v1866
      %v2150 = vunpack.c.l.b16 %v1867
      %v2151 = vunpack.c.h.b16 %v1867
      %v2152 = vunpack.c.l.b16 %v1868
      %v2153 = vunpack.c.h.b16 %v1868
      %v2154 = vunpack.c.l.b16 %v1869
      %v2155 = vunpack.c.h.b16 %v1869
      %v2156 = vunpack.c.l.b16 %v1870
      %v2157 = vunpack.c.h.b16 %v1870
      %v2158 = vunpack.c.l.b16 %v1871
      %v2159 = vunpack.c.h.b16 %v1871
      %v2160 = vunpack.c.l.b16 %v1872
      %v2161 = vunpack.c.h.b16 %v1872
      %v2162 = vunpack.c.l.b16 %v1873
      %v2163 = vunpack.c.h.b16 %v1873
      %v2164 = vunpack.c.l.b16 %v1874
      %v2165 = vunpack.c.h.b16 %v1874
      %v2166 = vunpack.c.l.b16 %v1875
      %v2167 = vunpack.c.h.b16 %v1875
      %v2168 = vunpack.c.l.b16 %v1876
      %v2169 = vunpack.c.h.b16 %v1876
      %v2170 = vunpack.c.l.b16 %v1877
      %v2171 = vunpack.c.h.b16 %v1877
      %v2172 = vunpack.c.l.b16 %v1878
      %v2173 = vunpack.c.h.b16 %v1878
      %v2174 = vunpack.c.l.b16 %v1879
      %v2175 = vunpack.c.h.b16 %v1879
      %v2176 = vunpack.c.l.b16 %v1880
      %v2177 = vunpack.c.h.b16 %v1880
      %v2178 = vunpack.c.l.b16 %v1881
      %v2179 = vunpack.c.h.b16 %v1881
      %v2180 = vunpack.c.l.b16 %v1882
      %v2181 = vunpack.c.h.b16 %v1882
      %v2182 = vunpack.c.l.b16 %v1883
      %v2183 = vunpack.c.h.b16 %v1883
      %v2184 = vunpack.c.l.b16 %v1884
      %v2185 = vunpack.c.h.b16 %v1884
      %v2186 = vunpack.c.l.b16 %v1885
      %v2187 = vunpack.c.h.b16 %v1885
      %v2188 = vunpack.c.l.b16 %v1886
      %v2189 = vunpack.c.h.b16 %v1886
      %v2190 = vunpack.c.l.b16 %v1887
      %v2191 = vunpack.c.h.b16 %v1887
      %v2192 = vunpack.c.l.b16 %v1888
      %v2193 = vunpack.c.h.b16 %v1888
      %v2194 = vunpack.c.l.b16 %v1889
      %v2195 = vunpack.c.h.b16 %v1889
      %v2196 = vunpack.c.l.b16 %v1890
      %v2197 = vunpack.c.h.b16 %v1890
      %v2198 = vunpack.c.l.b16 %v1891
      %v2199 = vunpack.c.h.b16 %v1891
      %v2200 = vunpack.c.l.b16 %v1892
      %v2201 = vunpack.c.h.b16 %v1892
      %v2202 = vunpack.c.l.b16 %v1893
      %v2203 = vunpack.c.h.b16 %v1893
      %v2204 = vunpack.c.l.b16 %v1894
      %v2205 = vunpack.c.h.b16 %v1894
      %v2206 = vunpack.c.l.b16 %v1895
      %v2207 = vunpack.c.h.b16 %v1895
      %v2208 = vunpack.c.l.b16 %v1896
      %v2209 = vunpack.c.h.b16 %v1896
      %v2210 = vunpack.c.l.b16 %v1897
      %v2211 = vunpack.c.h.b16 %v1897
      %v2212 = vunpack.c.l.b16 %v1898
      %v2213 = vunpack.c.h.b16 %v1898
      %v2214 = vunpack.c.l.b16 %v1899
      %v2215 = vunpack.c.h.b16 %v1899
      %v2216 = vunpack.c.l.b16 %v1900
      %v2217 = vunpack.c.h.b16 %v1900
      %v2218 = vunpack.c.l.b16 %v1901
      %v2219 = vunpack.c.h.b16 %v1901
      %v2220 = vunpack.c.l.b16 %v1902
      %v2221 = vunpack.c.h.b16 %v1902
      %v2222 = vunpack.c.l.b16 %v1903
      %v2223 = vunpack.c.h.b16 %v1903
      %v2224 = vunpack.c.l.b16 %v1904
      %v2225 = vunpack.c.h.b16 %v1904
      %v2226 = vunpack.c.l.b16 %v1905
      %v2227 = vunpack.c.h.b16 %v1905
      %v2228 = vunpack.c.l.b16 %v1906
      %v2229 = vunpack.c.h.b16 %v1906
      %v2230 = vunpack.c.l.b16 %v1907
      %v2231 = vunpack.c.h.b16 %v1907
      %v2232 = vunpack.c.l.b16 %v1908
      %v2233 = vunpack.c.h.b16 %v1908
      %v2234 = vunpack.c.l.b16 %v1909
      %v2235 = vunpack.c.h.b16 %v1909
      %v2236 = vunpack.c.l.b16 %v1910
      %v2237 = vunpack.c.h.b16 %v1910
      %v2238 = vunpack.c.l.b16 %v1911
      %v2239 = vunpack.c.h.b16 %v1911
      %v2240 = vunpack.c.l.b16 %v1912
      %v2241 = vunpack.c.h.b16 %v1912
      %v2242 = vunpack.c.l.b16 %v1913
      %v2243 = vunpack.c.h.b16 %v1913
      %v2244 = vunpack.c.l.b16 %v1914
      %v2245 = vunpack.c.h.b16 %v1914
      %v2246 = vunpack.c.l.b16 %v1915
      %v2247 = vunpack.c.h.b16 %v1915
      %v2248 = vunpack.c.l.b16 %v1916
      %v2249 = vunpack.c.h.b16 %v1916
      %v2250 = vunpack.c.l.b16 %v1917
      %v2251 = vunpack.c.h.b16 %v1917
      %v2252 = vunpack.c.l.b16 %v1918
      %v2253 = vunpack.c.h.b16 %v1918
      %v2254 = vunpack.c.l.b16 %v1919
      %v2255 = vunpack.c.h.b16 %v1919
      %v2256 = vunpack.c.l.b16 %v1920
      %v2257 = vunpack.c.h.b16 %v1920
      %v2258 = vunpack.c.l.b16 %v1921
      %v2259 = vunpack.c.h.b16 %v1921
      %v2260 = vunpack.c.l.b16 %v1922
      %v2261 = vunpack.c.h.b16 %v1922
      %v2262 = vunpack.c.l.b16 %v1923
      %v2263 = vunpack.c.h.b16 %v1923
      %v2264 = vunpack.c.l.b16 %v1924
      %v2265 = vunpack.c.h.b16 %v1924
      %v2266 = vunpack.c.l.b16 %v1925
      %v2267 = vunpack.c.h.b16 %v1925
      %v2268 = vunpack.c.l.b16 %v1926
      %v2269 = vunpack.c.h.b16 %v1926
      %v2270 = vunpack.c.l.b16 %v1927
      %v2271 = vunpack.c.h.b16 %v1927
      %v2272 = vunpack.c.l.b16 %v1928
      %v2273 = vunpack.c.h.b16 %v1928
      %v2274 = vunpack.c.l.b16 %v1929
      %v2275 = vunpack.c.h.b16 %v1929
      %v2276 = vunpack.c.l.b16 %v1930
      %v2277 = vunpack.c.h.b16 %v1930
      %v2278 = vunpack.c.l.b16 %v1931
      %v2279 = vunpack.c.h.b16 %v1931
      %v2280 = vunpack.c.l.b16 %v1932
      %v2281 = vunpack.c.h.b16 %v1932
      %v2282 = vunpack.c.l.b16 %v1933
      %v2283 = vunpack.c.h.b16 %v1933
      %v2284 = vunpack.c.l.b16 %v1934
      %v2285 = vunpack.c.h.b16 %v1934
      %v2286 = vunpack.c.l.b16 %v1935
      %v2287 = vunpack.c.h.b16 %v1935
      %v2288 = vunpack.c.l.b16 %v1936
      %v2289 = vunpack.c.h.b16 %v1936
      %v2290 = vunpack.c.l.b16 %v1937
      %v2291 = vunpack.c.h.b16 %v1937
      %v2292 = vunpack.c.l.b16 %v1938
      %v2293 = vunpack.c.h.b16 %v1938
      %v2294 = vunpack.c.l.b16 %v1939
      %v2295 = vunpack.c.h.b16 %v1939
      %v2296 = vunpack.c.l.b16 %v1940
      %v2297 = vunpack.c.h.b16 %v1940
      %v2298 = vunpack.c.l.b16 %v1941
      %v2299 = vunpack.c.h.b16 %v1941
      %v2300 = vunpack.c.l.b16 %v1942
      %v2301 = vunpack.c.h.b16 %v1942
      %v2302 = vunpack.c.l.b16 %v1943
      %v2303 = vunpack.c.h.b16 %v1943
      %v2304 = vunpack.c.l.b16 %v1944
      %v2305 = vunpack.c.h.b16 %v1944
      %v2306 = vunpack.c.l.b16 %v1945
      %v2307 = vunpack.c.h.b16 %v1945
      %v2308 = vunpack.c.l.b16 %v1946
      %v2309 = vunpack.c.h.b16 %v1946
      %v2310 = vunpack.c.l.b16 %v1947
      %v2311 = vunpack.c.h.b16 %v1947
      %v2312 = vunpack.c.l.b16 %v1948
      %v2313 = vunpack.c.h.b16 %v1948
      %v2314 = vunpack.c.l.b16 %v1949
      %v2315 = vunpack.c.h.b16 %v1949
      %v2316 = vunpack.c.l.b16 %v1950
      %v2317 = vunpack.c.h.b16 %v1950
      %v2318 = vunpack.c.l.b16 %v1951
      %v2319 = vunpack.c.h.b16 %v1951
      %v2320 = vunpack.c.l.b16 %v1952
      %v2321 = vunpack.c.h.b16 %v1952
      %v2322 = vunpack.c.l.b16 %v1953
      %v2323 = vunpack.c.h.b16 %v1953
      %v2324 = vunpack.c.l.b16 %v1954
      %v2325 = vunpack.c.h.b16 %v1954
      %v2326 = vunpack.c.l.b16 %v1955
      %v2327 = vunpack.c.h.b16 %v1955
      %v2328 = vpack.c.b16 %v2136, %v2128
      %v2329 = vpack.c.b16 %v2137, %v2129
      %v2330 = vpack.c.b16 %v2138, %v2130
      %v2331 = vpack.c.b16 %v2139, %v2131
      %v2332 = vpack.c.b16 %v2140, %v2132
      %v2333 = vpack.c.b16 %v2141, %v2133
      %v2334 = vpack.c.b16 %v2142, %v2134
      %v2335 = vpack.c.b16 %v2143, %v2135
      %v2336 = vpack.c.b16 %v2152, %v2144
      %v2337 = vpack.c.b16 %v2153, %v2145
      %v2338 = vpack.c.b16 %v2154, %v2146
      %v2339 = vpack.c.b16 %v2155, %v2147
      %v2340 = vpack.c.b16 %v2156, %v2148
      %v2341 = vpack.c.b16 %v2157, %v2149
      %v2342 = vpack.c.b16 %v2158, %v2150
      %v2343 = vpack.c.b16 %v2159, %v2151
      %v2344 = vpack.c.b16 %v2168, %v2160
      %v2345 = vpack.c.b16 %v2169, %v2161
      %v2346 = vpack.c.b16 %v2170, %v2162
      %v2347 = vpack.c.b16 %v2171, %v2163
      %v2348 = vpack.c.b16 %v2172, %v2164
      %v2349 = vpack.c.b16 %v2173, %v2165
      %v2350 = vpack.c.b16 %v2174, %v2166
      %v2351 = vpack.c.b16 %v2175, %v2167
      %v2352 = vpack.c.b16 %v2184, %v2176
      %v2353 = vpack.c.b16 %v2185, %v2177
      %v2354 = vpack.c.b16 %v2186, %v2178
      %v2355 = vpack.c.b16 %v2187, %v2179
      %v2356 = vpack.c.b16 %v2188, %v2180
      %v2357 = vpack.c.b16 %v2189, %v2181
      %v2358 = vpack.c.b16 %v2190, %v2182
      %v2359 = vpack.c.b16 %v2191, %v2183
      %v2360 = vpack.c.b16 %v2200, %v2192
      %v2361 = vpack.c.b16 %v2201, %v2193
      %v2362 = vpack.c.b16 %v2202, %v2194
      %v2363 = vpack.c.b16 %v2203, %v2195
      %v2364 = vpack.c.b16 %v2204, %v2196
      %v2365 = vpack.c.b16 %v2205, %v2197
      %v2366 = vpack.c.b16 %v2206, %v2198
      %v2367 = vpack.c.b16 %v2207, %v2199
      %v2368 = vpack.c.b16 %v2216, %v2208
      %v2369 = vpack.c.b16 %v2217, %v2209
      %v2370 = vpack.c.b16 %v2218, %v2210
      %v2371 = vpack.c.b16 %v2219, %v2211
      %v2372 = vpack.c.b16 %v2220, %v2212
      %v2373 = vpack.c.b16 %v2221, %v2213
      %v2374 = vpack.c.b16 %v2222, %v2214
      %v2375 = vpack.c.b16 %v2223, %v2215
      %v2376 = vpack.c.b16 %v2232, %v2224
      %v2377 = vpack.c.b16 %v2233, %v2225
      %v2378 = vpack.c.b16 %v2234, %v2226
      %v2379 = vpack.c.b16 %v2235, %v2227
      %v2380 = vpack.c.b16 %v2236, %v2228
      %v2381 = vpack.c.b16 %v2237, %v2229
      %v2382 = vpack.c.b16 %v2238, %v2230
      %v2383 = vpack.c.b16 %v2239, %v2231
      %v2384 = vpack.c.b16 %v2248, %v2240
      %v2385 = vpack.c.b16 %v2249, %v2241
      %v2386 = vpack.c.b16 %v2250, %v2242
      %v2387 = vpack.c.b16 %v2251, %v2243
      %v2388 = vpack.c.b16 %v2252, %v2244
      %v2389 = vpack.c.b16 %v2253, %v2245
      %v2390 = vpack.c.b16 %v2254, %v2246
      %v2391 = vpack.c.b16 %v2255, %v2247
      %v2392 = vpack.c.b16 %v2264, %v2256
      %v2393 = vpack.c.b16 %v2265, %v2257
      %v2394 = vpack.c.b16 %v2266, %v2258
      %v2395 = vpack.c.b16 %v2267, %v2259
      %v2396 = vpack.c.b16 %v2268, %v2260
      %v2397 = vpack.c.b16 %v2269, %v2261
      %v2398 = vpack.c.b16 %v2270, %v2262
      %v2399 = vpack.c.b16 %v2271, %v2263
      %v2400 = vpack.c.b16 %v2280, %v2272
      %v2401 = vpack.c.b16 %v2281, %v2273
      %v2402 = vpack.c.b16 %v2282, %v2274
      %v2403 = vpack.c.b16 %v2283, %v2275
      %v2404 = vpack.c.b16 %v2284, %v2276
      %v2405 = vpack.c.b16 %v2285, %v2277
      %v2406 = vpack.c.b16 %v2286, %v2278
      %v2407 = vpack.c.b16 %v2287, %v2279
      %v2408 = vpack.c.b16 %v2296, %v2288
      %v2409 = vpack.c.b16 %v2297, %v2289
      %v2410 = vpack.c.b16 %v2298, %v2290
      %v2411 = vpack.c.b16 %v2299, %v2291
      %v2412 = vpack.c.b16 %v2300, %v2292
      %v2413 = vpack.c.b16 %v2301, %v2293
      %v2414 = vpack.c.b16 %v2302, %v2294
      %v2415 = vpack.c.b16 %v2303, %v2295
      %v2416 = vpack.c.b16 %v2312, %v2304
      %v2417 = vpack.c.b16 %v2313, %v2305
      %v2418 = vpack.c.b16 %v2314, %v2306
      %v2419 = vpack.c.b16 %v2315, %v2307
      %v2420 = vpack.c.b16 %v2316, %v2308
      %v2421 = vpack.c.b16 %v2317, %v2309
      %v2422 = vpack.c.b16 %v2318, %v2310
      %v2423 = vpack.c.b16 %v2319, %v2311
      %v2424 = vpack.c.b16 %v2320, %v2320
      %v2425 = vpack.c.b16 %v2321, %v2321
      %v2426 = vpack.c.b16 %v2322, %v2322
      %v2427 = vpack.c.b16 %v2323, %v2323
      %v2428 = vpack.c.b16 %v2324, %v2324
      %v2429 = vpack.c.b16 %v2325, %v2325
      %v2430 = vpack.c.b16 %v2326, %v2326
      %v2431 = vpack.c.b16 %v2327, %v2327
      %vm2528 = vcmask 588800
      %v2530 = vsel %vm2528, %v2005, 0
      %v2533 = vsel %vm2528, %v2007, 0
      %v2536 = vsel %vm2528, %v2009, 0
      %v2539 = vsel %vm2528, %v2011, 0
      %v2542 = vsel %vm2528, %v2013, 0
      %v2545 = vsel %vm2528, %v2015, 0
      %v2548 = vsel %vm2528, %v2017, 0
      %v2551 = vsel %vm2528, %v2019, 0
      %v2554 = vsel %vm323, %v2424, 0
      %v2557 = vsel %vm323, %v2425, 0
      %v2560 = vsel %vm323, %v2426, 0
      %v2563 = vsel %vm323, %v2427, 0
      %v2566 = vsel %vm323, %v2428, 0
      %v2569 = vsel %vm323, %v2429, 0
      %v2572 = vsel %vm323, %v2430, 0
      %v2575 = vsel %vm323, %v2431, 0
      %2577 = vmatprep.subr.bf16.mxu0 %v2329
      %2578 = vmatpush1.bf16.msra.mxu0 %v2328
      %2579 = vmatprep.subr.bf16.mxu0 %v2337
      %2580 = vmatpush1.bf16.msra.mxu0 %v2336
      %2581 = vmatprep.subr.bf16.mxu0 %v2345
      %2582 = vmatpush1.bf16.msra.mxu0 %v2344
      %2583 = vmatprep.subr.bf16.mxu0 %v2353
      %2584 = vmatpush1.bf16.msra.mxu0 %v2352
      %2585 = vmatprep.subr.bf16.mxu0 %v2361
      %2586 = vmatpush1.bf16.msra.mxu0 %v2360
      %2587 = vmatprep.subr.bf16.mxu0 %v2369
      %2588 = vmatpush1.bf16.msra.mxu0 %v2368
      %2589 = vmatprep.subr.bf16.mxu0 %v2377
      %2590 = vmatpush1.bf16.msra.mxu0 %v2376
      %2591 = vmatprep.subr.bf16.mxu0 %v2385
      %2592 = vmatpush1.bf16.msra.mxu0 %v2384
      %2593 = vmatprep.subr.bf16.mxu0 %v2393
      %2594 = vmatpush1.bf16.msra.mxu0 %v2392
      %2595 = vmatprep.subr.bf16.mxu0 %v2401
      %2596 = vmatpush1.bf16.msra.mxu0 %v2400
      %2597 = vmatprep.subr.bf16.mxu0 %v2409
      %2598 = vmatpush1.bf16.msra.mxu0 %v2408
      %2599 = vmatprep.subr.bf16.mxu0 %v2417
      %2600 = vmatpush1.bf16.msra.mxu0 %v2416
      %2601 = vmatprep.subr.bf16.mxu0 %v2557
      %2602 = vmatpush1.bf16.msra.mxu0 %v2554
      %2603 = vmatprep.subr.bf16.mxu0 0
      %2604 = vmatpush1.bf16.msra.mxu0 0
      %2605 = vmatprep.subr.bf16.mxu0 0
      %2606 = vmatpush1.bf16.msra.mxu0 0
      %2607 = vmatprep.subr.bf16.mxu0 0
      %2608 = vmatpush1.bf16.msra.mxu0 0
      %2609 = vmatprep.mubr.bf16.mxu0 %v2530
      %2610 = vmatmul.mubr.bf16.gmra.mrb[0].mxu0 %v2004
      %v2611 = vpop.f32.mrb[0].mxu0
      %v2612 = vadd.f32 0.0, %v2611
      %v2613 = vpop.f32.mrb[0].mxu0
      %v2614 = vadd.f32 0.0, %v2613
      %v2615 = vpop.f32.mrb[0].mxu0
      %v2616 = vadd.f32 0.0, %v2615
      %v2617 = vpop.f32.mrb[0].mxu0
      %v2618 = vadd.f32 0.0, %v2617
      %2619 = vmatprep.mubr.bf16.mxu0 %v2533
      %2620 = vmatmul.mubr.bf16.gmra.mrb[0].mxu0 %v2006
      %v2621 = vpop.f32.mrb[0].mxu0
      %v2622 = vadd.f32 0.0, %v2621
      %v2623 = vpop.f32.mrb[0].mxu0
      %v2624 = vadd.f32 0.0, %v2623
      %v2625 = vpop.f32.mrb[0].mxu0
      %v2626 = vadd.f32 0.0, %v2625
      %v2627 = vpop.f32.mrb[0].mxu0
      %v2628 = vadd.f32 0.0, %v2627
      %2629 = vmatprep.mubr.bf16.mxu0 %v2536
      %2630 = vmatmul.mubr.bf16.gmra.mrb[0].mxu0 %v2008
      %v2631 = vpop.f32.mrb[0].mxu0
      %v2632 = vadd.f32 0.0, %v2631
      %v2633 = vpop.f32.mrb[0].mxu0
      %v2634 = vadd.f32 0.0, %v2633
      %v2635 = vpop.f32.mrb[0].mxu0
      %v2636 = vadd.f32 0.0, %v2635
      %v2637 = vpop.f32.mrb[0].mxu0
      %v2638 = vadd.f32 0.0, %v2637
      %2639 = vmatprep.mubr.bf16.mxu0 %v2539
      %2640 = vmatmul.mubr.bf16.gmra.mrb[0].mxu0 %v2010
      %v2641 = vpop.f32.mrb[0].mxu0
      %v2642 = vadd.f32 0.0, %v2641
      %v2643 = vpop.f32.mrb[0].mxu0
      %v2644 = vadd.f32 0.0, %v2643
      %v2645 = vpop.f32.mrb[0].mxu0
      %v2646 = vadd.f32 0.0, %v2645
      %v2647 = vpop.f32.mrb[0].mxu0
      %v2648 = vadd.f32 0.0, %v2647
      %2649 = vmatprep.mubr.bf16.mxu0 %v2542
      %2650 = vmatmul.mubr.bf16.gmra.mrb[0].mxu0 %v2012
      %v2651 = vpop.f32.mrb[0].mxu0
      %v2652 = vadd.f32 0.0, %v2651
      %v2653 = vpop.f32.mrb[0].mxu0
      %v2654 = vadd.f32 0.0, %v2653
      %v2655 = vpop.f32.mrb[0].mxu0
      %v2656 = vadd.f32 0.0, %v2655
      %v2657 = vpop.f32.mrb[0].mxu0
      %v2658 = vadd.f32 0.0, %v2657
      %2659 = vmatprep.mubr.bf16.mxu0 %v2545
      %2660 = vmatmul.mubr.bf16.gmra.mrb[0].mxu0 %v2014
      %v2661 = vpop.f32.mrb[0].mxu0
      %v2662 = vadd.f32 0.0, %v2661
      %v2663 = vpop.f32.mrb[0].mxu0
      %v2664 = vadd.f32 0.0, %v2663
      %v2665 = vpop.f32.mrb[0].mxu0
      %v2666 = vadd.f32 0.0, %v2665
      %v2667 = vpop.f32.mrb[0].mxu0
      %v2668 = vadd.f32 0.0, %v2667
      %2669 = vmatprep.mubr.bf16.mxu0 %v2548
      %2670 = vmatmul.mubr.bf16.gmra.mrb[0].mxu0 %v2016
      %v2671 = vpop.f32.mrb[0].mxu0
      %v2672 = vadd.f32 0.0, %v2671
      %v2673 = vpop.f32.mrb[0].mxu0
      %v2674 = vadd.f32 0.0, %v2673
      %v2675 = vpop.f32.mrb[0].mxu0
      %v2676 = vadd.f32 0.0, %v2675
      %v2677 = vpop.f32.mrb[0].mxu0
      %v2678 = vadd.f32 0.0, %v2677
      %2679 = vmatprep.mubr.bf16.mxu0 %v2551
      %2680 = vmatmul.mubr.bf16.gmra.mrb[0].mxu0 %v2018
      %v2681 = vpop.f32.mrb[0].mxu0
      %v2682 = vadd.f32 0.0, %v2681
      %v2683 = vpop.f32.mrb[0].mxu0
      %v2684 = vadd.f32 0.0, %v2683
      %v2685 = vpop.f32.mrb[0].mxu0
      %v2686 = vadd.f32 0.0, %v2685
      %v2687 = vpop.f32.mrb[0].mxu0
      %v2688 = vadd.f32 0.0, %v2687
      %2689 = vdwg.mxu0
      %2690 = vmatprep.subr.bf16.mxu0 %v2331
      %2691 = vmatpush1.bf16.msra.mxu0 %v2330
      %2692 = vmatprep.subr.bf16.mxu0 %v2339
      %2693 = vmatpush1.bf16.msra.mxu0 %v2338
      %2694 = vmatprep.subr.bf16.mxu0 %v2347
      %2695 = vmatpush1.bf16.msra.mxu0 %v2346
      %2696 = vmatprep.subr.bf16.mxu0 %v2355
      %2697 = vmatpush1.bf16.msra.mxu0 %v2354
      %2698 = vmatprep.subr.bf16.mxu0 %v2363
      %2699 = vmatpush1.bf16.msra.mxu0 %v2362
      %2700 = vmatprep.subr.bf16.mxu0 %v2371
      %2701 = vmatpush1.bf16.msra.mxu0 %v2370
      %2702 = vmatprep.subr.bf16.mxu0 %v2379
      %2703 = vmatpush1.bf16.msra.mxu0 %v2378
      %2704 = vmatprep.subr.bf16.mxu0 %v2387
      %2705 = vmatpush1.bf16.msra.mxu0 %v2386
      %2706 = vmatprep.subr.bf16.mxu0 %v2395
      %2707 = vmatpush1.bf16.msra.mxu0 %v2394
      %2708 = vmatprep.subr.bf16.mxu0 %v2403
      %2709 = vmatpush1.bf16.msra.mxu0 %v2402
      %2710 = vmatprep.subr.bf16.mxu0 %v2411
      %2711 = vmatpush1.bf16.msra.mxu0 %v2410
      %2712 = vmatprep.subr.bf16.mxu0 %v2419
      %2713 = vmatpush1.bf16.msra.mxu0 %v2418
      %2714 = vmatprep.subr.bf16.mxu0 %v2563
      %2715 = vmatpush1.bf16.msra.mxu0 %v2560
      %2716 = vmatprep.subr.bf16.mxu0 0
      %2717 = vmatpush1.bf16.msra.mxu0 0
      %2718 = vmatprep.subr.bf16.mxu0 0
      %2719 = vmatpush1.bf16.msra.mxu0 0
      %2720 = vmatprep.subr.bf16.mxu0 0
      %2721 = vmatpush1.bf16.msra.mxu0 0
      %2722 = vmatprep.mubr.bf16.mxu0 %v2530
      %2723 = vmatmul.mubr.bf16.gmra.mrb[0].mxu0 %v2004
      %v2724 = vpop.f32.mrb[0].mxu0
      %v2725 = vadd.f32 0.0, %v2724
      %v2726 = vpop.f32.mrb[0].mxu0
      %v2727 = vadd.f32 0.0, %v2726
      %v2728 = vpop.f32.mrb[0].mxu0
      %v2729 = vadd.f32 0.0, %v2728
      %v2730 = vpop.f32.mrb[0].mxu0
      %v2731 = vadd.f32 0.0, %v2730
      %2732 = vmatprep.mubr.bf16.mxu0 %v2533
      %2733 = vmatmul.mubr.bf16.gmra.mrb[0].mxu0 %v2006
      %v2734 = vpop.f32.mrb[0].mxu0
      %v2735 = vadd.f32 0.0, %v2734
      %v2736 = vpop.f32.mrb[0].mxu0
      %v2737 = vadd.f32 0.0, %v2736
      %v2738 = vpop.f32.mrb[0].mxu0
      %v2739 = vadd.f32 0.0, %v2738
      %v2740 = vpop.f32.mrb[0].mxu0
      %v2741 = vadd.f32 0.0, %v2740
      %2742 = vmatprep.mubr.bf16.mxu0 %v2536
      %2743 = vmatmul.mubr.bf16.gmra.mrb[0].mxu0 %v2008
      %v2744 = vpop.f32.mrb[0].mxu0
      %v2745 = vadd.f32 0.0, %v2744
      %v2746 = vpop.f32.mrb[0].mxu0
      %v2747 = vadd.f32 0.0, %v2746
      %v2748 = vpop.f32.mrb[0].mxu0
      %v2749 = vadd.f32 0.0, %v2748
      %v2750 = vpop.f32.mrb[0].mxu0
      %v2751 = vadd.f32 0.0, %v2750
      %2752 = vmatprep.mubr.bf16.mxu0 %v2539
      %2753 = vmatmul.mubr.bf16.gmra.mrb[0].mxu0 %v2010
      %v2754 = vpop.f32.mrb[0].mxu0
      %v2755 = vadd.f32 0.0, %v2754
      %v2756 = vpop.f32.mrb[0].mxu0
      %v2757 = vadd.f32 0.0, %v2756
      %v2758 = vpop.f32.mrb[0].mxu0
      %v2759 = vadd.f32 0.0, %v2758
      %v2760 = vpop.f32.mrb[0].mxu0
      %v2761 = vadd.f32 0.0, %v2760
      %2762 = vmatprep.mubr.bf16.mxu0 %v2542
      %2763 = vmatmul.mubr.bf16.gmra.mrb[0].mxu0 %v2012
      %v2764 = vpop.f32.mrb[0].mxu0
      %v2765 = vadd.f32 0.0, %v2764
      %v2766 = vpop.f32.mrb[0].mxu0
      %v2767 = vadd.f32 0.0, %v2766
      %v2768 = vpop.f32.mrb[0].mxu0
      %v2769 = vadd.f32 0.0, %v2768
      %v2770 = vpop.f32.mrb[0].mxu0
      %v2771 = vadd.f32 0.0, %v2770
      %2772 = vmatprep.mubr.bf16.mxu0 %v2545
      %2773 = vmatmul.mubr.bf16.gmra.mrb[0].mxu0 %v2014
      %v2774 = vpop.f32.mrb[0].mxu0
      %v2775 = vadd.f32 0.0, %v2774
      %v2776 = vpop.f32.mrb[0].mxu0
      %v2777 = vadd.f32 0.0, %v2776
      %v2778 = vpop.f32.mrb[0].mxu0
      %v2779 = vadd.f32 0.0, %v2778
      %v2780 = vpop.f32.mrb[0].mxu0
      %v2781 = vadd.f32 0.0, %v2780
      %2782 = vmatprep.mubr.bf16.mxu0 %v2548
      %2783 = vmatmul.mubr.bf16.gmra.mrb[0].mxu0 %v2016
      %v2784 = vpop.f32.mrb[0].mxu0
      %v2785 = vadd.f32 0.0, %v2784
      %v2786 = vpop.f32.mrb[0].mxu0
      %v2787 = vadd.f32 0.0, %v2786
      %v2788 = vpop.f32.mrb[0].mxu0
      %v2789 = vadd.f32 0.0, %v2788
      %v2790 = vpop.f32.mrb[0].mxu0
      %v2791 = vadd.f32 0.0, %v2790
      %2792 = vmatprep.mubr.bf16.mxu0 %v2551
      %2793 = vmatmul.mubr.bf16.gmra.mrb[0].mxu0 %v2018
      %v2794 = vpop.f32.mrb[0].mxu0
      %v2795 = vadd.f32 0.0, %v2794
      %v2796 = vpop.f32.mrb[0].mxu0
      %v2797 = vadd.f32 0.0, %v2796
      %v2798 = vpop.f32.mrb[0].mxu0
      %v2799 = vadd.f32 0.0, %v2798
      %v2800 = vpop.f32.mrb[0].mxu0
      %v2801 = vadd.f32 0.0, %v2800
      %2802 = vdwg.mxu0
      %2803 = vmatprep.subr.bf16.mxu0 %v2333
      %2804 = vmatpush1.bf16.msra.mxu0 %v2332
      %2805 = vmatprep.subr.bf16.mxu0 %v2341
      %2806 = vmatpush1.bf16.msra.mxu0 %v2340
      %2807 = vmatprep.subr.bf16.mxu0 %v2349
      %2808 = vmatpush1.bf16.msra.mxu0 %v2348
      %2809 = vmatprep.subr.bf16.mxu0 %v2357
      %2810 = vmatpush1.bf16.msra.mxu0 %v2356
      %2811 = vmatprep.subr.bf16.mxu0 %v2365
      %2812 = vmatpush1.bf16.msra.mxu0 %v2364
      %2813 = vmatprep.subr.bf16.mxu0 %v2373
      %2814 = vmatpush1.bf16.msra.mxu0 %v2372
      %2815 = vmatprep.subr.bf16.mxu0 %v2381
      %2816 = vmatpush1.bf16.msra.mxu0 %v2380
      %2817 = vmatprep.subr.bf16.mxu0 %v2389
      %2818 = vmatpush1.bf16.msra.mxu0 %v2388
      %2819 = vmatprep.subr.bf16.mxu0 %v2397
      %2820 = vmatpush1.bf16.msra.mxu0 %v2396
      %2821 = vmatprep.subr.bf16.mxu0 %v2405
      %2822 = vmatpush1.bf16.msra.mxu0 %v2404
      %2823 = vmatprep.subr.bf16.mxu0 %v2413
      %2824 = vmatpush1.bf16.msra.mxu0 %v2412
      %2825 = vmatprep.subr.bf16.mxu0 %v2421
      %2826 = vmatpush1.bf16.msra.mxu0 %v2420
      %2827 = vmatprep.subr.bf16.mxu0 %v2569
      %2828 = vmatpush1.bf16.msra.mxu0 %v2566
      %2829 = vmatprep.subr.bf16.mxu0 0
      %2830 = vmatpush1.bf16.msra.mxu0 0
      %2831 = vmatprep.subr.bf16.mxu0 0
      %2832 = vmatpush1.bf16.msra.mxu0 0
      %2833 = vmatprep.subr.bf16.mxu0 0
      %2834 = vmatpush1.bf16.msra.mxu0 0
      %2835 = vmatprep.mubr.bf16.mxu0 %v2530
      %2836 = vmatmul.mubr.bf16.gmra.mrb[0].mxu0 %v2004
      %v2837 = vpop.f32.mrb[0].mxu0
      %v2838 = vadd.f32 0.0, %v2837
      %v2839 = vpop.f32.mrb[0].mxu0
      %v2840 = vadd.f32 0.0, %v2839
      %v2841 = vpop.f32.mrb[0].mxu0
      %v2842 = vadd.f32 0.0, %v2841
      %v2843 = vpop.f32.mrb[0].mxu0
      %v2844 = vadd.f32 0.0, %v2843
      %2845 = vmatprep.mubr.bf16.mxu0 %v2533
      %2846 = vmatmul.mubr.bf16.gmra.mrb[0].mxu0 %v2006
      %v2847 = vpop.f32.mrb[0].mxu0
      %v2848 = vadd.f32 0.0, %v2847
      %v2849 = vpop.f32.mrb[0].mxu0
      %v2850 = vadd.f32 0.0, %v2849
      %v2851 = vpop.f32.mrb[0].mxu0
      %v2852 = vadd.f32 0.0, %v2851
      %v2853 = vpop.f32.mrb[0].mxu0
      %v2854 = vadd.f32 0.0, %v2853
      %2855 = vmatprep.mubr.bf16.mxu0 %v2536
      %2856 = vmatmul.mubr.bf16.gmra.mrb[0].mxu0 %v2008
      %v2857 = vpop.f32.mrb[0].mxu0
      %v2858 = vadd.f32 0.0, %v2857
      %v2859 = vpop.f32.mrb[0].mxu0
      %v2860 = vadd.f32 0.0, %v2859
      %v2861 = vpop.f32.mrb[0].mxu0
      %v2862 = vadd.f32 0.0, %v2861
      %v2863 = vpop.f32.mrb[0].mxu0
      %v2864 = vadd.f32 0.0, %v2863
      %2865 = vmatprep.mubr.bf16.mxu0 %v2539
      %2866 = vmatmul.mubr.bf16.gmra.mrb[0].mxu0 %v2010
      %v2867 = vpop.f32.mrb[0].mxu0
      %v2868 = vadd.f32 0.0, %v2867
      %v2869 = vpop.f32.mrb[0].mxu0
      %v2870 = vadd.f32 0.0, %v2869
      %v2871 = vpop.f32.mrb[0].mxu0
      %v2872 = vadd.f32 0.0, %v2871
      %v2873 = vpop.f32.mrb[0].mxu0
      %v2874 = vadd.f32 0.0, %v2873
      %2875 = vmatprep.mubr.bf16.mxu0 %v2542
      %2876 = vmatmul.mubr.bf16.gmra.mrb[0].mxu0 %v2012
      %v2877 = vpop.f32.mrb[0].mxu0
      %v2878 = vadd.f32 0.0, %v2877
      %v2879 = vpop.f32.mrb[0].mxu0
      %v2880 = vadd.f32 0.0, %v2879
      %v2881 = vpop.f32.mrb[0].mxu0
      %v2882 = vadd.f32 0.0, %v2881
      %v2883 = vpop.f32.mrb[0].mxu0
      %v2884 = vadd.f32 0.0, %v2883
      %2885 = vmatprep.mubr.bf16.mxu0 %v2545
      %2886 = vmatmul.mubr.bf16.gmra.mrb[0].mxu0 %v2014
      %v2887 = vpop.f32.mrb[0].mxu0
      %v2888 = vadd.f32 0.0, %v2887
      %v2889 = vpop.f32.mrb[0].mxu0
      %v2890 = vadd.f32 0.0, %v2889
      %v2891 = vpop.f32.mrb[0].mxu0
      %v2892 = vadd.f32 0.0, %v2891
      %v2893 = vpop.f32.mrb[0].mxu0
      %v2894 = vadd.f32 0.0, %v2893
      %2895 = vmatprep.mubr.bf16.mxu0 %v2548
      %2896 = vmatmul.mubr.bf16.gmra.mrb[0].mxu0 %v2016
      %v2897 = vpop.f32.mrb[0].mxu0
      %v2898 = vadd.f32 0.0, %v2897
      %v2899 = vpop.f32.mrb[0].mxu0
      %v2900 = vadd.f32 0.0, %v2899
      %v2901 = vpop.f32.mrb[0].mxu0
      %v2902 = vadd.f32 0.0, %v2901
      %v2903 = vpop.f32.mrb[0].mxu0
      %v2904 = vadd.f32 0.0, %v2903
      %2905 = vmatprep.mubr.bf16.mxu0 %v2551
      %2906 = vmatmul.mubr.bf16.gmra.mrb[0].mxu0 %v2018
      %v2907 = vpop.f32.mrb[0].mxu0
      %v2908 = vadd.f32 0.0, %v2907
      %v2909 = vpop.f32.mrb[0].mxu0
      %v2910 = vadd.f32 0.0, %v2909
      %v2911 = vpop.f32.mrb[0].mxu0
      %v2912 = vadd.f32 0.0, %v2911
      %v2913 = vpop.f32.mrb[0].mxu0
      %v2914 = vadd.f32 0.0, %v2913
      %2915 = vdwg.mxu0
      %2916 = vmatprep.subr.bf16.mxu0 %v2335
      %2917 = vmatpush1.bf16.msra.mxu0 %v2334
      %2918 = vmatprep.subr.bf16.mxu0 %v2343
      %2919 = vmatpush1.bf16.msra.mxu0 %v2342
      %2920 = vmatprep.subr.bf16.mxu0 %v2351
      %2921 = vmatpush1.bf16.msra.mxu0 %v2350
      %2922 = vmatprep.subr.bf16.mxu0 %v2359
      %2923 = vmatpush1.bf16.msra.mxu0 %v2358
      %2924 = vmatprep.subr.bf16.mxu0 %v2367
      %2925 = vmatpush1.bf16.msra.mxu0 %v2366
      %2926 = vmatprep.subr.bf16.mxu0 %v2375
      %2927 = vmatpush1.bf16.msra.mxu0 %v2374
      %2928 = vmatprep.subr.bf16.mxu0 %v2383
      %2929 = vmatpush1.bf16.msra.mxu0 %v2382
      %2930 = vmatprep.subr.bf16.mxu0 %v2391
      %2931 = vmatpush1.bf16.msra.mxu0 %v2390
      %2932 = vmatprep.subr.bf16.mxu0 %v2399
      %2933 = vmatpush1.bf16.msra.mxu0 %v2398
      %2934 = vmatprep.subr.bf16.mxu0 %v2407
      %2935 = vmatpush1.bf16.msra.mxu0 %v2406
      %2936 = vmatprep.subr.bf16.mxu0 %v2415
      %2937 = vmatpush1.bf16.msra.mxu0 %v2414
      %2938 = vmatprep.subr.bf16.mxu0 %v2423
      %2939 = vmatpush1.bf16.msra.mxu0 %v2422
      %2940 = vmatprep.subr.bf16.mxu0 %v2575
      %2941 = vmatpush1.bf16.msra.mxu0 %v2572
      %2942 = vmatprep.subr.bf16.mxu0 0
      %2943 = vmatpush1.bf16.msra.mxu0 0
      %2944 = vmatprep.subr.bf16.mxu0 0
      %2945 = vmatpush1.bf16.msra.mxu0 0
      %2946 = vmatprep.subr.bf16.mxu0 0
      %2947 = vmatpush1.bf16.msra.mxu0 0
      %2948 = vmatprep.mubr.bf16.mxu0 %v2530
      %2949 = vmatmul.mubr.bf16.gmra.mrb[0].mxu0 %v2004
      %v2950 = vpop.f32.mrb[0].mxu0
      %v2951 = vadd.f32 0.0, %v2950
      %v2952 = vpop.f32.mrb[0].mxu0
      %v2953 = vadd.f32 0.0, %v2952
      %v2954 = vpop.f32.mrb[0].mxu0
      %v2955 = vadd.f32 0.0, %v2954
      %v2956 = vpop.f32.mrb[0].mxu0
      %v2957 = vadd.f32 0.0, %v2956
      %2958 = vmatprep.mubr.bf16.mxu0 %v2533
      %2959 = vmatmul.mubr.bf16.gmra.mrb[0].mxu0 %v2006
      %v2960 = vpop.f32.mrb[0].mxu0
      %v2961 = vadd.f32 0.0, %v2960
      %v2962 = vpop.f32.mrb[0].mxu0
      %v2963 = vadd.f32 0.0, %v2962
      %v2964 = vpop.f32.mrb[0].mxu0
      %v2965 = vadd.f32 0.0, %v2964
      %v2966 = vpop.f32.mrb[0].mxu0
      %v2967 = vadd.f32 0.0, %v2966
      %2968 = vmatprep.mubr.bf16.mxu0 %v2536
      %2969 = vmatmul.mubr.bf16.gmra.mrb[0].mxu0 %v2008
      %v2970 = vpop.f32.mrb[0].mxu0
      %v2971 = vadd.f32 0.0, %v2970
      %v2972 = vpop.f32.mrb[0].mxu0
      %v2973 = vadd.f32 0.0, %v2972
      %v2974 = vpop.f32.mrb[0].mxu0
      %v2975 = vadd.f32 0.0, %v2974
      %v2976 = vpop.f32.mrb[0].mxu0
      %v2977 = vadd.f32 0.0, %v2976
      %2978 = vmatprep.mubr.bf16.mxu0 %v2539
      %2979 = vmatmul.mubr.bf16.gmra.mrb[0].mxu0 %v2010
      %v2980 = vpop.f32.mrb[0].mxu0
      %v2981 = vadd.f32 0.0, %v2980
      %v2982 = vpop.f32.mrb[0].mxu0
      %v2983 = vadd.f32 0.0, %v2982
      %v2984 = vpop.f32.mrb[0].mxu0
      %v2985 = vadd.f32 0.0, %v2984
      %v2986 = vpop.f32.mrb[0].mxu0
      %v2987 = vadd.f32 0.0, %v2986
      %2988 = vmatprep.mubr.bf16.mxu0 %v2542
      %2989 = vmatmul.mubr.bf16.gmra.mrb[0].mxu0 %v2012
      %v2990 = vpop.f32.mrb[0].mxu0
      %v2991 = vadd.f32 0.0, %v2990
      %v2992 = vpop.f32.mrb[0].mxu0
      %v2993 = vadd.f32 0.0, %v2992
      %v2994 = vpop.f32.mrb[0].mxu0
      %v2995 = vadd.f32 0.0, %v2994
      %v2996 = vpop.f32.mrb[0].mxu0
      %v2997 = vadd.f32 0.0, %v2996
      %2998 = vmatprep.mubr.bf16.mxu0 %v2545
      %2999 = vmatmul.mubr.bf16.gmra.mrb[0].mxu0 %v2014
      %v3000 = vpop.f32.mrb[0].mxu0
      %v3001 = vadd.f32 0.0, %v3000
      %v3002 = vpop.f32.mrb[0].mxu0
      %v3003 = vadd.f32 0.0, %v3002
      %v3004 = vpop.f32.mrb[0].mxu0
      %v3005 = vadd.f32 0.0, %v3004
      %v3006 = vpop.f32.mrb[0].mxu0
      %v3007 = vadd.f32 0.0, %v3006
      %3008 = vmatprep.mubr.bf16.mxu0 %v2548
      %3009 = vmatmul.mubr.bf16.gmra.mrb[0].mxu0 %v2016
      %v3010 = vpop.f32.mrb[0].mxu0
      %v3011 = vadd.f32 0.0, %v3010
      %v3012 = vpop.f32.mrb[0].mxu0
      %v3013 = vadd.f32 0.0, %v3012
      %v3014 = vpop.f32.mrb[0].mxu0
      %v3015 = vadd.f32 0.0, %v3014
      %v3016 = vpop.f32.mrb[0].mxu0
      %v3017 = vadd.f32 0.0, %v3016
      %3018 = vmatprep.mubr.bf16.mxu0 %v2551
      %3019 = vmatmul.mubr.bf16.gmra.mrb[0].mxu0 %v2018
      %v3020 = vpop.f32.mrb[0].mxu0
      %v3021 = vadd.f32 0.0, %v3020
      %v3022 = vpop.f32.mrb[0].mxu0
      %v3023 = vadd.f32 0.0, %v3022
      %v3024 = vpop.f32.mrb[0].mxu0
      %v3025 = vadd.f32 0.0, %v3024
      %v3026 = vpop.f32.mrb[0].mxu0
      %v3027 = vadd.f32 0.0, %v3026
      %3028 = vdwg.mxu0
      %3029 = vst [vmem:[#allocation3] sm:$0xff] %v2612
      %3030 = vst [vmem:[#allocation3 + $0x8] sm:$0xff] %v2614
      %3031 = vst [vmem:[#allocation3 + $0x10] sm:$0xff] %v2725
      %3032 = vst [vmem:[#allocation3 + $0x18] sm:$0xff] %v2727
      %3033 = vst [vmem:[#allocation3 + $0x20] sm:$0xff] %v2838
      %3034 = vst [vmem:[#allocation3 + $0x28] sm:$0xff] %v2840
      %3035 = vst [vmem:[#allocation3 + $0x30] sm:$0xff] %v2951
      %vm3036 = vcmask 64512
      %3037 = vst.msk [vmem:[#allocation3 + $0x38] sm:$0xff] %vm3036, %v2953
      %3038 = vst [vmem:[#allocation3 + $0x40] sm:$0xff] %v2616
      %3039 = vst [vmem:[#allocation3 + $0x48] sm:$0xff] %v2618
      %3040 = vst [vmem:[#allocation3 + $0x50] sm:$0xff] %v2729
      %3041 = vst [vmem:[#allocation3 + $0x58] sm:$0xff] %v2731
      %3042 = vst [vmem:[#allocation3 + $0x60] sm:$0xff] %v2842
      %3043 = vst [vmem:[#allocation3 + $0x68] sm:$0xff] %v2844
      %3044 = vst [vmem:[#allocation3 + $0x70] sm:$0xff] %v2955
      %3045 = vst.msk [vmem:[#allocation3 + $0x78] sm:$0xff] %vm3036, %v2957
      %3046 = vst [vmem:[#allocation3 + $0x80] sm:$0xff] %v2622
      %3047 = vst [vmem:[#allocation3 + $0x88] sm:$0xff] %v2624
      %3048 = vst [vmem:[#allocation3 + $0x90] sm:$0xff] %v2735
      %3049 = vst [vmem:[#allocation3 + $0x98] sm:$0xff] %v2737
      %3050 = vst [vmem:[#allocation3 + $0xa0] sm:$0xff] %v2848
      %3051 = vst [vmem:[#allocation3 + $0xa8] sm:$0xff] %v2850
      %3052 = vst [vmem:[#allocation3 + $0xb0] sm:$0xff] %v2961
      %3053 = vst.msk [vmem:[#allocation3 + $0xb8] sm:$0xff] %vm3036, %v2963
      %3054 = vst [vmem:[#allocation3 + $0xc0] sm:$0xff] %v2626
      %3055 = vst [vmem:[#allocation3 + $0xc8] sm:$0xff] %v2628
      %3056 = vst [vmem:[#allocation3 + $0xd0] sm:$0xff] %v2739
      %3057 = vst [vmem:[#allocation3 + $0xd8] sm:$0xff] %v2741
      %3058 = vst [vmem:[#allocation3 + $0xe0] sm:$0xff] %v2852
      %3059 = vst [vmem:[#allocation3 + $0xe8] sm:$0xff] %v2854
      %3060 = vst [vmem:[#allocation3 + $0xf0] sm:$0xff] %v2965
      %3061 = vst.msk [vmem:[#allocation3 + $0xf8] sm:$0xff] %vm3036, %v2967
      %3062 = vst [vmem:[#allocation3 + $0x100] sm:$0xff] %v2632
      %3063 = vst [vmem:[#allocation3 + $0x108] sm:$0xff] %v2634
      %3064 = vst [vmem:[#allocation3 + $0x110] sm:$0xff] %v2745
      %3065 = vst [vmem:[#allocation3 + $0x118] sm:$0xff] %v2747
      %3066 = vst [vmem:[#allocation3 + $0x120] sm:$0xff] %v2858
      %3067 = vst [vmem:[#allocation3 + $0x128] sm:$0xff] %v2860
      %3068 = vst [vmem:[#allocation3 + $0x130] sm:$0xff] %v2971
      %3069 = vst.msk [vmem:[#allocation3 + $0x138] sm:$0xff] %vm3036, %v2973
      %3070 = vst [vmem:[#allocation3 + $0x140] sm:$0xff] %v2636
      %3071 = vst [vmem:[#allocation3 + $0x148] sm:$0xff] %v2638
      %3072 = vst [vmem:[#allocation3 + $0x150] sm:$0xff] %v2749
      %3073 = vst [vmem:[#allocation3 + $0x158] sm:$0xff] %v2751
      %3074 = vst [vmem:[#allocation3 + $0x160] sm:$0xff] %v2862
      %3075 = vst [vmem:[#allocation3 + $0x168] sm:$0xff] %v2864
      %3076 = vst [vmem:[#allocation3 + $0x170] sm:$0xff] %v2975
      %3077 = vst.msk [vmem:[#allocation3 + $0x178] sm:$0xff] %vm3036, %v2977
      %3078 = vst [vmem:[#allocation3 + $0x180] sm:$0xff] %v2642
      %3079 = vst [vmem:[#allocation3 + $0x188] sm:$0xff] %v2644
      %3080 = vst [vmem:[#allocation3 + $0x190] sm:$0xff] %v2755
      %3081 = vst [vmem:[#allocation3 + $0x198] sm:$0xff] %v2757
      %3082 = vst [vmem:[#allocation3 + $0x1a0] sm:$0xff] %v2868
      %3083 = vst [vmem:[#allocation3 + $0x1a8] sm:$0xff] %v2870
      %3084 = vst [vmem:[#allocation3 + $0x1b0] sm:$0xff] %v2981
      %3085 = vst.msk [vmem:[#allocation3 + $0x1b8] sm:$0xff] %vm3036, %v2983
      %3086 = vst [vmem:[#allocation3 + $0x1c0] sm:$0xff] %v2646
      %3087 = vst [vmem:[#allocation3 + $0x1c8] sm:$0xff] %v2648
      %3088 = vst [vmem:[#allocation3 + $0x1d0] sm:$0xff] %v2759
      %3089 = vst [vmem:[#allocation3 + $0x1d8] sm:$0xff] %v2761
      %3090 = vst [vmem:[#allocation3 + $0x1e0] sm:$0xff] %v2872
      %3091 = vst [vmem:[#allocation3 + $0x1e8] sm:$0xff] %v2874
      %3092 = vst [vmem:[#allocation3 + $0x1f0] sm:$0xff] %v2985
      %3093 = vst.msk [vmem:[#allocation3 + $0x1f8] sm:$0xff] %vm3036, %v2987
      %3094 = vst [vmem:[#allocation3 + $0x200] sm:$0xff] %v2652
      %3095 = vst [vmem:[#allocation3 + $0x208] sm:$0xff] %v2654
      %3096 = vst [vmem:[#allocation3 + $0x210] sm:$0xff] %v2765
      %3097 = vst [vmem:[#allocation3 + $0x218] sm:$0xff] %v2767
      %3098 = vst [vmem:[#allocation3 + $0x220] sm:$0xff] %v2878
      %3099 = vst [vmem:[#allocation3 + $0x228] sm:$0xff] %v2880
      %3100 = vst [vmem:[#allocation3 + $0x230] sm:$0xff] %v2991
      %3101 = vst.msk [vmem:[#allocation3 + $0x238] sm:$0xff] %vm3036, %v2993
      %3102 = vst [vmem:[#allocation3 + $0x240] sm:$0xff] %v2656
      %3103 = vst [vmem:[#allocation3 + $0x248] sm:$0xff] %v2658
      %3104 = vst [vmem:[#allocation3 + $0x250] sm:$0xff] %v2769
      %3105 = vst [vmem:[#allocation3 + $0x258] sm:$0xff] %v2771
      %3106 = vst [vmem:[#allocation3 + $0x260] sm:$0xff] %v2882
      %3107 = vst [vmem:[#allocation3 + $0x268] sm:$0xff] %v2884
      %3108 = vst [vmem:[#allocation3 + $0x270] sm:$0xff] %v2995
      %3109 = vst.msk [vmem:[#allocation3 + $0x278] sm:$0xff] %vm3036, %v2997
      %3110 = vst [vmem:[#allocation3 + $0x280] sm:$0xff] %v2662
      %3111 = vst [vmem:[#allocation3 + $0x288] sm:$0xff] %v2664
      %3112 = vst [vmem:[#allocation3 + $0x290] sm:$0xff] %v2775
      %3113 = vst [vmem:[#allocation3 + $0x298] sm:$0xff] %v2777
      %3114 = vst [vmem:[#allocation3 + $0x2a0] sm:$0xff] %v2888
      %3115 = vst [vmem:[#allocation3 + $0x2a8] sm:$0xff] %v2890
      %3116 = vst [vmem:[#allocation3 + $0x2b0] sm:$0xff] %v3001
      %3117 = vst.msk [vmem:[#allocation3 + $0x2b8] sm:$0xff] %vm3036, %v3003
      %3118 = vst [vmem:[#allocation3 + $0x2c0] sm:$0xff] %v2666
      %3119 = vst [vmem:[#allocation3 + $0x2c8] sm:$0xff] %v2668
      %3120 = vst [vmem:[#allocation3 + $0x2d0] sm:$0xff] %v2779
      %3121 = vst [vmem:[#allocation3 + $0x2d8] sm:$0xff] %v2781
      %3122 = vst [vmem:[#allocation3 + $0x2e0] sm:$0xff] %v2892
      %3123 = vst [vmem:[#allocation3 + $0x2e8] sm:$0xff] %v2894
      %3124 = vst [vmem:[#allocation3 + $0x2f0] sm:$0xff] %v3005
      %3125 = vst.msk [vmem:[#allocation3 + $0x2f8] sm:$0xff] %vm3036, %v3007
      %3126 = vst [vmem:[#allocation3 + $0x300] sm:$0xff] %v2672
      %3127 = vst [vmem:[#allocation3 + $0x308] sm:$0xff] %v2674
      %3128 = vst [vmem:[#allocation3 + $0x310] sm:$0xff] %v2785
      %3129 = vst [vmem:[#allocation3 + $0x318] sm:$0xff] %v2787
      %3130 = vst [vmem:[#allocation3 + $0x320] sm:$0xff] %v2898
      %3131 = vst [vmem:[#allocation3 + $0x328] sm:$0xff] %v2900
      %3132 = vst [vmem:[#allocation3 + $0x330] sm:$0xff] %v3011
      %3133 = vst.msk [vmem:[#allocation3 + $0x338] sm:$0xff] %vm3036, %v3013
      %3134 = vst [vmem:[#allocation3 + $0x340] sm:$0xff] %v2676
      %3135 = vst [vmem:[#allocation3 + $0x348] sm:$0xff] %v2678
      %3136 = vst [vmem:[#allocation3 + $0x350] sm:$0xff] %v2789
      %3137 = vst [vmem:[#allocation3 + $0x358] sm:$0xff] %v2791
      %3138 = vst [vmem:[#allocation3 + $0x360] sm:$0xff] %v2902
      %3139 = vst [vmem:[#allocation3 + $0x368] sm:$0xff] %v2904
      %3140 = vst [vmem:[#allocation3 + $0x370] sm:$0xff] %v3015
      %3141 = vst.msk [vmem:[#allocation3 + $0x378] sm:$0xff] %vm3036, %v3017
      %3142 = vst [vmem:[#allocation3 + $0x380] sm:$0xff] %v2682
      %3143 = vst [vmem:[#allocation3 + $0x388] sm:$0xff] %v2684
      %3144 = vst [vmem:[#allocation3 + $0x390] sm:$0xff] %v2795
      %3145 = vst [vmem:[#allocation3 + $0x398] sm:$0xff] %v2797
      %3146 = vst [vmem:[#allocation3 + $0x3a0] sm:$0xff] %v2908
      %3147 = vst [vmem:[#allocation3 + $0x3a8] sm:$0xff] %v2910
      %3148 = vst [vmem:[#allocation3 + $0x3b0] sm:$0xff] %v3021
      %3149 = vst.msk [vmem:[#allocation3 + $0x3b8] sm:$0xff] %vm3036, %v3023
      %3150 = vst [vmem:[#allocation3 + $0x3c0] sm:$0xff] %v2686
      %3151 = vst [vmem:[#allocation3 + $0x3c8] sm:$0xff] %v2688
      %3152 = vst [vmem:[#allocation3 + $0x3d0] sm:$0xff] %v2799
      %3153 = vst [vmem:[#allocation3 + $0x3d8] sm:$0xff] %v2801
      %3154 = vst [vmem:[#allocation3 + $0x3e0] sm:$0xff] %v2912
      %3155 = vst [vmem:[#allocation3 + $0x3e8] sm:$0xff] %v2914
      %3156 = vst [vmem:[#allocation3 + $0x3f0] sm:$0xff] %v3025
      %3157 = vst.msk [vmem:[#allocation3 + $0x3f8] sm:$0xff] %vm3036, %v3027
      loop: start=0, step=1, limit=8
      $region49: #{tpu_custom_call.1} parent=47 // loop_pre_header
        _
      $region50: #{tpu_custom_call.1} parent=47 // loop_header
        %s3159 = sphi 0, %s3163
        %p3160 = scmp.ge.s32.totalorder %s3159, 8
      $region51: #{tpu_custom_call.1} parent=47 // loop_header_branch
        %3162 = sbr.rel (%p3160) target = $region55
      $region52: #{tpu_custom_call.1} parent=47 // loop_body
        %s3164 = smul.u32 %s3159, 16
        %s3165 = sshra.s32 %s3164, 3
        %s3166 = sand.u32 %s3164, 7
        %s3167 = smul.u32 %s3165, 8
        %s3168 = smul.addr %s3167, 8
        %s3169 = scalar_lea.vmem [#allocation3], %s3168
        %v3170 = vld [vmem:[%s3169] sm:$0xff]
        %v3171 = vld [vmem:[%s3169 + $0x8] sm:$0xff]
        %v3172 = vld [vmem:[%s3169 + $0x10] sm:$0xff]
        %v3173 = vld [vmem:[%s3169 + $0x18] sm:$0xff]
        %v3174 = vld [vmem:[%s3169 + $0x20] sm:$0xff]
        %v3175 = vld [vmem:[%s3169 + $0x28] sm:$0xff]
        %v3176 = vld [vmem:[%s3169 + $0x30] sm:$0xff]
        %v3177 = vld [vmem:[%s3169 + $0x38] sm:$0xff]
        %v3178 = vld [vmem:[%s3169 + $0x40] sm:$0xff]
        %v3179 = vld [vmem:[%s3169 + $0x48] sm:$0xff]
        %v3180 = vld [vmem:[%s3169 + $0x50] sm:$0xff]
        %v3181 = vld [vmem:[%s3169 + $0x58] sm:$0xff]
        %v3182 = vld [vmem:[%s3169 + $0x60] sm:$0xff]
        %v3183 = vld [vmem:[%s3169 + $0x68] sm:$0xff]
        %v3184 = vld [vmem:[%s3169 + $0x70] sm:$0xff]
        %v3185 = vld [vmem:[%s3169 + $0x78] sm:$0xff]
        %3200 = vrot.lane.b32.xlu0 %v3170, 127
        %v3201 = vpop.permute.xlu0 %3200
        %3202 = vrot.lane.b32.xlu0 %v3171, 127
        %v3203 = vpop.permute.xlu0 %3202
        %3204 = vrot.lane.b32.xlu0 %v3172, 127
        %v3205 = vpop.permute.xlu0 %3204
        %3206 = vrot.lane.b32.xlu0 %v3173, 127
        %v3207 = vpop.permute.xlu0 %3206
        %3208 = vrot.lane.b32.xlu0 %v3174, 127
        %v3209 = vpop.permute.xlu0 %3208
        %3210 = vrot.lane.b32.xlu0 %v3175, 127
        %v3211 = vpop.permute.xlu0 %3210
        %3212 = vrot.lane.b32.xlu0 %v3176, 127
        %v3213 = vpop.permute.xlu0 %3212
        %3214 = vrot.lane.b32.xlu0 %v3178, 127
        %v3215 = vpop.permute.xlu0 %3214
        %3216 = vrot.lane.b32.xlu0 %v3179, 127
        %v3217 = vpop.permute.xlu0 %3216
        %3218 = vrot.lane.b32.xlu0 %v3180, 127
        %v3219 = vpop.permute.xlu0 %3218
        %3220 = vrot.lane.b32.xlu0 %v3181, 127
        %v3221 = vpop.permute.xlu0 %3220
        %3222 = vrot.lane.b32.xlu0 %v3182, 127
        %v3223 = vpop.permute.xlu0 %3222
        %3224 = vrot.lane.b32.xlu0 %v3183, 127
        %v3225 = vpop.permute.xlu0 %3224
        %3226 = vrot.lane.b32.xlu0 %v3184, 127
        %v3227 = vpop.permute.xlu0 %3226
        %vm3228 = vcmask 1039360
        %v3229 = vsel %vm3228, %v3201, %v3203
        %v3230 = vsel %vm3228, %v3203, %v3205
        %v3231 = vsel %vm3228, %v3205, %v3207
        %v3232 = vsel %vm3228, %v3207, %v3209
        %v3233 = vsel %vm3228, %v3209, %v3211
        %v3234 = vsel %vm3228, %v3211, %v3213
        %v3235 = vsel %vm3228, %v3215, %v3217
        %v3236 = vsel %vm3228, %v3217, %v3219
        %v3237 = vsel %vm3228, %v3219, %v3221
        %v3238 = vsel %vm3228, %v3221, %v3223
        %v3239 = vsel %vm3228, %v3223, %v3225
        %v3240 = vsel %vm3228, %v3225, %v3227
        %v3255 = vmax.f32 %v3170, %v3229
        %v3256 = vmax.f32 %v3171, %v3230
        %v3257 = vmax.f32 %v3172, %v3231
        %v3258 = vmax.f32 %v3173, %v3232
        %v3259 = vmax.f32 %v3174, %v3233
        %v3260 = vmax.f32 %v3175, %v3234
        %v3261 = vmax.f32 %v3176, %v3213
        %v3262 = vmax.f32 %v3178, %v3235
        %v3263 = vmax.f32 %v3179, %v3236
        %v3264 = vmax.f32 %v3180, %v3237
        %v3265 = vmax.f32 %v3181, %v3238
        %v3266 = vmax.f32 %v3182, %v3239
        %v3267 = vmax.f32 %v3183, %v3240
        %v3268 = vmax.f32 %v3184, %v3227
        %3271 = vrot.lane.b32.xlu0 %v3177, 127
        %v3272 = vpop.permute.xlu0 %3271
        %3273 = vrot.lane.b32.xlu0 %v3185, 127
        %v3274 = vpop.permute.xlu0 %3273
        %v3275 = vsel %vm3228, %v3213, %v3272
        %v3276 = vsel %vm3228, %v3227, %v3274
        %v3279 = vmax.f32 %v3176, %v3275
        %v3280 = vmax.f32 %v3184, %v3276
        %3295 = vrot.lane.b32.xlu0 %v3255, 96
        %v3296 = vpop.permute.xlu0 %3295
        %3297 = vrot.lane.b32.xlu0 %v3256, 96
        %v3298 = vpop.permute.xlu0 %3297
        %3299 = vrot.lane.b32.xlu0 %v3257, 96
        %v3300 = vpop.permute.xlu0 %3299
        %3301 = vrot.lane.b32.xlu0 %v3258, 96
        %v3302 = vpop.permute.xlu0 %3301
        %3303 = vrot.lane.b32.xlu0 %v3259, 96
        %v3304 = vpop.permute.xlu0 %3303
        %3305 = vrot.lane.b32.xlu0 %v3260, 96
        %v3306 = vpop.permute.xlu0 %3305
        %3307 = vrot.lane.b32.xlu0 %v3279, 96
        %v3308 = vpop.permute.xlu0 %3307
        %3309 = vrot.lane.b32.xlu0 %v3262, 96
        %v3310 = vpop.permute.xlu0 %3309
        %3311 = vrot.lane.b32.xlu0 %v3263, 96
        %v3312 = vpop.permute.xlu0 %3311
        %3313 = vrot.lane.b32.xlu0 %v3264, 96
        %v3314 = vpop.permute.xlu0 %3313
        %3315 = vrot.lane.b32.xlu0 %v3265, 96
        %v3316 = vpop.permute.xlu0 %3315
        %3317 = vrot.lane.b32.xlu0 %v3266, 96
        %v3318 = vpop.permute.xlu0 %3317
        %3319 = vrot.lane.b32.xlu0 %v3267, 96
        %v3320 = vpop.permute.xlu0 %3319
        %3321 = vrot.lane.b32.xlu0 %v3280, 96
        %v3322 = vpop.permute.xlu0 %3321
        %vm3323 = vcmask 785408
        %v3324 = vsel %vm3323, %v3296, %v3298
        %v3325 = vsel %vm3323, %v3298, %v3300
        %v3326 = vsel %vm3323, %v3300, %v3302
        %v3327 = vsel %vm3323, %v3302, %v3304
        %v3328 = vsel %vm3323, %v3304, %v3306
        %v3329 = vsel %vm3323, %v3306, %v3308
        %v3330 = vsel %vm3323, %v3310, %v3312
        %v3331 = vsel %vm3323, %v3312, %v3314
        %v3332 = vsel %vm3323, %v3314, %v3316
        %v3333 = vsel %vm3323, %v3316, %v3318
        %v3334 = vsel %vm3323, %v3318, %v3320
        %v3335 = vsel %vm3323, %v3320, %v3322
        %v3350 = vmax.f32 %v3255, %v3324
        %v3351 = vmax.f32 %v3256, %v3325
        %v3352 = vmax.f32 %v3257, %v3326
        %v3353 = vmax.f32 %v3258, %v3327
        %v3354 = vmax.f32 %v3259, %v3328
        %v3355 = vmax.f32 %v3260, %v3329
        %v3356 = vmax.f32 %v3261, %v3308
        %v3357 = vmax.f32 %v3262, %v3330
        %v3358 = vmax.f32 %v3263, %v3331
        %v3359 = vmax.f32 %v3264, %v3332
        %v3360 = vmax.f32 %v3265, %v3333
        %v3361 = vmax.f32 %v3266, %v3334
        %v3362 = vmax.f32 %v3267, %v3335
        %v3363 = vmax.f32 %v3268, %v3322
        %v3364 = vld [vmem:[%s2] sm:$0xff]
        %v3365 = vld [vmem:[%s2 + $0x8] sm:$0xff]
        %3367 = vset.pattern.permute.xlu0 0
        %3368 = vperm.xlu0 %3367, %v3364
        %v3369 = vpop.permute.xlu0 %3368
        %3372 = vset.pattern.permute.xlu0 0
        %3373 = vperm.xlu0 %3372, %v3365
        %v3374 = vpop.permute.xlu0 %3373
        %v3376 = vadd.f32 %v3350, %v3369
        %v3377 = vadd.f32 %v3351, %v3369
        %v3378 = vadd.f32 %v3352, %v3369
        %v3379 = vadd.f32 %v3353, %v3369
        %v3380 = vadd.f32 %v3354, %v3369
        %v3381 = vadd.f32 %v3355, %v3369
        %v3382 = vadd.f32 %v3356, %v3369
        %v3383 = vadd.f32 %v3357, %v3374
        %v3384 = vadd.f32 %v3358, %v3374
        %v3385 = vadd.f32 %v3359, %v3374
        %v3386 = vadd.f32 %v3360, %v3374
        %v3387 = vadd.f32 %v3361, %v3374
        %v3388 = vadd.f32 %v3362, %v3374
        %v3389 = vadd.f32 %v3363, %v3374
        %v3390 = vmax.f32 %v3376, 0.0
        %v3391 = vmax.f32 %v3377, 0.0
        %v3392 = vmax.f32 %v3378, 0.0
        %v3393 = vmax.f32 %v3379, 0.0
        %v3394 = vmax.f32 %v3380, 0.0
        %v3395 = vmax.f32 %v3381, 0.0
        %v3396 = vmax.f32 %v3382, 0.0
        %v3397 = vmax.f32 %v3383, 0.0
        %v3398 = vmax.f32 %v3384, 0.0
        %v3399 = vmax.f32 %v3385, 0.0
        %v3400 = vmax.f32 %v3386, 0.0
        %v3401 = vmax.f32 %v3387, 0.0
        %v3402 = vmax.f32 %v3388, 0.0
        %v3403 = vmax.f32 %v3389, 0.0
        %v3404 = vpack.c.bf16 %v3397, %v3390
        %v3405 = vpack.c.bf16 %v3398, %v3391
        %v3406 = vpack.c.bf16 %v3399, %v3392
        %v3407 = vpack.c.bf16 %v3400, %v3393
        %v3408 = vpack.c.bf16 %v3401, %v3394
        %v3409 = vpack.c.bf16 %v3402, %v3395
        %v3410 = vpack.c.bf16 %v3403, %v3396
        %s3411 = sshra.s32 %s3164, 4
        %s3412 = sand.u32 %s3164, 15
        %s3413 = smul.u32 %s3411, 7
        %s3414 = smul.addr %s3413, 8
        %s3415 = scalar_lea.vmem [#allocation4], %s3414
        %3416 = vst [vmem:[%s3415] sm:$0xff] %v3404
        %3417 = vst [vmem:[%s3415 + $0x8] sm:$0xff] %v3405
        %3418 = vst [vmem:[%s3415 + $0x10] sm:$0xff] %v3406
        %3419 = vst [vmem:[%s3415 + $0x18] sm:$0xff] %v3407
        %3420 = vst [vmem:[%s3415 + $0x20] sm:$0xff] %v3408
        %3421 = vst [vmem:[%s3415 + $0x28] sm:$0xff] %v3409
        %3422 = vst.msk [vmem:[%s3415 + $0x30] sm:$0xff] %vm3323, %v3410
      $region53: #{tpu_custom_call.1} parent=47 // loop_footer
        %s3163 = sadd.s32 1, %s3159
      $region54: #{tpu_custom_call.1} parent=47 // loop_footer_branch
        %3158 = sbr.rel target = $region50
      $region55: #{tpu_custom_call.1} parent=47 // loop_exit
        _
      %v3423 = vld [vmem:[#allocation4] sm:$0xff]
      %v3424 = vld [vmem:[#allocation4 + $0x8] sm:$0xff]
      %v3425 = vld [vmem:[#allocation4 + $0x10] sm:$0xff]
      %v3426 = vld [vmem:[#allocation4 + $0x18] sm:$0xff]
      %v3427 = vld [vmem:[#allocation4 + $0x20] sm:$0xff]
      %v3428 = vld [vmem:[#allocation4 + $0x28] sm:$0xff]
      %v3429 = vld [vmem:[#allocation4 + $0x30] sm:$0xff]
      %v3430 = vld [vmem:[#allocation4 + $0x38] sm:$0xff]
      %v3431 = vld [vmem:[#allocation4 + $0x40] sm:$0xff]
      %v3432 = vld [vmem:[#allocation4 + $0x48] sm:$0xff]
      %v3433 = vld [vmem:[#allocation4 + $0x50] sm:$0xff]
      %v3434 = vld [vmem:[#allocation4 + $0x58] sm:$0xff]
      %v3435 = vld [vmem:[#allocation4 + $0x60] sm:$0xff]
      %v3436 = vld [vmem:[#allocation4 + $0x68] sm:$0xff]
      %v3437 = vld [vmem:[#allocation4 + $0x70] sm:$0xff]
      %v3438 = vld [vmem:[#allocation4 + $0x78] sm:$0xff]
      %v3439 = vld [vmem:[#allocation4 + $0x80] sm:$0xff]
      %v3440 = vld [vmem:[#allocation4 + $0x88] sm:$0xff]
      %v3441 = vld [vmem:[#allocation4 + $0x90] sm:$0xff]
      %v3442 = vld [vmem:[#allocation4 + $0x98] sm:$0xff]
      %v3443 = vld [vmem:[#allocation4 + $0xa0] sm:$0xff]
      %v3444 = vld [vmem:[#allocation4 + $0xa8] sm:$0xff]
      %v3445 = vld [vmem:[#allocation4 + $0xb0] sm:$0xff]
      %v3446 = vld [vmem:[#allocation4 + $0xb8] sm:$0xff]
      %v3447 = vld [vmem:[#allocation4 + $0xc0] sm:$0xff]
      %v3448 = vld [vmem:[#allocation4 + $0xc8] sm:$0xff]
      %v3449 = vld [vmem:[#allocation4 + $0xd0] sm:$0xff]
      %v3450 = vld [vmem:[#allocation4 + $0xd8] sm:$0xff]
      %v3451 = vld [vmem:[#allocation4 + $0xe0] sm:$0xff]
      %v3452 = vld [vmem:[#allocation4 + $0xe8] sm:$0xff]
      %v3453 = vld [vmem:[#allocation4 + $0xf0] sm:$0xff]
      %v3454 = vld [vmem:[#allocation4 + $0xf8] sm:$0xff]
      %v3455 = vld [vmem:[#allocation4 + $0x100] sm:$0xff]
      %v3456 = vld [vmem:[#allocation4 + $0x108] sm:$0xff]
      %v3457 = vld [vmem:[#allocation4 + $0x110] sm:$0xff]
      %v3458 = vld [vmem:[#allocation4 + $0x118] sm:$0xff]
      %v3459 = vld [vmem:[#allocation4 + $0x120] sm:$0xff]
      %v3460 = vld [vmem:[#allocation4 + $0x128] sm:$0xff]
      %v3461 = vld [vmem:[#allocation4 + $0x130] sm:$0xff]
      %v3462 = vld [vmem:[#allocation4 + $0x138] sm:$0xff]
      %v3463 = vld [vmem:[#allocation4 + $0x140] sm:$0xff]
      %v3464 = vld [vmem:[#allocation4 + $0x148] sm:$0xff]
      %v3465 = vld [vmem:[#allocation4 + $0x150] sm:$0xff]
      %v3466 = vld [vmem:[#allocation4 + $0x158] sm:$0xff]
      %v3467 = vld [vmem:[#allocation4 + $0x160] sm:$0xff]
      %v3468 = vld [vmem:[#allocation4 + $0x168] sm:$0xff]
      %v3469 = vld [vmem:[#allocation4 + $0x170] sm:$0xff]
      %v3470 = vld [vmem:[#allocation4 + $0x178] sm:$0xff]
      %v3471 = vld [vmem:[#allocation4 + $0x180] sm:$0xff]
      %v3472 = vld [vmem:[#allocation4 + $0x188] sm:$0xff]
      %v3473 = vld [vmem:[#allocation4 + $0x190] sm:$0xff]
      %v3474 = vld [vmem:[#allocation4 + $0x198] sm:$0xff]
      %v3475 = vld [vmem:[#allocation4 + $0x1a0] sm:$0xff]
      %v3476 = vld [vmem:[#allocation4 + $0x1a8] sm:$0xff]
      %v3477 = vld [vmem:[#allocation4 + $0x1b0] sm:$0xff]
      %v3478 = vld [vmem:[#allocation4 + $0x1b8] sm:$0xff]
      %v3479 = vld [vmem:[%s5] sm:$0xff]
      %v3480 = vld [vmem:[%s5 + $0x8] sm:$0xf]
      %v3481 = vld [vmem:[%s5 + $0xc] sm:$0xff]
      %v3482 = vld [vmem:[%s5 + $0x14] sm:$0xf]
      %v3483 = vld [vmem:[%s5 + $0x18] sm:$0xff]
      %v3484 = vld [vmem:[%s5 + $0x20] sm:$0xf]
      %v3485 = vld [vmem:[%s5 + $0x24] sm:$0xff]
      %v3486 = vld [vmem:[%s5 + $0x2c] sm:$0xf]
      %v3487 = vld [vmem:[%s5 + $0x30] sm:$0xff]
      %v3488 = vld [vmem:[%s5 + $0x38] sm:$0xf]
      %v3489 = vld [vmem:[%s5 + $0x3c] sm:$0xff]
      %v3490 = vld [vmem:[%s5 + $0x44] sm:$0xf]
      %v3491 = vld [vmem:[%s5 + $0x48] sm:$0xff]
      %v3492 = vld [vmem:[%s5 + $0x50] sm:$0xf]
      %v3493 = vld [vmem:[%s5 + $0x54] sm:$0xff]
      %v3494 = vld [vmem:[%s5 + $0x5c] sm:$0xf]
      %v3495 = vld [vmem:[%s5 + $0x60] sm:$0xff]
      %v3496 = vld [vmem:[%s5 + $0x68] sm:$0xf]
      %v3497 = vld [vmem:[%s5 + $0x6c] sm:$0xff]
      %v3498 = vld [vmem:[%s5 + $0x74] sm:$0xf]
      %v3499 = vld [vmem:[%s5 + $0x78] sm:$0xff]
      %v3500 = vld [vmem:[%s5 + $0x80] sm:$0xf]
      %v3501 = vld [vmem:[%s5 + $0x84] sm:$0xff]
      %v3502 = vld [vmem:[%s5 + $0x8c] sm:$0xf]
      %v3503 = vld [vmem:[%s5 + $0x90] sm:$0xff]
      %v3504 = vld [vmem:[%s5 + $0x98] sm:$0xf]
      %v3505 = vld [vmem:[%s5 + $0x9c] sm:$0xff]
      %v3506 = vld [vmem:[%s5 + $0xa4] sm:$0xf]
      %v3507 = vld [vmem:[%s5 + $0xa8] sm:$0xff]
      %v3508 = vld [vmem:[%s5 + $0xb0] sm:$0xf]
      %v3509 = vld [vmem:[%s5 + $0xb4] sm:$0xff]
      %v3510 = vld [vmem:[%s5 + $0xbc] sm:$0xf]
      %v3511 = vld [vmem:[%s5 + $0xc0] sm:$0xff]
      %v3512 = vld [vmem:[%s5 + $0xc8] sm:$0xf]
      %v3513 = vld [vmem:[%s5 + $0xcc] sm:$0xff]
      %v3514 = vld [vmem:[%s5 + $0xd4] sm:$0xf]
      %v3515 = vld [vmem:[%s5 + $0xd8] sm:$0xff]
      %v3516 = vld [vmem:[%s5 + $0xe0] sm:$0xf]
      %v3517 = vld [vmem:[%s5 + $0xe4] sm:$0xff]
      %v3518 = vld [vmem:[%s5 + $0xec] sm:$0xf]
      %v3519 = vld [vmem:[%s5 + $0xf0] sm:$0xff]
      %v3520 = vld [vmem:[%s5 + $0xf8] sm:$0xf]
      %v3521 = vld [vmem:[%s5 + $0xfc] sm:$0xff]
      %v3522 = vld [vmem:[%s5 + $0x104] sm:$0xf]
      %v3523 = vld [vmem:[%s5 + $0x108] sm:$0xff]
      %v3524 = vld [vmem:[%s5 + $0x110] sm:$0xf]
      %v3525 = vld [vmem:[%s5 + $0x114] sm:$0xff]
      %v3526 = vld [vmem:[%s5 + $0x11c] sm:$0xf]
      %v3527 = vld [vmem:[%s5 + $0x120] sm:$0xff]
      %v3528 = vld [vmem:[%s5 + $0x128] sm:$0xf]
      %v3529 = vld [vmem:[%s5 + $0x12c] sm:$0xff]
      %v3530 = vld [vmem:[%s5 + $0x134] sm:$0xf]
      %v3531 = vld [vmem:[%s5 + $0x138] sm:$0xff]
      %v3532 = vld [vmem:[%s5 + $0x140] sm:$0xf]
      %v3533 = vld [vmem:[%s5 + $0x144] sm:$0xff]
      %v3534 = vld [vmem:[%s5 + $0x14c] sm:$0xf]
      %v3535 = vld [vmem:[%s5 + $0x150] sm:$0xff]
      %v3536 = vld [vmem:[%s5 + $0x158] sm:$0xf]
      %v3537 = vld [vmem:[%s5 + $0x15c] sm:$0xff]
      %v3538 = vld [vmem:[%s5 + $0x164] sm:$0xf]
      %v3539 = vld [vmem:[%s5 + $0x168] sm:$0xff]
      %v3540 = vld [vmem:[%s5 + $0x170] sm:$0xf]
      %v3541 = vld [vmem:[%s5 + $0x174] sm:$0xff]
      %v3542 = vld [vmem:[%s5 + $0x17c] sm:$0xf]
      %v3543 = vld [vmem:[%s5 + $0x180] sm:$0xff]
      %v3544 = vld [vmem:[%s5 + $0x188] sm:$0xf]
      %v3545 = vld [vmem:[%s5 + $0x18c] sm:$0xff]
      %v3546 = vld [vmem:[%s5 + $0x194] sm:$0xf]
      %v3547 = vld [vmem:[%s5 + $0x198] sm:$0xff]
      %v3548 = vld [vmem:[%s5 + $0x1a0] sm:$0xf]
      %v3549 = vld [vmem:[%s5 + $0x1a4] sm:$0xff]
      %v3550 = vld [vmem:[%s5 + $0x1ac] sm:$0xf]
      %v3551 = vld [vmem:[%s5 + $0x1b0] sm:$0xff]
      %v3552 = vld [vmem:[%s5 + $0x1b8] sm:$0xf]
      %v3553 = vld [vmem:[%s5 + $0x1bc] sm:$0xff]
      %v3554 = vld [vmem:[%s5 + $0x1c4] sm:$0xf]
      %v3555 = vld [vmem:[%s5 + $0x1c8] sm:$0xff]
      %v3556 = vld [vmem:[%s5 + $0x1d0] sm:$0xf]
      %v3557 = vld [vmem:[%s5 + $0x1d4] sm:$0xff]
      %v3558 = vld [vmem:[%s5 + $0x1dc] sm:$0xf]
      %v3559 = vld [vmem:[%s5 + $0x1e0] sm:$0xff]
      %v3560 = vld [vmem:[%s5 + $0x1e8] sm:$0xf]
      %v3561 = vld [vmem:[%s5 + $0x1ec] sm:$0xff]
      %v3562 = vld [vmem:[%s5 + $0x1f4] sm:$0xf]
      %v3563 = vld [vmem:[%s5 + $0x1f8] sm:$0xff]
      %v3564 = vld [vmem:[%s5 + $0x200] sm:$0xf]
      %v3565 = vld [vmem:[%s5 + $0x204] sm:$0xff]
      %v3566 = vld [vmem:[%s5 + $0x20c] sm:$0xf]
      %v3567 = vld [vmem:[%s5 + $0x210] sm:$0xff]
      %v3568 = vld [vmem:[%s5 + $0x218] sm:$0xf]
      %v3569 = vld [vmem:[%s5 + $0x21c] sm:$0xff]
      %v3570 = vld [vmem:[%s5 + $0x224] sm:$0xf]
      %v3571 = vld [vmem:[%s5 + $0x228] sm:$0xff]
      %v3572 = vld [vmem:[%s5 + $0x230] sm:$0xf]
      %v3573 = vld [vmem:[%s5 + $0x234] sm:$0xff]
      %v3574 = vld [vmem:[%s5 + $0x23c] sm:$0xf]
      %v3575 = vld [vmem:[%s5 + $0x240] sm:$0xff]
      %v3576 = vld [vmem:[%s5 + $0x248] sm:$0xf]
      %v3577 = vld [vmem:[%s5 + $0x24c] sm:$0xff]
      %v3578 = vld [vmem:[%s5 + $0x254] sm:$0xf]
      %v3579 = vld [vmem:[%s5 + $0x258] sm:$0xff]
      %v3580 = vld [vmem:[%s5 + $0x260] sm:$0xf]
      %v3581 = vld [vmem:[%s5 + $0x264] sm:$0xff]
      %v3582 = vld [vmem:[%s5 + $0x26c] sm:$0xf]
      %v3583 = vld [vmem:[%s5 + $0x270] sm:$0xff]
      %v3584 = vld [vmem:[%s5 + $0x278] sm:$0xf]
      %v3585 = vld [vmem:[%s5 + $0x27c] sm:$0xff]
      %v3586 = vld [vmem:[%s5 + $0x284] sm:$0xf]
      %v3587 = vld [vmem:[%s5 + $0x288] sm:$0xff]
      %v3588 = vld [vmem:[%s5 + $0x290] sm:$0xf]
      %v3589 = vld [vmem:[%s5 + $0x294] sm:$0xff]
      %v3590 = vld [vmem:[%s5 + $0x29c] sm:$0xf]
      %v3591 = vld [vmem:[%s5 + $0x2a0] sm:$0xff]
      %v3592 = vld [vmem:[%s5 + $0x2a8] sm:$0xf]
      %v3593 = vld [vmem:[%s5 + $0x2ac] sm:$0xff]
      %v3594 = vld [vmem:[%s5 + $0x2b4] sm:$0xf]
      %v3595 = vld [vmem:[%s5 + $0x2b8] sm:$0xff]
      %v3596 = vld [vmem:[%s5 + $0x2c0] sm:$0xf]
      %v3597 = vld [vmem:[%s5 + $0x2c4] sm:$0xff]
      %v3598 = vld [vmem:[%s5 + $0x2cc] sm:$0xf]
      %v3599 = vld [vmem:[%s5 + $0x2d0] sm:$0xff]
      %v3600 = vld [vmem:[%s5 + $0x2d8] sm:$0xf]
      %v3601 = vld [vmem:[%s5 + $0x2dc] sm:$0xff]
      %v3602 = vld [vmem:[%s5 + $0x2e4] sm:$0xf]
      %v3603 = vld [vmem:[%s5 + $0x2e8] sm:$0xff]
      %v3604 = vld [vmem:[%s5 + $0x2f0] sm:$0xf]
      %v3605 = vld [vmem:[%s5 + $0x2f4] sm:$0xff]
      %v3606 = vld [vmem:[%s5 + $0x2fc] sm:$0xf]
      %v3607 = vld [vmem:[%s5 + $0x300] sm:$0xff]
      %v3608 = vld [vmem:[%s5 + $0x308] sm:$0xf]
      %v3609 = vld [vmem:[%s5 + $0x30c] sm:$0xff]
      %v3610 = vld [vmem:[%s5 + $0x314] sm:$0xf]
      %v3611 = vld [vmem:[%s5 + $0x318] sm:$0xff]
      %v3612 = vld [vmem:[%s5 + $0x320] sm:$0xf]
      %v3613 = vld [vmem:[%s5 + $0x324] sm:$0xff]
      %v3614 = vld [vmem:[%s5 + $0x32c] sm:$0xf]
      %v3615 = vld [vmem:[%s5 + $0x330] sm:$0xff]
      %v3616 = vld [vmem:[%s5 + $0x338] sm:$0xf]
      %v3617 = vld [vmem:[%s5 + $0x33c] sm:$0xff]
      %v3618 = vld [vmem:[%s5 + $0x344] sm:$0xf]
      %v3619 = vld [vmem:[%s5 + $0x348] sm:$0xff]
      %v3620 = vld [vmem:[%s5 + $0x350] sm:$0xf]
      %v3621 = vld [vmem:[%s5 + $0x354] sm:$0xff]
      %v3622 = vld [vmem:[%s5 + $0x35c] sm:$0xf]
      %v3623 = vld [vmem:[%s5 + $0x360] sm:$0xff]
      %v3624 = vld [vmem:[%s5 + $0x368] sm:$0xf]
      %v3625 = vld [vmem:[%s5 + $0x36c] sm:$0xff]
      %v3626 = vld [vmem:[%s5 + $0x374] sm:$0xf]
      %v3627 = vld [vmem:[%s5 + $0x378] sm:$0xff]
      %v3628 = vld [vmem:[%s5 + $0x380] sm:$0xf]
      %v3629 = vld [vmem:[%s5 + $0x384] sm:$0xff]
      %v3630 = vld [vmem:[%s5 + $0x38c] sm:$0xf]
      %v3631 = vld [vmem:[%s5 + $0x390] sm:$0xff]
      %v3632 = vld [vmem:[%s5 + $0x398] sm:$0xf]
      %v3633 = vld [vmem:[%s5 + $0x39c] sm:$0xff]
      %v3634 = vld [vmem:[%s5 + $0x3a4] sm:$0xf]
      %v3635 = vld [vmem:[%s5 + $0x3a8] sm:$0xff]
      %v3636 = vld [vmem:[%s5 + $0x3b0] sm:$0xf]
      %v3637 = vld [vmem:[%s5 + $0x3b4] sm:$0xff]
      %v3638 = vld [vmem:[%s5 + $0x3bc] sm:$0xf]
      %v3639 = vld [vmem:[%s5 + $0x3c0] sm:$0xff]
      %v3640 = vld [vmem:[%s5 + $0x3c8] sm:$0xf]
      %v3641 = vld [vmem:[%s5 + $0x3cc] sm:$0xff]
      %v3642 = vld [vmem:[%s5 + $0x3d4] sm:$0xf]
      %v3643 = vld [vmem:[%s5 + $0x3d8] sm:$0xff]
      %v3644 = vld [vmem:[%s5 + $0x3e0] sm:$0xf]
      %v3645 = vld [vmem:[%s5 + $0x3e4] sm:$0xff]
      %v3646 = vld [vmem:[%s5 + $0x3ec] sm:$0xf]
      %v3647 = vld [vmem:[%s5 + $0x3f0] sm:$0xff]
      %v3648 = vld [vmem:[%s5 + $0x3f8] sm:$0xf]
      %v3649 = vld [vmem:[%s5 + $0x3fc] sm:$0xff]
      %v3650 = vld [vmem:[%s5 + $0x404] sm:$0xf]
      %v3651 = vld [vmem:[%s5 + $0x408] sm:$0xff]
      %v3652 = vld [vmem:[%s5 + $0x410] sm:$0xf]
      %v3653 = vld [vmem:[%s5 + $0x414] sm:$0xff]
      %v3654 = vld [vmem:[%s5 + $0x41c] sm:$0xf]
      %v3655 = vld [vmem:[%s5 + $0x420] sm:$0xff]
      %v3656 = vld [vmem:[%s5 + $0x428] sm:$0xf]
      %v3657 = vld [vmem:[%s5 + $0x42c] sm:$0xff]
      %v3658 = vld [vmem:[%s5 + $0x434] sm:$0xf]
      %v3659 = vld [vmem:[%s5 + $0x438] sm:$0xff]
      %v3660 = vld [vmem:[%s5 + $0x440] sm:$0xf]
      %v3661 = vld [vmem:[%s5 + $0x444] sm:$0xff]
      %v3662 = vld [vmem:[%s5 + $0x44c] sm:$0xf]
      %v3663 = vld [vmem:[%s5 + $0x450] sm:$0xff]
      %v3664 = vld [vmem:[%s5 + $0x458] sm:$0xf]
      %v3665 = vld [vmem:[%s5 + $0x45c] sm:$0xff]
      %v3666 = vld [vmem:[%s5 + $0x464] sm:$0xf]
      %v3667 = vld [vmem:[%s5 + $0x468] sm:$0xff]
      %v3668 = vld [vmem:[%s5 + $0x470] sm:$0xf]
      %v3669 = vld [vmem:[%s5 + $0x474] sm:$0xff]
      %v3670 = vld [vmem:[%s5 + $0x47c] sm:$0xf]
      %v3671 = vld [vmem:[%s5 + $0x480] sm:$0xff]
      %v3672 = vld [vmem:[%s5 + $0x488] sm:$0xf]
      %v3673 = vld [vmem:[%s5 + $0x48c] sm:$0xff]
      %v3674 = vld [vmem:[%s5 + $0x494] sm:$0xf]
      %v3675 = vld [vmem:[%s5 + $0x498] sm:$0xff]
      %v3676 = vld [vmem:[%s5 + $0x4a0] sm:$0xf]
      %v3677 = vld [vmem:[%s5 + $0x4a4] sm:$0xff]
      %v3678 = vld [vmem:[%s5 + $0x4ac] sm:$0xf]
      %v3679 = vld [vmem:[%s5 + $0x4b0] sm:$0xff]
      %v3680 = vld [vmem:[%s5 + $0x4b8] sm:$0xf]
      %v3681 = vld [vmem:[%s5 + $0x4bc] sm:$0xff]
      %v3682 = vld [vmem:[%s5 + $0x4c4] sm:$0xf]
      %v3683 = vld [vmem:[%s5 + $0x4c8] sm:$0xff]
      %v3684 = vld [vmem:[%s5 + $0x4d0] sm:$0xf]
      %v3685 = vld [vmem:[%s5 + $0x4d4] sm:$0xff]
      %v3686 = vld [vmem:[%s5 + $0x4dc] sm:$0xf]
      %v3687 = vld [vmem:[%s5 + $0x4e0] sm:$0xff]
      %v3688 = vld [vmem:[%s5 + $0x4e8] sm:$0xf]
      %v3689 = vld [vmem:[%s5 + $0x4ec] sm:$0xff]
      %v3690 = vld [vmem:[%s5 + $0x4f4] sm:$0xf]
      %v3691 = vld [vmem:[%s5 + $0x4f8] sm:$0xff]
      %v3692 = vld [vmem:[%s5 + $0x500] sm:$0xf]
      %v3693 = vld [vmem:[%s5 + $0x504] sm:$0xff]
      %v3694 = vld [vmem:[%s5 + $0x50c] sm:$0xf]
      %v3911 = vunpack.c.l.b16 %v3479
      %v3912 = vunpack.c.h.b16 %v3479
      %v3913 = vunpack.c.l.b16 %v3480
      %v3914 = vunpack.c.l.b16 %v3481
      %v3915 = vunpack.c.h.b16 %v3481
      %v3916 = vunpack.c.l.b16 %v3482
      %v3917 = vunpack.c.l.b16 %v3483
      %v3918 = vunpack.c.h.b16 %v3483
      %v3919 = vunpack.c.l.b16 %v3484
      %v3920 = vunpack.c.l.b16 %v3485
      %v3921 = vunpack.c.h.b16 %v3485
      %v3922 = vunpack.c.l.b16 %v3486
      %v3923 = vunpack.c.l.b16 %v3487
      %v3924 = vunpack.c.h.b16 %v3487
      %v3925 = vunpack.c.l.b16 %v3488
      %v3926 = vunpack.c.l.b16 %v3489
      %v3927 = vunpack.c.h.b16 %v3489
      %v3928 = vunpack.c.l.b16 %v3490
      %v3929 = vunpack.c.l.b16 %v3491
      %v3930 = vunpack.c.h.b16 %v3491
      %v3931 = vunpack.c.l.b16 %v3492
      %v3932 = vunpack.c.l.b16 %v3493
      %v3933 = vunpack.c.h.b16 %v3493
      %v3934 = vunpack.c.l.b16 %v3494
      %v3935 = vunpack.c.l.b16 %v3495
      %v3936 = vunpack.c.h.b16 %v3495
      %v3937 = vunpack.c.l.b16 %v3496
      %v3938 = vunpack.c.l.b16 %v3497
      %v3939 = vunpack.c.h.b16 %v3497
      %v3940 = vunpack.c.l.b16 %v3498
      %v3941 = vunpack.c.l.b16 %v3499
      %v3942 = vunpack.c.h.b16 %v3499
      %v3943 = vunpack.c.l.b16 %v3500
      %v3944 = vunpack.c.l.b16 %v3501
      %v3945 = vunpack.c.h.b16 %v3501
      %v3946 = vunpack.c.l.b16 %v3502
      %v3947 = vunpack.c.l.b16 %v3503
      %v3948 = vunpack.c.h.b16 %v3503
      %v3949 = vunpack.c.l.b16 %v3504
      %v3950 = vunpack.c.l.b16 %v3505
      %v3951 = vunpack.c.h.b16 %v3505
      %v3952 = vunpack.c.l.b16 %v3506
      %v3953 = vunpack.c.l.b16 %v3507
      %v3954 = vunpack.c.h.b16 %v3507
      %v3955 = vunpack.c.l.b16 %v3508
      %v3956 = vunpack.c.l.b16 %v3509
      %v3957 = vunpack.c.h.b16 %v3509
      %v3958 = vunpack.c.l.b16 %v3510
      %v3959 = vunpack.c.l.b16 %v3511
      %v3960 = vunpack.c.h.b16 %v3511
      %v3961 = vunpack.c.l.b16 %v3512
      %v3962 = vunpack.c.l.b16 %v3513
      %v3963 = vunpack.c.h.b16 %v3513
      %v3964 = vunpack.c.l.b16 %v3514
      %v3965 = vunpack.c.l.b16 %v3515
      %v3966 = vunpack.c.h.b16 %v3515
      %v3967 = vunpack.c.l.b16 %v3516
      %v3968 = vunpack.c.l.b16 %v3517
      %v3969 = vunpack.c.h.b16 %v3517
      %v3970 = vunpack.c.l.b16 %v3518
      %v3971 = vunpack.c.l.b16 %v3519
      %v3972 = vunpack.c.h.b16 %v3519
      %v3973 = vunpack.c.l.b16 %v3520
      %v3974 = vunpack.c.l.b16 %v3521
      %v3975 = vunpack.c.h.b16 %v3521
      %v3976 = vunpack.c.l.b16 %v3522
      %v3977 = vunpack.c.l.b16 %v3523
      %v3978 = vunpack.c.h.b16 %v3523
      %v3979 = vunpack.c.l.b16 %v3524
      %v3980 = vunpack.c.l.b16 %v3525
      %v3981 = vunpack.c.h.b16 %v3525
      %v3982 = vunpack.c.l.b16 %v3526
      %v3983 = vunpack.c.l.b16 %v3527
      %v3984 = vunpack.c.h.b16 %v3527
      %v3985 = vunpack.c.l.b16 %v3528
      %v3986 = vunpack.c.l.b16 %v3529
      %v3987 = vunpack.c.h.b16 %v3529
      %v3988 = vunpack.c.l.b16 %v3530
      %v3989 = vunpack.c.l.b16 %v3531
      %v3990 = vunpack.c.h.b16 %v3531
      %v3991 = vunpack.c.l.b16 %v3532
      %v3992 = vunpack.c.l.b16 %v3533
      %v3993 = vunpack.c.h.b16 %v3533
      %v3994 = vunpack.c.l.b16 %v3534
      %v3995 = vunpack.c.l.b16 %v3535
      %v3996 = vunpack.c.h.b16 %v3535
      %v3997 = vunpack.c.l.b16 %v3536
      %v3998 = vunpack.c.l.b16 %v3537
      %v3999 = vunpack.c.h.b16 %v3537
      %v4000 = vunpack.c.l.b16 %v3538
      %v4001 = vunpack.c.l.b16 %v3539
      %v4002 = vunpack.c.h.b16 %v3539
      %v4003 = vunpack.c.l.b16 %v3540
      %v4004 = vunpack.c.l.b16 %v3541
      %v4005 = vunpack.c.h.b16 %v3541
      %v4006 = vunpack.c.l.b16 %v3542
      %v4007 = vunpack.c.l.b16 %v3543
      %v4008 = vunpack.c.h.b16 %v3543
      %v4009 = vunpack.c.l.b16 %v3544
      %v4010 = vunpack.c.l.b16 %v3545
      %v4011 = vunpack.c.h.b16 %v3545
      %v4012 = vunpack.c.l.b16 %v3546
      %v4013 = vunpack.c.l.b16 %v3547
      %v4014 = vunpack.c.h.b16 %v3547
      %v4015 = vunpack.c.l.b16 %v3548
      %v4016 = vunpack.c.l.b16 %v3549
      %v4017 = vunpack.c.h.b16 %v3549
      %v4018 = vunpack.c.l.b16 %v3550
      %v4019 = vunpack.c.l.b16 %v3551
      %v4020 = vunpack.c.h.b16 %v3551
      %v4021 = vunpack.c.l.b16 %v3552
      %v4022 = vunpack.c.l.b16 %v3553
      %v4023 = vunpack.c.h.b16 %v3553
      %v4024 = vunpack.c.l.b16 %v3554
      %v4025 = vunpack.c.l.b16 %v3555
      %v4026 = vunpack.c.h.b16 %v3555
      %v4027 = vunpack.c.l.b16 %v3556
      %v4028 = vunpack.c.l.b16 %v3557
      %v4029 = vunpack.c.h.b16 %v3557
      %v4030 = vunpack.c.l.b16 %v3558
      %v4031 = vunpack.c.l.b16 %v3559
      %v4032 = vunpack.c.h.b16 %v3559
      %v4033 = vunpack.c.l.b16 %v3560
      %v4034 = vunpack.c.l.b16 %v3561
      %v4035 = vunpack.c.h.b16 %v3561
      %v4036 = vunpack.c.l.b16 %v3562
      %v4037 = vunpack.c.l.b16 %v3563
      %v4038 = vunpack.c.h.b16 %v3563
      %v4039 = vunpack.c.l.b16 %v3564
      %v4040 = vunpack.c.l.b16 %v3565
      %v4041 = vunpack.c.h.b16 %v3565
      %v4042 = vunpack.c.l.b16 %v3566
      %v4043 = vunpack.c.l.b16 %v3567
      %v4044 = vunpack.c.h.b16 %v3567
      %v4045 = vunpack.c.l.b16 %v3568
      %v4046 = vunpack.c.l.b16 %v3569
      %v4047 = vunpack.c.h.b16 %v3569
      %v4048 = vunpack.c.l.b16 %v3570
      %v4049 = vunpack.c.l.b16 %v3571
      %v4050 = vunpack.c.h.b16 %v3571
      %v4051 = vunpack.c.l.b16 %v3572
      %v4052 = vunpack.c.l.b16 %v3573
      %v4053 = vunpack.c.h.b16 %v3573
      %v4054 = vunpack.c.l.b16 %v3574
      %v4055 = vunpack.c.l.b16 %v3575
      %v4056 = vunpack.c.h.b16 %v3575
      %v4057 = vunpack.c.l.b16 %v3576
      %v4058 = vunpack.c.l.b16 %v3577
      %v4059 = vunpack.c.h.b16 %v3577
      %v4060 = vunpack.c.l.b16 %v3578
      %v4061 = vunpack.c.l.b16 %v3579
      %v4062 = vunpack.c.h.b16 %v3579
      %v4063 = vunpack.c.l.b16 %v3580
      %v4064 = vunpack.c.l.b16 %v3581
      %v4065 = vunpack.c.h.b16 %v3581
      %v4066 = vunpack.c.l.b16 %v3582
      %v4067 = vunpack.c.l.b16 %v3583
      %v4068 = vunpack.c.h.b16 %v3583
      %v4069 = vunpack.c.l.b16 %v3584
      %v4070 = vunpack.c.l.b16 %v3585
      %v4071 = vunpack.c.h.b16 %v3585
      %v4072 = vunpack.c.l.b16 %v3586
      %v4073 = vunpack.c.l.b16 %v3587
      %v4074 = vunpack.c.h.b16 %v3587
      %v4075 = vunpack.c.l.b16 %v3588
      %v4076 = vunpack.c.l.b16 %v3589
      %v4077 = vunpack.c.h.b16 %v3589
      %v4078 = vunpack.c.l.b16 %v3590
      %v4079 = vunpack.c.l.b16 %v3591
      %v4080 = vunpack.c.h.b16 %v3591
      %v4081 = vunpack.c.l.b16 %v3592
      %v4082 = vunpack.c.l.b16 %v3593
      %v4083 = vunpack.c.h.b16 %v3593
      %v4084 = vunpack.c.l.b16 %v3594
      %v4085 = vunpack.c.l.b16 %v3595
      %v4086 = vunpack.c.h.b16 %v3595
      %v4087 = vunpack.c.l.b16 %v3596
      %v4088 = vunpack.c.l.b16 %v3597
      %v4089 = vunpack.c.h.b16 %v3597
      %v4090 = vunpack.c.l.b16 %v3598
      %v4091 = vunpack.c.l.b16 %v3599
      %v4092 = vunpack.c.h.b16 %v3599
      %v4093 = vunpack.c.l.b16 %v3600
      %v4094 = vunpack.c.l.b16 %v3601
      %v4095 = vunpack.c.h.b16 %v3601
      %v4096 = vunpack.c.l.b16 %v3602
      %v4097 = vunpack.c.l.b16 %v3603
      %v4098 = vunpack.c.h.b16 %v3603
      %v4099 = vunpack.c.l.b16 %v3604
      %v4100 = vunpack.c.l.b16 %v3605
      %v4101 = vunpack.c.h.b16 %v3605
      %v4102 = vunpack.c.l.b16 %v3606
      %v4103 = vunpack.c.l.b16 %v3607
      %v4104 = vunpack.c.h.b16 %v3607
      %v4105 = vunpack.c.l.b16 %v3608
      %v4106 = vunpack.c.l.b16 %v3609
      %v4107 = vunpack.c.h.b16 %v3609
      %v4108 = vunpack.c.l.b16 %v3610
      %v4109 = vunpack.c.l.b16 %v3611
      %v4110 = vunpack.c.h.b16 %v3611
      %v4111 = vunpack.c.l.b16 %v3612
      %v4112 = vunpack.c.l.b16 %v3613
      %v4113 = vunpack.c.h.b16 %v3613
      %v4114 = vunpack.c.l.b16 %v3614
      %v4115 = vunpack.c.l.b16 %v3615
      %v4116 = vunpack.c.h.b16 %v3615
      %v4117 = vunpack.c.l.b16 %v3616
      %v4118 = vunpack.c.l.b16 %v3617
      %v4119 = vunpack.c.h.b16 %v3617
      %v4120 = vunpack.c.l.b16 %v3618
      %v4121 = vunpack.c.l.b16 %v3619
      %v4122 = vunpack.c.h.b16 %v3619
      %v4123 = vunpack.c.l.b16 %v3620
      %v4124 = vunpack.c.l.b16 %v3621
      %v4125 = vunpack.c.h.b16 %v3621
      %v4126 = vunpack.c.l.b16 %v3622
      %v4127 = vunpack.c.l.b16 %v3623
      %v4128 = vunpack.c.h.b16 %v3623
      %v4129 = vunpack.c.l.b16 %v3624
      %v4130 = vunpack.c.l.b16 %v3625
      %v4131 = vunpack.c.h.b16 %v3625
      %v4132 = vunpack.c.l.b16 %v3626
      %v4133 = vunpack.c.l.b16 %v3627
      %v4134 = vunpack.c.h.b16 %v3627
      %v4135 = vunpack.c.l.b16 %v3628
      %v4136 = vunpack.c.l.b16 %v3629
      %v4137 = vunpack.c.h.b16 %v3629
      %v4138 = vunpack.c.l.b16 %v3630
      %v4139 = vunpack.c.l.b16 %v3631
      %v4140 = vunpack.c.h.b16 %v3631
      %v4141 = vunpack.c.l.b16 %v3632
      %v4142 = vunpack.c.l.b16 %v3633
      %v4143 = vunpack.c.h.b16 %v3633
      %v4144 = vunpack.c.l.b16 %v3634
      %v4145 = vunpack.c.l.b16 %v3635
      %v4146 = vunpack.c.h.b16 %v3635
      %v4147 = vunpack.c.l.b16 %v3636
      %v4148 = vunpack.c.l.b16 %v3637
      %v4149 = vunpack.c.h.b16 %v3637
      %v4150 = vunpack.c.l.b16 %v3638
      %v4151 = vunpack.c.l.b16 %v3639
      %v4152 = vunpack.c.h.b16 %v3639
      %v4153 = vunpack.c.l.b16 %v3640
      %v4154 = vunpack.c.l.b16 %v3641
      %v4155 = vunpack.c.h.b16 %v3641
      %v4156 = vunpack.c.l.b16 %v3642
      %v4157 = vunpack.c.l.b16 %v3643
      %v4158 = vunpack.c.h.b16 %v3643
      %v4159 = vunpack.c.l.b16 %v3644
      %v4160 = vunpack.c.l.b16 %v3645
      %v4161 = vunpack.c.h.b16 %v3645
      %v4162 = vunpack.c.l.b16 %v3646
      %v4163 = vunpack.c.l.b16 %v3647
      %v4164 = vunpack.c.h.b16 %v3647
      %v4165 = vunpack.c.l.b16 %v3648
      %v4166 = vunpack.c.l.b16 %v3649
      %v4167 = vunpack.c.h.b16 %v3649
      %v4168 = vunpack.c.l.b16 %v3650
      %v4169 = vunpack.c.l.b16 %v3651
      %v4170 = vunpack.c.h.b16 %v3651
      %v4171 = vunpack.c.l.b16 %v3652
      %v4172 = vunpack.c.l.b16 %v3653
      %v4173 = vunpack.c.h.b16 %v3653
      %v4174 = vunpack.c.l.b16 %v3654
      %v4175 = vunpack.c.l.b16 %v3655
      %v4176 = vunpack.c.h.b16 %v3655
      %v4177 = vunpack.c.l.b16 %v3656
      %v4178 = vunpack.c.l.b16 %v3657
      %v4179 = vunpack.c.h.b16 %v3657
      %v4180 = vunpack.c.l.b16 %v3658
      %v4181 = vunpack.c.l.b16 %v3659
      %v4182 = vunpack.c.h.b16 %v3659
      %v4183 = vunpack.c.l.b16 %v3660
      %v4184 = vunpack.c.l.b16 %v3661
      %v4185 = vunpack.c.h.b16 %v3661
      %v4186 = vunpack.c.l.b16 %v3662
      %v4187 = vunpack.c.l.b16 %v3663
      %v4188 = vunpack.c.h.b16 %v3663
      %v4189 = vunpack.c.l.b16 %v3664
      %v4190 = vunpack.c.l.b16 %v3665
      %v4191 = vunpack.c.h.b16 %v3665
      %v4192 = vunpack.c.l.b16 %v3666
      %v4193 = vunpack.c.l.b16 %v3667
      %v4194 = vunpack.c.h.b16 %v3667
      %v4195 = vunpack.c.l.b16 %v3668
      %v4196 = vunpack.c.l.b16 %v3669
      %v4197 = vunpack.c.h.b16 %v3669
      %v4198 = vunpack.c.l.b16 %v3670
      %v4199 = vunpack.c.l.b16 %v3671
      %v4200 = vunpack.c.h.b16 %v3671
      %v4201 = vunpack.c.l.b16 %v3672
      %v4202 = vunpack.c.l.b16 %v3673
      %v4203 = vunpack.c.h.b16 %v3673
      %v4204 = vunpack.c.l.b16 %v3674
      %v4205 = vunpack.c.l.b16 %v3675
      %v4206 = vunpack.c.h.b16 %v3675
      %v4207 = vunpack.c.l.b16 %v3676
      %v4208 = vunpack.c.l.b16 %v3677
      %v4209 = vunpack.c.h.b16 %v3677
      %v4210 = vunpack.c.l.b16 %v3678
      %v4211 = vunpack.c.l.b16 %v3679
      %v4212 = vunpack.c.h.b16 %v3679
      %v4213 = vunpack.c.l.b16 %v3680
      %v4214 = vunpack.c.l.b16 %v3681
      %v4215 = vunpack.c.h.b16 %v3681
      %v4216 = vunpack.c.l.b16 %v3682
      %v4217 = vunpack.c.l.b16 %v3683
      %v4218 = vunpack.c.h.b16 %v3683
      %v4219 = vunpack.c.l.b16 %v3684
      %v4220 = vunpack.c.l.b16 %v3685
      %v4221 = vunpack.c.h.b16 %v3685
      %v4222 = vunpack.c.l.b16 %v3686
      %v4223 = vunpack.c.l.b16 %v3687
      %v4224 = vunpack.c.h.b16 %v3687
      %v4225 = vunpack.c.l.b16 %v3688
      %v4226 = vunpack.c.l.b16 %v3689
      %v4227 = vunpack.c.h.b16 %v3689
      %v4228 = vunpack.c.l.b16 %v3690
      %v4229 = vunpack.c.l.b16 %v3691
      %v4230 = vunpack.c.h.b16 %v3691
      %v4231 = vunpack.c.l.b16 %v3692
      %v4232 = vunpack.c.l.b16 %v3693
      %v4233 = vunpack.c.h.b16 %v3693
      %v4234 = vunpack.c.l.b16 %v3694
      %v4235 = vpack.c.b16 %v3914, %v3911
      %v4236 = vpack.c.b16 %v3915, %v3912
      %v4237 = vpack.c.b16 %v3916, %v3913
      %v4238 = vpack.c.b16 %v3920, %v3917
      %v4239 = vpack.c.b16 %v3921, %v3918
      %v4240 = vpack.c.b16 %v3922, %v3919
      %v4241 = vpack.c.b16 %v3926, %v3923
      %v4242 = vpack.c.b16 %v3927, %v3924
      %v4243 = vpack.c.b16 %v3928, %v3925
      %v4244 = vpack.c.b16 %v3932, %v3929
      %v4245 = vpack.c.b16 %v3933, %v3930
      %v4246 = vpack.c.b16 %v3934, %v3931
      %v4247 = vpack.c.b16 %v3938, %v3935
      %v4248 = vpack.c.b16 %v3939, %v3936
      %v4249 = vpack.c.b16 %v3940, %v3937
      %v4250 = vpack.c.b16 %v3944, %v3941
      %v4251 = vpack.c.b16 %v3945, %v3942
      %v4252 = vpack.c.b16 %v3946, %v3943
      %v4253 = vpack.c.b16 %v3950, %v3947
      %v4254 = vpack.c.b16 %v3951, %v3948
      %v4255 = vpack.c.b16 %v3952, %v3949
      %v4256 = vpack.c.b16 %v3956, %v3953
      %v4257 = vpack.c.b16 %v3957, %v3954
      %v4258 = vpack.c.b16 %v3958, %v3955
      %v4259 = vpack.c.b16 %v3962, %v3959
      %v4260 = vpack.c.b16 %v3963, %v3960
      %v4261 = vpack.c.b16 %v3964, %v3961
      %v4262 = vpack.c.b16 %v3968, %v3965
      %v4263 = vpack.c.b16 %v3969, %v3966
      %v4264 = vpack.c.b16 %v3970, %v3967
      %v4265 = vpack.c.b16 %v3974, %v3971
      %v4266 = vpack.c.b16 %v3975, %v3972
      %v4267 = vpack.c.b16 %v3976, %v3973
      %v4268 = vpack.c.b16 %v3980, %v3977
      %v4269 = vpack.c.b16 %v3981, %v3978
      %v4270 = vpack.c.b16 %v3982, %v3979
      %v4271 = vpack.c.b16 %v3986, %v3983
      %v4272 = vpack.c.b16 %v3987, %v3984
      %v4273 = vpack.c.b16 %v3988, %v3985
      %v4274 = vpack.c.b16 %v3992, %v3989
      %v4275 = vpack.c.b16 %v3993, %v3990
      %v4276 = vpack.c.b16 %v3994, %v3991
      %v4277 = vpack.c.b16 %v3998, %v3995
      %v4278 = vpack.c.b16 %v3999, %v3996
      %v4279 = vpack.c.b16 %v4000, %v3997
      %v4280 = vpack.c.b16 %v4004, %v4001
      %v4281 = vpack.c.b16 %v4005, %v4002
      %v4282 = vpack.c.b16 %v4006, %v4003
      %v4283 = vpack.c.b16 %v4010, %v4007
      %v4284 = vpack.c.b16 %v4011, %v4008
      %v4285 = vpack.c.b16 %v4012, %v4009
      %v4286 = vpack.c.b16 %v4016, %v4013
      %v4287 = vpack.c.b16 %v4017, %v4014
      %v4288 = vpack.c.b16 %v4018, %v4015
      %v4289 = vpack.c.b16 %v4022, %v4019
      %v4290 = vpack.c.b16 %v4023, %v4020
      %v4291 = vpack.c.b16 %v4024, %v4021
      %v4292 = vpack.c.b16 %v4028, %v4025
      %v4293 = vpack.c.b16 %v4029, %v4026
      %v4294 = vpack.c.b16 %v4030, %v4027
      %v4295 = vpack.c.b16 %v4034, %v4031
      %v4296 = vpack.c.b16 %v4035, %v4032
      %v4297 = vpack.c.b16 %v4036, %v4033
      %v4298 = vpack.c.b16 %v4040, %v4037
      %v4299 = vpack.c.b16 %v4041, %v4038
      %v4300 = vpack.c.b16 %v4042, %v4039
      %v4301 = vpack.c.b16 %v4046, %v4043
      %v4302 = vpack.c.b16 %v4047, %v4044
      %v4303 = vpack.c.b16 %v4048, %v4045
      %v4304 = vpack.c.b16 %v4052, %v4049
      %v4305 = vpack.c.b16 %v4053, %v4050
      %v4306 = vpack.c.b16 %v4054, %v4051
      %v4307 = vpack.c.b16 %v4058, %v4055
      %v4308 = vpack.c.b16 %v4059, %v4056
      %v4309 = vpack.c.b16 %v4060, %v4057
      %v4310 = vpack.c.b16 %v4064, %v4061
      %v4311 = vpack.c.b16 %v4065, %v4062
      %v4312 = vpack.c.b16 %v4066, %v4063
      %v4313 = vpack.c.b16 %v4070, %v4067
      %v4314 = vpack.c.b16 %v4071, %v4068
      %v4315 = vpack.c.b16 %v4072, %v4069
      %v4316 = vpack.c.b16 %v4076, %v4073
      %v4317 = vpack.c.b16 %v4077, %v4074
      %v4318 = vpack.c.b16 %v4078, %v4075
      %v4319 = vpack.c.b16 %v4082, %v4079
      %v4320 = vpack.c.b16 %v4083, %v4080
      %v4321 = vpack.c.b16 %v4084, %v4081
      %v4322 = vpack.c.b16 %v4088, %v4085
      %v4323 = vpack.c.b16 %v4089, %v4086
      %v4324 = vpack.c.b16 %v4090, %v4087
      %v4325 = vpack.c.b16 %v4094, %v4091
      %v4326 = vpack.c.b16 %v4095, %v4092
      %v4327 = vpack.c.b16 %v4096, %v4093
      %v4328 = vpack.c.b16 %v4100, %v4097
      %v4329 = vpack.c.b16 %v4101, %v4098
      %v4330 = vpack.c.b16 %v4102, %v4099
      %v4331 = vpack.c.b16 %v4106, %v4103
      %v4332 = vpack.c.b16 %v4107, %v4104
      %v4333 = vpack.c.b16 %v4108, %v4105
      %v4334 = vpack.c.b16 %v4112, %v4109
      %v4335 = vpack.c.b16 %v4113, %v4110
      %v4336 = vpack.c.b16 %v4114, %v4111
      %v4337 = vpack.c.b16 %v4118, %v4115
      %v4338 = vpack.c.b16 %v4119, %v4116
      %v4339 = vpack.c.b16 %v4120, %v4117
      %v4340 = vpack.c.b16 %v4124, %v4121
      %v4341 = vpack.c.b16 %v4125, %v4122
      %v4342 = vpack.c.b16 %v4126, %v4123
      %v4343 = vpack.c.b16 %v4130, %v4127
      %v4344 = vpack.c.b16 %v4131, %v4128
      %v4345 = vpack.c.b16 %v4132, %v4129
      %v4346 = vpack.c.b16 %v4136, %v4133
      %v4347 = vpack.c.b16 %v4137, %v4134
      %v4348 = vpack.c.b16 %v4138, %v4135
      %v4349 = vpack.c.b16 %v4142, %v4139
      %v4350 = vpack.c.b16 %v4143, %v4140
      %v4351 = vpack.c.b16 %v4144, %v4141
      %v4352 = vpack.c.b16 %v4148, %v4145
      %v4353 = vpack.c.b16 %v4149, %v4146
      %v4354 = vpack.c.b16 %v4150, %v4147
      %v4355 = vpack.c.b16 %v4154, %v4151
      %v4356 = vpack.c.b16 %v4155, %v4152
      %v4357 = vpack.c.b16 %v4156, %v4153
      %v4358 = vpack.c.b16 %v4160, %v4157
      %v4359 = vpack.c.b16 %v4161, %v4158
      %v4360 = vpack.c.b16 %v4162, %v4159
      %v4361 = vpack.c.b16 %v4166, %v4163
      %v4362 = vpack.c.b16 %v4167, %v4164
      %v4363 = vpack.c.b16 %v4168, %v4165
      %v4364 = vpack.c.b16 %v4172, %v4169
      %v4365 = vpack.c.b16 %v4173, %v4170
      %v4366 = vpack.c.b16 %v4174, %v4171
      %v4367 = vpack.c.b16 %v4178, %v4175
      %v4368 = vpack.c.b16 %v4179, %v4176
      %v4369 = vpack.c.b16 %v4180, %v4177
      %v4370 = vpack.c.b16 %v4184, %v4181
      %v4371 = vpack.c.b16 %v4185, %v4182
      %v4372 = vpack.c.b16 %v4186, %v4183
      %v4373 = vpack.c.b16 %v4190, %v4187
      %v4374 = vpack.c.b16 %v4191, %v4188
      %v4375 = vpack.c.b16 %v4192, %v4189
      %v4376 = vpack.c.b16 %v4196, %v4193
      %v4377 = vpack.c.b16 %v4197, %v4194
      %v4378 = vpack.c.b16 %v4198, %v4195
      %v4379 = vpack.c.b16 %v4202, %v4199
      %v4380 = vpack.c.b16 %v4203, %v4200
      %v4381 = vpack.c.b16 %v4204, %v4201
      %v4382 = vpack.c.b16 %v4208, %v4205
      %v4383 = vpack.c.b16 %v4209, %v4206
      %v4384 = vpack.c.b16 %v4210, %v4207
      %v4385 = vpack.c.b16 %v4214, %v4211
      %v4386 = vpack.c.b16 %v4215, %v4212
      %v4387 = vpack.c.b16 %v4216, %v4213
      %v4388 = vpack.c.b16 %v4220, %v4217
      %v4389 = vpack.c.b16 %v4221, %v4218
      %v4390 = vpack.c.b16 %v4222, %v4219
      %v4391 = vpack.c.b16 %v4226, %v4223
      %v4392 = vpack.c.b16 %v4227, %v4224
      %v4393 = vpack.c.b16 %v4228, %v4225
      %v4394 = vpack.c.b16 %v4232, %v4229
      %v4395 = vpack.c.b16 %v4233, %v4230
      %v4396 = vpack.c.b16 %v4234, %v4231
      %vm4559 = vcmask 785408
      %v4561 = vsel %vm4559, %v3429, 0
      %v4564 = vsel %vm4559, %v3436, 0
      %v4567 = vsel %vm4559, %v3443, 0
      %v4570 = vsel %vm4559, %v3450, 0
      %v4573 = vsel %vm4559, %v3457, 0
      %v4576 = vsel %vm4559, %v3464, 0
      %v4579 = vsel %vm4559, %v3471, 0
      %v4582 = vsel %vm4559, %v3478, 0
      %4584 = vmatprep.subr.bf16.mxu0 %v4236
      %4585 = vmatpush1.bf16.msra.mxu0 %v4235
      %4586 = vmatprep.subr.bf16.mxu0 %v4239
      %4587 = vmatpush1.bf16.msra.mxu0 %v4238
      %4588 = vmatprep.subr.bf16.mxu0 %v4242
      %4589 = vmatpush1.bf16.msra.mxu0 %v4241
      %4590 = vmatprep.subr.bf16.mxu0 %v4245
      %4591 = vmatpush1.bf16.msra.mxu0 %v4244
      %4592 = vmatprep.subr.bf16.mxu0 %v4248
      %4593 = vmatpush1.bf16.msra.mxu0 %v4247
      %4594 = vmatprep.subr.bf16.mxu0 %v4251
      %4595 = vmatpush1.bf16.msra.mxu0 %v4250
      %4596 = vmatprep.subr.bf16.mxu0 %v4254
      %4597 = vmatpush1.bf16.msra.mxu0 %v4253
      %4598 = vmatprep.subr.bf16.mxu0 %v4257
      %4599 = vmatpush1.bf16.msra.mxu0 %v4256
      %4600 = vmatprep.subr.bf16.mxu0 %v4260
      %4601 = vmatpush1.bf16.msra.mxu0 %v4259
      %4602 = vmatprep.subr.bf16.mxu0 %v4263
      %4603 = vmatpush1.bf16.msra.mxu0 %v4262
      %4604 = vmatprep.subr.bf16.mxu0 %v4266
      %4605 = vmatpush1.bf16.msra.mxu0 %v4265
      %4606 = vmatprep.subr.bf16.mxu0 %v4269
      %4607 = vmatpush1.bf16.msra.mxu0 %v4268
      %4608 = vmatprep.subr.bf16.mxu0 %v4272
      %4609 = vmatpush1.bf16.msra.mxu0 %v4271
      %4610 = vmatprep.subr.bf16.mxu0 %v4275
      %4611 = vmatpush1.bf16.msra.mxu0 %v4274
      %4612 = vmatprep.subr.bf16.mxu0 %v4278
      %4613 = vmatpush1.bf16.msra.mxu0 %v4277
      %4614 = vmatprep.subr.bf16.mxu0 %v4281
      %4615 = vmatpush1.bf16.msra.mxu0 %v4280
      %4616 = vmatprep.mubr.bf16.mxu0 %v3424
      %4617 = vmatmul.mubr.bf16.gmra.mrb[0].mxu0 %v3423
      %v4618 = vpop.f32.mrb[0].mxu0
      %v4619 = vadd.f32 0.0, %v4618
      %v4620 = vpop.f32.mrb[0].mxu0
      %v4621 = vadd.f32 0.0, %v4620
      %v4622 = vpop.f32.mrb[0].mxu0
      %v4623 = vadd.f32 0.0, %v4622
      %v4624 = vpop.f32.mrb[0].mxu0
      %v4625 = vadd.f32 0.0, %v4624
      %4626 = vmatprep.mubr.bf16.mxu0 %v3431
      %4627 = vmatmul.mubr.bf16.gmra.mrb[0].mxu0 %v3430
      %v4628 = vpop.f32.mrb[0].mxu0
      %v4629 = vadd.f32 0.0, %v4628
      %v4630 = vpop.f32.mrb[0].mxu0
      %v4631 = vadd.f32 0.0, %v4630
      %v4632 = vpop.f32.mrb[0].mxu0
      %v4633 = vadd.f32 0.0, %v4632
      %v4634 = vpop.f32.mrb[0].mxu0
      %v4635 = vadd.f32 0.0, %v4634
      %4636 = vmatprep.mubr.bf16.mxu0 %v3438
      %4637 = vmatmul.mubr.bf16.gmra.mrb[0].mxu0 %v3437
      %v4638 = vpop.f32.mrb[0].mxu0
      %v4639 = vadd.f32 0.0, %v4638
      %v4640 = vpop.f32.mrb[0].mxu0
      %v4641 = vadd.f32 0.0, %v4640
      %v4642 = vpop.f32.mrb[0].mxu0
      %v4643 = vadd.f32 0.0, %v4642
      %v4644 = vpop.f32.mrb[0].mxu0
      %v4645 = vadd.f32 0.0, %v4644
      %4646 = vmatprep.mubr.bf16.mxu0 %v3445
      %4647 = vmatmul.mubr.bf16.gmra.mrb[0].mxu0 %v3444
      %v4648 = vpop.f32.mrb[0].mxu0
      %v4649 = vadd.f32 0.0, %v4648
      %v4650 = vpop.f32.mrb[0].mxu0
      %v4651 = vadd.f32 0.0, %v4650
      %v4652 = vpop.f32.mrb[0].mxu0
      %v4653 = vadd.f32 0.0, %v4652
      %v4654 = vpop.f32.mrb[0].mxu0
      %v4655 = vadd.f32 0.0, %v4654
      %4656 = vmatprep.mubr.bf16.mxu0 %v3452
      %4657 = vmatmul.mubr.bf16.gmra.mrb[0].mxu0 %v3451
      %v4658 = vpop.f32.mrb[0].mxu0
      %v4659 = vadd.f32 0.0, %v4658
      %v4660 = vpop.f32.mrb[0].mxu0
      %v4661 = vadd.f32 0.0, %v4660
      %v4662 = vpop.f32.mrb[0].mxu0
      %v4663 = vadd.f32 0.0, %v4662
      %v4664 = vpop.f32.mrb[0].mxu0
      %v4665 = vadd.f32 0.0, %v4664
      %4666 = vmatprep.mubr.bf16.mxu0 %v3459
      %4667 = vmatmul.mubr.bf16.gmra.mrb[0].mxu0 %v3458
      %v4668 = vpop.f32.mrb[0].mxu0
      %v4669 = vadd.f32 0.0, %v4668
      %v4670 = vpop.f32.mrb[0].mxu0
      %v4671 = vadd.f32 0.0, %v4670
      %v4672 = vpop.f32.mrb[0].mxu0
      %v4673 = vadd.f32 0.0, %v4672
      %v4674 = vpop.f32.mrb[0].mxu0
      %v4675 = vadd.f32 0.0, %v4674
      %4676 = vmatprep.mubr.bf16.mxu0 %v3466
      %4677 = vmatmul.mubr.bf16.gmra.mrb[0].mxu0 %v3465
      %v4678 = vpop.f32.mrb[0].mxu0
      %v4679 = vadd.f32 0.0, %v4678
      %v4680 = vpop.f32.mrb[0].mxu0
      %v4681 = vadd.f32 0.0, %v4680
      %v4682 = vpop.f32.mrb[0].mxu0
      %v4683 = vadd.f32 0.0, %v4682
      %v4684 = vpop.f32.mrb[0].mxu0
      %v4685 = vadd.f32 0.0, %v4684
      %4686 = vmatprep.mubr.bf16.mxu0 %v3473
      %4687 = vmatmul.mubr.bf16.gmra.mrb[0].mxu0 %v3472
      %v4688 = vpop.f32.mrb[0].mxu0
      %v4689 = vadd.f32 0.0, %v4688
      %v4690 = vpop.f32.mrb[0].mxu0
      %v4691 = vadd.f32 0.0, %v4690
      %v4692 = vpop.f32.mrb[0].mxu0
      %v4693 = vadd.f32 0.0, %v4692
      %v4694 = vpop.f32.mrb[0].mxu0
      %v4695 = vadd.f32 0.0, %v4694
      %4696 = vdwg.mxu0
      %4697 = vmatprep.subr.bf16.mxu0 %v4284
      %4698 = vmatpush1.bf16.msra.mxu0 %v4283
      %4699 = vmatprep.subr.bf16.mxu0 %v4287
      %4700 = vmatpush1.bf16.msra.mxu0 %v4286
      %4701 = vmatprep.subr.bf16.mxu0 %v4290
      %4702 = vmatpush1.bf16.msra.mxu0 %v4289
      %4703 = vmatprep.subr.bf16.mxu0 %v4293
      %4704 = vmatpush1.bf16.msra.mxu0 %v4292
      %4705 = vmatprep.subr.bf16.mxu0 %v4296
      %4706 = vmatpush1.bf16.msra.mxu0 %v4295
      %4707 = vmatprep.subr.bf16.mxu0 %v4299
      %4708 = vmatpush1.bf16.msra.mxu0 %v4298
      %4709 = vmatprep.subr.bf16.mxu0 %v4302
      %4710 = vmatpush1.bf16.msra.mxu0 %v4301
      %4711 = vmatprep.subr.bf16.mxu0 %v4305
      %4712 = vmatpush1.bf16.msra.mxu0 %v4304
      %4713 = vmatprep.subr.bf16.mxu0 %v4308
      %4714 = vmatpush1.bf16.msra.mxu0 %v4307
      %4715 = vmatprep.subr.bf16.mxu0 %v4311
      %4716 = vmatpush1.bf16.msra.mxu0 %v4310
      %4717 = vmatprep.subr.bf16.mxu0 %v4314
      %4718 = vmatpush1.bf16.msra.mxu0 %v4313
      %4719 = vmatprep.subr.bf16.mxu0 %v4317
      %4720 = vmatpush1.bf16.msra.mxu0 %v4316
      %4721 = vmatprep.subr.bf16.mxu0 %v4320
      %4722 = vmatpush1.bf16.msra.mxu0 %v4319
      %4723 = vmatprep.subr.bf16.mxu0 %v4323
      %4724 = vmatpush1.bf16.msra.mxu0 %v4322
      %4725 = vmatprep.subr.bf16.mxu0 %v4326
      %4726 = vmatpush1.bf16.msra.mxu0 %v4325
      %4727 = vmatprep.subr.bf16.mxu0 %v4329
      %4728 = vmatpush1.bf16.msra.mxu0 %v4328
      %4729 = vmatprep.mubr.bf16.mxu0 %v3426
      %4730 = vmatmul.mubr.bf16.gmra.mrb[0].mxu0 %v3425
      %v4731 = vpop.f32.mrb[0].mxu0
      %v4732 = vadd.f32 %v4619, %v4731
      %v4733 = vpop.f32.mrb[0].mxu0
      %v4734 = vadd.f32 %v4621, %v4733
      %v4735 = vpop.f32.mrb[0].mxu0
      %v4736 = vadd.f32 %v4623, %v4735
      %v4737 = vpop.f32.mrb[0].mxu0
      %v4738 = vadd.f32 %v4625, %v4737
      %4739 = vmatprep.mubr.bf16.mxu0 %v3433
      %4740 = vmatmul.mubr.bf16.gmra.mrb[0].mxu0 %v3432
      %v4741 = vpop.f32.mrb[0].mxu0
      %v4742 = vadd.f32 %v4629, %v4741
      %v4743 = vpop.f32.mrb[0].mxu0
      %v4744 = vadd.f32 %v4631, %v4743
      %v4745 = vpop.f32.mrb[0].mxu0
      %v4746 = vadd.f32 %v4633, %v4745
      %v4747 = vpop.f32.mrb[0].mxu0
      %v4748 = vadd.f32 %v4635, %v4747
      %4749 = vmatprep.mubr.bf16.mxu0 %v3440
      %4750 = vmatmul.mubr.bf16.gmra.mrb[0].mxu0 %v3439
      %v4751 = vpop.f32.mrb[0].mxu0
      %v4752 = vadd.f32 %v4639, %v4751
      %v4753 = vpop.f32.mrb[0].mxu0
      %v4754 = vadd.f32 %v4641, %v4753
      %v4755 = vpop.f32.mrb[0].mxu0
      %v4756 = vadd.f32 %v4643, %v4755
      %v4757 = vpop.f32.mrb[0].mxu0
      %v4758 = vadd.f32 %v4645, %v4757
      %4759 = vmatprep.mubr.bf16.mxu0 %v3447
      %4760 = vmatmul.mubr.bf16.gmra.mrb[0].mxu0 %v3446
      %v4761 = vpop.f32.mrb[0].mxu0
      %v4762 = vadd.f32 %v4649, %v4761
      %v4763 = vpop.f32.mrb[0].mxu0
      %v4764 = vadd.f32 %v4651, %v4763
      %v4765 = vpop.f32.mrb[0].mxu0
      %v4766 = vadd.f32 %v4653, %v4765
      %v4767 = vpop.f32.mrb[0].mxu0
      %v4768 = vadd.f32 %v4655, %v4767
      %4769 = vmatprep.mubr.bf16.mxu0 %v3454
      %4770 = vmatmul.mubr.bf16.gmra.mrb[0].mxu0 %v3453
      %v4771 = vpop.f32.mrb[0].mxu0
      %v4772 = vadd.f32 %v4659, %v4771
      %v4773 = vpop.f32.mrb[0].mxu0
      %v4774 = vadd.f32 %v4661, %v4773
      %v4775 = vpop.f32.mrb[0].mxu0
      %v4776 = vadd.f32 %v4663, %v4775
      %v4777 = vpop.f32.mrb[0].mxu0
      %v4778 = vadd.f32 %v4665, %v4777
      %4779 = vmatprep.mubr.bf16.mxu0 %v3461
      %4780 = vmatmul.mubr.bf16.gmra.mrb[0].mxu0 %v3460
      %v4781 = vpop.f32.mrb[0].mxu0
      %v4782 = vadd.f32 %v4669, %v4781
      %v4783 = vpop.f32.mrb[0].mxu0
      %v4784 = vadd.f32 %v4671, %v4783
      %v4785 = vpop.f32.mrb[0].mxu0
      %v4786 = vadd.f32 %v4673, %v4785
      %v4787 = vpop.f32.mrb[0].mxu0
      %v4788 = vadd.f32 %v4675, %v4787
      %4789 = vmatprep.mubr.bf16.mxu0 %v3468
      %4790 = vmatmul.mubr.bf16.gmra.mrb[0].mxu0 %v3467
      %v4791 = vpop.f32.mrb[0].mxu0
      %v4792 = vadd.f32 %v4679, %v4791
      %v4793 = vpop.f32.mrb[0].mxu0
      %v4794 = vadd.f32 %v4681, %v4793
      %v4795 = vpop.f32.mrb[0].mxu0
      %v4796 = vadd.f32 %v4683, %v4795
      %v4797 = vpop.f32.mrb[0].mxu0
      %v4798 = vadd.f32 %v4685, %v4797
      %4799 = vmatprep.mubr.bf16.mxu0 %v3475
      %4800 = vmatmul.mubr.bf16.gmra.mrb[0].mxu0 %v3474
      %v4801 = vpop.f32.mrb[0].mxu0
      %v4802 = vadd.f32 %v4689, %v4801
      %v4803 = vpop.f32.mrb[0].mxu0
      %v4804 = vadd.f32 %v4691, %v4803
      %v4805 = vpop.f32.mrb[0].mxu0
      %v4806 = vadd.f32 %v4693, %v4805
      %v4807 = vpop.f32.mrb[0].mxu0
      %v4808 = vadd.f32 %v4695, %v4807
      %4809 = vdwg.mxu0
      %4810 = vmatprep.subr.bf16.mxu0 %v4332
      %4811 = vmatpush1.bf16.msra.mxu0 %v4331
      %4812 = vmatprep.subr.bf16.mxu0 %v4335
      %4813 = vmatpush1.bf16.msra.mxu0 %v4334
      %4814 = vmatprep.subr.bf16.mxu0 %v4338
      %4815 = vmatpush1.bf16.msra.mxu0 %v4337
      %4816 = vmatprep.subr.bf16.mxu0 %v4341
      %4817 = vmatpush1.bf16.msra.mxu0 %v4340
      %4818 = vmatprep.subr.bf16.mxu0 %v4344
      %4819 = vmatpush1.bf16.msra.mxu0 %v4343
      %4820 = vmatprep.subr.bf16.mxu0 %v4347
      %4821 = vmatpush1.bf16.msra.mxu0 %v4346
      %4822 = vmatprep.subr.bf16.mxu0 %v4350
      %4823 = vmatpush1.bf16.msra.mxu0 %v4349
      %4824 = vmatprep.subr.bf16.mxu0 %v4353
      %4825 = vmatpush1.bf16.msra.mxu0 %v4352
      %4826 = vmatprep.subr.bf16.mxu0 %v4356
      %4827 = vmatpush1.bf16.msra.mxu0 %v4355
      %4828 = vmatprep.subr.bf16.mxu0 %v4359
      %4829 = vmatpush1.bf16.msra.mxu0 %v4358
      %4830 = vmatprep.subr.bf16.mxu0 %v4362
      %4831 = vmatpush1.bf16.msra.mxu0 %v4361
      %4832 = vmatprep.subr.bf16.mxu0 %v4365
      %4833 = vmatpush1.bf16.msra.mxu0 %v4364
      %4834 = vmatprep.subr.bf16.mxu0 %v4368
      %4835 = vmatpush1.bf16.msra.mxu0 %v4367
      %4836 = vmatprep.subr.bf16.mxu0 %v4371
      %4837 = vmatpush1.bf16.msra.mxu0 %v4370
      %4838 = vmatprep.subr.bf16.mxu0 %v4374
      %4839 = vmatpush1.bf16.msra.mxu0 %v4373
      %4840 = vmatprep.subr.bf16.mxu0 %v4377
      %4841 = vmatpush1.bf16.msra.mxu0 %v4376
      %4842 = vmatprep.mubr.bf16.mxu0 %v3428
      %4843 = vmatmul.mubr.bf16.gmra.mrb[0].mxu0 %v3427
      %v4844 = vpop.f32.mrb[0].mxu0
      %v4845 = vadd.f32 %v4732, %v4844
      %v4846 = vpop.f32.mrb[0].mxu0
      %v4847 = vadd.f32 %v4734, %v4846
      %v4848 = vpop.f32.mrb[0].mxu0
      %v4849 = vadd.f32 %v4736, %v4848
      %v4850 = vpop.f32.mrb[0].mxu0
      %v4851 = vadd.f32 %v4738, %v4850
      %4852 = vmatprep.mubr.bf16.mxu0 %v3435
      %4853 = vmatmul.mubr.bf16.gmra.mrb[0].mxu0 %v3434
      %v4854 = vpop.f32.mrb[0].mxu0
      %v4855 = vadd.f32 %v4742, %v4854
      %v4856 = vpop.f32.mrb[0].mxu0
      %v4857 = vadd.f32 %v4744, %v4856
      %v4858 = vpop.f32.mrb[0].mxu0
      %v4859 = vadd.f32 %v4746, %v4858
      %v4860 = vpop.f32.mrb[0].mxu0
      %v4861 = vadd.f32 %v4748, %v4860
      %4862 = vmatprep.mubr.bf16.mxu0 %v3442
      %4863 = vmatmul.mubr.bf16.gmra.mrb[0].mxu0 %v3441
      %v4864 = vpop.f32.mrb[0].mxu0
      %v4865 = vadd.f32 %v4752, %v4864
      %v4866 = vpop.f32.mrb[0].mxu0
      %v4867 = vadd.f32 %v4754, %v4866
      %v4868 = vpop.f32.mrb[0].mxu0
      %v4869 = vadd.f32 %v4756, %v4868
      %v4870 = vpop.f32.mrb[0].mxu0
      %v4871 = vadd.f32 %v4758, %v4870
      %4872 = vmatprep.mubr.bf16.mxu0 %v3449
      %4873 = vmatmul.mubr.bf16.gmra.mrb[0].mxu0 %v3448
      %v4874 = vpop.f32.mrb[0].mxu0
      %v4875 = vadd.f32 %v4762, %v4874
      %v4876 = vpop.f32.mrb[0].mxu0
      %v4877 = vadd.f32 %v4764, %v4876
      %v4878 = vpop.f32.mrb[0].mxu0
      %v4879 = vadd.f32 %v4766, %v4878
      %v4880 = vpop.f32.mrb[0].mxu0
      %v4881 = vadd.f32 %v4768, %v4880
      %4882 = vmatprep.mubr.bf16.mxu0 %v3456
      %4883 = vmatmul.mubr.bf16.gmra.mrb[0].mxu0 %v3455
      %v4884 = vpop.f32.mrb[0].mxu0
      %v4885 = vadd.f32 %v4772, %v4884
      %v4886 = vpop.f32.mrb[0].mxu0
      %v4887 = vadd.f32 %v4774, %v4886
      %v4888 = vpop.f32.mrb[0].mxu0
      %v4889 = vadd.f32 %v4776, %v4888
      %v4890 = vpop.f32.mrb[0].mxu0
      %v4891 = vadd.f32 %v4778, %v4890
      %4892 = vmatprep.mubr.bf16.mxu0 %v3463
      %4893 = vmatmul.mubr.bf16.gmra.mrb[0].mxu0 %v3462
      %v4894 = vpop.f32.mrb[0].mxu0
      %v4895 = vadd.f32 %v4782, %v4894
      %v4896 = vpop.f32.mrb[0].mxu0
      %v4897 = vadd.f32 %v4784, %v4896
      %v4898 = vpop.f32.mrb[0].mxu0
      %v4899 = vadd.f32 %v4786, %v4898
      %v4900 = vpop.f32.mrb[0].mxu0
      %v4901 = vadd.f32 %v4788, %v4900
      %4902 = vmatprep.mubr.bf16.mxu0 %v3470
      %4903 = vmatmul.mubr.bf16.gmra.mrb[0].mxu0 %v3469
      %v4904 = vpop.f32.mrb[0].mxu0
      %v4905 = vadd.f32 %v4792, %v4904
      %v4906 = vpop.f32.mrb[0].mxu0
      %v4907 = vadd.f32 %v4794, %v4906
      %v4908 = vpop.f32.mrb[0].mxu0
      %v4909 = vadd.f32 %v4796, %v4908
      %v4910 = vpop.f32.mrb[0].mxu0
      %v4911 = vadd.f32 %v4798, %v4910
      %4912 = vmatprep.mubr.bf16.mxu0 %v3477
      %4913 = vmatmul.mubr.bf16.gmra.mrb[0].mxu0 %v3476
      %v4914 = vpop.f32.mrb[0].mxu0
      %v4915 = vadd.f32 %v4802, %v4914
      %v4916 = vpop.f32.mrb[0].mxu0
      %v4917 = vadd.f32 %v4804, %v4916
      %v4918 = vpop.f32.mrb[0].mxu0
      %v4919 = vadd.f32 %v4806, %v4918
      %v4920 = vpop.f32.mrb[0].mxu0
      %v4921 = vadd.f32 %v4808, %v4920
      %4922 = vdwg.mxu0
      %4923 = vmatprep.subr.bf16.mxu0 %v4380
      %4924 = vmatpush1.bf16.msra.mxu0 %v4379
      %4925 = vmatprep.subr.bf16.mxu0 %v4383
      %4926 = vmatpush1.bf16.msra.mxu0 %v4382
      %4927 = vmatprep.subr.bf16.mxu0 %v4386
      %4928 = vmatpush1.bf16.msra.mxu0 %v4385
      %4929 = vmatprep.subr.bf16.mxu0 %v4389
      %4930 = vmatpush1.bf16.msra.mxu0 %v4388
      %4931 = vmatprep.subr.bf16.mxu0 %v4392
      %4932 = vmatpush1.bf16.msra.mxu0 %v4391
      %4933 = vmatprep.subr.bf16.mxu0 %v4395
      %4934 = vmatpush1.bf16.msra.mxu0 %v4394
      %4935 = vmatprep.subr.bf16.mxu0 0
      %4936 = vmatpush1.bf16.msra.mxu0 0
      %4937 = vmatprep.subr.bf16.mxu0 0
      %4938 = vmatpush1.bf16.msra.mxu0 0
      %4939 = vmatprep.subr.bf16.mxu0 0
      %4940 = vmatpush1.bf16.msra.mxu0 0
      %4941 = vmatprep.subr.bf16.mxu0 0
      %4942 = vmatpush1.bf16.msra.mxu0 0
      %4943 = vmatprep.subr.bf16.mxu0 0
      %4944 = vmatpush1.bf16.msra.mxu0 0
      %4945 = vmatprep.subr.bf16.mxu0 0
      %4946 = vmatpush1.bf16.msra.mxu0 0
      %4947 = vmatprep.subr.bf16.mxu0 0
      %4948 = vmatpush1.bf16.msra.mxu0 0
      %4949 = vmatprep.subr.bf16.mxu0 0
      %4950 = vmatpush1.bf16.msra.mxu0 0
      %4951 = vmatprep.subr.bf16.mxu0 0
      %4952 = vmatpush1.bf16.msra.mxu0 0
      %4953 = vmatprep.subr.bf16.mxu0 0
      %4954 = vmatpush1.bf16.msra.mxu0 0
      %4955 = vmatprep.mubr.bf16.mxu0 0
      %4956 = vmatmul.mubr.bf16.gmra.mrb[0].mxu0 %v4561
      %v4957 = vpop.f32.mrb[0].mxu0
      %v4958 = vadd.f32 %v4845, %v4957
      %v4959 = vpop.f32.mrb[0].mxu0
      %v4960 = vadd.f32 %v4847, %v4959
      %v4961 = vpop.f32.mrb[0].mxu0
      %v4962 = vadd.f32 %v4849, %v4961
      %v4963 = vpop.f32.mrb[0].mxu0
      %v4964 = vadd.f32 %v4851, %v4963
      %4965 = vmatprep.mubr.bf16.mxu0 0
      %4966 = vmatmul.mubr.bf16.gmra.mrb[0].mxu0 %v4564
      %v4967 = vpop.f32.mrb[0].mxu0
      %v4968 = vadd.f32 %v4855, %v4967
      %v4969 = vpop.f32.mrb[0].mxu0
      %v4970 = vadd.f32 %v4857, %v4969
      %v4971 = vpop.f32.mrb[0].mxu0
      %v4972 = vadd.f32 %v4859, %v4971
      %v4973 = vpop.f32.mrb[0].mxu0
      %v4974 = vadd.f32 %v4861, %v4973
      %4975 = vmatprep.mubr.bf16.mxu0 0
      %4976 = vmatmul.mubr.bf16.gmra.mrb[0].mxu0 %v4567
      %v4977 = vpop.f32.mrb[0].mxu0
      %v4978 = vadd.f32 %v4865, %v4977
      %v4979 = vpop.f32.mrb[0].mxu0
      %v4980 = vadd.f32 %v4867, %v4979
      %v4981 = vpop.f32.mrb[0].mxu0
      %v4982 = vadd.f32 %v4869, %v4981
      %v4983 = vpop.f32.mrb[0].mxu0
      %v4984 = vadd.f32 %v4871, %v4983
      %4985 = vmatprep.mubr.bf16.mxu0 0
      %4986 = vmatmul.mubr.bf16.gmra.mrb[0].mxu0 %v4570
      %v4987 = vpop.f32.mrb[0].mxu0
      %v4988 = vadd.f32 %v4875, %v4987
      %v4989 = vpop.f32.mrb[0].mxu0
      %v4990 = vadd.f32 %v4877, %v4989
      %v4991 = vpop.f32.mrb[0].mxu0
      %v4992 = vadd.f32 %v4879, %v4991
      %v4993 = vpop.f32.mrb[0].mxu0
      %v4994 = vadd.f32 %v4881, %v4993
      %4995 = vmatprep.mubr.bf16.mxu0 0
      %4996 = vmatmul.mubr.bf16.gmra.mrb[0].mxu0 %v4573
      %v4997 = vpop.f32.mrb[0].mxu0
      %v4998 = vadd.f32 %v4885, %v4997
      %v4999 = vpop.f32.mrb[0].mxu0
      %v5000 = vadd.f32 %v4887, %v4999
      %v5001 = vpop.f32.mrb[0].mxu0
      %v5002 = vadd.f32 %v4889, %v5001
      %v5003 = vpop.f32.mrb[0].mxu0
      %v5004 = vadd.f32 %v4891, %v5003
      %5005 = vmatprep.mubr.bf16.mxu0 0
      %5006 = vmatmul.mubr.bf16.gmra.mrb[0].mxu0 %v4576
      %v5007 = vpop.f32.mrb[0].mxu0
      %v5008 = vadd.f32 %v4895, %v5007
      %v5009 = vpop.f32.mrb[0].mxu0
      %v5010 = vadd.f32 %v4897, %v5009
      %v5011 = vpop.f32.mrb[0].mxu0
      %v5012 = vadd.f32 %v4899, %v5011
      %v5013 = vpop.f32.mrb[0].mxu0
      %v5014 = vadd.f32 %v4901, %v5013
      %5015 = vmatprep.mubr.bf16.mxu0 0
      %5016 = vmatmul.mubr.bf16.gmra.mrb[0].mxu0 %v4579
      %v5017 = vpop.f32.mrb[0].mxu0
      %v5018 = vadd.f32 %v4905, %v5017
      %v5019 = vpop.f32.mrb[0].mxu0
      %v5020 = vadd.f32 %v4907, %v5019
      %v5021 = vpop.f32.mrb[0].mxu0
      %v5022 = vadd.f32 %v4909, %v5021
      %v5023 = vpop.f32.mrb[0].mxu0
      %v5024 = vadd.f32 %v4911, %v5023
      %5025 = vmatprep.mubr.bf16.mxu0 0
      %5026 = vmatmul.mubr.bf16.gmra.mrb[0].mxu0 %v4582
      %v5027 = vpop.f32.mrb[0].mxu0
      %v5028 = vadd.f32 %v4915, %v5027
      %v5029 = vpop.f32.mrb[0].mxu0
      %v5030 = vadd.f32 %v4917, %v5029
      %v5031 = vpop.f32.mrb[0].mxu0
      %v5032 = vadd.f32 %v4919, %v5031
      %v5033 = vpop.f32.mrb[0].mxu0
      %v5034 = vadd.f32 %v4921, %v5033
      %5035 = vdwg.mxu0
      %5036 = vmatprep.subr.bf16.mxu0 0
      %5037 = vmatpush1.bf16.msra.mxu0 %v4237
      %5038 = vmatprep.subr.bf16.mxu0 0
      %5039 = vmatpush1.bf16.msra.mxu0 %v4240
      %5040 = vmatprep.subr.bf16.mxu0 0
      %5041 = vmatpush1.bf16.msra.mxu0 %v4243
      %5042 = vmatprep.subr.bf16.mxu0 0
      %5043 = vmatpush1.bf16.msra.mxu0 %v4246
      %5044 = vmatprep.subr.bf16.mxu0 0
      %5045 = vmatpush1.bf16.msra.mxu0 %v4249
      %5046 = vmatprep.subr.bf16.mxu0 0
      %5047 = vmatpush1.bf16.msra.mxu0 %v4252
      %5048 = vmatprep.subr.bf16.mxu0 0
      %5049 = vmatpush1.bf16.msra.mxu0 %v4255
      %5050 = vmatprep.subr.bf16.mxu0 0
      %5051 = vmatpush1.bf16.msra.mxu0 %v4258
      %5052 = vmatprep.subr.bf16.mxu0 0
      %5053 = vmatpush1.bf16.msra.mxu0 %v4261
      %5054 = vmatprep.subr.bf16.mxu0 0
      %5055 = vmatpush1.bf16.msra.mxu0 %v4264
      %5056 = vmatprep.subr.bf16.mxu0 0
      %5057 = vmatpush1.bf16.msra.mxu0 %v4267
      %5058 = vmatprep.subr.bf16.mxu0 0
      %5059 = vmatpush1.bf16.msra.mxu0 %v4270
      %5060 = vmatprep.subr.bf16.mxu0 0
      %5061 = vmatpush1.bf16.msra.mxu0 %v4273
      %5062 = vmatprep.subr.bf16.mxu0 0
      %5063 = vmatpush1.bf16.msra.mxu0 %v4276
      %5064 = vmatprep.subr.bf16.mxu0 0
      %5065 = vmatpush1.bf16.msra.mxu0 %v4279
      %5066 = vmatprep.subr.bf16.mxu0 0
      %5067 = vmatpush1.bf16.msra.mxu0 %v4282
      %5068 = vmatprep.mubr.bf16.mxu0 %v3424
      %5069 = vmatmul.mubr.bf16.gmra.mrb[0].mxu0 %v3423
      %v5070 = vpop.f32.mrb[0].mxu0
      %v5071 = vadd.f32 0.0, %v5070
      %v5072 = vpop.f32.mrb[0].mxu0
      %v5073 = vpop.f32.mrb[0].mxu0
      %v5074 = vadd.f32 0.0, %v5073
      %v5075 = vpop.f32.mrb[0].mxu0
      %5076 = vmatprep.mubr.bf16.mxu0 %v3431
      %5077 = vmatmul.mubr.bf16.gmra.mrb[0].mxu0 %v3430
      %v5078 = vpop.f32.mrb[0].mxu0
      %v5079 = vadd.f32 0.0, %v5078
      %v5080 = vpop.f32.mrb[0].mxu0
      %v5081 = vpop.f32.mrb[0].mxu0
      %v5082 = vadd.f32 0.0, %v5081
      %v5083 = vpop.f32.mrb[0].mxu0
      %5084 = vmatprep.mubr.bf16.mxu0 %v3438
      %5085 = vmatmul.mubr.bf16.gmra.mrb[0].mxu0 %v3437
      %v5086 = vpop.f32.mrb[0].mxu0
      %v5087 = vadd.f32 0.0, %v5086
      %v5088 = vpop.f32.mrb[0].mxu0
      %v5089 = vpop.f32.mrb[0].mxu0
      %v5090 = vadd.f32 0.0, %v5089
      %v5091 = vpop.f32.mrb[0].mxu0
      %5092 = vmatprep.mubr.bf16.mxu0 %v3445
      %5093 = vmatmul.mubr.bf16.gmra.mrb[0].mxu0 %v3444
      %v5094 = vpop.f32.mrb[0].mxu0
      %v5095 = vadd.f32 0.0, %v5094
      %v5096 = vpop.f32.mrb[0].mxu0
      %v5097 = vpop.f32.mrb[0].mxu0
      %v5098 = vadd.f32 0.0, %v5097
      %v5099 = vpop.f32.mrb[0].mxu0
      %5100 = vmatprep.mubr.bf16.mxu0 %v3452
      %5101 = vmatmul.mubr.bf16.gmra.mrb[0].mxu0 %v3451
      %v5102 = vpop.f32.mrb[0].mxu0
      %v5103 = vadd.f32 0.0, %v5102
      %v5104 = vpop.f32.mrb[0].mxu0
      %v5105 = vpop.f32.mrb[0].mxu0
      %v5106 = vadd.f32 0.0, %v5105
      %v5107 = vpop.f32.mrb[0].mxu0
      %5108 = vmatprep.mubr.bf16.mxu0 %v3459
      %5109 = vmatmul.mubr.bf16.gmra.mrb[0].mxu0 %v3458
      %v5110 = vpop.f32.mrb[0].mxu0
      %v5111 = vadd.f32 0.0, %v5110
      %v5112 = vpop.f32.mrb[0].mxu0
      %v5113 = vpop.f32.mrb[0].mxu0
      %v5114 = vadd.f32 0.0, %v5113
      %v5115 = vpop.f32.mrb[0].mxu0
      %5116 = vmatprep.mubr.bf16.mxu0 %v3466
      %5117 = vmatmul.mubr.bf16.gmra.mrb[0].mxu0 %v3465
      %v5118 = vpop.f32.mrb[0].mxu0
      %v5119 = vadd.f32 0.0, %v5118
      %v5120 = vpop.f32.mrb[0].mxu0
      %v5121 = vpop.f32.mrb[0].mxu0
      %v5122 = vadd.f32 0.0, %v5121
      %v5123 = vpop.f32.mrb[0].mxu0
      %5124 = vmatprep.mubr.bf16.mxu0 %v3473
      %5125 = vmatmul.mubr.bf16.gmra.mrb[0].mxu0 %v3472
      %v5126 = vpop.f32.mrb[0].mxu0
      %v5127 = vadd.f32 0.0, %v5126
      %v5128 = vpop.f32.mrb[0].mxu0
      %v5129 = vpop.f32.mrb[0].mxu0
      %v5130 = vadd.f32 0.0, %v5129
      %v5131 = vpop.f32.mrb[0].mxu0
      %5132 = vdwg.mxu0
      %5133 = vmatprep.subr.bf16.mxu0 0
      %5134 = vmatpush1.bf16.msra.mxu0 %v4285
      %5135 = vmatprep.subr.bf16.mxu0 0
      %5136 = vmatpush1.bf16.msra.mxu0 %v4288
      %5137 = vmatprep.subr.bf16.mxu0 0
      %5138 = vmatpush1.bf16.msra.mxu0 %v4291
      %5139 = vmatprep.subr.bf16.mxu0 0
      %5140 = vmatpush1.bf16.msra.mxu0 %v4294
      %5141 = vmatprep.subr.bf16.mxu0 0
      %5142 = vmatpush1.bf16.msra.mxu0 %v4297
      %5143 = vmatprep.subr.bf16.mxu0 0
      %5144 = vmatpush1.bf16.msra.mxu0 %v4300
      %5145 = vmatprep.subr.bf16.mxu0 0
      %5146 = vmatpush1.bf16.msra.mxu0 %v4303
      %5147 = vmatprep.subr.bf16.mxu0 0
      %5148 = vmatpush1.bf16.msra.mxu0 %v4306
      %5149 = vmatprep.subr.bf16.mxu0 0
      %5150 = vmatpush1.bf16.msra.mxu0 %v4309
      %5151 = vmatprep.subr.bf16.mxu0 0
      %5152 = vmatpush1.bf16.msra.mxu0 %v4312
      %5153 = vmatprep.subr.bf16.mxu0 0
      %5154 = vmatpush1.bf16.msra.mxu0 %v4315
      %5155 = vmatprep.subr.bf16.mxu0 0
      %5156 = vmatpush1.bf16.msra.mxu0 %v4318
      %5157 = vmatprep.subr.bf16.mxu0 0
      %5158 = vmatpush1.bf16.msra.mxu0 %v4321
      %5159 = vmatprep.subr.bf16.mxu0 0
      %5160 = vmatpush1.bf16.msra.mxu0 %v4324
      %5161 = vmatprep.subr.bf16.mxu0 0
      %5162 = vmatpush1.bf16.msra.mxu0 %v4327
      %5163 = vmatprep.subr.bf16.mxu0 0
      %5164 = vmatpush1.bf16.msra.mxu0 %v4330
      %5165 = vmatprep.mubr.bf16.mxu0 %v3426
      %5166 = vmatmul.mubr.bf16.gmra.mrb[0].mxu0 %v3425
      %v5167 = vpop.f32.mrb[0].mxu0
      %v5168 = vadd.f32 %v5071, %v5167
      %v5169 = vpop.f32.mrb[0].mxu0
      %v5170 = vpop.f32.mrb[0].mxu0
      %v5171 = vadd.f32 %v5074, %v5170
      %v5172 = vpop.f32.mrb[0].mxu0
      %5173 = vmatprep.mubr.bf16.mxu0 %v3433
      %5174 = vmatmul.mubr.bf16.gmra.mrb[0].mxu0 %v3432
      %v5175 = vpop.f32.mrb[0].mxu0
      %v5176 = vadd.f32 %v5079, %v5175
      %v5177 = vpop.f32.mrb[0].mxu0
      %v5178 = vpop.f32.mrb[0].mxu0
      %v5179 = vadd.f32 %v5082, %v5178
      %v5180 = vpop.f32.mrb[0].mxu0
      %5181 = vmatprep.mubr.bf16.mxu0 %v3440
      %5182 = vmatmul.mubr.bf16.gmra.mrb[0].mxu0 %v3439
      %v5183 = vpop.f32.mrb[0].mxu0
      %v5184 = vadd.f32 %v5087, %v5183
      %v5185 = vpop.f32.mrb[0].mxu0
      %v5186 = vpop.f32.mrb[0].mxu0
      %v5187 = vadd.f32 %v5090, %v5186
      %v5188 = vpop.f32.mrb[0].mxu0
      %5189 = vmatprep.mubr.bf16.mxu0 %v3447
      %5190 = vmatmul.mubr.bf16.gmra.mrb[0].mxu0 %v3446
      %v5191 = vpop.f32.mrb[0].mxu0
      %v5192 = vadd.f32 %v5095, %v5191
      %v5193 = vpop.f32.mrb[0].mxu0
      %v5194 = vpop.f32.mrb[0].mxu0
      %v5195 = vadd.f32 %v5098, %v5194
      %v5196 = vpop.f32.mrb[0].mxu0
      %5197 = vmatprep.mubr.bf16.mxu0 %v3454
      %5198 = vmatmul.mubr.bf16.gmra.mrb[0].mxu0 %v3453
      %v5199 = vpop.f32.mrb[0].mxu0
      %v5200 = vadd.f32 %v5103, %v5199
      %v5201 = vpop.f32.mrb[0].mxu0
      %v5202 = vpop.f32.mrb[0].mxu0
      %v5203 = vadd.f32 %v5106, %v5202
      %v5204 = vpop.f32.mrb[0].mxu0
      %5205 = vmatprep.mubr.bf16.mxu0 %v3461
      %5206 = vmatmul.mubr.bf16.gmra.mrb[0].mxu0 %v3460
      %v5207 = vpop.f32.mrb[0].mxu0
      %v5208 = vadd.f32 %v5111, %v5207
      %v5209 = vpop.f32.mrb[0].mxu0
      %v5210 = vpop.f32.mrb[0].mxu0
      %v5211 = vadd.f32 %v5114, %v5210
      %v5212 = vpop.f32.mrb[0].mxu0
      %5213 = vmatprep.mubr.bf16.mxu0 %v3468
      %5214 = vmatmul.mubr.bf16.gmra.mrb[0].mxu0 %v3467
      %v5215 = vpop.f32.mrb[0].mxu0
      %v5216 = vadd.f32 %v5119, %v5215
      %v5217 = vpop.f32.mrb[0].mxu0
      %v5218 = vpop.f32.mrb[0].mxu0
      %v5219 = vadd.f32 %v5122, %v5218
      %v5220 = vpop.f32.mrb[0].mxu0
      %5221 = vmatprep.mubr.bf16.mxu0 %v3475
      %5222 = vmatmul.mubr.bf16.gmra.mrb[0].mxu0 %v3474
      %v5223 = vpop.f32.mrb[0].mxu0
      %v5224 = vadd.f32 %v5127, %v5223
      %v5225 = vpop.f32.mrb[0].mxu0
      %v5226 = vpop.f32.mrb[0].mxu0
      %v5227 = vadd.f32 %v5130, %v5226
      %v5228 = vpop.f32.mrb[0].mxu0
      %5229 = vdwg.mxu0
      %5230 = vmatprep.subr.bf16.mxu0 0
      %5231 = vmatpush1.bf16.msra.mxu0 %v4333
      %5232 = vmatprep.subr.bf16.mxu0 0
      %5233 = vmatpush1.bf16.msra.mxu0 %v4336
      %5234 = vmatprep.subr.bf16.mxu0 0
      %5235 = vmatpush1.bf16.msra.mxu0 %v4339
      %5236 = vmatprep.subr.bf16.mxu0 0
      %5237 = vmatpush1.bf16.msra.mxu0 %v4342
      %5238 = vmatprep.subr.bf16.mxu0 0
      %5239 = vmatpush1.bf16.msra.mxu0 %v4345
      %5240 = vmatprep.subr.bf16.mxu0 0
      %5241 = vmatpush1.bf16.msra.mxu0 %v4348
      %5242 = vmatprep.subr.bf16.mxu0 0
      %5243 = vmatpush1.bf16.msra.mxu0 %v4351
      %5244 = vmatprep.subr.bf16.mxu0 0
      %5245 = vmatpush1.bf16.msra.mxu0 %v4354
      %5246 = vmatprep.subr.bf16.mxu0 0
      %5247 = vmatpush1.bf16.msra.mxu0 %v4357
      %5248 = vmatprep.subr.bf16.mxu0 0
      %5249 = vmatpush1.bf16.msra.mxu0 %v4360
      %5250 = vmatprep.subr.bf16.mxu0 0
      %5251 = vmatpush1.bf16.msra.mxu0 %v4363
      %5252 = vmatprep.subr.bf16.mxu0 0
      %5253 = vmatpush1.bf16.msra.mxu0 %v4366
      %5254 = vmatprep.subr.bf16.mxu0 0
      %5255 = vmatpush1.bf16.msra.mxu0 %v4369
      %5256 = vmatprep.subr.bf16.mxu0 0
      %5257 = vmatpush1.bf16.msra.mxu0 %v4372
      %5258 = vmatprep.subr.bf16.mxu0 0
      %5259 = vmatpush1.bf16.msra.mxu0 %v4375
      %5260 = vmatprep.subr.bf16.mxu0 0
      %5261 = vmatpush1.bf16.msra.mxu0 %v4378
      %5262 = vmatprep.mubr.bf16.mxu0 %v3428
      %5263 = vmatmul.mubr.bf16.gmra.mrb[0].mxu0 %v3427
      %v5264 = vpop.f32.mrb[0].mxu0
      %v5265 = vadd.f32 %v5168, %v5264
      %v5266 = vpop.f32.mrb[0].mxu0
      %v5267 = vpop.f32.mrb[0].mxu0
      %v5268 = vadd.f32 %v5171, %v5267
      %v5269 = vpop.f32.mrb[0].mxu0
      %5270 = vmatprep.mubr.bf16.mxu0 %v3435
      %5271 = vmatmul.mubr.bf16.gmra.mrb[0].mxu0 %v3434
      %v5272 = vpop.f32.mrb[0].mxu0
      %v5273 = vadd.f32 %v5176, %v5272
      %v5274 = vpop.f32.mrb[0].mxu0
      %v5275 = vpop.f32.mrb[0].mxu0
      %v5276 = vadd.f32 %v5179, %v5275
      %v5277 = vpop.f32.mrb[0].mxu0
      %5278 = vmatprep.mubr.bf16.mxu0 %v3442
      %5279 = vmatmul.mubr.bf16.gmra.mrb[0].mxu0 %v3441
      %v5280 = vpop.f32.mrb[0].mxu0
      %v5281 = vadd.f32 %v5184, %v5280
      %v5282 = vpop.f32.mrb[0].mxu0
      %v5283 = vpop.f32.mrb[0].mxu0
      %v5284 = vadd.f32 %v5187, %v5283
      %v5285 = vpop.f32.mrb[0].mxu0
      %5286 = vmatprep.mubr.bf16.mxu0 %v3449
      %5287 = vmatmul.mubr.bf16.gmra.mrb[0].mxu0 %v3448
      %v5288 = vpop.f32.mrb[0].mxu0
      %v5289 = vadd.f32 %v5192, %v5288
      %v5290 = vpop.f32.mrb[0].mxu0
      %v5291 = vpop.f32.mrb[0].mxu0
      %v5292 = vadd.f32 %v5195, %v5291
      %v5293 = vpop.f32.mrb[0].mxu0
      %5294 = vmatprep.mubr.bf16.mxu0 %v3456
      %5295 = vmatmul.mubr.bf16.gmra.mrb[0].mxu0 %v3455
      %v5296 = vpop.f32.mrb[0].mxu0
      %v5297 = vadd.f32 %v5200, %v5296
      %v5298 = vpop.f32.mrb[0].mxu0
      %v5299 = vpop.f32.mrb[0].mxu0
      %v5300 = vadd.f32 %v5203, %v5299
      %v5301 = vpop.f32.mrb[0].mxu0
      %5302 = vmatprep.mubr.bf16.mxu0 %v3463
      %5303 = vmatmul.mubr.bf16.gmra.mrb[0].mxu0 %v3462
      %v5304 = vpop.f32.mrb[0].mxu0
      %v5305 = vadd.f32 %v5208, %v5304
      %v5306 = vpop.f32.mrb[0].mxu0
      %v5307 = vpop.f32.mrb[0].mxu0
      %v5308 = vadd.f32 %v5211, %v5307
      %v5309 = vpop.f32.mrb[0].mxu0
      %5310 = vmatprep.mubr.bf16.mxu0 %v3470
      %5311 = vmatmul.mubr.bf16.gmra.mrb[0].mxu0 %v3469
      %v5312 = vpop.f32.mrb[0].mxu0
      %v5313 = vadd.f32 %v5216, %v5312
      %v5314 = vpop.f32.mrb[0].mxu0
      %v5315 = vpop.f32.mrb[0].mxu0
      %v5316 = vadd.f32 %v5219, %v5315
      %v5317 = vpop.f32.mrb[0].mxu0
      %5318 = vmatprep.mubr.bf16.mxu0 %v3477
      %5319 = vmatmul.mubr.bf16.gmra.mrb[0].mxu0 %v3476
      %v5320 = vpop.f32.mrb[0].mxu0
      %v5321 = vadd.f32 %v5224, %v5320
      %v5322 = vpop.f32.mrb[0].mxu0
      %v5323 = vpop.f32.mrb[0].mxu0
      %v5324 = vadd.f32 %v5227, %v5323
      %v5325 = vpop.f32.mrb[0].mxu0
      %5326 = vdwg.mxu0
      %5327 = vmatprep.subr.bf16.mxu0 0
      %5328 = vmatpush1.bf16.msra.mxu0 %v4381
      %5329 = vmatprep.subr.bf16.mxu0 0
      %5330 = vmatpush1.bf16.msra.mxu0 %v4384
      %5331 = vmatprep.subr.bf16.mxu0 0
      %5332 = vmatpush1.bf16.msra.mxu0 %v4387
      %5333 = vmatprep.subr.bf16.mxu0 0
      %5334 = vmatpush1.bf16.msra.mxu0 %v4390
      %5335 = vmatprep.subr.bf16.mxu0 0
      %5336 = vmatpush1.bf16.msra.mxu0 %v4393
      %5337 = vmatprep.subr.bf16.mxu0 0
      %5338 = vmatpush1.bf16.msra.mxu0 %v4396
      %5339 = vmatprep.subr.bf16.mxu0 0
      %5340 = vmatpush1.bf16.msra.mxu0 0
      %5341 = vmatprep.subr.bf16.mxu0 0
      %5342 = vmatpush1.bf16.msra.mxu0 0
      %5343 = vmatprep.subr.bf16.mxu0 0
      %5344 = vmatpush1.bf16.msra.mxu0 0
      %5345 = vmatprep.subr.bf16.mxu0 0
      %5346 = vmatpush1.bf16.msra.mxu0 0
      %5347 = vmatprep.subr.bf16.mxu0 0
      %5348 = vmatpush1.bf16.msra.mxu0 0
      %5349 = vmatprep.subr.bf16.mxu0 0
      %5350 = vmatpush1.bf16.msra.mxu0 0
      %5351 = vmatprep.subr.bf16.mxu0 0
      %5352 = vmatpush1.bf16.msra.mxu0 0
      %5353 = vmatprep.subr.bf16.mxu0 0
      %5354 = vmatpush1.bf16.msra.mxu0 0
      %5355 = vmatprep.subr.bf16.mxu0 0
      %5356 = vmatpush1.bf16.msra.mxu0 0
      %5357 = vmatprep.subr.bf16.mxu0 0
      %5358 = vmatpush1.bf16.msra.mxu0 0
      %5359 = vmatprep.mubr.bf16.mxu0 0
      %5360 = vmatmul.mubr.bf16.gmra.mrb[0].mxu0 %v4561
      %v5361 = vpop.f32.mrb[0].mxu0
      %v5362 = vadd.f32 %v5265, %v5361
      %v5363 = vpop.f32.mrb[0].mxu0
      %v5364 = vpop.f32.mrb[0].mxu0
      %v5365 = vadd.f32 %v5268, %v5364
      %v5366 = vpop.f32.mrb[0].mxu0
      %5367 = vmatprep.mubr.bf16.mxu0 0
      %5368 = vmatmul.mubr.bf16.gmra.mrb[0].mxu0 %v4564
      %v5369 = vpop.f32.mrb[0].mxu0
      %v5370 = vadd.f32 %v5273, %v5369
      %v5371 = vpop.f32.mrb[0].mxu0
      %v5372 = vpop.f32.mrb[0].mxu0
      %v5373 = vadd.f32 %v5276, %v5372
      %v5374 = vpop.f32.mrb[0].mxu0
      %5375 = vmatprep.mubr.bf16.mxu0 0
      %5376 = vmatmul.mubr.bf16.gmra.mrb[0].mxu0 %v4567
      %v5377 = vpop.f32.mrb[0].mxu0
      %v5378 = vadd.f32 %v5281, %v5377
      %v5379 = vpop.f32.mrb[0].mxu0
      %v5380 = vpop.f32.mrb[0].mxu0
      %v5381 = vadd.f32 %v5284, %v5380
      %v5382 = vpop.f32.mrb[0].mxu0
      %5383 = vmatprep.mubr.bf16.mxu0 0
      %5384 = vmatmul.mubr.bf16.gmra.mrb[0].mxu0 %v4570
      %v5385 = vpop.f32.mrb[0].mxu0
      %v5386 = vadd.f32 %v5289, %v5385
      %v5387 = vpop.f32.mrb[0].mxu0
      %v5388 = vpop.f32.mrb[0].mxu0
      %v5389 = vadd.f32 %v5292, %v5388
      %v5390 = vpop.f32.mrb[0].mxu0
      %5391 = vmatprep.mubr.bf16.mxu0 0
      %5392 = vmatmul.mubr.bf16.gmra.mrb[0].mxu0 %v4573
      %v5393 = vpop.f32.mrb[0].mxu0
      %v5394 = vadd.f32 %v5297, %v5393
      %v5395 = vpop.f32.mrb[0].mxu0
      %v5396 = vpop.f32.mrb[0].mxu0
      %v5397 = vadd.f32 %v5300, %v5396
      %v5398 = vpop.f32.mrb[0].mxu0
      %5399 = vmatprep.mubr.bf16.mxu0 0
      %5400 = vmatmul.mubr.bf16.gmra.mrb[0].mxu0 %v4576
      %v5401 = vpop.f32.mrb[0].mxu0
      %v5402 = vadd.f32 %v5305, %v5401
      %v5403 = vpop.f32.mrb[0].mxu0
      %v5404 = vpop.f32.mrb[0].mxu0
      %v5405 = vadd.f32 %v5308, %v5404
      %v5406 = vpop.f32.mrb[0].mxu0
      %5407 = vmatprep.mubr.bf16.mxu0 0
      %5408 = vmatmul.mubr.bf16.gmra.mrb[0].mxu0 %v4579
      %v5409 = vpop.f32.mrb[0].mxu0
      %v5410 = vadd.f32 %v5313, %v5409
      %v5411 = vpop.f32.mrb[0].mxu0
      %v5412 = vpop.f32.mrb[0].mxu0
      %v5413 = vadd.f32 %v5316, %v5412
      %v5414 = vpop.f32.mrb[0].mxu0
      %5415 = vmatprep.mubr.bf16.mxu0 0
      %5416 = vmatmul.mubr.bf16.gmra.mrb[0].mxu0 %v4582
      %v5417 = vpop.f32.mrb[0].mxu0
      %v5418 = vadd.f32 %v5321, %v5417
      %v5419 = vpop.f32.mrb[0].mxu0
      %v5420 = vpop.f32.mrb[0].mxu0
      %v5421 = vadd.f32 %v5324, %v5420
      %v5422 = vpop.f32.mrb[0].mxu0
      %5423 = vdwg.mxu0
      %v5424 = vpack.c.bf16 %v4962, %v4958
      %v5425 = vpack.c.bf16 %v4964, %v4960
      %v5426 = vpack.c.bf16 %v5365, %v5362
      %v5427 = vpack.c.bf16 %v4972, %v4968
      %v5428 = vpack.c.bf16 %v4974, %v4970
      %v5429 = vpack.c.bf16 %v5373, %v5370
      %v5430 = vpack.c.bf16 %v4982, %v4978
      %v5431 = vpack.c.bf16 %v4984, %v4980
      %v5432 = vpack.c.bf16 %v5381, %v5378
      %v5433 = vpack.c.bf16 %v4992, %v4988
      %v5434 = vpack.c.bf16 %v4994, %v4990
      %v5435 = vpack.c.bf16 %v5389, %v5386
      %v5436 = vpack.c.bf16 %v5002, %v4998
      %v5437 = vpack.c.bf16 %v5004, %v5000
      %v5438 = vpack.c.bf16 %v5397, %v5394
      %v5439 = vpack.c.bf16 %v5012, %v5008
      %v5440 = vpack.c.bf16 %v5014, %v5010
      %v5441 = vpack.c.bf16 %v5405, %v5402
      %v5442 = vpack.c.bf16 %v5022, %v5018
      %v5443 = vpack.c.bf16 %v5024, %v5020
      %v5444 = vpack.c.bf16 %v5413, %v5410
      %v5445 = vpack.c.bf16 %v5032, %v5028
      %v5446 = vpack.c.bf16 %v5034, %v5030
      %v5447 = vpack.c.bf16 %v5421, %v5418
      %5448 = vst [vmem:[#allocation5] sm:$0xff] %v5424
      %5449 = vst [vmem:[#allocation5 + $0x8] sm:$0xff] %v5425
      %vm5450 = vcmask 703488
      %5451 = vst.msk [vmem:[#allocation5 + $0x10] sm:$0xff] %vm5450, %v5426
      %5452 = vst [vmem:[#allocation5 + $0x18] sm:$0xff] %v5427
      %5453 = vst [vmem:[#allocation5 + $0x20] sm:$0xff] %v5428
      %5454 = vst.msk [vmem:[#allocation5 + $0x28] sm:$0xff] %vm5450, %v5429
      %5455 = vst [vmem:[#allocation5 + $0x30] sm:$0xff] %v5430
      %5456 = vst [vmem:[#allocation5 + $0x38] sm:$0xff] %v5431
      %5457 = vst.msk [vmem:[#allocation5 + $0x40] sm:$0xff] %vm5450, %v5432
      %5458 = vst [vmem:[#allocation5 + $0x48] sm:$0xff] %v5433
      %5459 = vst [vmem:[#allocation5 + $0x50] sm:$0xff] %v5434
      %5460 = vst.msk [vmem:[#allocation5 + $0x58] sm:$0xff] %vm5450, %v5435
      %5461 = vst [vmem:[#allocation5 + $0x60] sm:$0xff] %v5436
      %5462 = vst [vmem:[#allocation5 + $0x68] sm:$0xff] %v5437
      %5463 = vst.msk [vmem:[#allocation5 + $0x70] sm:$0xff] %vm5450, %v5438
      %5464 = vst [vmem:[#allocation5 + $0x78] sm:$0xff] %v5439
      %5465 = vst [vmem:[#allocation5 + $0x80] sm:$0xff] %v5440
      %5466 = vst.msk [vmem:[#allocation5 + $0x88] sm:$0xff] %vm5450, %v5441
      %5467 = vst [vmem:[#allocation5 + $0x90] sm:$0xff] %v5442
      %5468 = vst [vmem:[#allocation5 + $0x98] sm:$0xff] %v5443
      %5469 = vst.msk [vmem:[#allocation5 + $0xa0] sm:$0xff] %vm5450, %v5444
      %5470 = vst [vmem:[#allocation5 + $0xa8] sm:$0xff] %v5445
      %5471 = vst [vmem:[#allocation5 + $0xb0] sm:$0xff] %v5446
      %5472 = vst.msk [vmem:[#allocation5 + $0xb8] sm:$0xff] %vm5450, %v5447
      loop: start=0, step=1, limit=8
      $region56: #{tpu_custom_call.1} parent=47 // loop_pre_header
        _
      $region57: #{tpu_custom_call.1} parent=47 // loop_header
        %s5474 = sphi 0, %s5478
        %p5475 = scmp.ge.s32.totalorder %s5474, 8
      $region58: #{tpu_custom_call.1} parent=47 // loop_header_branch
        %5477 = sbr.rel (%p5475) target = $region62
      $region59: #{tpu_custom_call.1} parent=47 // loop_body
        %s5479 = smul.u32 %s5474, 16
        %s5480 = sshra.s32 %s5479, 4
        %s5481 = sand.u32 %s5479, 15
        %s5482 = smul.u32 %s5480, 3
        %s5483 = smul.addr %s5482, 8
        %s5484 = scalar_lea.vmem [#allocation5], %s5483
        %v5485 = vld [vmem:[%s5484] sm:$0xff]
        %v5486 = vld [vmem:[%s5484 + $0x8] sm:$0xff]
        %s5487 = smul.u32 %s5474, 50
        %s5488 = smul.addr %s5487, 8
        %s5489 = scalar_lea.vmem [#allocation6], %s5488
        %5490 = vst [vmem:[%s5489] sm:$0xff] %v5485
        %5491 = vst [vmem:[%s5489 + $0x8] sm:$0xff] %v5486
        %v5492 = vld [vmem:[%s5484] sm:$0xff]
        %v5493 = vld [vmem:[%s5484 + $0x8] sm:$0xff]
        %v5494 = vld [vmem:[%s5484 + $0x10] sm:$0xff]
        %5498 = vrot.lane.b32.xlu0 %v5492, 127
        %v5499 = vpop.permute.xlu0 %5498
        %5500 = vrot.lane.b32.xlu0 %v5493, 127
        %v5501 = vpop.permute.xlu0 %5500
        %5502 = vrot.lane.b32.xlu0 %v5494, 127
        %v5503 = vpop.permute.xlu0 %5502
        %v5504 = vsel %vm377, %v5499, %v5501
        %v5505 = vsel %vm377, %v5501, %v5503
        %5508 = vst [vmem:[%s5489 + $0x10] sm:$0xff] %v5504
        %5509 = vst [vmem:[%s5489 + $0x18] sm:$0xff] %v5505
        %v5510 = vld [vmem:[%s5484] sm:$0xff]
        %v5511 = vld [vmem:[%s5484 + $0x8] sm:$0xff]
        %v5512 = vld [vmem:[%s5484 + $0x10] sm:$0xff]
        %5516 = vrot.lane.b32.xlu0 %v5510, 126
        %v5517 = vpop.permute.xlu0 %5516
        %5518 = vrot.lane.b32.xlu0 %v5511, 126
        %v5519 = vpop.permute.xlu0 %5518
        %5520 = vrot.lane.b32.xlu0 %v5512, 126
        %v5521 = vpop.permute.xlu0 %5520
        %v5522 = vsel %vm441, %v5517, %v5519
        %v5523 = vsel %vm441, %v5519, %v5521
        %5526 = vst [vmem:[%s5489 + $0x20] sm:$0xff] %v5522
        %5527 = vst [vmem:[%s5489 + $0x28] sm:$0xff] %v5523
        %v5528 = vld [vmem:[%s5484] sm:$0xff]
        %v5529 = vld [vmem:[%s5484 + $0x8] sm:$0xff]
        %v5530 = vld [vmem:[%s5484 + $0x10] sm:$0xff]
        %5534 = vrot.lane.b32.xlu0 %v5528, 125
        %v5535 = vpop.permute.xlu0 %5534
        %5536 = vrot.lane.b32.xlu0 %v5529, 125
        %v5537 = vpop.permute.xlu0 %5536
        %5538 = vrot.lane.b32.xlu0 %v5530, 125
        %v5539 = vpop.permute.xlu0 %5538
        %v5540 = vsel %vm505, %v5535, %v5537
        %v5541 = vsel %vm505, %v5537, %v5539
        %5544 = vst [vmem:[%s5489 + $0x30] sm:$0xff] %v5540
        %5545 = vst [vmem:[%s5489 + $0x38] sm:$0xff] %v5541
        %v5546 = vld [vmem:[%s5484] sm:$0xff]
        %v5547 = vld [vmem:[%s5484 + $0x8] sm:$0xff]
        %v5548 = vld [vmem:[%s5484 + $0x10] sm:$0xff]
        %5552 = vrot.lane.b32.xlu0 %v5546, 124
        %v5553 = vpop.permute.xlu0 %5552
        %5554 = vrot.lane.b32.xlu0 %v5547, 124
        %v5555 = vpop.permute.xlu0 %5554
        %5556 = vrot.lane.b32.xlu0 %v5548, 124
        %v5557 = vpop.permute.xlu0 %5556
        %v5558 = vsel %vm569, %v5553, %v5555
        %v5559 = vsel %vm569, %v5555, %v5557
        %5562 = vst [vmem:[%s5489 + $0x40] sm:$0xff] %v5558
        %5563 = vst [vmem:[%s5489 + $0x48] sm:$0xff] %v5559
        %v5564 = vld [vmem:[%s5484] sm:$0xff]
        %v5565 = vld [vmem:[%s5484 + $0x8] sm:$0xff]
        %v5566 = vld [vmem:[%s5484 + $0x10] sm:$0xff]
        %5570 = vrot.lane.b32.xlu0 %v5564, 110
        %v5571 = vpop.permute.xlu0 %5570
        %5572 = vrot.lane.b32.xlu0 %v5565, 110
        %v5573 = vpop.permute.xlu0 %5572
        %5574 = vrot.lane.b32.xlu0 %v5566, 110
        %v5575 = vpop.permute.xlu0 %5574
        %vm5576 = vcmask 900096
        %v5577 = vsel %vm5576, %v5571, %v5573
        %v5578 = vsel %vm5576, %v5573, %v5575
        %5581 = vst [vmem:[%s5489 + $0x50] sm:$0xff] %v5577
        %5582 = vst [vmem:[%s5489 + $0x58] sm:$0xff] %v5578
        %v5583 = vld [vmem:[%s5484] sm:$0xff]
        %v5584 = vld [vmem:[%s5484 + $0x8] sm:$0xff]
        %v5585 = vld [vmem:[%s5484 + $0x10] sm:$0xff]
        %5589 = vrot.lane.b32.xlu0 %v5583, 109
        %v5590 = vpop.permute.xlu0 %5589
        %5591 = vrot.lane.b32.xlu0 %v5584, 109
        %v5592 = vpop.permute.xlu0 %5591
        %5593 = vrot.lane.b32.xlu0 %v5585, 109
        %v5594 = vpop.permute.xlu0 %5593
        %vm5595 = vcmask 891904
        %v5596 = vsel %vm5595, %v5590, %v5592
        %v5597 = vsel %vm5595, %v5592, %v5594
        %5600 = vst [vmem:[%s5489 + $0x60] sm:$0xff] %v5596
        %5601 = vst [vmem:[%s5489 + $0x68] sm:$0xff] %v5597
        %v5602 = vld [vmem:[%s5484] sm:$0xff]
        %v5603 = vld [vmem:[%s5484 + $0x8] sm:$0xff]
        %v5604 = vld [vmem:[%s5484 + $0x10] sm:$0xff]
        %5608 = vrot.lane.b32.xlu0 %v5602, 108
        %v5609 = vpop.permute.xlu0 %5608
        %5610 = vrot.lane.b32.xlu0 %v5603, 108
        %v5611 = vpop.permute.xlu0 %5610
        %5612 = vrot.lane.b32.xlu0 %v5604, 108
        %v5613 = vpop.permute.xlu0 %5612
        %vm5614 = vcmask 883712
        %v5615 = vsel %vm5614, %v5609, %v5611
        %v5616 = vsel %vm5614, %v5611, %v5613
        %5619 = vst [vmem:[%s5489 + $0x70] sm:$0xff] %v5615
        %5620 = vst [vmem:[%s5489 + $0x78] sm:$0xff] %v5616
        %v5621 = vld [vmem:[%s5484] sm:$0xff]
        %v5622 = vld [vmem:[%s5484 + $0x8] sm:$0xff]
        %v5623 = vld [vmem:[%s5484 + $0x10] sm:$0xff]
        %5627 = vrot.lane.b32.xlu0 %v5621, 107
        %v5628 = vpop.permute.xlu0 %5627
        %5629 = vrot.lane.b32.xlu0 %v5622, 107
        %v5630 = vpop.permute.xlu0 %5629
        %5631 = vrot.lane.b32.xlu0 %v5623, 107
        %v5632 = vpop.permute.xlu0 %5631
        %vm5633 = vcmask 875520
        %v5634 = vsel %vm5633, %v5628, %v5630
        %v5635 = vsel %vm5633, %v5630, %v5632
        %5638 = vst [vmem:[%s5489 + $0x80] sm:$0xff] %v5634
        %5639 = vst [vmem:[%s5489 + $0x88] sm:$0xff] %v5635
        %v5640 = vld [vmem:[%s5484] sm:$0xff]
        %v5641 = vld [vmem:[%s5484 + $0x8] sm:$0xff]
        %v5642 = vld [vmem:[%s5484 + $0x10] sm:$0xff]
        %5646 = vrot.lane.b32.xlu0 %v5640, 106
        %v5647 = vpop.permute.xlu0 %5646
        %5648 = vrot.lane.b32.xlu0 %v5641, 106
        %v5649 = vpop.permute.xlu0 %5648
        %5650 = vrot.lane.b32.xlu0 %v5642, 106
        %v5651 = vpop.permute.xlu0 %5650
        %vm5652 = vcmask 867328
        %v5653 = vsel %vm5652, %v5647, %v5649
        %v5654 = vsel %vm5652, %v5649, %v5651
        %5657 = vst [vmem:[%s5489 + $0x90] sm:$0xff] %v5653
        %5658 = vst [vmem:[%s5489 + $0x98] sm:$0xff] %v5654
        %v5659 = vld [vmem:[%s5484] sm:$0xff]
        %v5660 = vld [vmem:[%s5484 + $0x8] sm:$0xff]
        %v5661 = vld [vmem:[%s5484 + $0x10] sm:$0xff]
        %5665 = vrot.lane.b32.xlu0 %v5659, 92
        %v5666 = vpop.permute.xlu0 %5665
        %5667 = vrot.lane.b32.xlu0 %v5660, 92
        %v5668 = vpop.permute.xlu0 %5667
        %5669 = vrot.lane.b32.xlu0 %v5661, 92
        %v5670 = vpop.permute.xlu0 %5669
        %v5671 = vsel %vm889, %v5666, %v5668
        %v5672 = vsel %vm889, %v5668, %v5670
        %5675 = vst [vmem:[%s5489 + $0xa0] sm:$0xff] %v5671
        %5676 = vst [vmem:[%s5489 + $0xa8] sm:$0xff] %v5672
        %v5677 = vld [vmem:[%s5484] sm:$0xff]
        %v5678 = vld [vmem:[%s5484 + $0x8] sm:$0xff]
        %v5679 = vld [vmem:[%s5484 + $0x10] sm:$0xff]
        %5683 = vrot.lane.b32.xlu0 %v5677, 91
        %v5684 = vpop.permute.xlu0 %5683
        %5685 = vrot.lane.b32.xlu0 %v5678, 91
        %v5686 = vpop.permute.xlu0 %5685
        %5687 = vrot.lane.b32.xlu0 %v5679, 91
        %v5688 = vpop.permute.xlu0 %5687
        %vm5689 = vcmask 744448
        %v5690 = vsel %vm5689, %v5684, %v5686
        %v5691 = vsel %vm5689, %v5686, %v5688
        %5694 = vst [vmem:[%s5489 + $0xb0] sm:$0xff] %v5690
        %5695 = vst [vmem:[%s5489 + $0xb8] sm:$0xff] %v5691
        %v5696 = vld [vmem:[%s5484] sm:$0xff]
        %v5697 = vld [vmem:[%s5484 + $0x8] sm:$0xff]
        %v5698 = vld [vmem:[%s5484 + $0x10] sm:$0xff]
        %5702 = vrot.lane.b32.xlu0 %v5696, 90
        %v5703 = vpop.permute.xlu0 %5702
        %5704 = vrot.lane.b32.xlu0 %v5697, 90
        %v5705 = vpop.permute.xlu0 %5704
        %5706 = vrot.lane.b32.xlu0 %v5698, 90
        %v5707 = vpop.permute.xlu0 %5706
        %vm5708 = vcmask 736256
        %v5709 = vsel %vm5708, %v5703, %v5705
        %v5710 = vsel %vm5708, %v5705, %v5707
        %5713 = vst [vmem:[%s5489 + $0xc0] sm:$0xff] %v5709
        %5714 = vst [vmem:[%s5489 + $0xc8] sm:$0xff] %v5710
        %v5715 = vld [vmem:[%s5484] sm:$0xff]
        %v5716 = vld [vmem:[%s5484 + $0x8] sm:$0xff]
        %v5717 = vld [vmem:[%s5484 + $0x10] sm:$0xff]
        %5721 = vrot.lane.b32.xlu0 %v5715, 89
        %v5722 = vpop.permute.xlu0 %5721
        %5723 = vrot.lane.b32.xlu0 %v5716, 89
        %v5724 = vpop.permute.xlu0 %5723
        %5725 = vrot.lane.b32.xlu0 %v5717, 89
        %v5726 = vpop.permute.xlu0 %5725
        %vm5727 = vcmask 728064
        %v5728 = vsel %vm5727, %v5722, %v5724
        %v5729 = vsel %vm5727, %v5724, %v5726
        %5732 = vst [vmem:[%s5489 + $0xd0] sm:$0xff] %v5728
        %5733 = vst [vmem:[%s5489 + $0xd8] sm:$0xff] %v5729
        %v5734 = vld [vmem:[%s5484] sm:$0xff]
        %v5735 = vld [vmem:[%s5484 + $0x8] sm:$0xff]
        %v5736 = vld [vmem:[%s5484 + $0x10] sm:$0xff]
        %5740 = vrot.lane.b32.xlu0 %v5734, 88
        %v5741 = vpop.permute.xlu0 %5740
        %5742 = vrot.lane.b32.xlu0 %v5735, 88
        %v5743 = vpop.permute.xlu0 %5742
        %5744 = vrot.lane.b32.xlu0 %v5736, 88
        %v5745 = vpop.permute.xlu0 %5744
        %vm5746 = vcmask 719872
        %v5747 = vsel %vm5746, %v5741, %v5743
        %v5748 = vsel %vm5746, %v5743, %v5745
        %5751 = vst [vmem:[%s5489 + $0xe0] sm:$0xff] %v5747
        %5752 = vst [vmem:[%s5489 + $0xe8] sm:$0xff] %v5748
        %v5753 = vld [vmem:[%s5484] sm:$0xff]
        %v5754 = vld [vmem:[%s5484 + $0x8] sm:$0xff]
        %v5755 = vld [vmem:[%s5484 + $0x10] sm:$0xff]
        %5759 = vrot.lane.b32.xlu0 %v5753, 74
        %v5760 = vpop.permute.xlu0 %5759
        %5761 = vrot.lane.b32.xlu0 %v5754, 74
        %v5762 = vpop.permute.xlu0 %5761
        %5763 = vrot.lane.b32.xlu0 %v5755, 74
        %v5764 = vpop.permute.xlu0 %5763
        %vm5765 = vcmask 605184
        %v5766 = vsel %vm5765, %v5760, %v5762
        %v5767 = vsel %vm5765, %v5762, %v5764
        %5770 = vst [vmem:[%s5489 + $0xf0] sm:$0xff] %v5766
        %5771 = vst [vmem:[%s5489 + $0xf8] sm:$0xff] %v5767
        %v5772 = vld [vmem:[%s5484] sm:$0xff]
        %v5773 = vld [vmem:[%s5484 + $0x8] sm:$0xff]
        %v5774 = vld [vmem:[%s5484 + $0x10] sm:$0xff]
        %5778 = vrot.lane.b32.xlu0 %v5772, 73
        %v5779 = vpop.permute.xlu0 %5778
        %5780 = vrot.lane.b32.xlu0 %v5773, 73
        %v5781 = vpop.permute.xlu0 %5780
        %5782 = vrot.lane.b32.xlu0 %v5774, 73
        %v5783 = vpop.permute.xlu0 %5782
        %vm5784 = vcmask 596992
        %v5785 = vsel %vm5784, %v5779, %v5781
        %v5786 = vsel %vm5784, %v5781, %v5783
        %5789 = vst [vmem:[%s5489 + $0x100] sm:$0xff] %v5785
        %5790 = vst [vmem:[%s5489 + $0x108] sm:$0xff] %v5786
        %v5791 = vld [vmem:[%s5484] sm:$0xff]
        %v5792 = vld [vmem:[%s5484 + $0x8] sm:$0xff]
        %v5793 = vld [vmem:[%s5484 + $0x10] sm:$0xff]
        %5797 = vrot.lane.b32.xlu0 %v5791, 72
        %v5798 = vpop.permute.xlu0 %5797
        %5799 = vrot.lane.b32.xlu0 %v5792, 72
        %v5800 = vpop.permute.xlu0 %5799
        %5801 = vrot.lane.b32.xlu0 %v5793, 72
        %v5802 = vpop.permute.xlu0 %5801
        %vm5803 = vcmask 588800
        %v5804 = vsel %vm5803, %v5798, %v5800
        %v5805 = vsel %vm5803, %v5800, %v5802
        %5808 = vst [vmem:[%s5489 + $0x110] sm:$0xff] %v5804
        %5809 = vst [vmem:[%s5489 + $0x118] sm:$0xff] %v5805
        %v5810 = vld [vmem:[%s5484] sm:$0xff]
        %v5811 = vld [vmem:[%s5484 + $0x8] sm:$0xff]
        %v5812 = vld [vmem:[%s5484 + $0x10] sm:$0xff]
        %5816 = vrot.lane.b32.xlu0 %v5810, 71
        %v5817 = vpop.permute.xlu0 %5816
        %5818 = vrot.lane.b32.xlu0 %v5811, 71
        %v5819 = vpop.permute.xlu0 %5818
        %5820 = vrot.lane.b32.xlu0 %v5812, 71
        %v5821 = vpop.permute.xlu0 %5820
        %vm5822 = vcmask 580608
        %v5823 = vsel %vm5822, %v5817, %v5819
        %v5824 = vsel %vm5822, %v5819, %v5821
        %5827 = vst [vmem:[%s5489 + $0x120] sm:$0xff] %v5823
        %5828 = vst [vmem:[%s5489 + $0x128] sm:$0xff] %v5824
        %v5829 = vld [vmem:[%s5484] sm:$0xff]
        %v5830 = vld [vmem:[%s5484 + $0x8] sm:$0xff]
        %v5831 = vld [vmem:[%s5484 + $0x10] sm:$0xff]
        %5835 = vrot.lane.b32.xlu0 %v5829, 70
        %v5836 = vpop.permute.xlu0 %5835
        %5837 = vrot.lane.b32.xlu0 %v5830, 70
        %v5838 = vpop.permute.xlu0 %5837
        %5839 = vrot.lane.b32.xlu0 %v5831, 70
        %v5840 = vpop.permute.xlu0 %5839
        %vm5841 = vcmask 572416
        %v5842 = vsel %vm5841, %v5836, %v5838
        %v5843 = vsel %vm5841, %v5838, %v5840
        %5846 = vst [vmem:[%s5489 + $0x130] sm:$0xff] %v5842
        %5847 = vst [vmem:[%s5489 + $0x138] sm:$0xff] %v5843
        %v5848 = vld [vmem:[%s5484] sm:$0xff]
        %v5849 = vld [vmem:[%s5484 + $0x8] sm:$0xff]
        %v5850 = vld [vmem:[%s5484 + $0x10] sm:$0xff]
        %5854 = vrot.lane.b32.xlu0 %v5848, 56
        %v5855 = vpop.permute.xlu0 %5854
        %5856 = vrot.lane.b32.xlu0 %v5849, 56
        %v5857 = vpop.permute.xlu0 %5856
        %5858 = vrot.lane.b32.xlu0 %v5850, 56
        %v5859 = vpop.permute.xlu0 %5858
        %vm5860 = vcmask 457728
        %v5861 = vsel %vm5860, %v5855, %v5857
        %v5862 = vsel %vm5860, %v5857, %v5859
        %5865 = vst [vmem:[%s5489 + $0x140] sm:$0xff] %v5861
        %5866 = vst [vmem:[%s5489 + $0x148] sm:$0xff] %v5862
        %v5867 = vld [vmem:[%s5484] sm:$0xff]
        %v5868 = vld [vmem:[%s5484 + $0x8] sm:$0xff]
        %v5869 = vld [vmem:[%s5484 + $0x10] sm:$0xff]
        %5873 = vrot.lane.b32.xlu0 %v5867, 55
        %v5874 = vpop.permute.xlu0 %5873
        %5875 = vrot.lane.b32.xlu0 %v5868, 55
        %v5876 = vpop.permute.xlu0 %5875
        %5877 = vrot.lane.b32.xlu0 %v5869, 55
        %v5878 = vpop.permute.xlu0 %5877
        %vm5879 = vcmask 449536
        %v5880 = vsel %vm5879, %v5874, %v5876
        %v5881 = vsel %vm5879, %v5876, %v5878
        %5884 = vst [vmem:[%s5489 + $0x150] sm:$0xff] %v5880
        %5885 = vst [vmem:[%s5489 + $0x158] sm:$0xff] %v5881
        %v5886 = vld [vmem:[%s5484] sm:$0xff]
        %v5887 = vld [vmem:[%s5484 + $0x8] sm:$0xff]
        %v5888 = vld [vmem:[%s5484 + $0x10] sm:$0xff]
        %5892 = vrot.lane.b32.xlu0 %v5886, 54
        %v5893 = vpop.permute.xlu0 %5892
        %5894 = vrot.lane.b32.xlu0 %v5887, 54
        %v5895 = vpop.permute.xlu0 %5894
        %5896 = vrot.lane.b32.xlu0 %v5888, 54
        %v5897 = vpop.permute.xlu0 %5896
        %vm5898 = vcmask 441344
        %v5899 = vsel %vm5898, %v5893, %v5895
        %v5900 = vsel %vm5898, %v5895, %v5897
        %5903 = vst [vmem:[%s5489 + $0x160] sm:$0xff] %v5899
        %5904 = vst [vmem:[%s5489 + $0x168] sm:$0xff] %v5900
        %v5905 = vld [vmem:[%s5484] sm:$0xff]
        %v5906 = vld [vmem:[%s5484 + $0x8] sm:$0xff]
        %v5907 = vld [vmem:[%s5484 + $0x10] sm:$0xff]
        %5911 = vrot.lane.b32.xlu0 %v5905, 53
        %v5912 = vpop.permute.xlu0 %5911
        %5913 = vrot.lane.b32.xlu0 %v5906, 53
        %v5914 = vpop.permute.xlu0 %5913
        %5915 = vrot.lane.b32.xlu0 %v5907, 53
        %v5916 = vpop.permute.xlu0 %5915
        %vm5917 = vcmask 433152
        %v5918 = vsel %vm5917, %v5912, %v5914
        %v5919 = vsel %vm5917, %v5914, %v5916
        %5922 = vst [vmem:[%s5489 + $0x170] sm:$0xff] %v5918
        %5923 = vst [vmem:[%s5489 + $0x178] sm:$0xff] %v5919
        %v5924 = vld [vmem:[%s5484] sm:$0xff]
        %v5925 = vld [vmem:[%s5484 + $0x8] sm:$0xff]
        %v5926 = vld [vmem:[%s5484 + $0x10] sm:$0xff]
        %5930 = vrot.lane.b32.xlu0 %v5924, 52
        %v5931 = vpop.permute.xlu0 %5930
        %5932 = vrot.lane.b32.xlu0 %v5925, 52
        %v5933 = vpop.permute.xlu0 %5932
        %5934 = vrot.lane.b32.xlu0 %v5926, 52
        %v5935 = vpop.permute.xlu0 %5934
        %vm5936 = vcmask 424960
        %v5937 = vsel %vm5936, %v5931, %v5933
        %v5938 = vsel %vm5936, %v5933, %v5935
        %5941 = vst [vmem:[%s5489 + $0x180] sm:$0xff] %v5937
        %5942 = vst [vmem:[%s5489 + $0x188] sm:$0xff] %v5938
      $region60: #{tpu_custom_call.1} parent=47 // loop_footer
        %s5478 = sadd.s32 1, %s5474
      $region61: #{tpu_custom_call.1} parent=47 // loop_footer_branch
        %5473 = sbr.rel target = $region57
      $region62: #{tpu_custom_call.1} parent=47 // loop_exit
        _
      %v5943 = vld [vmem:[%s3] sm:$0xff]
      %v5944 = vld [vmem:[%s3 + $0x8] sm:$0xff]
      %v5945 = vld [vmem:[%s3 + $0x10] sm:$0xff]
      %v5946 = vld [vmem:[%s3 + $0x18] sm:$0xff]
      %v5947 = vld [vmem:[%s3 + $0x20] sm:$0xff]
      %v5948 = vld [vmem:[%s3 + $0x28] sm:$0xff]
      %v5949 = vld [vmem:[%s3 + $0x30] sm:$0xff]
      %v5950 = vld [vmem:[%s3 + $0x38] sm:$0xff]
      %v5951 = vld [vmem:[%s3 + $0x40] sm:$0xff]
      %v5952 = vld [vmem:[%s3 + $0x48] sm:$0xff]
      %v5953 = vld [vmem:[%s3 + $0x50] sm:$0xff]
      %v5954 = vld [vmem:[%s3 + $0x58] sm:$0xff]
      %v5955 = vld [vmem:[%s3 + $0x60] sm:$0xff]
      %v5956 = vld [vmem:[%s3 + $0x68] sm:$0xff]
      %v5957 = vld [vmem:[%s3 + $0x70] sm:$0xff]
      %v5958 = vld [vmem:[%s3 + $0x78] sm:$0xff]
      %v5959 = vld [vmem:[%s3 + $0x80] sm:$0xff]
      %v5960 = vld [vmem:[%s3 + $0x88] sm:$0xff]
      %v5961 = vld [vmem:[%s3 + $0x90] sm:$0xff]
      %v5962 = vld [vmem:[%s3 + $0x98] sm:$0xff]
      %v5963 = vld [vmem:[%s3 + $0xa0] sm:$0xff]
      %v5964 = vld [vmem:[%s3 + $0xa8] sm:$0xff]
      %v5965 = vld [vmem:[%s3 + $0xb0] sm:$0xff]
      %v5966 = vld [vmem:[%s3 + $0xb8] sm:$0xff]
      %v5967 = vld [vmem:[%s3 + $0xc0] sm:$0xff]
      %v5968 = vld [vmem:[%s3 + $0xc8] sm:$0xff]
      %v5969 = vld [vmem:[%s3 + $0xd0] sm:$0xff]
      %v5970 = vld [vmem:[%s3 + $0xd8] sm:$0xff]
      %v5971 = vld [vmem:[%s3 + $0xe0] sm:$0xff]
      %v5972 = vld [vmem:[%s3 + $0xe8] sm:$0xff]
      %v5973 = vld [vmem:[%s3 + $0xf0] sm:$0xff]
      %v5974 = vld [vmem:[%s3 + $0xf8] sm:$0xff]
      %v5975 = vld [vmem:[%s3 + $0x100] sm:$0xff]
      %v5976 = vld [vmem:[%s3 + $0x108] sm:$0xff]
      %v5977 = vld [vmem:[%s3 + $0x110] sm:$0xff]
      %v5978 = vld [vmem:[%s3 + $0x118] sm:$0xff]
      %v5979 = vld [vmem:[%s3 + $0x120] sm:$0xff]
      %v5980 = vld [vmem:[%s3 + $0x128] sm:$0xff]
      %v5981 = vld [vmem:[%s3 + $0x130] sm:$0xff]
      %v5982 = vld [vmem:[%s3 + $0x138] sm:$0xff]
      %v5983 = vld [vmem:[%s3 + $0x140] sm:$0xff]
      %v5984 = vld [vmem:[%s3 + $0x148] sm:$0xff]
      %v5985 = vld [vmem:[%s3 + $0x150] sm:$0xff]
      %v5986 = vld [vmem:[%s3 + $0x158] sm:$0xff]
      %v5987 = vld [vmem:[%s3 + $0x160] sm:$0xff]
      %v5988 = vld [vmem:[%s3 + $0x168] sm:$0xff]
      %v5989 = vld [vmem:[%s3 + $0x170] sm:$0xff]
      %v5990 = vld [vmem:[%s3 + $0x178] sm:$0xff]
      %v5991 = vld [vmem:[%s3 + $0x180] sm:$0xff]
      %v5992 = vld [vmem:[%s3 + $0x188] sm:$0xff]
      %v5993 = vld [vmem:[%s3 + $0x190] sm:$0xff]
      %v5994 = vld [vmem:[%s3 + $0x198] sm:$0xff]
      %v5995 = vld [vmem:[%s3 + $0x1a0] sm:$0xff]
      %v5996 = vld [vmem:[%s3 + $0x1a8] sm:$0xff]
      %v5997 = vld [vmem:[%s3 + $0x1b0] sm:$0xff]
      %v5998 = vld [vmem:[%s3 + $0x1b8] sm:$0xff]
      %v5999 = vld [vmem:[%s3 + $0x1c0] sm:$0xff]
      %v6000 = vld [vmem:[%s3 + $0x1c8] sm:$0xff]
      %v6001 = vld [vmem:[%s3 + $0x1d0] sm:$0xff]
      %v6002 = vld [vmem:[%s3 + $0x1d8] sm:$0xff]
      %v6003 = vld [vmem:[%s3 + $0x1e0] sm:$0xff]
      %v6004 = vld [vmem:[%s3 + $0x1e8] sm:$0xff]
      %v6005 = vld [vmem:[%s3 + $0x1f0] sm:$0xff]
      %v6006 = vld [vmem:[%s3 + $0x1f8] sm:$0xff]
      %v6007 = vld [vmem:[#allocation6] sm:$0xff]
      %v6008 = vld [vmem:[#allocation6 + $0x8] sm:$0xff]
      %v6009 = vld [vmem:[#allocation6 + $0x10] sm:$0xff]
      %v6010 = vld [vmem:[#allocation6 + $0x18] sm:$0xff]
      %v6011 = vld [vmem:[#allocation6 + $0x20] sm:$0xff]
      %v6012 = vld [vmem:[#allocation6 + $0x28] sm:$0xff]
      %v6013 = vld [vmem:[#allocation6 + $0x30] sm:$0xff]
      %v6014 = vld [vmem:[#allocation6 + $0x38] sm:$0xff]
      %v6015 = vld [vmem:[#allocation6 + $0x40] sm:$0xff]
      %v6016 = vld [vmem:[#allocation6 + $0x48] sm:$0xff]
      %v6017 = vld [vmem:[#allocation6 + $0x50] sm:$0xff]
      %v6018 = vld [vmem:[#allocation6 + $0x58] sm:$0xff]
      %v6019 = vld [vmem:[#allocation6 + $0x60] sm:$0xff]
      %v6020 = vld [vmem:[#allocation6 + $0x68] sm:$0xff]
      %v6021 = vld [vmem:[#allocation6 + $0x70] sm:$0xff]
      %v6022 = vld [vmem:[#allocation6 + $0x78] sm:$0xff]
      %v6023 = vld [vmem:[#allocation6 + $0x80] sm:$0xff]
      %v6024 = vld [vmem:[#allocation6 + $0x88] sm:$0xff]
      %v6025 = vld [vmem:[#allocation6 + $0x90] sm:$0xff]
      %v6026 = vld [vmem:[#allocation6 + $0x98] sm:$0xff]
      %v6027 = vld [vmem:[#allocation6 + $0xa0] sm:$0xff]
      %v6028 = vld [vmem:[#allocation6 + $0xa8] sm:$0xff]
      %v6029 = vld [vmem:[#allocation6 + $0xb0] sm:$0xff]
      %v6030 = vld [vmem:[#allocation6 + $0xb8] sm:$0xff]
      %v6031 = vld [vmem:[#allocation6 + $0xc0] sm:$0xff]
      %v6032 = vld [vmem:[#allocation6 + $0xc8] sm:$0xff]
      %v6033 = vld [vmem:[#allocation6 + $0xd0] sm:$0xff]
      %v6034 = vld [vmem:[#allocation6 + $0xd8] sm:$0xff]
      %v6035 = vld [vmem:[#allocation6 + $0xe0] sm:$0xff]
      %v6036 = vld [vmem:[#allocation6 + $0xe8] sm:$0xff]
      %v6037 = vld [vmem:[#allocation6 + $0xf0] sm:$0xff]
      %v6038 = vld [vmem:[#allocation6 + $0xf8] sm:$0xff]
      %v6039 = vld [vmem:[#allocation6 + $0x100] sm:$0xff]
      %v6040 = vld [vmem:[#allocation6 + $0x108] sm:$0xff]
      %v6041 = vld [vmem:[#allocation6 + $0x110] sm:$0xff]
      %v6042 = vld [vmem:[#allocation6 + $0x118] sm:$0xff]
      %v6043 = vld [vmem:[#allocation6 + $0x120] sm:$0xff]
      %v6044 = vld [vmem:[#allocation6 + $0x128] sm:$0xff]
      %v6045 = vld [vmem:[#allocation6 + $0x130] sm:$0xff]
      %v6046 = vld [vmem:[#allocation6 + $0x138] sm:$0xff]
      %v6047 = vld [vmem:[#allocation6 + $0x140] sm:$0xff]
      %v6048 = vld [vmem:[#allocation6 + $0x148] sm:$0xff]
      %v6049 = vld [vmem:[#allocation6 + $0x150] sm:$0xff]
      %v6050 = vld [vmem:[#allocation6 + $0x158] sm:$0xff]
      %v6051 = vld [vmem:[#allocation6 + $0x160] sm:$0xff]
      %v6052 = vld [vmem:[#allocation6 + $0x168] sm:$0xff]
      %v6053 = vld [vmem:[#allocation6 + $0x170] sm:$0xff]
      %v6054 = vld [vmem:[#allocation6 + $0x178] sm:$0xff]
      %v6055 = vld [vmem:[#allocation6 + $0x180] sm:$0xff]
      %v6056 = vld [vmem:[#allocation6 + $0x188] sm:$0xff]
      %v6057 = vld [vmem:[#allocation6 + $0x190] sm:$0xff]
      %v6058 = vld [vmem:[#allocation6 + $0x198] sm:$0xff]
      %v6059 = vld [vmem:[#allocation6 + $0x1a0] sm:$0xff]
      %v6060 = vld [vmem:[#allocation6 + $0x1a8] sm:$0xff]
      %v6061 = vld [vmem:[#allocation6 + $0x1b0] sm:$0xff]
      %v6062 = vld [vmem:[#allocation6 + $0x1b8] sm:$0xff]
      %v6063 = vld [vmem:[#allocation6 + $0x1c0] sm:$0xff]
      %v6064 = vld [vmem:[#allocation6 + $0x1c8] sm:$0xff]
      %v6065 = vld [vmem:[#allocation6 + $0x1d0] sm:$0xff]
      %v6066 = vld [vmem:[#allocation6 + $0x1d8] sm:$0xff]
      %v6067 = vld [vmem:[#allocation6 + $0x1e0] sm:$0xff]
      %v6068 = vld [vmem:[#allocation6 + $0x1e8] sm:$0xff]
      %v6069 = vld [vmem:[#allocation6 + $0x1f0] sm:$0xff]
      %v6070 = vld [vmem:[#allocation6 + $0x1f8] sm:$0xff]
      %v6071 = vld [vmem:[#allocation6 + $0x200] sm:$0xff]
      %v6072 = vld [vmem:[#allocation6 + $0x208] sm:$0xff]
      %v6073 = vld [vmem:[#allocation6 + $0x210] sm:$0xff]
      %v6074 = vld [vmem:[#allocation6 + $0x218] sm:$0xff]
      %v6075 = vld [vmem:[#allocation6 + $0x220] sm:$0xff]
      %v6076 = vld [vmem:[#allocation6 + $0x228] sm:$0xff]
      %v6077 = vld [vmem:[#allocation6 + $0x230] sm:$0xff]
      %v6078 = vld [vmem:[#allocation6 + $0x238] sm:$0xff]
      %v6079 = vld [vmem:[#allocation6 + $0x240] sm:$0xff]
      %v6080 = vld [vmem:[#allocation6 + $0x248] sm:$0xff]
      %v6081 = vld [vmem:[#allocation6 + $0x250] sm:$0xff]
      %v6082 = vld [vmem:[#allocation6 + $0x258] sm:$0xff]
      %v6083 = vld [vmem:[#allocation6 + $0x260] sm:$0xff]
      %v6084 = vld [vmem:[#allocation6 + $0x268] sm:$0xff]
      %v6085 = vld [vmem:[#allocation6 + $0x270] sm:$0xff]
      %v6086 = vld [vmem:[#allocation6 + $0x278] sm:$0xff]
      %v6087 = vld [vmem:[#allocation6 + $0x280] sm:$0xff]
      %v6088 = vld [vmem:[#allocation6 + $0x288] sm:$0xff]
      %v6089 = vld [vmem:[#allocation6 + $0x290] sm:$0xff]
      %v6090 = vld [vmem:[#allocation6 + $0x298] sm:$0xff]
      %v6091 = vld [vmem:[#allocation6 + $0x2a0] sm:$0xff]
      %v6092 = vld [vmem:[#allocation6 + $0x2a8] sm:$0xff]
      %v6093 = vld [vmem:[#allocation6 + $0x2b0] sm:$0xff]
      %v6094 = vld [vmem:[#allocation6 + $0x2b8] sm:$0xff]
      %v6095 = vld [vmem:[#allocation6 + $0x2c0] sm:$0xff]
      %v6096 = vld [vmem:[#allocation6 + $0x2c8] sm:$0xff]
      %v6097 = vld [vmem:[#allocation6 + $0x2d0] sm:$0xff]
      %v6098 = vld [vmem:[#allocation6 + $0x2d8] sm:$0xff]
      %v6099 = vld [vmem:[#allocation6 + $0x2e0] sm:$0xff]
      %v6100 = vld [vmem:[#allocation6 + $0x2e8] sm:$0xff]
      %v6101 = vld [vmem:[#allocation6 + $0x2f0] sm:$0xff]
      %v6102 = vld [vmem:[#allocation6 + $0x2f8] sm:$0xff]
      %v6103 = vld [vmem:[#allocation6 + $0x300] sm:$0xff]
      %v6104 = vld [vmem:[#allocation6 + $0x308] sm:$0xff]
      %v6105 = vld [vmem:[#allocation6 + $0x310] sm:$0xff]
      %v6106 = vld [vmem:[#allocation6 + $0x318] sm:$0xff]
      %v6107 = vld [vmem:[#allocation6 + $0x320] sm:$0xff]
      %v6108 = vld [vmem:[#allocation6 + $0x328] sm:$0xff]
      %v6109 = vld [vmem:[#allocation6 + $0x330] sm:$0xff]
      %v6110 = vld [vmem:[#allocation6 + $0x338] sm:$0xff]
      %v6111 = vld [vmem:[#allocation6 + $0x340] sm:$0xff]
      %v6112 = vld [vmem:[#allocation6 + $0x348] sm:$0xff]
      %v6113 = vld [vmem:[#allocation6 + $0x350] sm:$0xff]
      %v6114 = vld [vmem:[#allocation6 + $0x358] sm:$0xff]
      %v6115 = vld [vmem:[#allocation6 + $0x360] sm:$0xff]
      %v6116 = vld [vmem:[#allocation6 + $0x368] sm:$0xff]
      %v6117 = vld [vmem:[#allocation6 + $0x370] sm:$0xff]
      %v6118 = vld [vmem:[#allocation6 + $0x378] sm:$0xff]
      %v6119 = vld [vmem:[#allocation6 + $0x380] sm:$0xff]
      %v6120 = vld [vmem:[#allocation6 + $0x388] sm:$0xff]
      %v6121 = vld [vmem:[#allocation6 + $0x390] sm:$0xff]
      %v6122 = vld [vmem:[#allocation6 + $0x398] sm:$0xff]
      %v6123 = vld [vmem:[#allocation6 + $0x3a0] sm:$0xff]
      %v6124 = vld [vmem:[#allocation6 + $0x3a8] sm:$0xff]
      %v6125 = vld [vmem:[#allocation6 + $0x3b0] sm:$0xff]
      %v6126 = vld [vmem:[#allocation6 + $0x3b8] sm:$0xff]
      %v6127 = vld [vmem:[#allocation6 + $0x3c0] sm:$0xff]
      %v6128 = vld [vmem:[#allocation6 + $0x3c8] sm:$0xff]
      %v6129 = vld [vmem:[#allocation6 + $0x3d0] sm:$0xff]
      %v6130 = vld [vmem:[#allocation6 + $0x3d8] sm:$0xff]
      %v6131 = vld [vmem:[#allocation6 + $0x3e0] sm:$0xff]
      %v6132 = vld [vmem:[#allocation6 + $0x3e8] sm:$0xff]
      %v6133 = vld [vmem:[#allocation6 + $0x3f0] sm:$0xff]
      %v6134 = vld [vmem:[#allocation6 + $0x3f8] sm:$0xff]
      %v6135 = vld [vmem:[#allocation6 + $0x400] sm:$0xff]
      %v6136 = vld [vmem:[#allocation6 + $0x408] sm:$0xff]
      %v6137 = vld [vmem:[#allocation6 + $0x410] sm:$0xff]
      %v6138 = vld [vmem:[#allocation6 + $0x418] sm:$0xff]
      %v6139 = vld [vmem:[#allocation6 + $0x420] sm:$0xff]
      %v6140 = vld [vmem:[#allocation6 + $0x428] sm:$0xff]
      %v6141 = vld [vmem:[#allocation6 + $0x430] sm:$0xff]
      %v6142 = vld [vmem:[#allocation6 + $0x438] sm:$0xff]
      %v6143 = vld [vmem:[#allocation6 + $0x440] sm:$0xff]
      %v6144 = vld [vmem:[#allocation6 + $0x448] sm:$0xff]
      %v6145 = vld [vmem:[#allocation6 + $0x450] sm:$0xff]
      %v6146 = vld [vmem:[#allocation6 + $0x458] sm:$0xff]
      %v6147 = vld [vmem:[#allocation6 + $0x460] sm:$0xff]
      %v6148 = vld [vmem:[#allocation6 + $0x468] sm:$0xff]
      %v6149 = vld [vmem:[#allocation6 + $0x470] sm:$0xff]
      %v6150 = vld [vmem:[#allocation6 + $0x478] sm:$0xff]
      %v6151 = vld [vmem:[#allocation6 + $0x480] sm:$0xff]
      %v6152 = vld [vmem:[#allocation6 + $0x488] sm:$0xff]
      %v6153 = vld [vmem:[#allocation6 + $0x490] sm:$0xff]
      %v6154 = vld [vmem:[#allocation6 + $0x498] sm:$0xff]
      %v6155 = vld [vmem:[#allocation6 + $0x4a0] sm:$0xff]
      %v6156 = vld [vmem:[#allocation6 + $0x4a8] sm:$0xff]
      %v6157 = vld [vmem:[#allocation6 + $0x4b0] sm:$0xff]
      %v6158 = vld [vmem:[#allocation6 + $0x4b8] sm:$0xff]
      %v6159 = vld [vmem:[#allocation6 + $0x4c0] sm:$0xff]
      %v6160 = vld [vmem:[#allocation6 + $0x4c8] sm:$0xff]
      %v6161 = vld [vmem:[#allocation6 + $0x4d0] sm:$0xff]
      %v6162 = vld [vmem:[#allocation6 + $0x4d8] sm:$0xff]
      %v6163 = vld [vmem:[#allocation6 + $0x4e0] sm:$0xff]
      %v6164 = vld [vmem:[#allocation6 + $0x4e8] sm:$0xff]
      %v6165 = vld [vmem:[#allocation6 + $0x4f0] sm:$0xff]
      %v6166 = vld [vmem:[#allocation6 + $0x4f8] sm:$0xff]
      %v6167 = vld [vmem:[#allocation6 + $0x500] sm:$0xff]
      %v6168 = vld [vmem:[#allocation6 + $0x508] sm:$0xff]
      %v6169 = vld [vmem:[#allocation6 + $0x510] sm:$0xff]
      %v6170 = vld [vmem:[#allocation6 + $0x518] sm:$0xff]
      %v6171 = vld [vmem:[#allocation6 + $0x520] sm:$0xff]
      %v6172 = vld [vmem:[#allocation6 + $0x528] sm:$0xff]
      %v6173 = vld [vmem:[#allocation6 + $0x530] sm:$0xff]
      %v6174 = vld [vmem:[#allocation6 + $0x538] sm:$0xff]
      %v6175 = vld [vmem:[#allocation6 + $0x540] sm:$0xff]
      %v6176 = vld [vmem:[#allocation6 + $0x548] sm:$0xff]
      %v6177 = vld [vmem:[#allocation6 + $0x550] sm:$0xff]
      %v6178 = vld [vmem:[#allocation6 + $0x558] sm:$0xff]
      %v6179 = vld [vmem:[#allocation6 + $0x560] sm:$0xff]
      %v6180 = vld [vmem:[#allocation6 + $0x568] sm:$0xff]
      %v6181 = vld [vmem:[#allocation6 + $0x570] sm:$0xff]
      %v6182 = vld [vmem:[#allocation6 + $0x578] sm:$0xff]
      %v6183 = vld [vmem:[#allocation6 + $0x580] sm:$0xff]
      %v6184 = vld [vmem:[#allocation6 + $0x588] sm:$0xff]
      %v6185 = vld [vmem:[#allocation6 + $0x590] sm:$0xff]
      %v6186 = vld [vmem:[#allocation6 + $0x598] sm:$0xff]
      %v6187 = vld [vmem:[#allocation6 + $0x5a0] sm:$0xff]
      %v6188 = vld [vmem:[#allocation6 + $0x5a8] sm:$0xff]
      %v6189 = vld [vmem:[#allocation6 + $0x5b0] sm:$0xff]
      %v6190 = vld [vmem:[#allocation6 + $0x5b8] sm:$0xff]
      %v6191 = vld [vmem:[#allocation6 + $0x5c0] sm:$0xff]
      %v6192 = vld [vmem:[#allocation6 + $0x5c8] sm:$0xff]
      %v6193 = vld [vmem:[#allocation6 + $0x5d0] sm:$0xff]
      %v6194 = vld [vmem:[#allocation6 + $0x5d8] sm:$0xff]
      %v6195 = vld [vmem:[#allocation6 + $0x5e0] sm:$0xff]
      %v6196 = vld [vmem:[#allocation6 + $0x5e8] sm:$0xff]
      %v6197 = vld [vmem:[#allocation6 + $0x5f0] sm:$0xff]
      %v6198 = vld [vmem:[#allocation6 + $0x5f8] sm:$0xff]
      %v6199 = vld [vmem:[#allocation6 + $0x600] sm:$0xff]
      %v6200 = vld [vmem:[#allocation6 + $0x608] sm:$0xff]
      %v6201 = vld [vmem:[#allocation6 + $0x610] sm:$0xff]
      %v6202 = vld [vmem:[#allocation6 + $0x618] sm:$0xff]
      %v6203 = vld [vmem:[#allocation6 + $0x620] sm:$0xff]
      %v6204 = vld [vmem:[#allocation6 + $0x628] sm:$0xff]
      %v6205 = vld [vmem:[#allocation6 + $0x630] sm:$0xff]
      %v6206 = vld [vmem:[#allocation6 + $0x638] sm:$0xff]
      %v6207 = vld [vmem:[#allocation6 + $0x640] sm:$0xff]
      %v6208 = vld [vmem:[#allocation6 + $0x648] sm:$0xff]
      %v6209 = vld [vmem:[#allocation6 + $0x650] sm:$0xff]
      %v6210 = vld [vmem:[#allocation6 + $0x658] sm:$0xff]
      %v6211 = vld [vmem:[#allocation6 + $0x660] sm:$0xff]
      %v6212 = vld [vmem:[#allocation6 + $0x668] sm:$0xff]
      %v6213 = vld [vmem:[#allocation6 + $0x670] sm:$0xff]
      %v6214 = vld [vmem:[#allocation6 + $0x678] sm:$0xff]
      %v6215 = vld [vmem:[#allocation6 + $0x680] sm:$0xff]
      %v6216 = vld [vmem:[#allocation6 + $0x688] sm:$0xff]
      %v6217 = vld [vmem:[#allocation6 + $0x690] sm:$0xff]
      %v6218 = vld [vmem:[#allocation6 + $0x698] sm:$0xff]
      %v6219 = vld [vmem:[#allocation6 + $0x6a0] sm:$0xff]
      %v6220 = vld [vmem:[#allocation6 + $0x6a8] sm:$0xff]
      %v6221 = vld [vmem:[#allocation6 + $0x6b0] sm:$0xff]
      %v6222 = vld [vmem:[#allocation6 + $0x6b8] sm:$0xff]
      %v6223 = vld [vmem:[#allocation6 + $0x6c0] sm:$0xff]
      %v6224 = vld [vmem:[#allocation6 + $0x6c8] sm:$0xff]
      %v6225 = vld [vmem:[#allocation6 + $0x6d0] sm:$0xff]
      %v6226 = vld [vmem:[#allocation6 + $0x6d8] sm:$0xff]
      %v6227 = vld [vmem:[#allocation6 + $0x6e0] sm:$0xff]
      %v6228 = vld [vmem:[#allocation6 + $0x6e8] sm:$0xff]
      %v6229 = vld [vmem:[#allocation6 + $0x6f0] sm:$0xff]
      %v6230 = vld [vmem:[#allocation6 + $0x6f8] sm:$0xff]
      %v6231 = vld [vmem:[#allocation6 + $0x700] sm:$0xff]
      %v6232 = vld [vmem:[#allocation6 + $0x708] sm:$0xff]
      %v6233 = vld [vmem:[#allocation6 + $0x710] sm:$0xff]
      %v6234 = vld [vmem:[#allocation6 + $0x718] sm:$0xff]
      %v6235 = vld [vmem:[#allocation6 + $0x720] sm:$0xff]
      %v6236 = vld [vmem:[#allocation6 + $0x728] sm:$0xff]
      %v6237 = vld [vmem:[#allocation6 + $0x730] sm:$0xff]
      %v6238 = vld [vmem:[#allocation6 + $0x738] sm:$0xff]
      %v6239 = vld [vmem:[#allocation6 + $0x740] sm:$0xff]
      %v6240 = vld [vmem:[#allocation6 + $0x748] sm:$0xff]
      %v6241 = vld [vmem:[#allocation6 + $0x750] sm:$0xff]
      %v6242 = vld [vmem:[#allocation6 + $0x758] sm:$0xff]
      %v6243 = vld [vmem:[#allocation6 + $0x760] sm:$0xff]
      %v6244 = vld [vmem:[#allocation6 + $0x768] sm:$0xff]
      %v6245 = vld [vmem:[#allocation6 + $0x770] sm:$0xff]
      %v6246 = vld [vmem:[#allocation6 + $0x778] sm:$0xff]
      %v6247 = vld [vmem:[#allocation6 + $0x780] sm:$0xff]
      %v6248 = vld [vmem:[#allocation6 + $0x788] sm:$0xff]
      %v6249 = vld [vmem:[#allocation6 + $0x790] sm:$0xff]
      %v6250 = vld [vmem:[#allocation6 + $0x798] sm:$0xff]
      %v6251 = vld [vmem:[#allocation6 + $0x7a0] sm:$0xff]
      %v6252 = vld [vmem:[#allocation6 + $0x7a8] sm:$0xff]
      %v6253 = vld [vmem:[#allocation6 + $0x7b0] sm:$0xff]
      %v6254 = vld [vmem:[#allocation6 + $0x7b8] sm:$0xff]
      %v6255 = vld [vmem:[#allocation6 + $0x7c0] sm:$0xff]
      %v6256 = vld [vmem:[#allocation6 + $0x7c8] sm:$0xff]
      %v6257 = vld [vmem:[#allocation6 + $0x7d0] sm:$0xff]
      %v6258 = vld [vmem:[#allocation6 + $0x7d8] sm:$0xff]
      %v6259 = vld [vmem:[#allocation6 + $0x7e0] sm:$0xff]
      %v6260 = vld [vmem:[#allocation6 + $0x7e8] sm:$0xff]
      %v6261 = vld [vmem:[#allocation6 + $0x7f0] sm:$0xff]
      %v6262 = vld [vmem:[#allocation6 + $0x7f8] sm:$0xff]
      %v6263 = vld [vmem:[#allocation6 + $0x800] sm:$0xff]
      %v6264 = vld [vmem:[#allocation6 + $0x808] sm:$0xff]
      %v6265 = vld [vmem:[#allocation6 + $0x810] sm:$0xff]
      %v6266 = vld [vmem:[#allocation6 + $0x818] sm:$0xff]
      %v6267 = vld [vmem:[#allocation6 + $0x820] sm:$0xff]
      %v6268 = vld [vmem:[#allocation6 + $0x828] sm:$0xff]
      %v6269 = vld [vmem:[#allocation6 + $0x830] sm:$0xff]
      %v6270 = vld [vmem:[#allocation6 + $0x838] sm:$0xff]
      %v6271 = vld [vmem:[#allocation6 + $0x840] sm:$0xff]
      %v6272 = vld [vmem:[#allocation6 + $0x848] sm:$0xff]
      %v6273 = vld [vmem:[#allocation6 + $0x850] sm:$0xff]
      %v6274 = vld [vmem:[#allocation6 + $0x858] sm:$0xff]
      %v6275 = vld [vmem:[#allocation6 + $0x860] sm:$0xff]
      %v6276 = vld [vmem:[#allocation6 + $0x868] sm:$0xff]
      %v6277 = vld [vmem:[#allocation6 + $0x870] sm:$0xff]
      %v6278 = vld [vmem:[#allocation6 + $0x878] sm:$0xff]
      %v6279 = vld [vmem:[#allocation6 + $0x880] sm:$0xff]
      %v6280 = vld [vmem:[#allocation6 + $0x888] sm:$0xff]
      %v6281 = vld [vmem:[#allocation6 + $0x890] sm:$0xff]
      %v6282 = vld [vmem:[#allocation6 + $0x898] sm:$0xff]
      %v6283 = vld [vmem:[#allocation6 + $0x8a0] sm:$0xff]
      %v6284 = vld [vmem:[#allocation6 + $0x8a8] sm:$0xff]
      %v6285 = vld [vmem:[#allocation6 + $0x8b0] sm:$0xff]
      %v6286 = vld [vmem:[#allocation6 + $0x8b8] sm:$0xff]
      %v6287 = vld [vmem:[#allocation6 + $0x8c0] sm:$0xff]
      %v6288 = vld [vmem:[#allocation6 + $0x8c8] sm:$0xff]
      %v6289 = vld [vmem:[#allocation6 + $0x8d0] sm:$0xff]
      %v6290 = vld [vmem:[#allocation6 + $0x8d8] sm:$0xff]
      %v6291 = vld [vmem:[#allocation6 + $0x8e0] sm:$0xff]
      %v6292 = vld [vmem:[#allocation6 + $0x8e8] sm:$0xff]
      %v6293 = vld [vmem:[#allocation6 + $0x8f0] sm:$0xff]
      %v6294 = vld [vmem:[#allocation6 + $0x8f8] sm:$0xff]
      %v6295 = vld [vmem:[#allocation6 + $0x900] sm:$0xff]
      %v6296 = vld [vmem:[#allocation6 + $0x908] sm:$0xff]
      %v6297 = vld [vmem:[#allocation6 + $0x910] sm:$0xff]
      %v6298 = vld [vmem:[#allocation6 + $0x918] sm:$0xff]
      %v6299 = vld [vmem:[#allocation6 + $0x920] sm:$0xff]
      %v6300 = vld [vmem:[#allocation6 + $0x928] sm:$0xff]
      %v6301 = vld [vmem:[#allocation6 + $0x930] sm:$0xff]
      %v6302 = vld [vmem:[#allocation6 + $0x938] sm:$0xff]
      %v6303 = vld [vmem:[#allocation6 + $0x940] sm:$0xff]
      %v6304 = vld [vmem:[#allocation6 + $0x948] sm:$0xff]
      %v6305 = vld [vmem:[#allocation6 + $0x950] sm:$0xff]
      %v6306 = vld [vmem:[#allocation6 + $0x958] sm:$0xff]
      %v6307 = vld [vmem:[#allocation6 + $0x960] sm:$0xff]
      %v6308 = vld [vmem:[#allocation6 + $0x968] sm:$0xff]
      %v6309 = vld [vmem:[#allocation6 + $0x970] sm:$0xff]
      %v6310 = vld [vmem:[#allocation6 + $0x978] sm:$0xff]
      %v6311 = vld [vmem:[#allocation6 + $0x980] sm:$0xff]
      %v6312 = vld [vmem:[#allocation6 + $0x988] sm:$0xff]
      %v6313 = vld [vmem:[#allocation6 + $0x990] sm:$0xff]
      %v6314 = vld [vmem:[#allocation6 + $0x998] sm:$0xff]
      %v6315 = vld [vmem:[#allocation6 + $0x9a0] sm:$0xff]
      %v6316 = vld [vmem:[#allocation6 + $0x9a8] sm:$0xff]
      %v6317 = vld [vmem:[#allocation6 + $0x9b0] sm:$0xff]
      %v6318 = vld [vmem:[#allocation6 + $0x9b8] sm:$0xff]
      %v6319 = vld [vmem:[#allocation6 + $0x9c0] sm:$0xff]
      %v6320 = vld [vmem:[#allocation6 + $0x9c8] sm:$0xff]
      %v6321 = vld [vmem:[#allocation6 + $0x9d0] sm:$0xff]
      %v6322 = vld [vmem:[#allocation6 + $0x9d8] sm:$0xff]
      %v6323 = vld [vmem:[#allocation6 + $0x9e0] sm:$0xff]
      %v6324 = vld [vmem:[#allocation6 + $0x9e8] sm:$0xff]
      %v6325 = vld [vmem:[#allocation6 + $0x9f0] sm:$0xff]
      %v6326 = vld [vmem:[#allocation6 + $0x9f8] sm:$0xff]
      %v6327 = vld [vmem:[#allocation6 + $0xa00] sm:$0xff]
      %v6328 = vld [vmem:[#allocation6 + $0xa08] sm:$0xff]
      %v6329 = vld [vmem:[#allocation6 + $0xa10] sm:$0xff]
      %v6330 = vld [vmem:[#allocation6 + $0xa18] sm:$0xff]
      %v6331 = vld [vmem:[#allocation6 + $0xa20] sm:$0xff]
      %v6332 = vld [vmem:[#allocation6 + $0xa28] sm:$0xff]
      %v6333 = vld [vmem:[#allocation6 + $0xa30] sm:$0xff]
      %v6334 = vld [vmem:[#allocation6 + $0xa38] sm:$0xff]
      %v6335 = vld [vmem:[#allocation6 + $0xa40] sm:$0xff]
      %v6336 = vld [vmem:[#allocation6 + $0xa48] sm:$0xff]
      %v6337 = vld [vmem:[#allocation6 + $0xa50] sm:$0xff]
      %v6338 = vld [vmem:[#allocation6 + $0xa58] sm:$0xff]
      %v6339 = vld [vmem:[#allocation6 + $0xa60] sm:$0xff]
      %v6340 = vld [vmem:[#allocation6 + $0xa68] sm:$0xff]
      %v6341 = vld [vmem:[#allocation6 + $0xa70] sm:$0xff]
      %v6342 = vld [vmem:[#allocation6 + $0xa78] sm:$0xff]
      %v6343 = vld [vmem:[#allocation6 + $0xa80] sm:$0xff]
      %v6344 = vld [vmem:[#allocation6 + $0xa88] sm:$0xff]
      %v6345 = vld [vmem:[#allocation6 + $0xa90] sm:$0xff]
      %v6346 = vld [vmem:[#allocation6 + $0xa98] sm:$0xff]
      %v6347 = vld [vmem:[#allocation6 + $0xaa0] sm:$0xff]
      %v6348 = vld [vmem:[#allocation6 + $0xaa8] sm:$0xff]
      %v6349 = vld [vmem:[#allocation6 + $0xab0] sm:$0xff]
      %v6350 = vld [vmem:[#allocation6 + $0xab8] sm:$0xff]
      %v6351 = vld [vmem:[#allocation6 + $0xac0] sm:$0xff]
      %v6352 = vld [vmem:[#allocation6 + $0xac8] sm:$0xff]
      %v6353 = vld [vmem:[#allocation6 + $0xad0] sm:$0xff]
      %v6354 = vld [vmem:[#allocation6 + $0xad8] sm:$0xff]
      %v6355 = vld [vmem:[#allocation6 + $0xae0] sm:$0xff]
      %v6356 = vld [vmem:[#allocation6 + $0xae8] sm:$0xff]
      %v6357 = vld [vmem:[#allocation6 + $0xaf0] sm:$0xff]
      %v6358 = vld [vmem:[#allocation6 + $0xaf8] sm:$0xff]
      %v6359 = vld [vmem:[#allocation6 + $0xb00] sm:$0xff]
      %v6360 = vld [vmem:[#allocation6 + $0xb08] sm:$0xff]
      %v6361 = vld [vmem:[#allocation6 + $0xb10] sm:$0xff]
      %v6362 = vld [vmem:[#allocation6 + $0xb18] sm:$0xff]
      %v6363 = vld [vmem:[#allocation6 + $0xb20] sm:$0xff]
      %v6364 = vld [vmem:[#allocation6 + $0xb28] sm:$0xff]
      %v6365 = vld [vmem:[#allocation6 + $0xb30] sm:$0xff]
      %v6366 = vld [vmem:[#allocation6 + $0xb38] sm:$0xff]
      %v6367 = vld [vmem:[#allocation6 + $0xb40] sm:$0xff]
      %v6368 = vld [vmem:[#allocation6 + $0xb48] sm:$0xff]
      %v6369 = vld [vmem:[#allocation6 + $0xb50] sm:$0xff]
      %v6370 = vld [vmem:[#allocation6 + $0xb58] sm:$0xff]
      %v6371 = vld [vmem:[#allocation6 + $0xb60] sm:$0xff]
      %v6372 = vld [vmem:[#allocation6 + $0xb68] sm:$0xff]
      %v6373 = vld [vmem:[#allocation6 + $0xb70] sm:$0xff]
      %v6374 = vld [vmem:[#allocation6 + $0xb78] sm:$0xff]
      %v6375 = vld [vmem:[#allocation6 + $0xb80] sm:$0xff]
      %v6376 = vld [vmem:[#allocation6 + $0xb88] sm:$0xff]
      %v6377 = vld [vmem:[#allocation6 + $0xb90] sm:$0xff]
      %v6378 = vld [vmem:[#allocation6 + $0xb98] sm:$0xff]
      %v6379 = vld [vmem:[#allocation6 + $0xba0] sm:$0xff]
      %v6380 = vld [vmem:[#allocation6 + $0xba8] sm:$0xff]
      %v6381 = vld [vmem:[#allocation6 + $0xbb0] sm:$0xff]
      %v6382 = vld [vmem:[#allocation6 + $0xbb8] sm:$0xff]
      %v6383 = vld [vmem:[#allocation6 + $0xbc0] sm:$0xff]
      %v6384 = vld [vmem:[#allocation6 + $0xbc8] sm:$0xff]
      %v6385 = vld [vmem:[#allocation6 + $0xbd0] sm:$0xff]
      %v6386 = vld [vmem:[#allocation6 + $0xbd8] sm:$0xff]
      %v6387 = vld [vmem:[#allocation6 + $0xbe0] sm:$0xff]
      %v6388 = vld [vmem:[#allocation6 + $0xbe8] sm:$0xff]
      %v6389 = vld [vmem:[#allocation6 + $0xbf0] sm:$0xff]
      %v6390 = vld [vmem:[#allocation6 + $0xbf8] sm:$0xff]
      %v6391 = vld [vmem:[#allocation6 + $0xc00] sm:$0xff]
      %v6392 = vld [vmem:[#allocation6 + $0xc08] sm:$0xff]
      %v6393 = vld [vmem:[#allocation6 + $0xc10] sm:$0xff]
      %v6394 = vld [vmem:[#allocation6 + $0xc18] sm:$0xff]
      %v6395 = vld [vmem:[#allocation6 + $0xc20] sm:$0xff]
      %v6396 = vld [vmem:[#allocation6 + $0xc28] sm:$0xff]
      %v6397 = vld [vmem:[#allocation6 + $0xc30] sm:$0xff]
      %v6398 = vld [vmem:[#allocation6 + $0xc38] sm:$0xff]
      %v6399 = vld [vmem:[#allocation6 + $0xc40] sm:$0xff]
      %v6400 = vld [vmem:[#allocation6 + $0xc48] sm:$0xff]
      %v6401 = vld [vmem:[#allocation6 + $0xc50] sm:$0xff]
      %v6402 = vld [vmem:[#allocation6 + $0xc58] sm:$0xff]
      %v6403 = vld [vmem:[#allocation6 + $0xc60] sm:$0xff]
      %v6404 = vld [vmem:[#allocation6 + $0xc68] sm:$0xff]
      %v6405 = vld [vmem:[#allocation6 + $0xc70] sm:$0xff]
      %v6406 = vld [vmem:[#allocation6 + $0xc78] sm:$0xff]
      %v6415 = vunpack.c.l.b16 %v5943
      %v6416 = vunpack.c.h.b16 %v5943
      %v6417 = vunpack.c.l.b16 %v5944
      %v6418 = vunpack.c.h.b16 %v5944
      %v6419 = vunpack.c.l.b16 %v5945
      %v6420 = vunpack.c.h.b16 %v5945
      %v6421 = vunpack.c.l.b16 %v5946
      %v6422 = vunpack.c.h.b16 %v5946
      %v6423 = vunpack.c.l.b16 %v5947
      %v6424 = vunpack.c.h.b16 %v5947
      %v6425 = vunpack.c.l.b16 %v5948
      %v6426 = vunpack.c.h.b16 %v5948
      %v6427 = vunpack.c.l.b16 %v5949
      %v6428 = vunpack.c.h.b16 %v5949
      %v6429 = vunpack.c.l.b16 %v5950
      %v6430 = vunpack.c.h.b16 %v5950
      %v6431 = vpack.c.b16 %v6419, %v6415
      %v6432 = vpack.c.b16 %v6420, %v6416
      %v6433 = vpack.c.b16 %v6421, %v6417
      %v6434 = vpack.c.b16 %v6422, %v6418
      %v6435 = vpack.c.b16 %v6427, %v6423
      %v6436 = vpack.c.b16 %v6428, %v6424
      %v6437 = vpack.c.b16 %v6429, %v6425
      %v6438 = vpack.c.b16 %v6430, %v6426
      %vm6445 = vcmask 130048
      %v6447 = vsel %vm6445, %v6434, 0
      %v6450 = vsel %vm6445, %v6438, 0
      %6452 = vmatprep.subr.bf16.mxu0 %v6008
      %6453 = vmatpush1.bf16.msra.mxu0 %v6007
      %6454 = vmatprep.subr.bf16.mxu0 %v6010
      %6455 = vmatpush1.bf16.msra.mxu0 %v6009
      %6456 = vmatprep.subr.bf16.mxu0 %v6012
      %6457 = vmatpush1.bf16.msra.mxu0 %v6011
      %6458 = vmatprep.subr.bf16.mxu0 %v6014
      %6459 = vmatpush1.bf16.msra.mxu0 %v6013
      %6460 = vmatprep.subr.bf16.mxu0 %v6016
      %6461 = vmatpush1.bf16.msra.mxu0 %v6015
      %6462 = vmatprep.subr.bf16.mxu0 %v6018
      %6463 = vmatpush1.bf16.msra.mxu0 %v6017
      %6464 = vmatprep.subr.bf16.mxu0 %v6020
      %6465 = vmatpush1.bf16.msra.mxu0 %v6019
      %6466 = vmatprep.subr.bf16.mxu0 %v6022
      %6467 = vmatpush1.bf16.msra.mxu0 %v6021
      %6468 = vmatprep.subr.bf16.mxu0 %v6024
      %6469 = vmatpush1.bf16.msra.mxu0 %v6023
      %6470 = vmatprep.subr.bf16.mxu0 %v6026
      %6471 = vmatpush1.bf16.msra.mxu0 %v6025
      %6472 = vmatprep.subr.bf16.mxu0 %v6028
      %6473 = vmatpush1.bf16.msra.mxu0 %v6027
      %6474 = vmatprep.subr.bf16.mxu0 %v6030
      %6475 = vmatpush1.bf16.msra.mxu0 %v6029
      %6476 = vmatprep.subr.bf16.mxu0 %v6032
      %6477 = vmatpush1.bf16.msra.mxu0 %v6031
      %6478 = vmatprep.subr.bf16.mxu0 %v6034
      %6479 = vmatpush1.bf16.msra.mxu0 %v6033
      %6480 = vmatprep.subr.bf16.mxu0 %v6036
      %6481 = vmatpush1.bf16.msra.mxu0 %v6035
      %6482 = vmatprep.subr.bf16.mxu0 %v6038
      %6483 = vmatpush1.bf16.msra.mxu0 %v6037
      %6484 = vmatprep.mubr.bf16.mxu0 %v6432
      %6485 = vmatmul.mubr.bf16.gmra.mrb[0].mxu0 %v6431
      %v6486 = vpop.f32.mrb[0].mxu0
      %v6487 = vadd.f32 0.0, %v6486
      %v6488 = vpop.f32.mrb[0].mxu0
      %v6489 = vadd.f32 0.0, %v6488
      %v6490 = vpop.f32.mrb[0].mxu0
      %v6491 = vadd.f32 0.0, %v6490
      %v6492 = vpop.f32.mrb[0].mxu0
      %v6493 = vadd.f32 0.0, %v6492
      %6494 = vmatprep.mubr.bf16.mxu0 %v6436
      %6495 = vmatmul.mubr.bf16.gmra.mrb[0].mxu0 %v6435
      %v6496 = vpop.f32.mrb[0].mxu0
      %v6497 = vadd.f32 0.0, %v6496
      %v6498 = vpop.f32.mrb[0].mxu0
      %v6499 = vadd.f32 0.0, %v6498
      %v6500 = vpop.f32.mrb[0].mxu0
      %v6501 = vadd.f32 0.0, %v6500
      %v6502 = vpop.f32.mrb[0].mxu0
      %v6503 = vadd.f32 0.0, %v6502
      %6504 = vdwg.mxu0
      %6505 = vmatprep.subr.bf16.mxu0 %v6040
      %6506 = vmatpush1.bf16.msra.mxu0 %v6039
      %6507 = vmatprep.subr.bf16.mxu0 %v6042
      %6508 = vmatpush1.bf16.msra.mxu0 %v6041
      %6509 = vmatprep.subr.bf16.mxu0 %v6044
      %6510 = vmatpush1.bf16.msra.mxu0 %v6043
      %6511 = vmatprep.subr.bf16.mxu0 %v6046
      %6512 = vmatpush1.bf16.msra.mxu0 %v6045
      %6513 = vmatprep.subr.bf16.mxu0 %v6048
      %6514 = vmatpush1.bf16.msra.mxu0 %v6047
      %6515 = vmatprep.subr.bf16.mxu0 %v6050
      %6516 = vmatpush1.bf16.msra.mxu0 %v6049
      %6517 = vmatprep.subr.bf16.mxu0 %v6052
      %6518 = vmatpush1.bf16.msra.mxu0 %v6051
      %6519 = vmatprep.subr.bf16.mxu0 %v6054
      %6520 = vmatpush1.bf16.msra.mxu0 %v6053
      %6521 = vmatprep.subr.bf16.mxu0 %v6056
      %6522 = vmatpush1.bf16.msra.mxu0 %v6055
      %6523 = vmatprep.subr.bf16.mxu0 0
      %6524 = vmatpush1.bf16.msra.mxu0 0
      %6525 = vmatprep.subr.bf16.mxu0 0
      %6526 = vmatpush1.bf16.msra.mxu0 0
      %6527 = vmatprep.subr.bf16.mxu0 0
      %6528 = vmatpush1.bf16.msra.mxu0 0
      %6529 = vmatprep.subr.bf16.mxu0 0
      %6530 = vmatpush1.bf16.msra.mxu0 0
      %6531 = vmatprep.subr.bf16.mxu0 0
      %6532 = vmatpush1.bf16.msra.mxu0 0
      %6533 = vmatprep.subr.bf16.mxu0 0
      %6534 = vmatpush1.bf16.msra.mxu0 0
      %6535 = vmatprep.subr.bf16.mxu0 0
      %6536 = vmatpush1.bf16.msra.mxu0 0
      %6537 = vmatprep.mubr.bf16.mxu0 %v6447
      %6538 = vmatmul.mubr.bf16.gmra.mrb[0].mxu0 %v6433
      %v6539 = vpop.f32.mrb[0].mxu0
      %v6540 = vadd.f32 %v6487, %v6539
      %v6541 = vpop.f32.mrb[0].mxu0
      %v6542 = vadd.f32 %v6489, %v6541
      %v6543 = vpop.f32.mrb[0].mxu0
      %v6544 = vadd.f32 %v6491, %v6543
      %v6545 = vpop.f32.mrb[0].mxu0
      %v6546 = vadd.f32 %v6493, %v6545
      %6547 = vmatprep.mubr.bf16.mxu0 %v6450
      %6548 = vmatmul.mubr.bf16.gmra.mrb[0].mxu0 %v6437
      %v6549 = vpop.f32.mrb[0].mxu0
      %v6550 = vadd.f32 %v6497, %v6549
      %v6551 = vpop.f32.mrb[0].mxu0
      %v6552 = vadd.f32 %v6499, %v6551
      %v6553 = vpop.f32.mrb[0].mxu0
      %v6554 = vadd.f32 %v6501, %v6553
      %v6555 = vpop.f32.mrb[0].mxu0
      %v6556 = vadd.f32 %v6503, %v6555
      %6557 = vdwg.mxu0
      %v6566 = vunpack.c.l.b16 %v5951
      %v6567 = vunpack.c.h.b16 %v5951
      %v6568 = vunpack.c.l.b16 %v5952
      %v6569 = vunpack.c.h.b16 %v5952
      %v6570 = vunpack.c.l.b16 %v5953
      %v6571 = vunpack.c.h.b16 %v5953
      %v6572 = vunpack.c.l.b16 %v5954
      %v6573 = vunpack.c.h.b16 %v5954
      %v6574 = vunpack.c.l.b16 %v5955
      %v6575 = vunpack.c.h.b16 %v5955
      %v6576 = vunpack.c.l.b16 %v5956
      %v6577 = vunpack.c.h.b16 %v5956
      %v6578 = vunpack.c.l.b16 %v5957
      %v6579 = vunpack.c.h.b16 %v5957
      %v6580 = vunpack.c.l.b16 %v5958
      %v6581 = vunpack.c.h.b16 %v5958
      %v6582 = vpack.c.b16 %v6570, %v6566
      %v6583 = vpack.c.b16 %v6571, %v6567
      %v6584 = vpack.c.b16 %v6572, %v6568
      %v6585 = vpack.c.b16 %v6573, %v6569
      %v6586 = vpack.c.b16 %v6578, %v6574
      %v6587 = vpack.c.b16 %v6579, %v6575
      %v6588 = vpack.c.b16 %v6580, %v6576
      %v6589 = vpack.c.b16 %v6581, %v6577
      %v6597 = vsel %vm6445, %v6585, 0
      %v6600 = vsel %vm6445, %v6589, 0
      %6602 = vmatprep.subr.bf16.mxu0 %v6058
      %6603 = vmatpush1.bf16.msra.mxu0 %v6057
      %6604 = vmatprep.subr.bf16.mxu0 %v6060
      %6605 = vmatpush1.bf16.msra.mxu0 %v6059
      %6606 = vmatprep.subr.bf16.mxu0 %v6062
      %6607 = vmatpush1.bf16.msra.mxu0 %v6061
      %6608 = vmatprep.subr.bf16.mxu0 %v6064
      %6609 = vmatpush1.bf16.msra.mxu0 %v6063
      %6610 = vmatprep.subr.bf16.mxu0 %v6066
      %6611 = vmatpush1.bf16.msra.mxu0 %v6065
      %6612 = vmatprep.subr.bf16.mxu0 %v6068
      %6613 = vmatpush1.bf16.msra.mxu0 %v6067
      %6614 = vmatprep.subr.bf16.mxu0 %v6070
      %6615 = vmatpush1.bf16.msra.mxu0 %v6069
      %6616 = vmatprep.subr.bf16.mxu0 %v6072
      %6617 = vmatpush1.bf16.msra.mxu0 %v6071
      %6618 = vmatprep.subr.bf16.mxu0 %v6074
      %6619 = vmatpush1.bf16.msra.mxu0 %v6073
      %6620 = vmatprep.subr.bf16.mxu0 %v6076
      %6621 = vmatpush1.bf16.msra.mxu0 %v6075
      %6622 = vmatprep.subr.bf16.mxu0 %v6078
      %6623 = vmatpush1.bf16.msra.mxu0 %v6077
      %6624 = vmatprep.subr.bf16.mxu0 %v6080
      %6625 = vmatpush1.bf16.msra.mxu0 %v6079
      %6626 = vmatprep.subr.bf16.mxu0 %v6082
      %6627 = vmatpush1.bf16.msra.mxu0 %v6081
      %6628 = vmatprep.subr.bf16.mxu0 %v6084
      %6629 = vmatpush1.bf16.msra.mxu0 %v6083
      %6630 = vmatprep.subr.bf16.mxu0 %v6086
      %6631 = vmatpush1.bf16.msra.mxu0 %v6085
      %6632 = vmatprep.subr.bf16.mxu0 %v6088
      %6633 = vmatpush1.bf16.msra.mxu0 %v6087
      %6634 = vmatprep.mubr.bf16.mxu0 %v6583
      %6635 = vmatmul.mubr.bf16.gmra.mrb[0].mxu0 %v6582
      %v6636 = vpop.f32.mrb[0].mxu0
      %v6637 = vadd.f32 0.0, %v6636
      %v6638 = vpop.f32.mrb[0].mxu0
      %v6639 = vadd.f32 0.0, %v6638
      %v6640 = vpop.f32.mrb[0].mxu0
      %v6641 = vadd.f32 0.0, %v6640
      %v6642 = vpop.f32.mrb[0].mxu0
      %v6643 = vadd.f32 0.0, %v6642
      %6644 = vmatprep.mubr.bf16.mxu0 %v6587
      %6645 = vmatmul.mubr.bf16.gmra.mrb[0].mxu0 %v6586
      %v6646 = vpop.f32.mrb[0].mxu0
      %v6647 = vadd.f32 0.0, %v6646
      %v6648 = vpop.f32.mrb[0].mxu0
      %v6649 = vadd.f32 0.0, %v6648
      %v6650 = vpop.f32.mrb[0].mxu0
      %v6651 = vadd.f32 0.0, %v6650
      %v6652 = vpop.f32.mrb[0].mxu0
      %v6653 = vadd.f32 0.0, %v6652
      %6654 = vdwg.mxu0
      %6655 = vmatprep.subr.bf16.mxu0 %v6090
      %6656 = vmatpush1.bf16.msra.mxu0 %v6089
      %6657 = vmatprep.subr.bf16.mxu0 %v6092
      %6658 = vmatpush1.bf16.msra.mxu0 %v6091
      %6659 = vmatprep.subr.bf16.mxu0 %v6094
      %6660 = vmatpush1.bf16.msra.mxu0 %v6093
      %6661 = vmatprep.subr.bf16.mxu0 %v6096
      %6662 = vmatpush1.bf16.msra.mxu0 %v6095
      %6663 = vmatprep.subr.bf16.mxu0 %v6098
      %6664 = vmatpush1.bf16.msra.mxu0 %v6097
      %6665 = vmatprep.subr.bf16.mxu0 %v6100
      %6666 = vmatpush1.bf16.msra.mxu0 %v6099
      %6667 = vmatprep.subr.bf16.mxu0 %v6102
      %6668 = vmatpush1.bf16.msra.mxu0 %v6101
      %6669 = vmatprep.subr.bf16.mxu0 %v6104
      %6670 = vmatpush1.bf16.msra.mxu0 %v6103
      %6671 = vmatprep.subr.bf16.mxu0 %v6106
      %6672 = vmatpush1.bf16.msra.mxu0 %v6105
      %6673 = vmatprep.subr.bf16.mxu0 0
      %6674 = vmatpush1.bf16.msra.mxu0 0
      %6675 = vmatprep.subr.bf16.mxu0 0
      %6676 = vmatpush1.bf16.msra.mxu0 0
      %6677 = vmatprep.subr.bf16.mxu0 0
      %6678 = vmatpush1.bf16.msra.mxu0 0
      %6679 = vmatprep.subr.bf16.mxu0 0
      %6680 = vmatpush1.bf16.msra.mxu0 0
      %6681 = vmatprep.subr.bf16.mxu0 0
      %6682 = vmatpush1.bf16.msra.mxu0 0
      %6683 = vmatprep.subr.bf16.mxu0 0
      %6684 = vmatpush1.bf16.msra.mxu0 0
      %6685 = vmatprep.subr.bf16.mxu0 0
      %6686 = vmatpush1.bf16.msra.mxu0 0
      %6687 = vmatprep.mubr.bf16.mxu0 %v6597
      %6688 = vmatmul.mubr.bf16.gmra.mrb[0].mxu0 %v6584
      %v6689 = vpop.f32.mrb[0].mxu0
      %v6690 = vadd.f32 %v6637, %v6689
      %v6691 = vpop.f32.mrb[0].mxu0
      %v6692 = vadd.f32 %v6639, %v6691
      %v6693 = vpop.f32.mrb[0].mxu0
      %v6694 = vadd.f32 %v6641, %v6693
      %v6695 = vpop.f32.mrb[0].mxu0
      %v6696 = vadd.f32 %v6643, %v6695
      %6697 = vmatprep.mubr.bf16.mxu0 %v6600
      %6698 = vmatmul.mubr.bf16.gmra.mrb[0].mxu0 %v6588
      %v6699 = vpop.f32.mrb[0].mxu0
      %v6700 = vadd.f32 %v6647, %v6699
      %v6701 = vpop.f32.mrb[0].mxu0
      %v6702 = vadd.f32 %v6649, %v6701
      %v6703 = vpop.f32.mrb[0].mxu0
      %v6704 = vadd.f32 %v6651, %v6703
      %v6705 = vpop.f32.mrb[0].mxu0
      %v6706 = vadd.f32 %v6653, %v6705
      %6707 = vdwg.mxu0
      %v6716 = vunpack.c.l.b16 %v5959
      %v6717 = vunpack.c.h.b16 %v5959
      %v6718 = vunpack.c.l.b16 %v5960
      %v6719 = vunpack.c.h.b16 %v5960
      %v6720 = vunpack.c.l.b16 %v5961
      %v6721 = vunpack.c.h.b16 %v5961
      %v6722 = vunpack.c.l.b16 %v5962
      %v6723 = vunpack.c.h.b16 %v5962
      %v6724 = vunpack.c.l.b16 %v5963
      %v6725 = vunpack.c.h.b16 %v5963
      %v6726 = vunpack.c.l.b16 %v5964
      %v6727 = vunpack.c.h.b16 %v5964
      %v6728 = vunpack.c.l.b16 %v5965
      %v6729 = vunpack.c.h.b16 %v5965
      %v6730 = vunpack.c.l.b16 %v5966
      %v6731 = vunpack.c.h.b16 %v5966
      %v6732 = vpack.c.b16 %v6720, %v6716
      %v6733 = vpack.c.b16 %v6721, %v6717
      %v6734 = vpack.c.b16 %v6722, %v6718
      %v6735 = vpack.c.b16 %v6723, %v6719
      %v6736 = vpack.c.b16 %v6728, %v6724
      %v6737 = vpack.c.b16 %v6729, %v6725
      %v6738 = vpack.c.b16 %v6730, %v6726
      %v6739 = vpack.c.b16 %v6731, %v6727
      %v6747 = vsel %vm6445, %v6735, 0
      %v6750 = vsel %vm6445, %v6739, 0
      %6752 = vmatprep.subr.bf16.mxu0 %v6108
      %6753 = vmatpush1.bf16.msra.mxu0 %v6107
      %6754 = vmatprep.subr.bf16.mxu0 %v6110
      %6755 = vmatpush1.bf16.msra.mxu0 %v6109
      %6756 = vmatprep.subr.bf16.mxu0 %v6112
      %6757 = vmatpush1.bf16.msra.mxu0 %v6111
      %6758 = vmatprep.subr.bf16.mxu0 %v6114
      %6759 = vmatpush1.bf16.msra.mxu0 %v6113
      %6760 = vmatprep.subr.bf16.mxu0 %v6116
      %6761 = vmatpush1.bf16.msra.mxu0 %v6115
      %6762 = vmatprep.subr.bf16.mxu0 %v6118
      %6763 = vmatpush1.bf16.msra.mxu0 %v6117
      %6764 = vmatprep.subr.bf16.mxu0 %v6120
      %6765 = vmatpush1.bf16.msra.mxu0 %v6119
      %6766 = vmatprep.subr.bf16.mxu0 %v6122
      %6767 = vmatpush1.bf16.msra.mxu0 %v6121
      %6768 = vmatprep.subr.bf16.mxu0 %v6124
      %6769 = vmatpush1.bf16.msra.mxu0 %v6123
      %6770 = vmatprep.subr.bf16.mxu0 %v6126
      %6771 = vmatpush1.bf16.msra.mxu0 %v6125
      %6772 = vmatprep.subr.bf16.mxu0 %v6128
      %6773 = vmatpush1.bf16.msra.mxu0 %v6127
      %6774 = vmatprep.subr.bf16.mxu0 %v6130
      %6775 = vmatpush1.bf16.msra.mxu0 %v6129
      %6776 = vmatprep.subr.bf16.mxu0 %v6132
      %6777 = vmatpush1.bf16.msra.mxu0 %v6131
      %6778 = vmatprep.subr.bf16.mxu0 %v6134
      %6779 = vmatpush1.bf16.msra.mxu0 %v6133
      %6780 = vmatprep.subr.bf16.mxu0 %v6136
      %6781 = vmatpush1.bf16.msra.mxu0 %v6135
      %6782 = vmatprep.subr.bf16.mxu0 %v6138
      %6783 = vmatpush1.bf16.msra.mxu0 %v6137
      %6784 = vmatprep.mubr.bf16.mxu0 %v6733
      %6785 = vmatmul.mubr.bf16.gmra.mrb[0].mxu0 %v6732
      %v6786 = vpop.f32.mrb[0].mxu0
      %v6787 = vadd.f32 0.0, %v6786
      %v6788 = vpop.f32.mrb[0].mxu0
      %v6789 = vadd.f32 0.0, %v6788
      %v6790 = vpop.f32.mrb[0].mxu0
      %v6791 = vadd.f32 0.0, %v6790
      %v6792 = vpop.f32.mrb[0].mxu0
      %v6793 = vadd.f32 0.0, %v6792
      %6794 = vmatprep.mubr.bf16.mxu0 %v6737
      %6795 = vmatmul.mubr.bf16.gmra.mrb[0].mxu0 %v6736
      %v6796 = vpop.f32.mrb[0].mxu0
      %v6797 = vadd.f32 0.0, %v6796
      %v6798 = vpop.f32.mrb[0].mxu0
      %v6799 = vadd.f32 0.0, %v6798
      %v6800 = vpop.f32.mrb[0].mxu0
      %v6801 = vadd.f32 0.0, %v6800
      %v6802 = vpop.f32.mrb[0].mxu0
      %v6803 = vadd.f32 0.0, %v6802
      %6804 = vdwg.mxu0
      %6805 = vmatprep.subr.bf16.mxu0 %v6140
      %6806 = vmatpush1.bf16.msra.mxu0 %v6139
      %6807 = vmatprep.subr.bf16.mxu0 %v6142
      %6808 = vmatpush1.bf16.msra.mxu0 %v6141
      %6809 = vmatprep.subr.bf16.mxu0 %v6144
      %6810 = vmatpush1.bf16.msra.mxu0 %v6143
      %6811 = vmatprep.subr.bf16.mxu0 %v6146
      %6812 = vmatpush1.bf16.msra.mxu0 %v6145
      %6813 = vmatprep.subr.bf16.mxu0 %v6148
      %6814 = vmatpush1.bf16.msra.mxu0 %v6147
      %6815 = vmatprep.subr.bf16.mxu0 %v6150
      %6816 = vmatpush1.bf16.msra.mxu0 %v6149
      %6817 = vmatprep.subr.bf16.mxu0 %v6152
      %6818 = vmatpush1.bf16.msra.mxu0 %v6151
      %6819 = vmatprep.subr.bf16.mxu0 %v6154
      %6820 = vmatpush1.bf16.msra.mxu0 %v6153
      %6821 = vmatprep.subr.bf16.mxu0 %v6156
      %6822 = vmatpush1.bf16.msra.mxu0 %v6155
      %6823 = vmatprep.subr.bf16.mxu0 0
      %6824 = vmatpush1.bf16.msra.mxu0 0
      %6825 = vmatprep.subr.bf16.mxu0 0
      %6826 = vmatpush1.bf16.msra.mxu0 0
      %6827 = vmatprep.subr.bf16.mxu0 0
      %6828 = vmatpush1.bf16.msra.mxu0 0
      %6829 = vmatprep.subr.bf16.mxu0 0
      %6830 = vmatpush1.bf16.msra.mxu0 0
      %6831 = vmatprep.subr.bf16.mxu0 0
      %6832 = vmatpush1.bf16.msra.mxu0 0
      %6833 = vmatprep.subr.bf16.mxu0 0
      %6834 = vmatpush1.bf16.msra.mxu0 0
      %6835 = vmatprep.subr.bf16.mxu0 0
      %6836 = vmatpush1.bf16.msra.mxu0 0
      %6837 = vmatprep.mubr.bf16.mxu0 %v6747
      %6838 = vmatmul.mubr.bf16.gmra.mrb[0].mxu0 %v6734
      %v6839 = vpop.f32.mrb[0].mxu0
      %v6840 = vadd.f32 %v6787, %v6839
      %v6841 = vpop.f32.mrb[0].mxu0
      %v6842 = vadd.f32 %v6789, %v6841
      %v6843 = vpop.f32.mrb[0].mxu0
      %v6844 = vadd.f32 %v6791, %v6843
      %v6845 = vpop.f32.mrb[0].mxu0
      %v6846 = vadd.f32 %v6793, %v6845
      %6847 = vmatprep.mubr.bf16.mxu0 %v6750
      %6848 = vmatmul.mubr.bf16.gmra.mrb[0].mxu0 %v6738
      %v6849 = vpop.f32.mrb[0].mxu0
      %v6850 = vadd.f32 %v6797, %v6849
      %v6851 = vpop.f32.mrb[0].mxu0
      %v6852 = vadd.f32 %v6799, %v6851
      %v6853 = vpop.f32.mrb[0].mxu0
      %v6854 = vadd.f32 %v6801, %v6853
      %v6855 = vpop.f32.mrb[0].mxu0
      %v6856 = vadd.f32 %v6803, %v6855
      %6857 = vdwg.mxu0
      %v6866 = vunpack.c.l.b16 %v5967
      %v6867 = vunpack.c.h.b16 %v5967
      %v6868 = vunpack.c.l.b16 %v5968
      %v6869 = vunpack.c.h.b16 %v5968
      %v6870 = vunpack.c.l.b16 %v5969
      %v6871 = vunpack.c.h.b16 %v5969
      %v6872 = vunpack.c.l.b16 %v5970
      %v6873 = vunpack.c.h.b16 %v5970
      %v6874 = vunpack.c.l.b16 %v5971
      %v6875 = vunpack.c.h.b16 %v5971
      %v6876 = vunpack.c.l.b16 %v5972
      %v6877 = vunpack.c.h.b16 %v5972
      %v6878 = vunpack.c.l.b16 %v5973
      %v6879 = vunpack.c.h.b16 %v5973
      %v6880 = vunpack.c.l.b16 %v5974
      %v6881 = vunpack.c.h.b16 %v5974
      %v6882 = vpack.c.b16 %v6870, %v6866
      %v6883 = vpack.c.b16 %v6871, %v6867
      %v6884 = vpack.c.b16 %v6872, %v6868
      %v6885 = vpack.c.b16 %v6873, %v6869
      %v6886 = vpack.c.b16 %v6878, %v6874
      %v6887 = vpack.c.b16 %v6879, %v6875
      %v6888 = vpack.c.b16 %v6880, %v6876
      %v6889 = vpack.c.b16 %v6881, %v6877
      %v6897 = vsel %vm6445, %v6885, 0
      %v6900 = vsel %vm6445, %v6889, 0
      %6902 = vmatprep.subr.bf16.mxu0 %v6158
      %6903 = vmatpush1.bf16.msra.mxu0 %v6157
      %6904 = vmatprep.subr.bf16.mxu0 %v6160
      %6905 = vmatpush1.bf16.msra.mxu0 %v6159
      %6906 = vmatprep.subr.bf16.mxu0 %v6162
      %6907 = vmatpush1.bf16.msra.mxu0 %v6161
      %6908 = vmatprep.subr.bf16.mxu0 %v6164
      %6909 = vmatpush1.bf16.msra.mxu0 %v6163
      %6910 = vmatprep.subr.bf16.mxu0 %v6166
      %6911 = vmatpush1.bf16.msra.mxu0 %v6165
      %6912 = vmatprep.subr.bf16.mxu0 %v6168
      %6913 = vmatpush1.bf16.msra.mxu0 %v6167
      %6914 = vmatprep.subr.bf16.mxu0 %v6170
      %6915 = vmatpush1.bf16.msra.mxu0 %v6169
      %6916 = vmatprep.subr.bf16.mxu0 %v6172
      %6917 = vmatpush1.bf16.msra.mxu0 %v6171
      %6918 = vmatprep.subr.bf16.mxu0 %v6174
      %6919 = vmatpush1.bf16.msra.mxu0 %v6173
      %6920 = vmatprep.subr.bf16.mxu0 %v6176
      %6921 = vmatpush1.bf16.msra.mxu0 %v6175
      %6922 = vmatprep.subr.bf16.mxu0 %v6178
      %6923 = vmatpush1.bf16.msra.mxu0 %v6177
      %6924 = vmatprep.subr.bf16.mxu0 %v6180
      %6925 = vmatpush1.bf16.msra.mxu0 %v6179
      %6926 = vmatprep.subr.bf16.mxu0 %v6182
      %6927 = vmatpush1.bf16.msra.mxu0 %v6181
      %6928 = vmatprep.subr.bf16.mxu0 %v6184
      %6929 = vmatpush1.bf16.msra.mxu0 %v6183
      %6930 = vmatprep.subr.bf16.mxu0 %v6186
      %6931 = vmatpush1.bf16.msra.mxu0 %v6185
      %6932 = vmatprep.subr.bf16.mxu0 %v6188
      %6933 = vmatpush1.bf16.msra.mxu0 %v6187
      %6934 = vmatprep.mubr.bf16.mxu0 %v6883
      %6935 = vmatmul.mubr.bf16.gmra.mrb[0].mxu0 %v6882
      %v6936 = vpop.f32.mrb[0].mxu0
      %v6937 = vadd.f32 0.0, %v6936
      %v6938 = vpop.f32.mrb[0].mxu0
      %v6939 = vadd.f32 0.0, %v6938
      %v6940 = vpop.f32.mrb[0].mxu0
      %v6941 = vadd.f32 0.0, %v6940
      %v6942 = vpop.f32.mrb[0].mxu0
      %v6943 = vadd.f32 0.0, %v6942
      %6944 = vmatprep.mubr.bf16.mxu0 %v6887
      %6945 = vmatmul.mubr.bf16.gmra.mrb[0].mxu0 %v6886
      %v6946 = vpop.f32.mrb[0].mxu0
      %v6947 = vadd.f32 0.0, %v6946
      %v6948 = vpop.f32.mrb[0].mxu0
      %v6949 = vadd.f32 0.0, %v6948
      %v6950 = vpop.f32.mrb[0].mxu0
      %v6951 = vadd.f32 0.0, %v6950
      %v6952 = vpop.f32.mrb[0].mxu0
      %v6953 = vadd.f32 0.0, %v6952
      %6954 = vdwg.mxu0
      %6955 = vmatprep.subr.bf16.mxu0 %v6190
      %6956 = vmatpush1.bf16.msra.mxu0 %v6189
      %6957 = vmatprep.subr.bf16.mxu0 %v6192
      %6958 = vmatpush1.bf16.msra.mxu0 %v6191
      %6959 = vmatprep.subr.bf16.mxu0 %v6194
      %6960 = vmatpush1.bf16.msra.mxu0 %v6193
      %6961 = vmatprep.subr.bf16.mxu0 %v6196
      %6962 = vmatpush1.bf16.msra.mxu0 %v6195
      %6963 = vmatprep.subr.bf16.mxu0 %v6198
      %6964 = vmatpush1.bf16.msra.mxu0 %v6197
      %6965 = vmatprep.subr.bf16.mxu0 %v6200
      %6966 = vmatpush1.bf16.msra.mxu0 %v6199
      %6967 = vmatprep.subr.bf16.mxu0 %v6202
      %6968 = vmatpush1.bf16.msra.mxu0 %v6201
      %6969 = vmatprep.subr.bf16.mxu0 %v6204
      %6970 = vmatpush1.bf16.msra.mxu0 %v6203
      %6971 = vmatprep.subr.bf16.mxu0 %v6206
      %6972 = vmatpush1.bf16.msra.mxu0 %v6205
      %6973 = vmatprep.subr.bf16.mxu0 0
      %6974 = vmatpush1.bf16.msra.mxu0 0
      %6975 = vmatprep.subr.bf16.mxu0 0
      %6976 = vmatpush1.bf16.msra.mxu0 0
      %6977 = vmatprep.subr.bf16.mxu0 0
      %6978 = vmatpush1.bf16.msra.mxu0 0
      %6979 = vmatprep.subr.bf16.mxu0 0
      %6980 = vmatpush1.bf16.msra.mxu0 0
      %6981 = vmatprep.subr.bf16.mxu0 0
      %6982 = vmatpush1.bf16.msra.mxu0 0
      %6983 = vmatprep.subr.bf16.mxu0 0
      %6984 = vmatpush1.bf16.msra.mxu0 0
      %6985 = vmatprep.subr.bf16.mxu0 0
      %6986 = vmatpush1.bf16.msra.mxu0 0
      %6987 = vmatprep.mubr.bf16.mxu0 %v6897
      %6988 = vmatmul.mubr.bf16.gmra.mrb[0].mxu0 %v6884
      %v6989 = vpop.f32.mrb[0].mxu0
      %v6990 = vadd.f32 %v6937, %v6989
      %v6991 = vpop.f32.mrb[0].mxu0
      %v6992 = vadd.f32 %v6939, %v6991
      %v6993 = vpop.f32.mrb[0].mxu0
      %v6994 = vadd.f32 %v6941, %v6993
      %v6995 = vpop.f32.mrb[0].mxu0
      %v6996 = vadd.f32 %v6943, %v6995
      %6997 = vmatprep.mubr.bf16.mxu0 %v6900
      %6998 = vmatmul.mubr.bf16.gmra.mrb[0].mxu0 %v6888
      %v6999 = vpop.f32.mrb[0].mxu0
      %v7000 = vadd.f32 %v6947, %v6999
      %v7001 = vpop.f32.mrb[0].mxu0
      %v7002 = vadd.f32 %v6949, %v7001
      %v7003 = vpop.f32.mrb[0].mxu0
      %v7004 = vadd.f32 %v6951, %v7003
      %v7005 = vpop.f32.mrb[0].mxu0
      %v7006 = vadd.f32 %v6953, %v7005
      %7007 = vdwg.mxu0
      %v7016 = vunpack.c.l.b16 %v5975
      %v7017 = vunpack.c.h.b16 %v5975
      %v7018 = vunpack.c.l.b16 %v5976
      %v7019 = vunpack.c.h.b16 %v5976
      %v7020 = vunpack.c.l.b16 %v5977
      %v7021 = vunpack.c.h.b16 %v5977
      %v7022 = vunpack.c.l.b16 %v5978
      %v7023 = vunpack.c.h.b16 %v5978
      %v7024 = vunpack.c.l.b16 %v5979
      %v7025 = vunpack.c.h.b16 %v5979
      %v7026 = vunpack.c.l.b16 %v5980
      %v7027 = vunpack.c.h.b16 %v5980
      %v7028 = vunpack.c.l.b16 %v5981
      %v7029 = vunpack.c.h.b16 %v5981
      %v7030 = vunpack.c.l.b16 %v5982
      %v7031 = vunpack.c.h.b16 %v5982
      %v7032 = vpack.c.b16 %v7020, %v7016
      %v7033 = vpack.c.b16 %v7021, %v7017
      %v7034 = vpack.c.b16 %v7022, %v7018
      %v7035 = vpack.c.b16 %v7023, %v7019
      %v7036 = vpack.c.b16 %v7028, %v7024
      %v7037 = vpack.c.b16 %v7029, %v7025
      %v7038 = vpack.c.b16 %v7030, %v7026
      %v7039 = vpack.c.b16 %v7031, %v7027
      %v7047 = vsel %vm6445, %v7035, 0
      %v7050 = vsel %vm6445, %v7039, 0
      %7052 = vmatprep.subr.bf16.mxu0 %v6208
      %7053 = vmatpush1.bf16.msra.mxu0 %v6207
      %7054 = vmatprep.subr.bf16.mxu0 %v6210
      %7055 = vmatpush1.bf16.msra.mxu0 %v6209
      %7056 = vmatprep.subr.bf16.mxu0 %v6212
      %7057 = vmatpush1.bf16.msra.mxu0 %v6211
      %7058 = vmatprep.subr.bf16.mxu0 %v6214
      %7059 = vmatpush1.bf16.msra.mxu0 %v6213
      %7060 = vmatprep.subr.bf16.mxu0 %v6216
      %7061 = vmatpush1.bf16.msra.mxu0 %v6215
      %7062 = vmatprep.subr.bf16.mxu0 %v6218
      %7063 = vmatpush1.bf16.msra.mxu0 %v6217
      %7064 = vmatprep.subr.bf16.mxu0 %v6220
      %7065 = vmatpush1.bf16.msra.mxu0 %v6219
      %7066 = vmatprep.subr.bf16.mxu0 %v6222
      %7067 = vmatpush1.bf16.msra.mxu0 %v6221
      %7068 = vmatprep.subr.bf16.mxu0 %v6224
      %7069 = vmatpush1.bf16.msra.mxu0 %v6223
      %7070 = vmatprep.subr.bf16.mxu0 %v6226
      %7071 = vmatpush1.bf16.msra.mxu0 %v6225
      %7072 = vmatprep.subr.bf16.mxu0 %v6228
      %7073 = vmatpush1.bf16.msra.mxu0 %v6227
      %7074 = vmatprep.subr.bf16.mxu0 %v6230
      %7075 = vmatpush1.bf16.msra.mxu0 %v6229
      %7076 = vmatprep.subr.bf16.mxu0 %v6232
      %7077 = vmatpush1.bf16.msra.mxu0 %v6231
      %7078 = vmatprep.subr.bf16.mxu0 %v6234
      %7079 = vmatpush1.bf16.msra.mxu0 %v6233
      %7080 = vmatprep.subr.bf16.mxu0 %v6236
      %7081 = vmatpush1.bf16.msra.mxu0 %v6235
      %7082 = vmatprep.subr.bf16.mxu0 %v6238
      %7083 = vmatpush1.bf16.msra.mxu0 %v6237
      %7084 = vmatprep.mubr.bf16.mxu0 %v7033
      %7085 = vmatmul.mubr.bf16.gmra.mrb[0].mxu0 %v7032
      %v7086 = vpop.f32.mrb[0].mxu0
      %v7087 = vadd.f32 0.0, %v7086
      %v7088 = vpop.f32.mrb[0].mxu0
      %v7089 = vadd.f32 0.0, %v7088
      %v7090 = vpop.f32.mrb[0].mxu0
      %v7091 = vadd.f32 0.0, %v7090
      %v7092 = vpop.f32.mrb[0].mxu0
      %v7093 = vadd.f32 0.0, %v7092
      %7094 = vmatprep.mubr.bf16.mxu0 %v7037
      %7095 = vmatmul.mubr.bf16.gmra.mrb[0].mxu0 %v7036
      %v7096 = vpop.f32.mrb[0].mxu0
      %v7097 = vadd.f32 0.0, %v7096
      %v7098 = vpop.f32.mrb[0].mxu0
      %v7099 = vadd.f32 0.0, %v7098
      %v7100 = vpop.f32.mrb[0].mxu0
      %v7101 = vadd.f32 0.0, %v7100
      %v7102 = vpop.f32.mrb[0].mxu0
      %v7103 = vadd.f32 0.0, %v7102
      %7104 = vdwg.mxu0
      %7105 = vmatprep.subr.bf16.mxu0 %v6240
      %7106 = vmatpush1.bf16.msra.mxu0 %v6239
      %7107 = vmatprep.subr.bf16.mxu0 %v6242
      %7108 = vmatpush1.bf16.msra.mxu0 %v6241
      %7109 = vmatprep.subr.bf16.mxu0 %v6244
      %7110 = vmatpush1.bf16.msra.mxu0 %v6243
      %7111 = vmatprep.subr.bf16.mxu0 %v6246
      %7112 = vmatpush1.bf16.msra.mxu0 %v6245
      %7113 = vmatprep.subr.bf16.mxu0 %v6248
      %7114 = vmatpush1.bf16.msra.mxu0 %v6247
      %7115 = vmatprep.subr.bf16.mxu0 %v6250
      %7116 = vmatpush1.bf16.msra.mxu0 %v6249
      %7117 = vmatprep.subr.bf16.mxu0 %v6252
      %7118 = vmatpush1.bf16.msra.mxu0 %v6251
      %7119 = vmatprep.subr.bf16.mxu0 %v6254
      %7120 = vmatpush1.bf16.msra.mxu0 %v6253
      %7121 = vmatprep.subr.bf16.mxu0 %v6256
      %7122 = vmatpush1.bf16.msra.mxu0 %v6255
      %7123 = vmatprep.subr.bf16.mxu0 0
      %7124 = vmatpush1.bf16.msra.mxu0 0
      %7125 = vmatprep.subr.bf16.mxu0 0
      %7126 = vmatpush1.bf16.msra.mxu0 0
      %7127 = vmatprep.subr.bf16.mxu0 0
      %7128 = vmatpush1.bf16.msra.mxu0 0
      %7129 = vmatprep.subr.bf16.mxu0 0
      %7130 = vmatpush1.bf16.msra.mxu0 0
      %7131 = vmatprep.subr.bf16.mxu0 0
      %7132 = vmatpush1.bf16.msra.mxu0 0
      %7133 = vmatprep.subr.bf16.mxu0 0
      %7134 = vmatpush1.bf16.msra.mxu0 0
      %7135 = vmatprep.subr.bf16.mxu0 0
      %7136 = vmatpush1.bf16.msra.mxu0 0
      %7137 = vmatprep.mubr.bf16.mxu0 %v7047
      %7138 = vmatmul.mubr.bf16.gmra.mrb[0].mxu0 %v7034
      %v7139 = vpop.f32.mrb[0].mxu0
      %v7140 = vadd.f32 %v7087, %v7139
      %v7141 = vpop.f32.mrb[0].mxu0
      %v7142 = vadd.f32 %v7089, %v7141
      %v7143 = vpop.f32.mrb[0].mxu0
      %v7144 = vadd.f32 %v7091, %v7143
      %v7145 = vpop.f32.mrb[0].mxu0
      %v7146 = vadd.f32 %v7093, %v7145
      %7147 = vmatprep.mubr.bf16.mxu0 %v7050
      %7148 = vmatmul.mubr.bf16.gmra.mrb[0].mxu0 %v7038
      %v7149 = vpop.f32.mrb[0].mxu0
      %v7150 = vadd.f32 %v7097, %v7149
      %v7151 = vpop.f32.mrb[0].mxu0
      %v7152 = vadd.f32 %v7099, %v7151
      %v7153 = vpop.f32.mrb[0].mxu0
      %v7154 = vadd.f32 %v7101, %v7153
      %v7155 = vpop.f32.mrb[0].mxu0
      %v7156 = vadd.f32 %v7103, %v7155
      %7157 = vdwg.mxu0
      %v7166 = vunpack.c.l.b16 %v5983
      %v7167 = vunpack.c.h.b16 %v5983
      %v7168 = vunpack.c.l.b16 %v5984
      %v7169 = vunpack.c.h.b16 %v5984
      %v7170 = vunpack.c.l.b16 %v5985
      %v7171 = vunpack.c.h.b16 %v5985
      %v7172 = vunpack.c.l.b16 %v5986
      %v7173 = vunpack.c.h.b16 %v5986
      %v7174 = vunpack.c.l.b16 %v5987
      %v7175 = vunpack.c.h.b16 %v5987
      %v7176 = vunpack.c.l.b16 %v5988
      %v7177 = vunpack.c.h.b16 %v5988
      %v7178 = vunpack.c.l.b16 %v5989
      %v7179 = vunpack.c.h.b16 %v5989
      %v7180 = vunpack.c.l.b16 %v5990
      %v7181 = vunpack.c.h.b16 %v5990
      %v7182 = vpack.c.b16 %v7170, %v7166
      %v7183 = vpack.c.b16 %v7171, %v7167
      %v7184 = vpack.c.b16 %v7172, %v7168
      %v7185 = vpack.c.b16 %v7173, %v7169
      %v7186 = vpack.c.b16 %v7178, %v7174
      %v7187 = vpack.c.b16 %v7179, %v7175
      %v7188 = vpack.c.b16 %v7180, %v7176
      %v7189 = vpack.c.b16 %v7181, %v7177
      %v7197 = vsel %vm6445, %v7185, 0
      %v7200 = vsel %vm6445, %v7189, 0
      %7202 = vmatprep.subr.bf16.mxu0 %v6258
      %7203 = vmatpush1.bf16.msra.mxu0 %v6257
      %7204 = vmatprep.subr.bf16.mxu0 %v6260
      %7205 = vmatpush1.bf16.msra.mxu0 %v6259
      %7206 = vmatprep.subr.bf16.mxu0 %v6262
      %7207 = vmatpush1.bf16.msra.mxu0 %v6261
      %7208 = vmatprep.subr.bf16.mxu0 %v6264
      %7209 = vmatpush1.bf16.msra.mxu0 %v6263
      %7210 = vmatprep.subr.bf16.mxu0 %v6266
      %7211 = vmatpush1.bf16.msra.mxu0 %v6265
      %7212 = vmatprep.subr.bf16.mxu0 %v6268
      %7213 = vmatpush1.bf16.msra.mxu0 %v6267
      %7214 = vmatprep.subr.bf16.mxu0 %v6270
      %7215 = vmatpush1.bf16.msra.mxu0 %v6269
      %7216 = vmatprep.subr.bf16.mxu0 %v6272
      %7217 = vmatpush1.bf16.msra.mxu0 %v6271
      %7218 = vmatprep.subr.bf16.mxu0 %v6274
      %7219 = vmatpush1.bf16.msra.mxu0 %v6273
      %7220 = vmatprep.subr.bf16.mxu0 %v6276
      %7221 = vmatpush1.bf16.msra.mxu0 %v6275
      %7222 = vmatprep.subr.bf16.mxu0 %v6278
      %7223 = vmatpush1.bf16.msra.mxu0 %v6277
      %7224 = vmatprep.subr.bf16.mxu0 %v6280
      %7225 = vmatpush1.bf16.msra.mxu0 %v6279
      %7226 = vmatprep.subr.bf16.mxu0 %v6282
      %7227 = vmatpush1.bf16.msra.mxu0 %v6281
      %7228 = vmatprep.subr.bf16.mxu0 %v6284
      %7229 = vmatpush1.bf16.msra.mxu0 %v6283
      %7230 = vmatprep.subr.bf16.mxu0 %v6286
      %7231 = vmatpush1.bf16.msra.mxu0 %v6285
      %7232 = vmatprep.subr.bf16.mxu0 %v6288
      %7233 = vmatpush1.bf16.msra.mxu0 %v6287
      %7234 = vmatprep.mubr.bf16.mxu0 %v7183
      %7235 = vmatmul.mubr.bf16.gmra.mrb[0].mxu0 %v7182
      %v7236 = vpop.f32.mrb[0].mxu0
      %v7237 = vadd.f32 0.0, %v7236
      %v7238 = vpop.f32.mrb[0].mxu0
      %v7239 = vadd.f32 0.0, %v7238
      %v7240 = vpop.f32.mrb[0].mxu0
      %v7241 = vadd.f32 0.0, %v7240
      %v7242 = vpop.f32.mrb[0].mxu0
      %v7243 = vadd.f32 0.0, %v7242
      %7244 = vmatprep.mubr.bf16.mxu0 %v7187
      %7245 = vmatmul.mubr.bf16.gmra.mrb[0].mxu0 %v7186
      %v7246 = vpop.f32.mrb[0].mxu0
      %v7247 = vadd.f32 0.0, %v7246
      %v7248 = vpop.f32.mrb[0].mxu0
      %v7249 = vadd.f32 0.0, %v7248
      %v7250 = vpop.f32.mrb[0].mxu0
      %v7251 = vadd.f32 0.0, %v7250
      %v7252 = vpop.f32.mrb[0].mxu0
      %v7253 = vadd.f32 0.0, %v7252
      %7254 = vdwg.mxu0
      %7255 = vmatprep.subr.bf16.mxu0 %v6290
      %7256 = vmatpush1.bf16.msra.mxu0 %v6289
      %7257 = vmatprep.subr.bf16.mxu0 %v6292
      %7258 = vmatpush1.bf16.msra.mxu0 %v6291
      %7259 = vmatprep.subr.bf16.mxu0 %v6294
      %7260 = vmatpush1.bf16.msra.mxu0 %v6293
      %7261 = vmatprep.subr.bf16.mxu0 %v6296
      %7262 = vmatpush1.bf16.msra.mxu0 %v6295
      %7263 = vmatprep.subr.bf16.mxu0 %v6298
      %7264 = vmatpush1.bf16.msra.mxu0 %v6297
      %7265 = vmatprep.subr.bf16.mxu0 %v6300
      %7266 = vmatpush1.bf16.msra.mxu0 %v6299
      %7267 = vmatprep.subr.bf16.mxu0 %v6302
      %7268 = vmatpush1.bf16.msra.mxu0 %v6301
      %7269 = vmatprep.subr.bf16.mxu0 %v6304
      %7270 = vmatpush1.bf16.msra.mxu0 %v6303
      %7271 = vmatprep.subr.bf16.mxu0 %v6306
      %7272 = vmatpush1.bf16.msra.mxu0 %v6305
      %7273 = vmatprep.subr.bf16.mxu0 0
      %7274 = vmatpush1.bf16.msra.mxu0 0
      %7275 = vmatprep.subr.bf16.mxu0 0
      %7276 = vmatpush1.bf16.msra.mxu0 0
      %7277 = vmatprep.subr.bf16.mxu0 0
      %7278 = vmatpush1.bf16.msra.mxu0 0
      %7279 = vmatprep.subr.bf16.mxu0 0
      %7280 = vmatpush1.bf16.msra.mxu0 0
      %7281 = vmatprep.subr.bf16.mxu0 0
      %7282 = vmatpush1.bf16.msra.mxu0 0
      %7283 = vmatprep.subr.bf16.mxu0 0
      %7284 = vmatpush1.bf16.msra.mxu0 0
      %7285 = vmatprep.subr.bf16.mxu0 0
      %7286 = vmatpush1.bf16.msra.mxu0 0
      %7287 = vmatprep.mubr.bf16.mxu0 %v7197
      %7288 = vmatmul.mubr.bf16.gmra.mrb[0].mxu0 %v7184
      %v7289 = vpop.f32.mrb[0].mxu0
      %v7290 = vadd.f32 %v7237, %v7289
      %v7291 = vpop.f32.mrb[0].mxu0
      %v7292 = vadd.f32 %v7239, %v7291
      %v7293 = vpop.f32.mrb[0].mxu0
      %v7294 = vadd.f32 %v7241, %v7293
      %v7295 = vpop.f32.mrb[0].mxu0
      %v7296 = vadd.f32 %v7243, %v7295
      %7297 = vmatprep.mubr.bf16.mxu0 %v7200
      %7298 = vmatmul.mubr.bf16.gmra.mrb[0].mxu0 %v7188
      %v7299 = vpop.f32.mrb[0].mxu0
      %v7300 = vadd.f32 %v7247, %v7299
      %v7301 = vpop.f32.mrb[0].mxu0
      %v7302 = vadd.f32 %v7249, %v7301
      %v7303 = vpop.f32.mrb[0].mxu0
      %v7304 = vadd.f32 %v7251, %v7303
      %v7305 = vpop.f32.mrb[0].mxu0
      %v7306 = vadd.f32 %v7253, %v7305
      %7307 = vdwg.mxu0
      %v7316 = vunpack.c.l.b16 %v5991
      %v7317 = vunpack.c.h.b16 %v5991
      %v7318 = vunpack.c.l.b16 %v5992
      %v7319 = vunpack.c.h.b16 %v5992
      %v7320 = vunpack.c.l.b16 %v5993
      %v7321 = vunpack.c.h.b16 %v5993
      %v7322 = vunpack.c.l.b16 %v5994
      %v7323 = vunpack.c.h.b16 %v5994
      %v7324 = vunpack.c.l.b16 %v5995
      %v7325 = vunpack.c.h.b16 %v5995
      %v7326 = vunpack.c.l.b16 %v5996
      %v7327 = vunpack.c.h.b16 %v5996
      %v7328 = vunpack.c.l.b16 %v5997
      %v7329 = vunpack.c.h.b16 %v5997
      %v7330 = vunpack.c.l.b16 %v5998
      %v7331 = vunpack.c.h.b16 %v5998
      %v7332 = vpack.c.b16 %v7320, %v7316
      %v7333 = vpack.c.b16 %v7321, %v7317
      %v7334 = vpack.c.b16 %v7322, %v7318
      %v7335 = vpack.c.b16 %v7323, %v7319
      %v7336 = vpack.c.b16 %v7328, %v7324
      %v7337 = vpack.c.b16 %v7329, %v7325
      %v7338 = vpack.c.b16 %v7330, %v7326
      %v7339 = vpack.c.b16 %v7331, %v7327
      %v7347 = vsel %vm6445, %v7335, 0
      %v7350 = vsel %vm6445, %v7339, 0
      %7352 = vmatprep.subr.bf16.mxu0 %v6308
      %7353 = vmatpush1.bf16.msra.mxu0 %v6307
      %7354 = vmatprep.subr.bf16.mxu0 %v6310
      %7355 = vmatpush1.bf16.msra.mxu0 %v6309
      %7356 = vmatprep.subr.bf16.mxu0 %v6312
      %7357 = vmatpush1.bf16.msra.mxu0 %v6311
      %7358 = vmatprep.subr.bf16.mxu0 %v6314
      %7359 = vmatpush1.bf16.msra.mxu0 %v6313
      %7360 = vmatprep.subr.bf16.mxu0 %v6316
      %7361 = vmatpush1.bf16.msra.mxu0 %v6315
      %7362 = vmatprep.subr.bf16.mxu0 %v6318
      %7363 = vmatpush1.bf16.msra.mxu0 %v6317
      %7364 = vmatprep.subr.bf16.mxu0 %v6320
      %7365 = vmatpush1.bf16.msra.mxu0 %v6319
      %7366 = vmatprep.subr.bf16.mxu0 %v6322
      %7367 = vmatpush1.bf16.msra.mxu0 %v6321
      %7368 = vmatprep.subr.bf16.mxu0 %v6324
      %7369 = vmatpush1.bf16.msra.mxu0 %v6323
      %7370 = vmatprep.subr.bf16.mxu0 %v6326
      %7371 = vmatpush1.bf16.msra.mxu0 %v6325
      %7372 = vmatprep.subr.bf16.mxu0 %v6328
      %7373 = vmatpush1.bf16.msra.mxu0 %v6327
      %7374 = vmatprep.subr.bf16.mxu0 %v6330
      %7375 = vmatpush1.bf16.msra.mxu0 %v6329
      %7376 = vmatprep.subr.bf16.mxu0 %v6332
      %7377 = vmatpush1.bf16.msra.mxu0 %v6331
      %7378 = vmatprep.subr.bf16.mxu0 %v6334
      %7379 = vmatpush1.bf16.msra.mxu0 %v6333
      %7380 = vmatprep.subr.bf16.mxu0 %v6336
      %7381 = vmatpush1.bf16.msra.mxu0 %v6335
      %7382 = vmatprep.subr.bf16.mxu0 %v6338
      %7383 = vmatpush1.bf16.msra.mxu0 %v6337
      %7384 = vmatprep.mubr.bf16.mxu0 %v7333
      %7385 = vmatmul.mubr.bf16.gmra.mrb[0].mxu0 %v7332
      %v7386 = vpop.f32.mrb[0].mxu0
      %v7387 = vadd.f32 0.0, %v7386
      %v7388 = vpop.f32.mrb[0].mxu0
      %v7389 = vadd.f32 0.0, %v7388
      %v7390 = vpop.f32.mrb[0].mxu0
      %v7391 = vadd.f32 0.0, %v7390
      %v7392 = vpop.f32.mrb[0].mxu0
      %v7393 = vadd.f32 0.0, %v7392
      %7394 = vmatprep.mubr.bf16.mxu0 %v7337
      %7395 = vmatmul.mubr.bf16.gmra.mrb[0].mxu0 %v7336
      %v7396 = vpop.f32.mrb[0].mxu0
      %v7397 = vadd.f32 0.0, %v7396
      %v7398 = vpop.f32.mrb[0].mxu0
      %v7399 = vadd.f32 0.0, %v7398
      %v7400 = vpop.f32.mrb[0].mxu0
      %v7401 = vadd.f32 0.0, %v7400
      %v7402 = vpop.f32.mrb[0].mxu0
      %v7403 = vadd.f32 0.0, %v7402
      %7404 = vdwg.mxu0
      %7405 = vmatprep.subr.bf16.mxu0 %v6340
      %7406 = vmatpush1.bf16.msra.mxu0 %v6339
      %7407 = vmatprep.subr.bf16.mxu0 %v6342
      %7408 = vmatpush1.bf16.msra.mxu0 %v6341
      %7409 = vmatprep.subr.bf16.mxu0 %v6344
      %7410 = vmatpush1.bf16.msra.mxu0 %v6343
      %7411 = vmatprep.subr.bf16.mxu0 %v6346
      %7412 = vmatpush1.bf16.msra.mxu0 %v6345
      %7413 = vmatprep.subr.bf16.mxu0 %v6348
      %7414 = vmatpush1.bf16.msra.mxu0 %v6347
      %7415 = vmatprep.subr.bf16.mxu0 %v6350
      %7416 = vmatpush1.bf16.msra.mxu0 %v6349
      %7417 = vmatprep.subr.bf16.mxu0 %v6352
      %7418 = vmatpush1.bf16.msra.mxu0 %v6351
      %7419 = vmatprep.subr.bf16.mxu0 %v6354
      %7420 = vmatpush1.bf16.msra.mxu0 %v6353
      %7421 = vmatprep.subr.bf16.mxu0 %v6356
      %7422 = vmatpush1.bf16.msra.mxu0 %v6355
      %7423 = vmatprep.subr.bf16.mxu0 0
      %7424 = vmatpush1.bf16.msra.mxu0 0
      %7425 = vmatprep.subr.bf16.mxu0 0
      %7426 = vmatpush1.bf16.msra.mxu0 0
      %7427 = vmatprep.subr.bf16.mxu0 0
      %7428 = vmatpush1.bf16.msra.mxu0 0
      %7429 = vmatprep.subr.bf16.mxu0 0
      %7430 = vmatpush1.bf16.msra.mxu0 0
      %7431 = vmatprep.subr.bf16.mxu0 0
      %7432 = vmatpush1.bf16.msra.mxu0 0
      %7433 = vmatprep.subr.bf16.mxu0 0
      %7434 = vmatpush1.bf16.msra.mxu0 0
      %7435 = vmatprep.subr.bf16.mxu0 0
      %7436 = vmatpush1.bf16.msra.mxu0 0
      %7437 = vmatprep.mubr.bf16.mxu0 %v7347
      %7438 = vmatmul.mubr.bf16.gmra.mrb[0].mxu0 %v7334
      %v7439 = vpop.f32.mrb[0].mxu0
      %v7440 = vadd.f32 %v7387, %v7439
      %v7441 = vpop.f32.mrb[0].mxu0
      %v7442 = vadd.f32 %v7389, %v7441
      %v7443 = vpop.f32.mrb[0].mxu0
      %v7444 = vadd.f32 %v7391, %v7443
      %v7445 = vpop.f32.mrb[0].mxu0
      %v7446 = vadd.f32 %v7393, %v7445
      %7447 = vmatprep.mubr.bf16.mxu0 %v7350
      %7448 = vmatmul.mubr.bf16.gmra.mrb[0].mxu0 %v7338
      %v7449 = vpop.f32.mrb[0].mxu0
      %v7450 = vadd.f32 %v7397, %v7449
      %v7451 = vpop.f32.mrb[0].mxu0
      %v7452 = vadd.f32 %v7399, %v7451
      %v7453 = vpop.f32.mrb[0].mxu0
      %v7454 = vadd.f32 %v7401, %v7453
      %v7455 = vpop.f32.mrb[0].mxu0
      %v7456 = vadd.f32 %v7403, %v7455
      %7457 = vdwg.mxu0
      %v7466 = vunpack.c.l.b16 %v5999
      %v7467 = vunpack.c.h.b16 %v5999
      %v7468 = vunpack.c.l.b16 %v6000
      %v7469 = vunpack.c.h.b16 %v6000
      %v7470 = vunpack.c.l.b16 %v6001
      %v7471 = vunpack.c.h.b16 %v6001
      %v7472 = vunpack.c.l.b16 %v6002
      %v7473 = vunpack.c.h.b16 %v6002
      %v7474 = vunpack.c.l.b16 %v6003
      %v7475 = vunpack.c.h.b16 %v6003
      %v7476 = vunpack.c.l.b16 %v6004
      %v7477 = vunpack.c.h.b16 %v6004
      %v7478 = vunpack.c.l.b16 %v6005
      %v7479 = vunpack.c.h.b16 %v6005
      %v7480 = vunpack.c.l.b16 %v6006
      %v7481 = vunpack.c.h.b16 %v6006
      %v7482 = vpack.c.b16 %v7470, %v7466
      %v7483 = vpack.c.b16 %v7471, %v7467
      %v7484 = vpack.c.b16 %v7472, %v7468
      %v7485 = vpack.c.b16 %v7473, %v7469
      %v7486 = vpack.c.b16 %v7478, %v7474
      %v7487 = vpack.c.b16 %v7479, %v7475
      %v7488 = vpack.c.b16 %v7480, %v7476
      %v7489 = vpack.c.b16 %v7481, %v7477
      %v7497 = vsel %vm6445, %v7485, 0
      %v7500 = vsel %vm6445, %v7489, 0
      %7502 = vmatprep.subr.bf16.mxu0 %v6358
      %7503 = vmatpush1.bf16.msra.mxu0 %v6357
      %7504 = vmatprep.subr.bf16.mxu0 %v6360
      %7505 = vmatpush1.bf16.msra.mxu0 %v6359
      %7506 = vmatprep.subr.bf16.mxu0 %v6362
      %7507 = vmatpush1.bf16.msra.mxu0 %v6361
      %7508 = vmatprep.subr.bf16.mxu0 %v6364
      %7509 = vmatpush1.bf16.msra.mxu0 %v6363
      %7510 = vmatprep.subr.bf16.mxu0 %v6366
      %7511 = vmatpush1.bf16.msra.mxu0 %v6365
      %7512 = vmatprep.subr.bf16.mxu0 %v6368
      %7513 = vmatpush1.bf16.msra.mxu0 %v6367
      %7514 = vmatprep.subr.bf16.mxu0 %v6370
      %7515 = vmatpush1.bf16.msra.mxu0 %v6369
      %7516 = vmatprep.subr.bf16.mxu0 %v6372
      %7517 = vmatpush1.bf16.msra.mxu0 %v6371
      %7518 = vmatprep.subr.bf16.mxu0 %v6374
      %7519 = vmatpush1.bf16.msra.mxu0 %v6373
      %7520 = vmatprep.subr.bf16.mxu0 %v6376
      %7521 = vmatpush1.bf16.msra.mxu0 %v6375
      %7522 = vmatprep.subr.bf16.mxu0 %v6378
      %7523 = vmatpush1.bf16.msra.mxu0 %v6377
      %7524 = vmatprep.subr.bf16.mxu0 %v6380
      %7525 = vmatpush1.bf16.msra.mxu0 %v6379
      %7526 = vmatprep.subr.bf16.mxu0 %v6382
      %7527 = vmatpush1.bf16.msra.mxu0 %v6381
      %7528 = vmatprep.subr.bf16.mxu0 %v6384
      %7529 = vmatpush1.bf16.msra.mxu0 %v6383
      %7530 = vmatprep.subr.bf16.mxu0 %v6386
      %7531 = vmatpush1.bf16.msra.mxu0 %v6385
      %7532 = vmatprep.subr.bf16.mxu0 %v6388
      %7533 = vmatpush1.bf16.msra.mxu0 %v6387
      %7534 = vmatprep.mubr.bf16.mxu0 %v7483
      %7535 = vmatmul.mubr.bf16.gmra.mrb[0].mxu0 %v7482
      %v7536 = vpop.f32.mrb[0].mxu0
      %v7537 = vadd.f32 0.0, %v7536
      %v7538 = vpop.f32.mrb[0].mxu0
      %v7539 = vadd.f32 0.0, %v7538
      %v7540 = vpop.f32.mrb[0].mxu0
      %v7541 = vadd.f32 0.0, %v7540
      %v7542 = vpop.f32.mrb[0].mxu0
      %v7543 = vadd.f32 0.0, %v7542
      %7544 = vmatprep.mubr.bf16.mxu0 %v7487
      %7545 = vmatmul.mubr.bf16.gmra.mrb[0].mxu0 %v7486
      %v7546 = vpop.f32.mrb[0].mxu0
      %v7547 = vadd.f32 0.0, %v7546
      %v7548 = vpop.f32.mrb[0].mxu0
      %v7549 = vadd.f32 0.0, %v7548
      %v7550 = vpop.f32.mrb[0].mxu0
      %v7551 = vadd.f32 0.0, %v7550
      %v7552 = vpop.f32.mrb[0].mxu0
      %v7553 = vadd.f32 0.0, %v7552
      %7554 = vdwg.mxu0
      %7555 = vmatprep.subr.bf16.mxu0 %v6390
      %7556 = vmatpush1.bf16.msra.mxu0 %v6389
      %7557 = vmatprep.subr.bf16.mxu0 %v6392
      %7558 = vmatpush1.bf16.msra.mxu0 %v6391
      %7559 = vmatprep.subr.bf16.mxu0 %v6394
      %7560 = vmatpush1.bf16.msra.mxu0 %v6393
      %7561 = vmatprep.subr.bf16.mxu0 %v6396
      %7562 = vmatpush1.bf16.msra.mxu0 %v6395
      %7563 = vmatprep.subr.bf16.mxu0 %v6398
      %7564 = vmatpush1.bf16.msra.mxu0 %v6397
      %7565 = vmatprep.subr.bf16.mxu0 %v6400
      %7566 = vmatpush1.bf16.msra.mxu0 %v6399
      %7567 = vmatprep.subr.bf16.mxu0 %v6402
      %7568 = vmatpush1.bf16.msra.mxu0 %v6401
      %7569 = vmatprep.subr.bf16.mxu0 %v6404
      %7570 = vmatpush1.bf16.msra.mxu0 %v6403
      %7571 = vmatprep.subr.bf16.mxu0 %v6406
      %7572 = vmatpush1.bf16.msra.mxu0 %v6405
      %7573 = vmatprep.subr.bf16.mxu0 0
      %7574 = vmatpush1.bf16.msra.mxu0 0
      %7575 = vmatprep.subr.bf16.mxu0 0
      %7576 = vmatpush1.bf16.msra.mxu0 0
      %7577 = vmatprep.subr.bf16.mxu0 0
      %7578 = vmatpush1.bf16.msra.mxu0 0
      %7579 = vmatprep.subr.bf16.mxu0 0
      %7580 = vmatpush1.bf16.msra.mxu0 0
      %7581 = vmatprep.subr.bf16.mxu0 0
      %7582 = vmatpush1.bf16.msra.mxu0 0
      %7583 = vmatprep.subr.bf16.mxu0 0
      %7584 = vmatpush1.bf16.msra.mxu0 0
      %7585 = vmatprep.subr.bf16.mxu0 0
      %7586 = vmatpush1.bf16.msra.mxu0 0
      %7587 = vmatprep.mubr.bf16.mxu0 %v7497
      %7588 = vmatmul.mubr.bf16.gmra.mrb[0].mxu0 %v7484
      %v7589 = vpop.f32.mrb[0].mxu0
      %v7590 = vadd.f32 %v7537, %v7589
      %v7591 = vpop.f32.mrb[0].mxu0
      %v7592 = vadd.f32 %v7539, %v7591
      %v7593 = vpop.f32.mrb[0].mxu0
      %v7594 = vadd.f32 %v7541, %v7593
      %v7595 = vpop.f32.mrb[0].mxu0
      %v7596 = vadd.f32 %v7543, %v7595
      %7597 = vmatprep.mubr.bf16.mxu0 %v7500
      %7598 = vmatmul.mubr.bf16.gmra.mrb[0].mxu0 %v7488
      %v7599 = vpop.f32.mrb[0].mxu0
      %v7600 = vadd.f32 %v7547, %v7599
      %v7601 = vpop.f32.mrb[0].mxu0
      %v7602 = vadd.f32 %v7549, %v7601
      %v7603 = vpop.f32.mrb[0].mxu0
      %v7604 = vadd.f32 %v7551, %v7603
      %v7605 = vpop.f32.mrb[0].mxu0
      %v7606 = vadd.f32 %v7553, %v7605
      %7607 = vdwg.mxu0
      %7608 = vst [vmem:[#allocation7] sm:$0xff] %v6540
      %7609 = vst [vmem:[#allocation7 + $0x8] sm:$0xff] %v6542
      %7610 = vst [vmem:[#allocation7 + $0x10] sm:$0xff] %v6544
      %7611 = vst [vmem:[#allocation7 + $0x18] sm:$0xff] %v6546
      %7612 = vst [vmem:[#allocation7 + $0x20] sm:$0xff] %v6550
      %7613 = vst [vmem:[#allocation7 + $0x28] sm:$0xff] %v6552
      %7614 = vst [vmem:[#allocation7 + $0x30] sm:$0xff] %v6554
      %7615 = vst [vmem:[#allocation7 + $0x38] sm:$0xff] %v6556
      %7616 = vst [vmem:[#allocation7 + $0x40] sm:$0xff] %v6690
      %7617 = vst [vmem:[#allocation7 + $0x48] sm:$0xff] %v6692
      %7618 = vst [vmem:[#allocation7 + $0x50] sm:$0xff] %v6694
      %7619 = vst [vmem:[#allocation7 + $0x58] sm:$0xff] %v6696
      %7620 = vst [vmem:[#allocation7 + $0x60] sm:$0xff] %v6700
      %7621 = vst [vmem:[#allocation7 + $0x68] sm:$0xff] %v6702
      %7622 = vst [vmem:[#allocation7 + $0x70] sm:$0xff] %v6704
      %7623 = vst [vmem:[#allocation7 + $0x78] sm:$0xff] %v6706
      %7624 = vst [vmem:[#allocation7 + $0x80] sm:$0xff] %v6840
      %7625 = vst [vmem:[#allocation7 + $0x88] sm:$0xff] %v6842
      %7626 = vst [vmem:[#allocation7 + $0x90] sm:$0xff] %v6844
      %7627 = vst [vmem:[#allocation7 + $0x98] sm:$0xff] %v6846
      %7628 = vst [vmem:[#allocation7 + $0xa0] sm:$0xff] %v6850
      %7629 = vst [vmem:[#allocation7 + $0xa8] sm:$0xff] %v6852
      %7630 = vst [vmem:[#allocation7 + $0xb0] sm:$0xff] %v6854
      %7631 = vst [vmem:[#allocation7 + $0xb8] sm:$0xff] %v6856
      %7632 = vst [vmem:[#allocation7 + $0xc0] sm:$0xff] %v6990
      %7633 = vst [vmem:[#allocation7 + $0xc8] sm:$0xff] %v6992
      %7634 = vst [vmem:[#allocation7 + $0xd0] sm:$0xff] %v6994
      %7635 = vst [vmem:[#allocation7 + $0xd8] sm:$0xff] %v6996
      %7636 = vst [vmem:[#allocation7 + $0xe0] sm:$0xff] %v7000
      %7637 = vst [vmem:[#allocation7 + $0xe8] sm:$0xff] %v7002
      %7638 = vst [vmem:[#allocation7 + $0xf0] sm:$0xff] %v7004
      %7639 = vst [vmem:[#allocation7 + $0xf8] sm:$0xff] %v7006
      %7640 = vst [vmem:[#allocation7 + $0x100] sm:$0xff] %v7140
      %7641 = vst [vmem:[#allocation7 + $0x108] sm:$0xff] %v7142
      %7642 = vst [vmem:[#allocation7 + $0x110] sm:$0xff] %v7144
      %7643 = vst [vmem:[#allocation7 + $0x118] sm:$0xff] %v7146
      %7644 = vst [vmem:[#allocation7 + $0x120] sm:$0xff] %v7150
      %7645 = vst [vmem:[#allocation7 + $0x128] sm:$0xff] %v7152
      %7646 = vst [vmem:[#allocation7 + $0x130] sm:$0xff] %v7154
      %7647 = vst [vmem:[#allocation7 + $0x138] sm:$0xff] %v7156
      %7648 = vst [vmem:[#allocation7 + $0x140] sm:$0xff] %v7290
      %7649 = vst [vmem:[#allocation7 + $0x148] sm:$0xff] %v7292
      %7650 = vst [vmem:[#allocation7 + $0x150] sm:$0xff] %v7294
      %7651 = vst [vmem:[#allocation7 + $0x158] sm:$0xff] %v7296
      %7652 = vst [vmem:[#allocation7 + $0x160] sm:$0xff] %v7300
      %7653 = vst [vmem:[#allocation7 + $0x168] sm:$0xff] %v7302
      %7654 = vst [vmem:[#allocation7 + $0x170] sm:$0xff] %v7304
      %7655 = vst [vmem:[#allocation7 + $0x178] sm:$0xff] %v7306
      %7656 = vst [vmem:[#allocation7 + $0x180] sm:$0xff] %v7440
      %7657 = vst [vmem:[#allocation7 + $0x188] sm:$0xff] %v7442
      %7658 = vst [vmem:[#allocation7 + $0x190] sm:$0xff] %v7444
      %7659 = vst [vmem:[#allocation7 + $0x198] sm:$0xff] %v7446
      %7660 = vst [vmem:[#allocation7 + $0x1a0] sm:$0xff] %v7450
      %7661 = vst [vmem:[#allocation7 + $0x1a8] sm:$0xff] %v7452
      %7662 = vst [vmem:[#allocation7 + $0x1b0] sm:$0xff] %v7454
      %7663 = vst [vmem:[#allocation7 + $0x1b8] sm:$0xff] %v7456
      %7664 = vst [vmem:[#allocation7 + $0x1c0] sm:$0xff] %v7590
      %7665 = vst [vmem:[#allocation7 + $0x1c8] sm:$0xff] %v7592
      %7666 = vst [vmem:[#allocation7 + $0x1d0] sm:$0xff] %v7594
      %7667 = vst [vmem:[#allocation7 + $0x1d8] sm:$0xff] %v7596
      %7668 = vst [vmem:[#allocation7 + $0x1e0] sm:$0xff] %v7600
      %7669 = vst [vmem:[#allocation7 + $0x1e8] sm:$0xff] %v7602
      %7670 = vst [vmem:[#allocation7 + $0x1f0] sm:$0xff] %v7604
      %7671 = vst [vmem:[#allocation7 + $0x1f8] sm:$0xff] %v7606
      loop: start=0, step=1, limit=8
      $region63: #{tpu_custom_call.1} parent=47 // loop_pre_header
        _
      $region64: #{tpu_custom_call.1} parent=47 // loop_header
        %s7673 = sphi 0, %s7677
        %p7674 = scmp.ge.s32.totalorder %s7673, 8
      $region65: #{tpu_custom_call.1} parent=47 // loop_header_branch
        %7676 = sbr.rel (%p7674) target = $region69
      $region66: #{tpu_custom_call.1} parent=47 // loop_body
        %s7678 = smul.u32 %s7673, 8
        %s7679 = smul.addr %s7678, 8
        %s7680 = scalar_lea.vmem [#allocation7], %s7679
        %v7681 = vld [vmem:[%s7680] sm:$0xff]
        %v7682 = vld [vmem:[%s7680 + $0x8] sm:$0xff]
        %v7683 = vld [vmem:[%s7680 + $0x10] sm:$0xff]
        %v7684 = vld [vmem:[%s7680 + $0x18] sm:$0xff]
        %v7685 = vld [vmem:[%s7680 + $0x20] sm:$0xff]
        %v7686 = vld [vmem:[%s7680 + $0x28] sm:$0xff]
        %v7687 = vld [vmem:[%s7680 + $0x30] sm:$0xff]
        %v7688 = vld [vmem:[%s7680 + $0x38] sm:$0xff]
        %7697 = vrot.lane.b32.xlu0 %v7681, 127
        %v7698 = vpop.permute.xlu0 %7697
        %7699 = vrot.lane.b32.xlu0 %v7682, 127
        %v7700 = vpop.permute.xlu0 %7699
        %7701 = vrot.lane.b32.xlu0 %v7683, 127
        %v7702 = vpop.permute.xlu0 %7701
        %7703 = vrot.lane.b32.xlu0 %v7684, 127
        %v7704 = vpop.permute.xlu0 %7703
        %7705 = vrot.lane.b32.xlu0 %v7685, 127
        %v7706 = vpop.permute.xlu0 %7705
        %7707 = vrot.lane.b32.xlu0 %v7686, 127
        %v7708 = vpop.permute.xlu0 %7707
        %7709 = vrot.lane.b32.xlu0 %v7687, 127
        %v7710 = vpop.permute.xlu0 %7709
        %7711 = vrot.lane.b32.xlu0 %v7688, 127
        %v7712 = vpop.permute.xlu0 %7711
        %vm7713 = vcmask 1039360
        %v7714 = vsel %vm7713, %v7698, %v7700
        %v7715 = vsel %vm7713, %v7702, %v7704
        %v7716 = vsel %vm7713, %v7706, %v7708
        %v7717 = vsel %vm7713, %v7710, %v7712
        %v7726 = vmax.f32 %v7681, %v7714
        %v7727 = vmax.f32 %v7682, %v7700
        %v7728 = vmax.f32 %v7683, %v7715
        %v7729 = vmax.f32 %v7684, %v7704
        %v7730 = vmax.f32 %v7685, %v7716
        %v7731 = vmax.f32 %v7686, %v7708
        %v7732 = vmax.f32 %v7687, %v7717
        %v7733 = vmax.f32 %v7688, %v7712
        %7742 = vrot.lane.b32.xlu0 %v7726, 110
        %v7743 = vpop.permute.xlu0 %7742
        %7744 = vrot.lane.b32.xlu0 %v7727, 110
        %v7745 = vpop.permute.xlu0 %7744
        %7746 = vrot.lane.b32.xlu0 %v7728, 110
        %v7747 = vpop.permute.xlu0 %7746
        %7748 = vrot.lane.b32.xlu0 %v7729, 110
        %v7749 = vpop.permute.xlu0 %7748
        %7750 = vrot.lane.b32.xlu0 %v7730, 110
        %v7751 = vpop.permute.xlu0 %7750
        %7752 = vrot.lane.b32.xlu0 %v7731, 110
        %v7753 = vpop.permute.xlu0 %7752
        %7754 = vrot.lane.b32.xlu0 %v7732, 110
        %v7755 = vpop.permute.xlu0 %7754
        %7756 = vrot.lane.b32.xlu0 %v7733, 110
        %v7757 = vpop.permute.xlu0 %7756
        %vm7758 = vcmask 900096
        %v7759 = vsel %vm7758, %v7743, %v7745
        %v7760 = vsel %vm7758, %v7747, %v7749
        %v7761 = vsel %vm7758, %v7751, %v7753
        %v7762 = vsel %vm7758, %v7755, %v7757
        %v7771 = vmax.f32 %v7726, %v7759
        %v7772 = vmax.f32 %v7727, %v7745
        %v7773 = vmax.f32 %v7728, %v7760
        %v7774 = vmax.f32 %v7729, %v7749
        %v7775 = vmax.f32 %v7730, %v7761
        %v7776 = vmax.f32 %v7731, %v7753
        %v7777 = vmax.f32 %v7732, %v7762
        %v7778 = vmax.f32 %v7733, %v7757
        %v7779 = vld [vmem:[%s4] sm:$0xff]
        %v7780 = vld [vmem:[%s4 + $0x8] sm:$0xff]
        %v7781 = vld [vmem:[%s4 + $0x10] sm:$0xff]
        %v7782 = vld [vmem:[%s4 + $0x18] sm:$0xff]
        %7784 = vset.pattern.permute.xlu0 0
        %7785 = vperm.xlu0 %7784, %v7779
        %v7786 = vpop.permute.xlu0 %7785
        %7789 = vset.pattern.permute.xlu0 0
        %7790 = vperm.xlu0 %7789, %v7780
        %v7791 = vpop.permute.xlu0 %7790
        %7794 = vset.pattern.permute.xlu0 0
        %7795 = vperm.xlu0 %7794, %v7781
        %v7796 = vpop.permute.xlu0 %7795
        %7799 = vset.pattern.permute.xlu0 0
        %7800 = vperm.xlu0 %7799, %v7782
        %v7801 = vpop.permute.xlu0 %7800
        %v7803 = vadd.f32 %v7771, %v7786
        %v7804 = vadd.f32 %v7772, %v7786
        %v7805 = vadd.f32 %v7773, %v7791
        %v7806 = vadd.f32 %v7774, %v7791
        %v7807 = vadd.f32 %v7775, %v7796
        %v7808 = vadd.f32 %v7776, %v7796
        %v7809 = vadd.f32 %v7777, %v7801
        %v7810 = vadd.f32 %v7778, %v7801
        %v7811 = vmax.f32 %v7803, 0.0
        %v7812 = vmax.f32 %v7804, 0.0
        %v7813 = vmax.f32 %v7805, 0.0
        %v7814 = vmax.f32 %v7806, 0.0
        %v7815 = vmax.f32 %v7807, 0.0
        %v7816 = vmax.f32 %v7808, 0.0
        %v7817 = vmax.f32 %v7809, 0.0
        %v7818 = vmax.f32 %v7810, 0.0
        %v7819 = vpack.c.bf16 %v7813, %v7811
        %v7820 = vpack.c.bf16 %v7814, %v7812
        %v7821 = vpack.c.bf16 %v7817, %v7815
        %v7822 = vpack.c.bf16 %v7818, %v7816
        %s7823 = smul.u32 %s7673, 32
        %s7824 = sshra.s32 %s7823, 4
        %s7825 = sand.u32 %s7823, 15
        %s7826 = smul.u32 %s7824, 2
        %s7827 = smul.addr %s7826, 8
        %s7828 = scalar_lea.vmem [#allocation8], %s7827
        %7829 = vst [vmem:[%s7828] sm:$0xff] %v7819
        %vm7830 = vcmask 850944
        %7831 = vst.msk [vmem:[%s7828 + $0x8] sm:$0xff] %vm7830, %v7820
        %7832 = vst [vmem:[%s7828 + $0x10] sm:$0xff] %v7821
        %7833 = vst.msk [vmem:[%s7828 + $0x18] sm:$0xff] %vm7830, %v7822
      $region67: #{tpu_custom_call.1} parent=47 // loop_footer
        %s7677 = sadd.s32 1, %s7673
      $region68: #{tpu_custom_call.1} parent=47 // loop_footer_branch
        %7672 = sbr.rel target = $region64
      $region69: #{tpu_custom_call.1} parent=47 // loop_exit
        _
      %v7834 = vld [vmem:[#allocation8] sm:$0xff]
      %v7835 = vld [vmem:[#allocation8 + $0x8] sm:$0xff]
      %v7836 = vld [vmem:[#allocation8 + $0x10] sm:$0xff]
      %v7837 = vld [vmem:[#allocation8 + $0x18] sm:$0xff]
      %v7838 = vld [vmem:[#allocation8 + $0x20] sm:$0xff]
      %v7839 = vld [vmem:[#allocation8 + $0x28] sm:$0xff]
      %v7840 = vld [vmem:[#allocation8 + $0x30] sm:$0xff]
      %v7841 = vld [vmem:[#allocation8 + $0x38] sm:$0xff]
      %v7842 = vld [vmem:[#allocation8 + $0x40] sm:$0xff]
      %v7843 = vld [vmem:[#allocation8 + $0x48] sm:$0xff]
      %v7844 = vld [vmem:[#allocation8 + $0x50] sm:$0xff]
      %v7845 = vld [vmem:[#allocation8 + $0x58] sm:$0xff]
      %v7846 = vld [vmem:[#allocation8 + $0x60] sm:$0xff]
      %v7847 = vld [vmem:[#allocation8 + $0x68] sm:$0xff]
      %v7848 = vld [vmem:[#allocation8 + $0x70] sm:$0xff]
      %v7849 = vld [vmem:[#allocation8 + $0x78] sm:$0xff]
      %v7850 = vld [vmem:[#allocation8 + $0x80] sm:$0xff]
      %v7851 = vld [vmem:[#allocation8 + $0x88] sm:$0xff]
      %v7852 = vld [vmem:[#allocation8 + $0x90] sm:$0xff]
      %v7853 = vld [vmem:[#allocation8 + $0x98] sm:$0xff]
      %v7854 = vld [vmem:[#allocation8 + $0xa0] sm:$0xff]
      %v7855 = vld [vmem:[#allocation8 + $0xa8] sm:$0xff]
      %v7856 = vld [vmem:[#allocation8 + $0xb0] sm:$0xff]
      %v7857 = vld [vmem:[#allocation8 + $0xb8] sm:$0xff]
      %v7858 = vld [vmem:[#allocation8 + $0xc0] sm:$0xff]
      %v7859 = vld [vmem:[#allocation8 + $0xc8] sm:$0xff]
      %v7860 = vld [vmem:[#allocation8 + $0xd0] sm:$0xff]
      %v7861 = vld [vmem:[#allocation8 + $0xd8] sm:$0xff]
      %v7862 = vld [vmem:[#allocation8 + $0xe0] sm:$0xff]
      %v7863 = vld [vmem:[#allocation8 + $0xe8] sm:$0xff]
      %v7864 = vld [vmem:[#allocation8 + $0xf0] sm:$0xff]
      %v7865 = vld [vmem:[#allocation8 + $0xf8] sm:$0xff]
      %v7866 = vld [vmem:[%s6] sm:$0xf]
      %v7867 = vld [vmem:[%s6 + $0x4] sm:$0xf]
      %v7868 = vld [vmem:[%s6 + $0x8] sm:$0xf]
      %v7869 = vld [vmem:[%s6 + $0xc] sm:$0xf]
      %v7870 = vld [vmem:[%s6 + $0x10] sm:$0xf]
      %v7871 = vld [vmem:[%s6 + $0x14] sm:$0xf]
      %v7872 = vld [vmem:[%s6 + $0x18] sm:$0xf]
      %v7873 = vld [vmem:[%s6 + $0x1c] sm:$0xf]
      %v7874 = vld [vmem:[%s6 + $0x20] sm:$0xf]
      %v7875 = vld [vmem:[%s6 + $0x24] sm:$0xf]
      %v7876 = vld [vmem:[%s6 + $0x28] sm:$0xf]
      %v7877 = vld [vmem:[%s6 + $0x2c] sm:$0xf]
      %v7878 = vld [vmem:[%s6 + $0x30] sm:$0xf]
      %v7879 = vld [vmem:[%s6 + $0x34] sm:$0xf]
      %v7880 = vld [vmem:[%s6 + $0x38] sm:$0xf]
      %v7881 = vld [vmem:[%s6 + $0x3c] sm:$0xf]
      %v7882 = vld [vmem:[%s6 + $0x40] sm:$0xf]
      %v7883 = vld [vmem:[%s6 + $0x44] sm:$0xf]
      %v7884 = vld [vmem:[%s6 + $0x48] sm:$0xf]
      %v7885 = vld [vmem:[%s6 + $0x4c] sm:$0xf]
      %v7886 = vld [vmem:[%s6 + $0x50] sm:$0xf]
      %v7887 = vld [vmem:[%s6 + $0x54] sm:$0xf]
      %v7888 = vld [vmem:[%s6 + $0x58] sm:$0xf]
      %v7889 = vld [vmem:[%s6 + $0x5c] sm:$0xf]
      %v7890 = vld [vmem:[%s6 + $0x60] sm:$0xf]
      %v7891 = vld [vmem:[%s6 + $0x64] sm:$0xf]
      %v7892 = vld [vmem:[%s6 + $0x68] sm:$0xf]
      %v7893 = vld [vmem:[%s6 + $0x6c] sm:$0xf]
      %v7894 = vld [vmem:[%s6 + $0x70] sm:$0xf]
      %v7924 = vunpack.c.l.b16 %v7866
      %v7925 = vunpack.c.l.b16 %v7867
      %v7926 = vunpack.c.l.b16 %v7868
      %v7927 = vunpack.c.l.b16 %v7869
      %v7928 = vunpack.c.l.b16 %v7870
      %v7929 = vunpack.c.l.b16 %v7871
      %v7930 = vunpack.c.l.b16 %v7872
      %v7931 = vunpack.c.l.b16 %v7873
      %v7932 = vunpack.c.l.b16 %v7874
      %v7933 = vunpack.c.l.b16 %v7875
      %v7934 = vunpack.c.l.b16 %v7876
      %v7935 = vunpack.c.l.b16 %v7877
      %v7936 = vunpack.c.l.b16 %v7878
      %v7937 = vunpack.c.l.b16 %v7879
      %v7938 = vunpack.c.l.b16 %v7880
      %v7939 = vunpack.c.l.b16 %v7881
      %v7940 = vunpack.c.l.b16 %v7882
      %v7941 = vunpack.c.l.b16 %v7883
      %v7942 = vunpack.c.l.b16 %v7884
      %v7943 = vunpack.c.l.b16 %v7885
      %v7944 = vunpack.c.l.b16 %v7886
      %v7945 = vunpack.c.l.b16 %v7887
      %v7946 = vunpack.c.l.b16 %v7888
      %v7947 = vunpack.c.l.b16 %v7889
      %v7948 = vunpack.c.l.b16 %v7890
      %v7949 = vunpack.c.l.b16 %v7891
      %v7950 = vunpack.c.l.b16 %v7892
      %v7951 = vunpack.c.l.b16 %v7893
      %v7952 = vunpack.c.l.b16 %v7894
      %v7953 = vpack.c.b16 %v7925, %v7924
      %v7954 = vpack.c.b16 %v7927, %v7926
      %v7955 = vpack.c.b16 %v7929, %v7928
      %v7956 = vpack.c.b16 %v7931, %v7930
      %v7957 = vpack.c.b16 %v7933, %v7932
      %v7958 = vpack.c.b16 %v7935, %v7934
      %v7959 = vpack.c.b16 %v7937, %v7936
      %v7960 = vpack.c.b16 %v7939, %v7938
      %v7961 = vpack.c.b16 %v7941, %v7940
      %v7962 = vpack.c.b16 %v7943, %v7942
      %v7963 = vpack.c.b16 %v7945, %v7944
      %v7964 = vpack.c.b16 %v7947, %v7946
      %v7965 = vpack.c.b16 %v7949, %v7948
      %v7966 = vpack.c.b16 %v7951, %v7950
      %v7967 = vpack.c.b16 %v7952, %v7952
      %vm7982 = vcmask 850944
      %v7984 = vsel %vm7982, %v7835, 0
      %v7987 = vsel %vm7982, %v7837, 0
      %v7990 = vsel %vm7982, %v7839, 0
      %v7993 = vsel %vm7982, %v7841, 0
      %v7996 = vsel %vm7982, %v7843, 0
      %v7999 = vsel %vm7982, %v7845, 0
      %v8002 = vsel %vm7982, %v7847, 0
      %v8005 = vsel %vm7982, %v7849, 0
      %v8008 = vsel %vm7982, %v7851, 0
      %v8011 = vsel %vm7982, %v7853, 0
      %v8014 = vsel %vm7982, %v7855, 0
      %v8017 = vsel %vm7982, %v7857, 0
      %v8020 = vsel %vm7982, %v7859, 0
      %v8023 = vsel %vm7982, %v7861, 0
      %v8026 = vsel %vm7982, %v7863, 0
      %v8029 = vsel %vm7982, %v7865, 0
      %v8032 = vsel %vm323, %v7967, 0
      %8034 = vmatprep.subr.bf16.mxu0 0
      %8035 = vmatpush1.bf16.msra.mxu0 %v7953
      %8036 = vmatprep.subr.bf16.mxu0 0
      %8037 = vmatpush1.bf16.msra.mxu0 %v7954
      %8038 = vmatprep.subr.bf16.mxu0 0
      %8039 = vmatpush1.bf16.msra.mxu0 %v7955
      %8040 = vmatprep.subr.bf16.mxu0 0
      %8041 = vmatpush1.bf16.msra.mxu0 %v7956
      %8042 = vmatprep.subr.bf16.mxu0 0
      %8043 = vmatpush1.bf16.msra.mxu0 %v7957
      %8044 = vmatprep.subr.bf16.mxu0 0
      %8045 = vmatpush1.bf16.msra.mxu0 %v7958
      %8046 = vmatprep.subr.bf16.mxu0 0
      %8047 = vmatpush1.bf16.msra.mxu0 %v7959
      %8048 = vmatprep.subr.bf16.mxu0 0
      %8049 = vmatpush1.bf16.msra.mxu0 %v7960
      %8050 = vmatprep.subr.bf16.mxu0 0
      %8051 = vmatpush1.bf16.msra.mxu0 %v7961
      %8052 = vmatprep.subr.bf16.mxu0 0
      %8053 = vmatpush1.bf16.msra.mxu0 %v7962
      %8054 = vmatprep.subr.bf16.mxu0 0
      %8055 = vmatpush1.bf16.msra.mxu0 %v7963
      %8056 = vmatprep.subr.bf16.mxu0 0
      %8057 = vmatpush1.bf16.msra.mxu0 %v7964
      %8058 = vmatprep.subr.bf16.mxu0 0
      %8059 = vmatpush1.bf16.msra.mxu0 %v7965
      %8060 = vmatprep.subr.bf16.mxu0 0
      %8061 = vmatpush1.bf16.msra.mxu0 %v7966
      %8062 = vmatprep.subr.bf16.mxu0 0
      %8063 = vmatpush1.bf16.msra.mxu0 %v8032
      %8064 = vmatprep.subr.bf16.mxu0 0
      %8065 = vmatpush1.bf16.msra.mxu0 0
      %8066 = vmatprep.mubr.bf16.mxu0 %v7984
      %8067 = vmatmul.mubr.bf16.gmra.mrb[0].mxu0 %v7834
      %v8068 = vpop.f32.mrb[0].mxu0
      %v8069 = vadd.f32 0.0, %v8068
      %v8070 = vpop.f32.mrb[0].mxu0
      %v8071 = vpop.f32.mrb[0].mxu0
      %v8072 = vadd.f32 0.0, %v8071
      %v8073 = vpop.f32.mrb[0].mxu0
      %8074 = vmatprep.mubr.bf16.mxu0 %v7987
      %8075 = vmatmul.mubr.bf16.gmra.mrb[0].mxu0 %v7836
      %v8076 = vpop.f32.mrb[0].mxu0
      %v8077 = vadd.f32 0.0, %v8076
      %v8078 = vpop.f32.mrb[0].mxu0
      %v8079 = vpop.f32.mrb[0].mxu0
      %v8080 = vadd.f32 0.0, %v8079
      %v8081 = vpop.f32.mrb[0].mxu0
      %8082 = vmatprep.mubr.bf16.mxu0 %v7990
      %8083 = vmatmul.mubr.bf16.gmra.mrb[0].mxu0 %v7838
      %v8084 = vpop.f32.mrb[0].mxu0
      %v8085 = vadd.f32 0.0, %v8084
      %v8086 = vpop.f32.mrb[0].mxu0
      %v8087 = vpop.f32.mrb[0].mxu0
      %v8088 = vadd.f32 0.0, %v8087
      %v8089 = vpop.f32.mrb[0].mxu0
      %8090 = vmatprep.mubr.bf16.mxu0 %v7993
      %8091 = vmatmul.mubr.bf16.gmra.mrb[0].mxu0 %v7840
      %v8092 = vpop.f32.mrb[0].mxu0
      %v8093 = vadd.f32 0.0, %v8092
      %v8094 = vpop.f32.mrb[0].mxu0
      %v8095 = vpop.f32.mrb[0].mxu0
      %v8096 = vadd.f32 0.0, %v8095
      %v8097 = vpop.f32.mrb[0].mxu0
      %8098 = vmatprep.mubr.bf16.mxu0 %v7996
      %8099 = vmatmul.mubr.bf16.gmra.mrb[0].mxu0 %v7842
      %v8100 = vpop.f32.mrb[0].mxu0
      %v8101 = vadd.f32 0.0, %v8100
      %v8102 = vpop.f32.mrb[0].mxu0
      %v8103 = vpop.f32.mrb[0].mxu0
      %v8104 = vadd.f32 0.0, %v8103
      %v8105 = vpop.f32.mrb[0].mxu0
      %8106 = vmatprep.mubr.bf16.mxu0 %v7999
      %8107 = vmatmul.mubr.bf16.gmra.mrb[0].mxu0 %v7844
      %v8108 = vpop.f32.mrb[0].mxu0
      %v8109 = vadd.f32 0.0, %v8108
      %v8110 = vpop.f32.mrb[0].mxu0
      %v8111 = vpop.f32.mrb[0].mxu0
      %v8112 = vadd.f32 0.0, %v8111
      %v8113 = vpop.f32.mrb[0].mxu0
      %8114 = vmatprep.mubr.bf16.mxu0 %v8002
      %8115 = vmatmul.mubr.bf16.gmra.mrb[0].mxu0 %v7846
      %v8116 = vpop.f32.mrb[0].mxu0
      %v8117 = vadd.f32 0.0, %v8116
      %v8118 = vpop.f32.mrb[0].mxu0
      %v8119 = vpop.f32.mrb[0].mxu0
      %v8120 = vadd.f32 0.0, %v8119
      %v8121 = vpop.f32.mrb[0].mxu0
      %8122 = vmatprep.mubr.bf16.mxu0 %v8005
      %8123 = vmatmul.mubr.bf16.gmra.mrb[0].mxu0 %v7848
      %v8124 = vpop.f32.mrb[0].mxu0
      %v8125 = vadd.f32 0.0, %v8124
      %v8126 = vpop.f32.mrb[0].mxu0
      %v8127 = vpop.f32.mrb[0].mxu0
      %v8128 = vadd.f32 0.0, %v8127
      %v8129 = vpop.f32.mrb[0].mxu0
      %8130 = vmatprep.mubr.bf16.mxu0 %v8008
      %8131 = vmatmul.mubr.bf16.gmra.mrb[0].mxu0 %v7850
      %v8132 = vpop.f32.mrb[0].mxu0
      %v8133 = vadd.f32 0.0, %v8132
      %v8134 = vpop.f32.mrb[0].mxu0
      %v8135 = vpop.f32.mrb[0].mxu0
      %v8136 = vadd.f32 0.0, %v8135
      %v8137 = vpop.f32.mrb[0].mxu0
      %8138 = vmatprep.mubr.bf16.mxu0 %v8011
      %8139 = vmatmul.mubr.bf16.gmra.mrb[0].mxu0 %v7852
      %v8140 = vpop.f32.mrb[0].mxu0
      %v8141 = vadd.f32 0.0, %v8140
      %v8142 = vpop.f32.mrb[0].mxu0
      %v8143 = vpop.f32.mrb[0].mxu0
      %v8144 = vadd.f32 0.0, %v8143
      %v8145 = vpop.f32.mrb[0].mxu0
      %8146 = vmatprep.mubr.bf16.mxu0 %v8014
      %8147 = vmatmul.mubr.bf16.gmra.mrb[0].mxu0 %v7854
      %v8148 = vpop.f32.mrb[0].mxu0
      %v8149 = vadd.f32 0.0, %v8148
      %v8150 = vpop.f32.mrb[0].mxu0
      %v8151 = vpop.f32.mrb[0].mxu0
      %v8152 = vadd.f32 0.0, %v8151
      %v8153 = vpop.f32.mrb[0].mxu0
      %8154 = vmatprep.mubr.bf16.mxu0 %v8017
      %8155 = vmatmul.mubr.bf16.gmra.mrb[0].mxu0 %v7856
      %v8156 = vpop.f32.mrb[0].mxu0
      %v8157 = vadd.f32 0.0, %v8156
      %v8158 = vpop.f32.mrb[0].mxu0
      %v8159 = vpop.f32.mrb[0].mxu0
      %v8160 = vadd.f32 0.0, %v8159
      %v8161 = vpop.f32.mrb[0].mxu0
      %8162 = vmatprep.mubr.bf16.mxu0 %v8020
      %8163 = vmatmul.mubr.bf16.gmra.mrb[0].mxu0 %v7858
      %v8164 = vpop.f32.mrb[0].mxu0
      %v8165 = vadd.f32 0.0, %v8164
      %v8166 = vpop.f32.mrb[0].mxu0
      %v8167 = vpop.f32.mrb[0].mxu0
      %v8168 = vadd.f32 0.0, %v8167
      %v8169 = vpop.f32.mrb[0].mxu0
      %8170 = vmatprep.mubr.bf16.mxu0 %v8023
      %8171 = vmatmul.mubr.bf16.gmra.mrb[0].mxu0 %v7860
      %v8172 = vpop.f32.mrb[0].mxu0
      %v8173 = vadd.f32 0.0, %v8172
      %v8174 = vpop.f32.mrb[0].mxu0
      %v8175 = vpop.f32.mrb[0].mxu0
      %v8176 = vadd.f32 0.0, %v8175
      %v8177 = vpop.f32.mrb[0].mxu0
      %8178 = vmatprep.mubr.bf16.mxu0 %v8026
      %8179 = vmatmul.mubr.bf16.gmra.mrb[0].mxu0 %v7862
      %v8180 = vpop.f32.mrb[0].mxu0
      %v8181 = vadd.f32 0.0, %v8180
      %v8182 = vpop.f32.mrb[0].mxu0
      %v8183 = vpop.f32.mrb[0].mxu0
      %v8184 = vadd.f32 0.0, %v8183
      %v8185 = vpop.f32.mrb[0].mxu0
      %8186 = vmatprep.mubr.bf16.mxu0 %v8029
      %8187 = vmatmul.mubr.bf16.gmra.mrb[0].mxu0 %v7864
      %v8188 = vpop.f32.mrb[0].mxu0
      %v8189 = vadd.f32 0.0, %v8188
      %v8190 = vpop.f32.mrb[0].mxu0
      %v8191 = vpop.f32.mrb[0].mxu0
      %v8192 = vadd.f32 0.0, %v8191
      %v8193 = vpop.f32.mrb[0].mxu0
      %8194 = vdwg.mxu0
      %vm8195 = vcmask 400384
      %8196 = vst.msk [vmem:[%s278] sm:$0xff] %vm8195, %v8069
      %8197 = vst.msk [vmem:[%s278 + $0x8] sm:$0xff] %vm8195, %v8072
      %8198 = vst.msk [vmem:[%s278 + $0x10] sm:$0xff] %vm8195, %v8077
      %8199 = vst.msk [vmem:[%s278 + $0x18] sm:$0xff] %vm8195, %v8080
      %8200 = vst.msk [vmem:[%s278 + $0x20] sm:$0xff] %vm8195, %v8085
      %8201 = vst.msk [vmem:[%s278 + $0x28] sm:$0xff] %vm8195, %v8088
      %8202 = vst.msk [vmem:[%s278 + $0x30] sm:$0xff] %vm8195, %v8093
      %8203 = vst.msk [vmem:[%s278 + $0x38] sm:$0xff] %vm8195, %v8096
      %8204 = vst.msk [vmem:[%s278 + $0x40] sm:$0xff] %vm8195, %v8101
      %8205 = vst.msk [vmem:[%s278 + $0x48] sm:$0xff] %vm8195, %v8104
      %8206 = vst.msk [vmem:[%s278 + $0x50] sm:$0xff] %vm8195, %v8109
      %8207 = vst.msk [vmem:[%s278 + $0x58] sm:$0xff] %vm8195, %v8112
      %8208 = vst.msk [vmem:[%s278 + $0x60] sm:$0xff] %vm8195, %v8117
      %8209 = vst.msk [vmem:[%s278 + $0x68] sm:$0xff] %vm8195, %v8120
      %8210 = vst.msk [vmem:[%s278 + $0x70] sm:$0xff] %vm8195, %v8125
      %8211 = vst.msk [vmem:[%s278 + $0x78] sm:$0xff] %vm8195, %v8128
      %8212 = vst.msk [vmem:[%s278 + $0x80] sm:$0xff] %vm8195, %v8133
      %8213 = vst.msk [vmem:[%s278 + $0x88] sm:$0xff] %vm8195, %v8136
      %8214 = vst.msk [vmem:[%s278 + $0x90] sm:$0xff] %vm8195, %v8141
      %8215 = vst.msk [vmem:[%s278 + $0x98] sm:$0xff] %vm8195, %v8144
      %8216 = vst.msk [vmem:[%s278 + $0xa0] sm:$0xff] %vm8195, %v8149
      %8217 = vst.msk [vmem:[%s278 + $0xa8] sm:$0xff] %vm8195, %v8152
      %8218 = vst.msk [vmem:[%s278 + $0xb0] sm:$0xff] %vm8195, %v8157
      %8219 = vst.msk [vmem:[%s278 + $0xb8] sm:$0xff] %vm8195, %v8160
      %8220 = vst.msk [vmem:[%s278 + $0xc0] sm:$0xff] %vm8195, %v8165
      %8221 = vst.msk [vmem:[%s278 + $0xc8] sm:$0xff] %vm8195, %v8168
      %8222 = vst.msk [vmem:[%s278 + $0xd0] sm:$0xff] %vm8195, %v8173
      %8223 = vst.msk [vmem:[%s278 + $0xd8] sm:$0xff] %vm8195, %v8176
      %8224 = vst.msk [vmem:[%s278 + $0xe0] sm:$0xff] %vm8195, %v8181
      %8225 = vst.msk [vmem:[%s278 + $0xe8] sm:$0xff] %vm8195, %v8184
      %8226 = vst.msk [vmem:[%s278 + $0xf0] sm:$0xff] %vm8195, %v8189
      %8227 = vst.msk [vmem:[%s278 + $0xf8] sm:$0xff] %vm8195, %v8192
      %p8228 = scmp.lt.s32.totalorder %s18, 1
      %s8229 = scalar_select %p8228, %s18, 1
      %s8230 = smul.addr %s8229, 32
      %s8231 = smul.addr %s8230, 8
      %s8232 = scalar_lea.vmem %s7, %s8231
      // Predicated region
      $region70: #{tpu_custom_call.1} parent=47 // pred_check
        %p8233 = pneg %p188
      $region71: #{tpu_custom_call.1} parent=47 // pred_check_branch
        %8235 = sbr.rel (%p8233) target = $region73
      $region72: #{tpu_custom_call.1} parent=47 // pred_region
        _
      $region73: #{tpu_custom_call.1} parent=47 // pred_fallthru
        _
    $region48: #{tpu_custom_call.1} parent=5 // pred_fallthru
      _
    %p8236 = scmp.le.s32.totalorder 2, %s13
    // Predicated region
    $region74: #{tpu_custom_call.1} parent=5 // pred_check
      %p8237 = pneg %p8236
    $region75: #{tpu_custom_call.1} parent=5 // pred_check_branch
      %8239 = sbr.rel (%p8237) target = $region77
    $region76: #{tpu_custom_call.1} parent=5 // pred_region
      %s8240 = ssub.s32 %s13, 2
      // Predicated region
      $region78: #{tpu_custom_call.1} parent=76 // pred_check
        %p8241 = pneg %p194
      $region79: #{tpu_custom_call.1} parent=76 // pred_check_branch
        %8243 = sbr.rel (%p8241) target = $region81
      $region80: #{tpu_custom_call.1} parent=76 // pred_region
        %p8244 = scmp.lt.s32.totalorder %s19, 1
        %s8245 = scalar_select %p8244, %s19, 1
        %s8246 = smul.addr %s8245, 32
        %s8247 = smul.addr %s8246, 8
        %s8248 = scalar_lea.vmem %s7, %s8247
      $region81: #{tpu_custom_call.1} parent=76 // pred_fallthru
        _
    $region77: #{tpu_custom_call.1} parent=5 // pred_fallthru
      _
  $region6: #{tpu_custom_call.1} parent=0 // loop_footer
    %s17 = sadd.s32 1, %s13
  $region7: #{tpu_custom_call.1} parent=0 // loop_footer_branch
    %12 = sbr.rel target = $region3
  $region8: #{tpu_custom_call.1} parent=0 // loop_exit
    _

</llo_original>
